<compile_context>
chip_gen: v5e
topology: v5e:2x2
jax: 0.10.0
libtpu: 0.0.40
codegen_flags: <defaults>
</compile_context>

<pallas_src>
import jax
import jax.numpy as jnp
import numpy as np
from jax.experimental import pallas as pl
from jax.experimental.pallas import tpu as pltpu


# Per conv layer: (H_in, W_in, C_in, C_out); kernel 4x4, stride 2, VALID.
_CONV_SHAPES = (
    (96, 96, 1, 6),
    (47, 47, 6, 16),
    (22, 22, 16, 32),
    (10, 10, 32, 64),
)


def _out_dim(n):
    return (n - 4) // 2 + 1


# ---------------------------------------------------------------------------
# Parameters (deterministic synthetic init, PyTorch shapes)
# ---------------------------------------------------------------------------
def init_params(key):
    ks = jax.random.split(key, 14)

    def nrm(k, shape, scale=0.05):
        return scale * jax.random.normal(k, shape, dtype=jnp.float32)

    return {
        "c1_w": nrm(ks[0], (6, 1, 4, 4)),   "c1_b": nrm(ks[1], (6,)),
        "c2_w": nrm(ks[2], (16, 6, 4, 4)),  "c2_b": nrm(ks[3], (16,)),
        "c3_w": nrm(ks[4], (32, 16, 4, 4)), "c3_b": nrm(ks[5], (32,)),
        "c4_w": nrm(ks[6], (64, 32, 4, 4)), "c4_b": nrm(ks[7], (64,)),
        "l1_w": nrm(ks[8], (64, 1024)),     "l1_b": nrm(ks[9], (64,)),
        "l2_w": nrm(ks[10], (32, 64)),      "l2_b": nrm(ks[11], (32,)),
        "l3_w": nrm(ks[12], (1, 32)),       "l3_b": nrm(ks[13], (1,)),
    }


def prepare_params(p):
    """One-time host-side transform of PyTorch-layout params into the fused
    kernel's constant operands.  Call once; reuse for every forward pass.

    Per conv layer (activations kept as 2D (H, W*C), lane dim = W*C):
      R[dh, oh, h]              = 1 iff h == 2*oh + dh              (row select)
      M[dh, (2*ow+dw)*C + c, ow*OC + o] = W_torch[o, c, dh, dw]     (col+chan)
      bias[0, ow*OC + o]        = b[o]
    FC head: l1_w rows permuted to conv4's (oh, ow*64 + c) layout and split by
    oh; l2_w/l3_w transposed; l3 padded to 128 output lanes (cols 1.. are 0).
    """
    prep = []
    for name, (H, W, C, OC) in zip(("c1", "c2", "c3", "c4"), _CONV_SHAPES):
        OH, OW = _out_dim(H), _out_dim(W)
        w = np.asarray(p[f"{name}_w"], np.float32)        # (OC, C, 4, 4)
        b = np.asarray(p[f"{name}_b"], np.float32)        # (OC,)
        w4 = np.transpose(w, (2, 3, 1, 0))                # (kh, kw, C, OC)

        R = np.zeros((4, OH, H), np.float32)
        oh_idx = np.arange(OH)
        for dh in range(4):
            R[dh, oh_idx, 2 * oh_idx + dh] = 1.0

        M = np.zeros((4, W * C, OW * OC), np.float32)
        for dh in range(4):
            for dw in range(4):
                for ow in range(OW):
                    wc = 2 * ow + dw
                    M[dh, wc * C:(wc + 1) * C, ow * OC:(ow + 1) * OC] = w4[dh, dw]

        bias = np.tile(b, OW)[None, :]                    # (1, OW*OC)

        prep += [jnp.asarray(R, jnp.bfloat16),
                 jnp.asarray(M, jnp.bfloat16),
                 jnp.asarray(bias, jnp.float32)]

    # FC1: conv4 activation index is (oh, ow*64 + c); PyTorch flatten index is
    # c*16 + oh*4 + ow.  Permute l1_w accordingly and split by oh.
    w1 = np.asarray(p["l1_w"], np.float32).reshape(64, 64, 4, 4)   # (o, c, h, w)
    w1 = np.transpose(w1, (2, 3, 1, 0)).reshape(4, 4 * 64, 64)      # (h, w*64+c, o)
    b1 = np.asarray(p["l1_b"], np.float32)[None, :]                 # (1, 64)
    w2 = np.asarray(p["l2_w"], np.float32).T                        # (64, 32)
    b2 = np.asarray(p["l2_b"], np.float32)[None, :]                 # (1, 32)
    w3 = np.zeros((32, 128), np.float32)
    w3[:, 0] = np.asarray(p["l3_w"], np.float32)[0]                 # (32, 128)
    b3 = np.zeros((1, 128), np.float32)
    b3[0, 0] = float(np.asarray(p["l3_b"], np.float32)[0])

    prep += [jnp.asarray(w1, jnp.bfloat16), jnp.asarray(b1, jnp.float32),
             jnp.asarray(w2, jnp.bfloat16), jnp.asarray(b2, jnp.float32),
             jnp.asarray(w3, jnp.bfloat16), jnp.asarray(b3, jnp.float32)]
    return tuple(prep)


# ---------------------------------------------------------------------------
# Fused Pallas kernel: whole Critic forward for one sample per grid step
# ---------------------------------------------------------------------------
def _critic_fused_kernel(x_ref,
                         r1, m1, cb1, r2, m2, cb2, r3, m3, cb3, r4, m4, cb4,
                         w1, b1, w2, b2, w3, b3,
                         o_ref):
    a = x_ref[0].astype(jnp.bfloat16)                    # (96, 96)

    def conv(a, r_ref, m_ref, bias_ref):
        # a: (H, W*C) bf16 -> returns (OH, OW*OC) bf16, all in VMEM/vregs.
        acc = None
        for dh in range(4):
            rows = jnp.dot(r_ref[dh], a,
                           preferred_element_type=jnp.float32)      # row select
            rows = rows.astype(jnp.bfloat16)             # (OH, W*C)
            part = jnp.dot(rows, m_ref[dh],
                           preferred_element_type=jnp.float32)      # conv cols
            acc = part if acc is None else acc + part    # (OH, OW*OC) f32
        return jnp.maximum(acc + bias_ref[...], 0.0).astype(jnp.bfloat16)

    a = conv(a, r1, m1, cb1)          # (47, 282)
    a = conv(a, r2, m2, cb2)          # (22, 352)
    a = conv(a, r3, m3, cb3)          # (10, 320)
    a = conv(a, r4, m4, cb4)          # (4, 256)

    # FC head: Flatten order is absorbed into the pre-permuted, oh-split w1.
    h = None
    for oh in range(4):
        part = jnp.dot(a[oh:oh + 1, :], w1[oh],
                       preferred_element_type=jnp.float32)
        h = part if h is None else h + part              # (1, 64)
    h = jnp.maximum(h + b1[...], 0.0).astype(jnp.bfloat16)
    h = jnp.dot(h, w2[...], preferred_element_type=jnp.float32) + b2[...]
    h = jnp.maximum(h, 0.0).astype(jnp.bfloat16)         # (1, 32)
    v = jnp.dot(h, w3[...], preferred_element_type=jnp.float32) + b3[...]
    # (1, 128) f32; only column 0 is real (w3/b3 zero-padded).
    o_ref[0] = jnp.broadcast_to(v, (8, 128))


def critic_forward(obs_nchw, prep):
    """obs_nchw: (B, 1, 96, 96) float32 -> (B,) value."""
    B = obs_nchw.shape[0]
    x = obs_nchw.reshape(B, 96, 96)       # C == 1: layout-trivial

    in_specs = [pl.BlockSpec((1, 96, 96), lambda b: (b, 0, 0))]
    for arr in prep:
        # Constants: full-array blocks, constant index_map -> fetched once.
        in_specs.append(
            pl.BlockSpec(arr.shape,
                         (lambda b: (0, 0, 0)) if arr.ndim == 3
                         else (lambda b: (0, 0))))

    out = pl.pallas_call(
        _critic_fused_kernel,
        out_shape=jax.ShapeDtypeStruct((B, 8, 128), jnp.float32),
        grid=(B,),
        in_specs=in_specs,
        out_specs=pl.BlockSpec((1, 8, 128), lambda b: (b, 0, 0)),
        compiler_params=pltpu.CompilerParams(
            dimension_semantics=("parallel",)),
    )(x, *prep)
    return out[:, 0, 0]


# ---------------------------------------------------------------------------
# Pure-JAX f32 reference (sanity check)
# ---------------------------------------------------------------------------
def critic_forward_ref(obs_nchw, p):
    x = obs_nchw
    for name in ("c1", "c2", "c3", "c4"):
        x = jax.lax.conv_general_dilated(
            x, p[f"{name}_w"], window_strides=(2, 2), padding="VALID",
            dimension_numbers=("NCHW", "OIHW", "NCHW"),
        ) + p[f"{name}_b"][None, :, None, None]
        x = jnp.maximum(x, 0.0)
    x = x.reshape(x.shape[0], -1)
    x = jnp.maximum(x @ p["l1_w"].T + p["l1_b"], 0.0)
    x = jnp.maximum(x @ p["l2_w"].T + p["l2_b"], 0.0)
    v = x @ p["l3_w"].T + p["l3_b"]
    return jnp.squeeze(v, -1)


if __name__ == "__main__":
    key = jax.random.PRNGKey(0)
    k_obs, k_par = jax.random.split(key)

    # CarRacing-style observation: (B, 1, 96, 96) NCHW (PyTorch layout).
    obs = jax.random.normal(k_obs, (2, 1, 96, 96), dtype=jnp.float32)
    params = init_params(k_par)

    # One-time weight preprocessing (selection / conv-as-matmul constants).
    prep = prepare_params(params)
    prep = jax.tree_util.tree_map(jax.block_until_ready, prep)

    value = jax.jit(critic_forward)(obs, prep)
    value = jax.block_until_ready(value)
    assert value.shape == (2,), value.shape

    ref = jax.block_until_ready(critic_forward_ref(obs, params))
    # bf16 matmul inputs (f32 accumulation): slightly relaxed tolerance.
    np.testing.assert_allclose(np.asarray(value), np.asarray(ref),
                               rtol=3e-2, atol=5e-3)

    print("KERNEL_OK")
</pallas_src>

<mosaic_0001>
module attributes {stable_mosaic.version = 11 : i64} {
  func.func @_critic_fused_kernel(%arg0: i32, %arg1: memref<1x96x96xf32, #tpu.memory_space<vmem>>, %arg2: memref<4x47x96xbf16, #tpu.memory_space<vmem>>, %arg3: memref<4x96x282xbf16, #tpu.memory_space<vmem>>, %arg4: memref<1x282xf32, #tpu.memory_space<vmem>>, %arg5: memref<4x22x47xbf16, #tpu.memory_space<vmem>>, %arg6: memref<4x282x352xbf16, #tpu.memory_space<vmem>>, %arg7: memref<1x352xf32, #tpu.memory_space<vmem>>, %arg8: memref<4x10x22xbf16, #tpu.memory_space<vmem>>, %arg9: memref<4x352x320xbf16, #tpu.memory_space<vmem>>, %arg10: memref<1x320xf32, #tpu.memory_space<vmem>>, %arg11: memref<4x4x10xbf16, #tpu.memory_space<vmem>>, %arg12: memref<4x320x256xbf16, #tpu.memory_space<vmem>>, %arg13: memref<1x256xf32, #tpu.memory_space<vmem>>, %arg14: memref<4x256x64xbf16, #tpu.memory_space<vmem>>, %arg15: memref<1x64xf32, #tpu.memory_space<vmem>>, %arg16: memref<64x32xbf16, #tpu.memory_space<vmem>>, %arg17: memref<1x32xf32, #tpu.memory_space<vmem>>, %arg18: memref<32x128xbf16, #tpu.memory_space<vmem>>, %arg19: memref<1x128xf32, #tpu.memory_space<vmem>>, %arg20: memref<1x8x128xf32, #tpu.memory_space<vmem>>) attributes {dimension_semantics = [#tpu.dimension_semantics<parallel>], iteration_bounds = array<i64: 2>, scalar_prefetch = 0 : i64, scratch_operands = 0 : i64, tpu.core_type = #tpu.core_type<tc>, window_params = [{transform_indices = @transform_0, window_bounds = array<i64: 1, 96, 96>}, {pipeline_mode = #tpu.pipeline_mode<synchronous>, transform_indices = @transform_1, window_bounds = array<i64: 4, 47, 96>}, {pipeline_mode = #tpu.pipeline_mode<synchronous>, transform_indices = @transform_2, window_bounds = array<i64: 4, 96, 282>}, {pipeline_mode = #tpu.pipeline_mode<synchronous>, transform_indices = @transform_3, window_bounds = array<i64: 1, 282>}, {pipeline_mode = #tpu.pipeline_mode<synchronous>, transform_indices = @transform_4, window_bounds = array<i64: 4, 22, 47>}, {pipeline_mode = #tpu.pipeline_mode<synchronous>, transform_indices = @transform_5, window_bounds = array<i64: 4, 282, 352>}, {pipeline_mode = #tpu.pipeline_mode<synchronous>, transform_indices = @transform_6, window_bounds = array<i64: 1, 352>}, {pipeline_mode = #tpu.pipeline_mode<synchronous>, transform_indices = @transform_7, window_bounds = array<i64: 4, 10, 22>}, {pipeline_mode = #tpu.pipeline_mode<synchronous>, transform_indices = @transform_8, window_bounds = array<i64: 4, 352, 320>}, {pipeline_mode = #tpu.pipeline_mode<synchronous>, transform_indices = @transform_9, window_bounds = array<i64: 1, 320>}, {pipeline_mode = #tpu.pipeline_mode<synchronous>, transform_indices = @transform_10, window_bounds = array<i64: 4, 4, 10>}, {pipeline_mode = #tpu.pipeline_mode<synchronous>, transform_indices = @transform_11, window_bounds = array<i64: 4, 320, 256>}, {pipeline_mode = #tpu.pipeline_mode<synchronous>, transform_indices = @transform_12, window_bounds = array<i64: 1, 256>}, {pipeline_mode = #tpu.pipeline_mode<synchronous>, transform_indices = @transform_13, window_bounds = array<i64: 4, 256, 64>}, {pipeline_mode = #tpu.pipeline_mode<synchronous>, transform_indices = @transform_14, window_bounds = array<i64: 1, 64>}, {pipeline_mode = #tpu.pipeline_mode<synchronous>, transform_indices = @transform_15, window_bounds = array<i64: 64, 32>}, {pipeline_mode = #tpu.pipeline_mode<synchronous>, transform_indices = @transform_16, window_bounds = array<i64: 1, 32>}, {pipeline_mode = #tpu.pipeline_mode<synchronous>, transform_indices = @transform_17, window_bounds = array<i64: 32, 128>}, {pipeline_mode = #tpu.pipeline_mode<synchronous>, transform_indices = @transform_18, window_bounds = array<i64: 1, 128>}, {transform_indices = @transform_19, window_bounds = array<i64: 1, 8, 128>}]} {
    %c0 = arith.constant 0 : index
    %c0_0 = arith.constant 0 : index
    %c0_1 = arith.constant 0 : index
    %0 = vector.load %arg1[%c0, %c0_0, %c0_1] : memref<1x96x96xf32, #tpu.memory_space<vmem>>, vector<1x96x96xf32>
    %1 = vector.shape_cast %0 : vector<1x96x96xf32> to vector<96x96xf32>
    %2 = arith.truncf %1 : vector<96x96xf32> to vector<96x96xbf16>
    %c0_2 = arith.constant 0 : index
    %c0_3 = arith.constant 0 : index
    %c0_4 = arith.constant 0 : index
    %3 = vector.load %arg2[%c0_2, %c0_3, %c0_4] : memref<4x47x96xbf16, #tpu.memory_space<vmem>>, vector<1x47x96xbf16>
    %4 = vector.shape_cast %3 : vector<1x47x96xbf16> to vector<47x96xbf16>
    %cst = arith.constant dense<0.000000e+00> : vector<47x96xf32>
    %5 = tpu.matmul %4, %2, %cst {dimension_numbers = #tpu.dot_dimension_numbers<[1], [0], [0], [1], [0, 0, 1, 1], [], []>} : vector<47x96xbf16>, vector<96x96xbf16>, vector<47x96xf32> -> vector<47x96xf32>
    %6 = arith.truncf %5 : vector<47x96xf32> to vector<47x96xbf16>
    %c0_5 = arith.constant 0 : index
    %c0_6 = arith.constant 0 : index
    %c0_7 = arith.constant 0 : index
    %7 = vector.load %arg3[%c0_5, %c0_6, %c0_7] : memref<4x96x282xbf16, #tpu.memory_space<vmem>>, vector<1x96x282xbf16>
    %8 = vector.shape_cast %7 : vector<1x96x282xbf16> to vector<96x282xbf16>
    %cst_8 = arith.constant dense<0.000000e+00> : vector<47x282xf32>
    %9 = tpu.matmul %6, %8, %cst_8 {dimension_numbers = #tpu.dot_dimension_numbers<[1], [0], [0], [1], [0, 0, 1, 1], [], []>} : vector<47x96xbf16>, vector<96x282xbf16>, vector<47x282xf32> -> vector<47x282xf32>
    %c1 = arith.constant 1 : index
    %c0_9 = arith.constant 0 : index
    %c0_10 = arith.constant 0 : index
    %10 = vector.load %arg2[%c1, %c0_9, %c0_10] : memref<4x47x96xbf16, #tpu.memory_space<vmem>>, vector<1x47x96xbf16>
    %11 = vector.shape_cast %10 : vector<1x47x96xbf16> to vector<47x96xbf16>
    %cst_11 = arith.constant dense<0.000000e+00> : vector<47x96xf32>
    %12 = tpu.matmul %11, %2, %cst_11 {dimension_numbers = #tpu.dot_dimension_numbers<[1], [0], [0], [1], [0, 0, 1, 1], [], []>} : vector<47x96xbf16>, vector<96x96xbf16>, vector<47x96xf32> -> vector<47x96xf32>
    %13 = arith.truncf %12 : vector<47x96xf32> to vector<47x96xbf16>
    %c1_12 = arith.constant 1 : index
    %c0_13 = arith.constant 0 : index
    %c0_14 = arith.constant 0 : index
    %14 = vector.load %arg3[%c1_12, %c0_13, %c0_14] : memref<4x96x282xbf16, #tpu.memory_space<vmem>>, vector<1x96x282xbf16>
    %15 = vector.shape_cast %14 : vector<1x96x282xbf16> to vector<96x282xbf16>
    %cst_15 = arith.constant dense<0.000000e+00> : vector<47x282xf32>
    %16 = tpu.matmul %13, %15, %cst_15 {dimension_numbers = #tpu.dot_dimension_numbers<[1], [0], [0], [1], [0, 0, 1, 1], [], []>} : vector<47x96xbf16>, vector<96x282xbf16>, vector<47x282xf32> -> vector<47x282xf32>
    %17 = arith.addf %9, %16 : vector<47x282xf32>
    %c2 = arith.constant 2 : index
    %c0_16 = arith.constant 0 : index
    %c0_17 = arith.constant 0 : index
    %18 = vector.load %arg2[%c2, %c0_16, %c0_17] : memref<4x47x96xbf16, #tpu.memory_space<vmem>>, vector<1x47x96xbf16>
    %19 = vector.shape_cast %18 : vector<1x47x96xbf16> to vector<47x96xbf16>
    %cst_18 = arith.constant dense<0.000000e+00> : vector<47x96xf32>
    %20 = tpu.matmul %19, %2, %cst_18 {dimension_numbers = #tpu.dot_dimension_numbers<[1], [0], [0], [1], [0, 0, 1, 1], [], []>} : vector<47x96xbf16>, vector<96x96xbf16>, vector<47x96xf32> -> vector<47x96xf32>
    %21 = arith.truncf %20 : vector<47x96xf32> to vector<47x96xbf16>
    %c2_19 = arith.constant 2 : index
    %c0_20 = arith.constant 0 : index
    %c0_21 = arith.constant 0 : index
    %22 = vector.load %arg3[%c2_19, %c0_20, %c0_21] : memref<4x96x282xbf16, #tpu.memory_space<vmem>>, vector<1x96x282xbf16>
    %23 = vector.shape_cast %22 : vector<1x96x282xbf16> to vector<96x282xbf16>
    %cst_22 = arith.constant dense<0.000000e+00> : vector<47x282xf32>
    %24 = tpu.matmul %21, %23, %cst_22 {dimension_numbers = #tpu.dot_dimension_numbers<[1], [0], [0], [1], [0, 0, 1, 1], [], []>} : vector<47x96xbf16>, vector<96x282xbf16>, vector<47x282xf32> -> vector<47x282xf32>
    %25 = arith.addf %17, %24 : vector<47x282xf32>
    %c3 = arith.constant 3 : index
    %c0_23 = arith.constant 0 : index
    %c0_24 = arith.constant 0 : index
    %26 = vector.load %arg2[%c3, %c0_23, %c0_24] : memref<4x47x96xbf16, #tpu.memory_space<vmem>>, vector<1x47x96xbf16>
    %27 = vector.shape_cast %26 : vector<1x47x96xbf16> to vector<47x96xbf16>
    %cst_25 = arith.constant dense<0.000000e+00> : vector<47x96xf32>
    %28 = tpu.matmul %27, %2, %cst_25 {dimension_numbers = #tpu.dot_dimension_numbers<[1], [0], [0], [1], [0, 0, 1, 1], [], []>} : vector<47x96xbf16>, vector<96x96xbf16>, vector<47x96xf32> -> vector<47x96xf32>
    %29 = arith.truncf %28 : vector<47x96xf32> to vector<47x96xbf16>
    %c3_26 = arith.constant 3 : index
    %c0_27 = arith.constant 0 : index
    %c0_28 = arith.constant 0 : index
    %30 = vector.load %arg3[%c3_26, %c0_27, %c0_28] : memref<4x96x282xbf16, #tpu.memory_space<vmem>>, vector<1x96x282xbf16>
    %31 = vector.shape_cast %30 : vector<1x96x282xbf16> to vector<96x282xbf16>
    %cst_29 = arith.constant dense<0.000000e+00> : vector<47x282xf32>
    %32 = tpu.matmul %29, %31, %cst_29 {dimension_numbers = #tpu.dot_dimension_numbers<[1], [0], [0], [1], [0, 0, 1, 1], [], []>} : vector<47x96xbf16>, vector<96x282xbf16>, vector<47x282xf32> -> vector<47x282xf32>
    %33 = arith.addf %25, %32 : vector<47x282xf32>
    %c0_30 = arith.constant 0 : index
    %c0_31 = arith.constant 0 : index
    %34 = vector.load %arg4[%c0_30, %c0_31] : memref<1x282xf32, #tpu.memory_space<vmem>>, vector<1x282xf32>
    %35 = vector.broadcast %34 : vector<1x282xf32> to vector<47x282xf32>
    %36 = arith.addf %33, %35 : vector<47x282xf32>
    %cst_32 = arith.constant 0.000000e+00 : f32
    %37 = vector.broadcast %cst_32 : f32 to vector<47x282xf32>
    %38 = arith.maximumf %36, %37 : vector<47x282xf32>
    %39 = arith.truncf %38 : vector<47x282xf32> to vector<47x282xbf16>
    %c0_33 = arith.constant 0 : index
    %c0_34 = arith.constant 0 : index
    %c0_35 = arith.constant 0 : index
    %40 = vector.load %arg5[%c0_33, %c0_34, %c0_35] : memref<4x22x47xbf16, #tpu.memory_space<vmem>>, vector<1x22x47xbf16>
    %41 = vector.shape_cast %40 : vector<1x22x47xbf16> to vector<22x47xbf16>
    %cst_36 = arith.constant dense<0.000000e+00> : vector<22x282xf32>
    %42 = tpu.matmul %41, %39, %cst_36 {dimension_numbers = #tpu.dot_dimension_numbers<[1], [0], [0], [1], [0, 0, 1, 1], [], []>} : vector<22x47xbf16>, vector<47x282xbf16>, vector<22x282xf32> -> vector<22x282xf32>
    %43 = arith.truncf %42 : vector<22x282xf32> to vector<22x282xbf16>
    %c0_37 = arith.constant 0 : index
    %c0_38 = arith.constant 0 : index
    %c0_39 = arith.constant 0 : index
    %44 = vector.load %arg6[%c0_37, %c0_38, %c0_39] : memref<4x282x352xbf16, #tpu.memory_space<vmem>>, vector<1x282x352xbf16>
    %45 = vector.shape_cast %44 : vector<1x282x352xbf16> to vector<282x352xbf16>
    %cst_40 = arith.constant dense<0.000000e+00> : vector<22x352xf32>
    %46 = tpu.matmul %43, %45, %cst_40 {dimension_numbers = #tpu.dot_dimension_numbers<[1], [0], [0], [1], [0, 0, 1, 1], [], []>} : vector<22x282xbf16>, vector<282x352xbf16>, vector<22x352xf32> -> vector<22x352xf32>
    %c1_41 = arith.constant 1 : index
    %c0_42 = arith.constant 0 : index
    %c0_43 = arith.constant 0 : index
    %47 = vector.load %arg5[%c1_41, %c0_42, %c0_43] : memref<4x22x47xbf16, #tpu.memory_space<vmem>>, vector<1x22x47xbf16>
    %48 = vector.shape_cast %47 : vector<1x22x47xbf16> to vector<22x47xbf16>
    %cst_44 = arith.constant dense<0.000000e+00> : vector<22x282xf32>
    %49 = tpu.matmul %48, %39, %cst_44 {dimension_numbers = #tpu.dot_dimension_numbers<[1], [0], [0], [1], [0, 0, 1, 1], [], []>} : vector<22x47xbf16>, vector<47x282xbf16>, vector<22x282xf32> -> vector<22x282xf32>
    %50 = arith.truncf %49 : vector<22x282xf32> to vector<22x282xbf16>
    %c1_45 = arith.constant 1 : index
    %c0_46 = arith.constant 0 : index
    %c0_47 = arith.constant 0 : index
    %51 = vector.load %arg6[%c1_45, %c0_46, %c0_47] : memref<4x282x352xbf16, #tpu.memory_space<vmem>>, vector<1x282x352xbf16>
    %52 = vector.shape_cast %51 : vector<1x282x352xbf16> to vector<282x352xbf16>
    %cst_48 = arith.constant dense<0.000000e+00> : vector<22x352xf32>
    %53 = tpu.matmul %50, %52, %cst_48 {dimension_numbers = #tpu.dot_dimension_numbers<[1], [0], [0], [1], [0, 0, 1, 1], [], []>} : vector<22x282xbf16>, vector<282x352xbf16>, vector<22x352xf32> -> vector<22x352xf32>
    %54 = arith.addf %46, %53 : vector<22x352xf32>
    %c2_49 = arith.constant 2 : index
    %c0_50 = arith.constant 0 : index
    %c0_51 = arith.constant 0 : index
    %55 = vector.load %arg5[%c2_49, %c0_50, %c0_51] : memref<4x22x47xbf16, #tpu.memory_space<vmem>>, vector<1x22x47xbf16>
    %56 = vector.shape_cast %55 : vector<1x22x47xbf16> to vector<22x47xbf16>
    %cst_52 = arith.constant dense<0.000000e+00> : vector<22x282xf32>
    %57 = tpu.matmul %56, %39, %cst_52 {dimension_numbers = #tpu.dot_dimension_numbers<[1], [0], [0], [1], [0, 0, 1, 1], [], []>} : vector<22x47xbf16>, vector<47x282xbf16>, vector<22x282xf32> -> vector<22x282xf32>
    %58 = arith.truncf %57 : vector<22x282xf32> to vector<22x282xbf16>
    %c2_53 = arith.constant 2 : index
    %c0_54 = arith.constant 0 : index
    %c0_55 = arith.constant 0 : index
    %59 = vector.load %arg6[%c2_53, %c0_54, %c0_55] : memref<4x282x352xbf16, #tpu.memory_space<vmem>>, vector<1x282x352xbf16>
    %60 = vector.shape_cast %59 : vector<1x282x352xbf16> to vector<282x352xbf16>
    %cst_56 = arith.constant dense<0.000000e+00> : vector<22x352xf32>
    %61 = tpu.matmul %58, %60, %cst_56 {dimension_numbers = #tpu.dot_dimension_numbers<[1], [0], [0], [1], [0, 0, 1, 1], [], []>} : vector<22x282xbf16>, vector<282x352xbf16>, vector<22x352xf32> -> vector<22x352xf32>
    %62 = arith.addf %54, %61 : vector<22x352xf32>
    %c3_57 = arith.constant 3 : index
    %c0_58 = arith.constant 0 : index
    %c0_59 = arith.constant 0 : index
    %63 = vector.load %arg5[%c3_57, %c0_58, %c0_59] : memref<4x22x47xbf16, #tpu.memory_space<vmem>>, vector<1x22x47xbf16>
    %64 = vector.shape_cast %63 : vector<1x22x47xbf16> to vector<22x47xbf16>
    %cst_60 = arith.constant dense<0.000000e+00> : vector<22x282xf32>
    %65 = tpu.matmul %64, %39, %cst_60 {dimension_numbers = #tpu.dot_dimension_numbers<[1], [0], [0], [1], [0, 0, 1, 1], [], []>} : vector<22x47xbf16>, vector<47x282xbf16>, vector<22x282xf32> -> vector<22x282xf32>
    %66 = arith.truncf %65 : vector<22x282xf32> to vector<22x282xbf16>
    %c3_61 = arith.constant 3 : index
    %c0_62 = arith.constant 0 : index
    %c0_63 = arith.constant 0 : index
    %67 = vector.load %arg6[%c3_61, %c0_62, %c0_63] : memref<4x282x352xbf16, #tpu.memory_space<vmem>>, vector<1x282x352xbf16>
    %68 = vector.shape_cast %67 : vector<1x282x352xbf16> to vector<282x352xbf16>
    %cst_64 = arith.constant dense<0.000000e+00> : vector<22x352xf32>
    %69 = tpu.matmul %66, %68, %cst_64 {dimension_numbers = #tpu.dot_dimension_numbers<[1], [0], [0], [1], [0, 0, 1, 1], [], []>} : vector<22x282xbf16>, vector<282x352xbf16>, vector<22x352xf32> -> vector<22x352xf32>
    %70 = arith.addf %62, %69 : vector<22x352xf32>
    %c0_65 = arith.constant 0 : index
    %c0_66 = arith.constant 0 : index
    %71 = vector.load %arg7[%c0_65, %c0_66] : memref<1x352xf32, #tpu.memory_space<vmem>>, vector<1x352xf32>
    %72 = vector.broadcast %71 : vector<1x352xf32> to vector<22x352xf32>
    %73 = arith.addf %70, %72 : vector<22x352xf32>
    %cst_67 = arith.constant 0.000000e+00 : f32
    %74 = vector.broadcast %cst_67 : f32 to vector<22x352xf32>
    %75 = arith.maximumf %73, %74 : vector<22x352xf32>
    %76 = arith.truncf %75 : vector<22x352xf32> to vector<22x352xbf16>
    %c0_68 = arith.constant 0 : index
    %c0_69 = arith.constant 0 : index
    %c0_70 = arith.constant 0 : index
    %77 = vector.load %arg8[%c0_68, %c0_69, %c0_70] : memref<4x10x22xbf16, #tpu.memory_space<vmem>>, vector<1x10x22xbf16>
    %78 = vector.shape_cast %77 : vector<1x10x22xbf16> to vector<10x22xbf16>
    %cst_71 = arith.constant dense<0.000000e+00> : vector<10x352xf32>
    %79 = tpu.matmul %78, %76, %cst_71 {dimension_numbers = #tpu.dot_dimension_numbers<[1], [0], [0], [1], [0, 0, 1, 1], [], []>} : vector<10x22xbf16>, vector<22x352xbf16>, vector<10x352xf32> -> vector<10x352xf32>
    %80 = arith.truncf %79 : vector<10x352xf32> to vector<10x352xbf16>
    %c0_72 = arith.constant 0 : index
    %c0_73 = arith.constant 0 : index
    %c0_74 = arith.constant 0 : index
    %81 = vector.load %arg9[%c0_72, %c0_73, %c0_74] : memref<4x352x320xbf16, #tpu.memory_space<vmem>>, vector<1x352x320xbf16>
    %82 = vector.shape_cast %81 : vector<1x352x320xbf16> to vector<352x320xbf16>
    %cst_75 = arith.constant dense<0.000000e+00> : vector<10x320xf32>
    %83 = tpu.matmul %80, %82, %cst_75 {dimension_numbers = #tpu.dot_dimension_numbers<[1], [0], [0], [1], [0, 0, 1, 1], [], []>} : vector<10x352xbf16>, vector<352x320xbf16>, vector<10x320xf32> -> vector<10x320xf32>
    %c1_76 = arith.constant 1 : index
    %c0_77 = arith.constant 0 : index
    %c0_78 = arith.constant 0 : index
    %84 = vector.load %arg8[%c1_76, %c0_77, %c0_78] : memref<4x10x22xbf16, #tpu.memory_space<vmem>>, vector<1x10x22xbf16>
    %85 = vector.shape_cast %84 : vector<1x10x22xbf16> to vector<10x22xbf16>
    %cst_79 = arith.constant dense<0.000000e+00> : vector<10x352xf32>
    %86 = tpu.matmul %85, %76, %cst_79 {dimension_numbers = #tpu.dot_dimension_numbers<[1], [0], [0], [1], [0, 0, 1, 1], [], []>} : vector<10x22xbf16>, vector<22x352xbf16>, vector<10x352xf32> -> vector<10x352xf32>
    %87 = arith.truncf %86 : vector<10x352xf32> to vector<10x352xbf16>
    %c1_80 = arith.constant 1 : index
    %c0_81 = arith.constant 0 : index
    %c0_82 = arith.constant 0 : index
    %88 = vector.load %arg9[%c1_80, %c0_81, %c0_82] : memref<4x352x320xbf16, #tpu.memory_space<vmem>>, vector<1x352x320xbf16>
    %89 = vector.shape_cast %88 : vector<1x352x320xbf16> to vector<352x320xbf16>
    %cst_83 = arith.constant dense<0.000000e+00> : vector<10x320xf32>
    %90 = tpu.matmul %87, %89, %cst_83 {dimension_numbers = #tpu.dot_dimension_numbers<[1], [0], [0], [1], [0, 0, 1, 1], [], []>} : vector<10x352xbf16>, vector<352x320xbf16>, vector<10x320xf32> -> vector<10x320xf32>
    %91 = arith.addf %83, %90 : vector<10x320xf32>
    %c2_84 = arith.constant 2 : index
    %c0_85 = arith.constant 0 : index
    %c0_86 = arith.constant 0 : index
    %92 = vector.load %arg8[%c2_84, %c0_85, %c0_86] : memref<4x10x22xbf16, #tpu.memory_space<vmem>>, vector<1x10x22xbf16>
    %93 = vector.shape_cast %92 : vector<1x10x22xbf16> to vector<10x22xbf16>
    %cst_87 = arith.constant dense<0.000000e+00> : vector<10x352xf32>
    %94 = tpu.matmul %93, %76, %cst_87 {dimension_numbers = #tpu.dot_dimension_numbers<[1], [0], [0], [1], [0, 0, 1, 1], [], []>} : vector<10x22xbf16>, vector<22x352xbf16>, vector<10x352xf32> -> vector<10x352xf32>
    %95 = arith.truncf %94 : vector<10x352xf32> to vector<10x352xbf16>
    %c2_88 = arith.constant 2 : index
    %c0_89 = arith.constant 0 : index
    %c0_90 = arith.constant 0 : index
    %96 = vector.load %arg9[%c2_88, %c0_89, %c0_90] : memref<4x352x320xbf16, #tpu.memory_space<vmem>>, vector<1x352x320xbf16>
    %97 = vector.shape_cast %96 : vector<1x352x320xbf16> to vector<352x320xbf16>
    %cst_91 = arith.constant dense<0.000000e+00> : vector<10x320xf32>
    %98 = tpu.matmul %95, %97, %cst_91 {dimension_numbers = #tpu.dot_dimension_numbers<[1], [0], [0], [1], [0, 0, 1, 1], [], []>} : vector<10x352xbf16>, vector<352x320xbf16>, vector<10x320xf32> -> vector<10x320xf32>
    %99 = arith.addf %91, %98 : vector<10x320xf32>
    %c3_92 = arith.constant 3 : index
    %c0_93 = arith.constant 0 : index
    %c0_94 = arith.constant 0 : index
    %100 = vector.load %arg8[%c3_92, %c0_93, %c0_94] : memref<4x10x22xbf16, #tpu.memory_space<vmem>>, vector<1x10x22xbf16>
    %101 = vector.shape_cast %100 : vector<1x10x22xbf16> to vector<10x22xbf16>
    %cst_95 = arith.constant dense<0.000000e+00> : vector<10x352xf32>
    %102 = tpu.matmul %101, %76, %cst_95 {dimension_numbers = #tpu.dot_dimension_numbers<[1], [0], [0], [1], [0, 0, 1, 1], [], []>} : vector<10x22xbf16>, vector<22x352xbf16>, vector<10x352xf32> -> vector<10x352xf32>
    %103 = arith.truncf %102 : vector<10x352xf32> to vector<10x352xbf16>
    %c3_96 = arith.constant 3 : index
    %c0_97 = arith.constant 0 : index
    %c0_98 = arith.constant 0 : index
    %104 = vector.load %arg9[%c3_96, %c0_97, %c0_98] : memref<4x352x320xbf16, #tpu.memory_space<vmem>>, vector<1x352x320xbf16>
    %105 = vector.shape_cast %104 : vector<1x352x320xbf16> to vector<352x320xbf16>
    %cst_99 = arith.constant dense<0.000000e+00> : vector<10x320xf32>
    %106 = tpu.matmul %103, %105, %cst_99 {dimension_numbers = #tpu.dot_dimension_numbers<[1], [0], [0], [1], [0, 0, 1, 1], [], []>} : vector<10x352xbf16>, vector<352x320xbf16>, vector<10x320xf32> -> vector<10x320xf32>
    %107 = arith.addf %99, %106 : vector<10x320xf32>
    %c0_100 = arith.constant 0 : index
    %c0_101 = arith.constant 0 : index
    %108 = vector.load %arg10[%c0_100, %c0_101] : memref<1x320xf32, #tpu.memory_space<vmem>>, vector<1x320xf32>
    %109 = vector.broadcast %108 : vector<1x320xf32> to vector<10x320xf32>
    %110 = arith.addf %107, %109 : vector<10x320xf32>
    %cst_102 = arith.constant 0.000000e+00 : f32
    %111 = vector.broadcast %cst_102 : f32 to vector<10x320xf32>
    %112 = arith.maximumf %110, %111 : vector<10x320xf32>
    %113 = arith.truncf %112 : vector<10x320xf32> to vector<10x320xbf16>
    %c0_103 = arith.constant 0 : index
    %c0_104 = arith.constant 0 : index
    %c0_105 = arith.constant 0 : index
    %114 = vector.load %arg11[%c0_103, %c0_104, %c0_105] : memref<4x4x10xbf16, #tpu.memory_space<vmem>>, vector<1x4x10xbf16>
    %115 = vector.shape_cast %114 : vector<1x4x10xbf16> to vector<4x10xbf16>
    %cst_106 = arith.constant dense<0.000000e+00> : vector<4x320xf32>
    %116 = tpu.matmul %115, %113, %cst_106 {dimension_numbers = #tpu.dot_dimension_numbers<[1], [0], [0], [1], [0, 0, 1, 1], [], []>} : vector<4x10xbf16>, vector<10x320xbf16>, vector<4x320xf32> -> vector<4x320xf32>
    %117 = arith.truncf %116 : vector<4x320xf32> to vector<4x320xbf16>
    %c0_107 = arith.constant 0 : index
    %c0_108 = arith.constant 0 : index
    %c0_109 = arith.constant 0 : index
    %118 = vector.load %arg12[%c0_107, %c0_108, %c0_109] : memref<4x320x256xbf16, #tpu.memory_space<vmem>>, vector<1x320x256xbf16>
    %119 = vector.shape_cast %118 : vector<1x320x256xbf16> to vector<320x256xbf16>
    %cst_110 = arith.constant dense<0.000000e+00> : vector<4x256xf32>
    %120 = tpu.matmul %117, %119, %cst_110 {dimension_numbers = #tpu.dot_dimension_numbers<[1], [0], [0], [1], [0, 0, 1, 1], [], []>} : vector<4x320xbf16>, vector<320x256xbf16>, vector<4x256xf32> -> vector<4x256xf32>
    %c1_111 = arith.constant 1 : index
    %c0_112 = arith.constant 0 : index
    %c0_113 = arith.constant 0 : index
    %121 = vector.load %arg11[%c1_111, %c0_112, %c0_113] : memref<4x4x10xbf16, #tpu.memory_space<vmem>>, vector<1x4x10xbf16>
    %122 = vector.shape_cast %121 : vector<1x4x10xbf16> to vector<4x10xbf16>
    %cst_114 = arith.constant dense<0.000000e+00> : vector<4x320xf32>
    %123 = tpu.matmul %122, %113, %cst_114 {dimension_numbers = #tpu.dot_dimension_numbers<[1], [0], [0], [1], [0, 0, 1, 1], [], []>} : vector<4x10xbf16>, vector<10x320xbf16>, vector<4x320xf32> -> vector<4x320xf32>
    %124 = arith.truncf %123 : vector<4x320xf32> to vector<4x320xbf16>
    %c1_115 = arith.constant 1 : index
    %c0_116 = arith.constant 0 : index
    %c0_117 = arith.constant 0 : index
    %125 = vector.load %arg12[%c1_115, %c0_116, %c0_117] : memref<4x320x256xbf16, #tpu.memory_space<vmem>>, vector<1x320x256xbf16>
    %126 = vector.shape_cast %125 : vector<1x320x256xbf16> to vector<320x256xbf16>
    %cst_118 = arith.constant dense<0.000000e+00> : vector<4x256xf32>
    %127 = tpu.matmul %124, %126, %cst_118 {dimension_numbers = #tpu.dot_dimension_numbers<[1], [0], [0], [1], [0, 0, 1, 1], [], []>} : vector<4x320xbf16>, vector<320x256xbf16>, vector<4x256xf32> -> vector<4x256xf32>
    %128 = arith.addf %120, %127 : vector<4x256xf32>
    %c2_119 = arith.constant 2 : index
    %c0_120 = arith.constant 0 : index
    %c0_121 = arith.constant 0 : index
    %129 = vector.load %arg11[%c2_119, %c0_120, %c0_121] : memref<4x4x10xbf16, #tpu.memory_space<vmem>>, vector<1x4x10xbf16>
    %130 = vector.shape_cast %129 : vector<1x4x10xbf16> to vector<4x10xbf16>
    %cst_122 = arith.constant dense<0.000000e+00> : vector<4x320xf32>
    %131 = tpu.matmul %130, %113, %cst_122 {dimension_numbers = #tpu.dot_dimension_numbers<[1], [0], [0], [1], [0, 0, 1, 1], [], []>} : vector<4x10xbf16>, vector<10x320xbf16>, vector<4x320xf32> -> vector<4x320xf32>
    %132 = arith.truncf %131 : vector<4x320xf32> to vector<4x320xbf16>
    %c2_123 = arith.constant 2 : index
    %c0_124 = arith.constant 0 : index
    %c0_125 = arith.constant 0 : index
    %133 = vector.load %arg12[%c2_123, %c0_124, %c0_125] : memref<4x320x256xbf16, #tpu.memory_space<vmem>>, vector<1x320x256xbf16>
    %134 = vector.shape_cast %133 : vector<1x320x256xbf16> to vector<320x256xbf16>
    %cst_126 = arith.constant dense<0.000000e+00> : vector<4x256xf32>
    %135 = tpu.matmul %132, %134, %cst_126 {dimension_numbers = #tpu.dot_dimension_numbers<[1], [0], [0], [1], [0, 0, 1, 1], [], []>} : vector<4x320xbf16>, vector<320x256xbf16>, vector<4x256xf32> -> vector<4x256xf32>
    %136 = arith.addf %128, %135 : vector<4x256xf32>
    %c3_127 = arith.constant 3 : index
    %c0_128 = arith.constant 0 : index
    %c0_129 = arith.constant 0 : index
    %137 = vector.load %arg11[%c3_127, %c0_128, %c0_129] : memref<4x4x10xbf16, #tpu.memory_space<vmem>>, vector<1x4x10xbf16>
    %138 = vector.shape_cast %137 : vector<1x4x10xbf16> to vector<4x10xbf16>
    %cst_130 = arith.constant dense<0.000000e+00> : vector<4x320xf32>
    %139 = tpu.matmul %138, %113, %cst_130 {dimension_numbers = #tpu.dot_dimension_numbers<[1], [0], [0], [1], [0, 0, 1, 1], [], []>} : vector<4x10xbf16>, vector<10x320xbf16>, vector<4x320xf32> -> vector<4x320xf32>
    %140 = arith.truncf %139 : vector<4x320xf32> to vector<4x320xbf16>
    %c3_131 = arith.constant 3 : index
    %c0_132 = arith.constant 0 : index
    %c0_133 = arith.constant 0 : index
    %141 = vector.load %arg12[%c3_131, %c0_132, %c0_133] : memref<4x320x256xbf16, #tpu.memory_space<vmem>>, vector<1x320x256xbf16>
    %142 = vector.shape_cast %141 : vector<1x320x256xbf16> to vector<320x256xbf16>
    %cst_134 = arith.constant dense<0.000000e+00> : vector<4x256xf32>
    %143 = tpu.matmul %140, %142, %cst_134 {dimension_numbers = #tpu.dot_dimension_numbers<[1], [0], [0], [1], [0, 0, 1, 1], [], []>} : vector<4x320xbf16>, vector<320x256xbf16>, vector<4x256xf32> -> vector<4x256xf32>
    %144 = arith.addf %136, %143 : vector<4x256xf32>
    %c0_135 = arith.constant 0 : index
    %c0_136 = arith.constant 0 : index
    %145 = vector.load %arg13[%c0_135, %c0_136] : memref<1x256xf32, #tpu.memory_space<vmem>>, vector<1x256xf32>
    %146 = vector.broadcast %145 : vector<1x256xf32> to vector<4x256xf32>
    %147 = arith.addf %144, %146 : vector<4x256xf32>
    %cst_137 = arith.constant 0.000000e+00 : f32
    %148 = vector.broadcast %cst_137 : f32 to vector<4x256xf32>
    %149 = arith.maximumf %147, %148 : vector<4x256xf32>
    %150 = arith.truncf %149 : vector<4x256xf32> to vector<4x256xbf16>
    %151 = vector.extract_strided_slice %150 {offsets = [0, 0], sizes = [1, 256], strides = [1, 1]} : vector<4x256xbf16> to vector<1x256xbf16>
    %c0_138 = arith.constant 0 : index
    %c0_139 = arith.constant 0 : index
    %c0_140 = arith.constant 0 : index
    %152 = vector.load %arg14[%c0_138, %c0_139, %c0_140] : memref<4x256x64xbf16, #tpu.memory_space<vmem>>, vector<1x256x64xbf16>
    %153 = vector.shape_cast %152 : vector<1x256x64xbf16> to vector<256x64xbf16>
    %cst_141 = arith.constant dense<0.000000e+00> : vector<1x64xf32>
    %154 = tpu.matmul %151, %153, %cst_141 {dimension_numbers = #tpu.dot_dimension_numbers<[1], [0], [0], [1], [0, 0, 1, 1], [], []>} : vector<1x256xbf16>, vector<256x64xbf16>, vector<1x64xf32> -> vector<1x64xf32>
    %155 = vector.extract_strided_slice %150 {offsets = [1, 0], sizes = [1, 256], strides = [1, 1]} : vector<4x256xbf16> to vector<1x256xbf16>
    %c1_142 = arith.constant 1 : index
    %c0_143 = arith.constant 0 : index
    %c0_144 = arith.constant 0 : index
    %156 = vector.load %arg14[%c1_142, %c0_143, %c0_144] : memref<4x256x64xbf16, #tpu.memory_space<vmem>>, vector<1x256x64xbf16>
    %157 = vector.shape_cast %156 : vector<1x256x64xbf16> to vector<256x64xbf16>
    %cst_145 = arith.constant dense<0.000000e+00> : vector<1x64xf32>
    %158 = tpu.matmul %155, %157, %cst_145 {dimension_numbers = #tpu.dot_dimension_numbers<[1], [0], [0], [1], [0, 0, 1, 1], [], []>} : vector<1x256xbf16>, vector<256x64xbf16>, vector<1x64xf32> -> vector<1x64xf32>
    %159 = arith.addf %154, %158 : vector<1x64xf32>
    %160 = vector.extract_strided_slice %150 {offsets = [2, 0], sizes = [1, 256], strides = [1, 1]} : vector<4x256xbf16> to vector<1x256xbf16>
    %c2_146 = arith.constant 2 : index
    %c0_147 = arith.constant 0 : index
    %c0_148 = arith.constant 0 : index
    %161 = vector.load %arg14[%c2_146, %c0_147, %c0_148] : memref<4x256x64xbf16, #tpu.memory_space<vmem>>, vector<1x256x64xbf16>
    %162 = vector.shape_cast %161 : vector<1x256x64xbf16> to vector<256x64xbf16>
    %cst_149 = arith.constant dense<0.000000e+00> : vector<1x64xf32>
    %163 = tpu.matmul %160, %162, %cst_149 {dimension_numbers = #tpu.dot_dimension_numbers<[1], [0], [0], [1], [0, 0, 1, 1], [], []>} : vector<1x256xbf16>, vector<256x64xbf16>, vector<1x64xf32> -> vector<1x64xf32>
    %164 = arith.addf %159, %163 : vector<1x64xf32>
    %165 = vector.extract_strided_slice %150 {offsets = [3, 0], sizes = [1, 256], strides = [1, 1]} : vector<4x256xbf16> to vector<1x256xbf16>
    %c3_150 = arith.constant 3 : index
    %c0_151 = arith.constant 0 : index
    %c0_152 = arith.constant 0 : index
    %166 = vector.load %arg14[%c3_150, %c0_151, %c0_152] : memref<4x256x64xbf16, #tpu.memory_space<vmem>>, vector<1x256x64xbf16>
    %167 = vector.shape_cast %166 : vector<1x256x64xbf16> to vector<256x64xbf16>
    %cst_153 = arith.constant dense<0.000000e+00> : vector<1x64xf32>
    %168 = tpu.matmul %165, %167, %cst_153 {dimension_numbers = #tpu.dot_dimension_numbers<[1], [0], [0], [1], [0, 0, 1, 1], [], []>} : vector<1x256xbf16>, vector<256x64xbf16>, vector<1x64xf32> -> vector<1x64xf32>
    %169 = arith.addf %164, %168 : vector<1x64xf32>
    %c0_154 = arith.constant 0 : index
    %c0_155 = arith.constant 0 : index
    %170 = vector.load %arg15[%c0_154, %c0_155] : memref<1x64xf32, #tpu.memory_space<vmem>>, vector<1x64xf32>
    %171 = arith.addf %169, %170 : vector<1x64xf32>
    %cst_156 = arith.constant 0.000000e+00 : f32
    %172 = vector.broadcast %cst_156 : f32 to vector<1x64xf32>
    %173 = arith.maximumf %171, %172 : vector<1x64xf32>
    %174 = arith.truncf %173 : vector<1x64xf32> to vector<1x64xbf16>
    %c0_157 = arith.constant 0 : index
    %c0_158 = arith.constant 0 : index
    %175 = vector.load %arg16[%c0_157, %c0_158] : memref<64x32xbf16, #tpu.memory_space<vmem>>, vector<64x32xbf16>
    %cst_159 = arith.constant dense<0.000000e+00> : vector<1x32xf32>
    %176 = tpu.matmul %174, %175, %cst_159 {dimension_numbers = #tpu.dot_dimension_numbers<[1], [0], [0], [1], [0, 0, 1, 1], [], []>} : vector<1x64xbf16>, vector<64x32xbf16>, vector<1x32xf32> -> vector<1x32xf32>
    %c0_160 = arith.constant 0 : index
    %c0_161 = arith.constant 0 : index
    %177 = vector.load %arg17[%c0_160, %c0_161] : memref<1x32xf32, #tpu.memory_space<vmem>>, vector<1x32xf32>
    %178 = arith.addf %176, %177 : vector<1x32xf32>
    %cst_162 = arith.constant 0.000000e+00 : f32
    %179 = vector.broadcast %cst_162 : f32 to vector<1x32xf32>
    %180 = arith.maximumf %178, %179 : vector<1x32xf32>
    %181 = arith.truncf %180 : vector<1x32xf32> to vector<1x32xbf16>
    %c0_163 = arith.constant 0 : index
    %c0_164 = arith.constant 0 : index
    %182 = vector.load %arg18[%c0_163, %c0_164] : memref<32x128xbf16, #tpu.memory_space<vmem>>, vector<32x128xbf16>
    %cst_165 = arith.constant dense<0.000000e+00> : vector<1x128xf32>
    %183 = tpu.matmul %181, %182, %cst_165 {dimension_numbers = #tpu.dot_dimension_numbers<[1], [0], [0], [1], [0, 0, 1, 1], [], []>} : vector<1x32xbf16>, vector<32x128xbf16>, vector<1x128xf32> -> vector<1x128xf32>
    %c0_166 = arith.constant 0 : index
    %c0_167 = arith.constant 0 : index
    %184 = vector.load %arg19[%c0_166, %c0_167] : memref<1x128xf32, #tpu.memory_space<vmem>>, vector<1x128xf32>
    %185 = arith.addf %183, %184 : vector<1x128xf32>
    %186 = vector.shape_cast %185 : vector<1x128xf32> to vector<1x128xf32>
    %187 = vector.broadcast %186 : vector<1x128xf32> to vector<8x128xf32>
    %c0_168 = arith.constant 0 : index
    %c0_169 = arith.constant 0 : index
    %c0_170 = arith.constant 0 : index
    %188 = vector.load %arg20[%c0_168, %c0_169, %c0_170] : memref<1x8x128xf32, #tpu.memory_space<vmem>>, vector<1x8x128xf32>
    %189 = vector.shape_cast %188 : vector<1x8x128xf32> to vector<8x128xf32>
    %190 = vector.shape_cast %187 : vector<8x128xf32> to vector<1x8x128xf32>
    tpu.vector_store %arg20[%c0_168, %c0_169, %c0_170], %190 {strides = array<i32>} : memref<1x8x128xf32, #tpu.memory_space<vmem>>, vector<1x8x128xf32>,
    return
  }
  func.func @transform_0(%arg0: i32) -> (i32, i32, i32) {
    %c0_i32 = arith.constant 0 : i32
    %c0_i32_0 = arith.constant 0 : i32
    %c0_i32_1 = arith.constant 0 : i32
    return %arg0, %c0_i32, %c0_i32_0 : i32, i32, i32
  }
  func.func @transform_1(%arg0: i32) -> (i32, i32, i32) {
    %c0_i32 = arith.constant 0 : i32
    %c0_i32_0 = arith.constant 0 : i32
    %c0_i32_1 = arith.constant 0 : i32
    %c0_i32_2 = arith.constant 0 : i32
    return %c0_i32, %c0_i32_0, %c0_i32_1 : i32, i32, i32
  }
  func.func @transform_2(%arg0: i32) -> (i32, i32, i32) {
    %c0_i32 = arith.constant 0 : i32
    %c0_i32_0 = arith.constant 0 : i32
    %c0_i32_1 = arith.constant 0 : i32
    %c0_i32_2 = arith.constant 0 : i32
    return %c0_i32, %c0_i32_0, %c0_i32_1 : i32, i32, i32
  }
  func.func @transform_3(%arg0: i32) -> (i32, i32) {
    %c0_i32 = arith.constant 0 : i32
    %c0_i32_0 = arith.constant 0 : i32
    %c0_i32_1 = arith.constant 0 : i32
    return %c0_i32, %c0_i32_0 : i32, i32
  }
  func.func @transform_4(%arg0: i32) -> (i32, i32, i32) {
    %c0_i32 = arith.constant 0 : i32
    %c0_i32_0 = arith.constant 0 : i32
    %c0_i32_1 = arith.constant 0 : i32
    %c0_i32_2 = arith.constant 0 : i32
    return %c0_i32, %c0_i32_0, %c0_i32_1 : i32, i32, i32
  }
  func.func @transform_5(%arg0: i32) -> (i32, i32, i32) {
    %c0_i32 = arith.constant 0 : i32
    %c0_i32_0 = arith.constant 0 : i32
    %c0_i32_1 = arith.constant 0 : i32
    %c0_i32_2 = arith.constant 0 : i32
    return %c0_i32, %c0_i32_0, %c0_i32_1 : i32, i32, i32
  }
  func.func @transform_6(%arg0: i32) -> (i32, i32) {
    %c0_i32 = arith.constant 0 : i32
    %c0_i32_0 = arith.constant 0 : i32
    %c0_i32_1 = arith.constant 0 : i32
    return %c0_i32, %c0_i32_0 : i32, i32
  }
  func.func @transform_7(%arg0: i32) -> (i32, i32, i32) {
    %c0_i32 = arith.constant 0 : i32
    %c0_i32_0 = arith.constant 0 : i32
    %c0_i32_1 = arith.constant 0 : i32
    %c0_i32_2 = arith.constant 0 : i32
    return %c0_i32, %c0_i32_0, %c0_i32_1 : i32, i32, i32
  }
  func.func @transform_8(%arg0: i32) -> (i32, i32, i32) {
    %c0_i32 = arith.constant 0 : i32
    %c0_i32_0 = arith.constant 0 : i32
    %c0_i32_1 = arith.constant 0 : i32
    %c0_i32_2 = arith.constant 0 : i32
    return %c0_i32, %c0_i32_0, %c0_i32_1 : i32, i32, i32
  }
  func.func @transform_9(%arg0: i32) -> (i32, i32) {
    %c0_i32 = arith.constant 0 : i32
    %c0_i32_0 = arith.constant 0 : i32
    %c0_i32_1 = arith.constant 0 : i32
    return %c0_i32, %c0_i32_0 : i32, i32
  }
  func.func @transform_10(%arg0: i32) -> (i32, i32, i32) {
    %c0_i32 = arith.constant 0 : i32
    %c0_i32_0 = arith.constant 0 : i32
    %c0_i32_1 = arith.constant 0 : i32
    %c0_i32_2 = arith.constant 0 : i32
    return %c0_i32, %c0_i32_0, %c0_i32_1 : i32, i32, i32
  }
  func.func @transform_11(%arg0: i32) -> (i32, i32, i32) {
    %c0_i32 = arith.constant 0 : i32
    %c0_i32_0 = arith.constant 0 : i32
    %c0_i32_1 = arith.constant 0 : i32
    %c0_i32_2 = arith.constant 0 : i32
    return %c0_i32, %c0_i32_0, %c0_i32_1 : i32, i32, i32
  }
  func.func @transform_12(%arg0: i32) -> (i32, i32) {
    %c0_i32 = arith.constant 0 : i32
    %c0_i32_0 = arith.constant 0 : i32
    %c0_i32_1 = arith.constant 0 : i32
    return %c0_i32, %c0_i32_0 : i32, i32
  }
  func.func @transform_13(%arg0: i32) -> (i32, i32, i32) {
    %c0_i32 = arith.constant 0 : i32
    %c0_i32_0 = arith.constant 0 : i32
    %c0_i32_1 = arith.constant 0 : i32
    %c0_i32_2 = arith.constant 0 : i32
    return %c0_i32, %c0_i32_0, %c0_i32_1 : i32, i32, i32
  }
  func.func @transform_14(%arg0: i32) -> (i32, i32) {
    %c0_i32 = arith.constant 0 : i32
    %c0_i32_0 = arith.constant 0 : i32
    %c0_i32_1 = arith.constant 0 : i32
    return %c0_i32, %c0_i32_0 : i32, i32
  }
  func.func @transform_15(%arg0: i32) -> (i32, i32) {
    %c0_i32 = arith.constant 0 : i32
    %c0_i32_0 = arith.constant 0 : i32
    %c0_i32_1 = arith.constant 0 : i32
    return %c0_i32, %c0_i32_0 : i32, i32
  }
  func.func @transform_16(%arg0: i32) -> (i32, i32) {
    %c0_i32 = arith.constant 0 : i32
    %c0_i32_0 = arith.constant 0 : i32
    %c0_i32_1 = arith.constant 0 : i32
    return %c0_i32, %c0_i32_0 : i32, i32
  }
  func.func @transform_17(%arg0: i32) -> (i32, i32) {
    %c0_i32 = arith.constant 0 : i32
    %c0_i32_0 = arith.constant 0 : i32
    %c0_i32_1 = arith.constant 0 : i32
    return %c0_i32, %c0_i32_0 : i32, i32
  }
  func.func @transform_18(%arg0: i32) -> (i32, i32) {
    %c0_i32 = arith.constant 0 : i32
    %c0_i32_0 = arith.constant 0 : i32
    %c0_i32_1 = arith.constant 0 : i32
    return %c0_i32, %c0_i32_0 : i32, i32
  }
  func.func @transform_19(%arg0: i32) -> (i32, i32, i32) {
    %c0_i32 = arith.constant 0 : i32
    %c0_i32_0 = arith.constant 0 : i32
    %c0_i32_1 = arith.constant 0 : i32
    return %arg0, %c0_i32, %c0_i32_0 : i32, i32, i32
  }
}

</mosaic_0001>

<llo_original>
// kernel: critic_forward.1
$region0: #{critic_forward.1}
  #allocation0 [shape = 'u32[]', space=smem, size = 0x4, offset = 0x4, fixed_abs, tag = 'smem constant byte address 0x4 - core index']
  #allocation1 [shape = 'u32[72,128]{1,0:T(1,128)}', space=vmem, size = 0x9000, scoped, tag = 'internal scratch']
  %s0 = inlined_call_operand.vmem [shape: f32[2,96,96], index: 0, kind: input, shape index: {}]
  %s1 = inlined_call_operand.vmem [shape: bf16[4,47,96], index: 1, kind: input, shape index: {}]
  %s2 = inlined_call_operand.vmem [shape: bf16[4,96,282], index: 2, kind: input, shape index: {}]
  %s3 = inlined_call_operand.vmem [shape: f32[1,282], index: 3, kind: input, shape index: {}]
  %s4 = inlined_call_operand.vmem [shape: bf16[4,22,47], index: 4, kind: input, shape index: {}]
  %s5 = inlined_call_operand.vmem [shape: bf16[4,282,352], index: 5, kind: input, shape index: {}]
  %s6 = inlined_call_operand.vmem [shape: f32[1,352], index: 6, kind: input, shape index: {}]
  %s7 = inlined_call_operand.vmem [shape: bf16[4,10,22], index: 7, kind: input, shape index: {}]
  %s8 = inlined_call_operand.vmem [shape: bf16[4,352,320], index: 8, kind: input, shape index: {}]
  %s9 = inlined_call_operand.vmem [shape: f32[1,320], index: 9, kind: input, shape index: {}]
  %s10 = inlined_call_operand.vmem [shape: bf16[4,4,10], index: 10, kind: input, shape index: {}]
  %s11 = inlined_call_operand.vmem [shape: bf16[4,320,256], index: 11, kind: input, shape index: {}]
  %s12 = inlined_call_operand.vmem [shape: f32[1,256], index: 12, kind: input, shape index: {}]
  %s13 = inlined_call_operand.vmem [shape: bf16[4,256,64], index: 13, kind: input, shape index: {}]
  %s14 = inlined_call_operand.vmem [shape: f32[1,64], index: 14, kind: input, shape index: {}]
  %s15 = inlined_call_operand.vmem [shape: bf16[64,32], index: 15, kind: input, shape index: {}]
  %s16 = inlined_call_operand.vmem [shape: f32[1,32], index: 16, kind: input, shape index: {}]
  %s17 = inlined_call_operand.vmem [shape: bf16[32,128], index: 17, kind: input, shape index: {}]
  %s18 = inlined_call_operand.vmem [shape: f32[1,128], index: 18, kind: input, shape index: {}]
  %s19 = inlined_call_operand.vmem [shape: f32[2,8,128], index: 19, kind: output, shape index: {}]
  %s20 = sld [smem:[#allocation0]]
  $region109: #{critic_forward.1} parent=0
    _
  %s22 = ssub.s32 1, %s20
  %s23 = scalar_select 0, %s22, %s20
  loop: start=0, step=1, limit=4
  $region2: #{critic_forward.1} parent=0 // loop_pre_header
    _
  $region3: #{critic_forward.1} parent=0 // loop_header
    %s25 = sphi 0, %s29
    %p26 = scmp.ge.s32.totalorder %s25, 4
    %s35 = sphi 0, %s37
    %s38 = sphi 0, %s35
    %s39 = sphi 0, %s38
    %s55 = sphi 0, %s39
    %s59 = sphi 0, %s59
    %s61 = sphi 0, %s59
    %s62 = sphi 0, %s61
    %s76 = sphi 0, %s62
    %s80 = sphi 0, %s80
    %s82 = sphi 0, %s80
    %s83 = sphi 0, %s82
    %s97 = sphi 0, %s83
    %s101 = sphi 0, %s101
    %s103 = sphi 0, %s101
    %s104 = sphi 0, %s103
    %s118 = sphi 0, %s104
    %s122 = sphi 0, %s122
    %s124 = sphi 0, %s122
    %s125 = sphi 0, %s124
    %s139 = sphi 0, %s125
    %s143 = sphi 0, %s143
    %s145 = sphi 0, %s143
    %s146 = sphi 0, %s145
    %s160 = sphi 0, %s146
    %s164 = sphi 0, %s164
    %s166 = sphi 0, %s164
    %s167 = sphi 0, %s166
    %s181 = sphi 0, %s167
    %s185 = sphi 0, %s185
    %s187 = sphi 0, %s185
    %s188 = sphi 0, %s187
    %s202 = sphi 0, %s188
    %s206 = sphi 0, %s206
    %s208 = sphi 0, %s206
    %s209 = sphi 0, %s208
    %s223 = sphi 0, %s209
    %s227 = sphi 0, %s227
    %s229 = sphi 0, %s227
    %s230 = sphi 0, %s229
    %s244 = sphi 0, %s230
    %s248 = sphi 0, %s248
    %s250 = sphi 0, %s248
    %s251 = sphi 0, %s250
    %s265 = sphi 0, %s251
    %s269 = sphi 0, %s269
    %s271 = sphi 0, %s269
    %s272 = sphi 0, %s271
    %s286 = sphi 0, %s272
    %s290 = sphi 0, %s290
    %s292 = sphi 0, %s290
    %s293 = sphi 0, %s292
    %s307 = sphi 0, %s293
    %s311 = sphi 0, %s311
    %s313 = sphi 0, %s311
    %s314 = sphi 0, %s313
    %s328 = sphi 0, %s314
    %s332 = sphi 0, %s332
    %s334 = sphi 0, %s332
    %s335 = sphi 0, %s334
    %s349 = sphi 0, %s335
    %s353 = sphi 0, %s353
    %s355 = sphi 0, %s353
    %s356 = sphi 0, %s355
    %s370 = sphi 0, %s356
    %s374 = sphi 0, %s374
    %s376 = sphi 0, %s374
    %s377 = sphi 0, %s376
    %s391 = sphi 0, %s377
    %s395 = sphi 0, %s395
    %s397 = sphi 0, %s395
    %s398 = sphi 0, %s397
    %s412 = sphi 0, %s398
    %s416 = sphi 0, %s416
    %s418 = sphi 0, %s416
    %s419 = sphi 0, %s418
    %s433 = sphi 0, %s419
    %s439 = sphi 0, %s441
    %s442 = sphi 0, %s439
    %s443 = sphi 0, %s442
    %s459 = sphi 0, %s443
  $region4: #{critic_forward.1} parent=0 // loop_header_branch
    %28 = sbr.rel (%p26) target = $region8
  $region5: #{critic_forward.1} parent=0 // loop_body
    %s30 = ssub.s32 %s25, 1
    %s31 = ssub.s32 %s25, 2
    %s32 = sadd.s32 %s25, 1
    %s33 = ssub.s32 %s25, %s32
    %p34 = scmp.eq.s32.totalorder %s33, 0
    %s36 = sadd.s32 %s35, 1
    %s37 = scalar_select %p34, %s35, %s36
    %p40 = pneg %p34
    %p41 = scmp.eq.s32.totalorder %s25, 1
    %p42 = por %p40, %p41
    %p43 = scmp.ne.s32.totalorder %s35, %s38
    %p44 = scmp.eq.s32.totalorder %s25, 0
    %p45 = por %p43, %p44
    %p46 = scmp.ne.s32.totalorder %s35, %s38
    %p47 = scmp.eq.s32.totalorder %s30, 1
    %p48 = por %p46, %p47
    %p49 = scmp.ne.s32.totalorder %s38, %s39
    %p50 = scmp.eq.s32.totalorder %s30, 0
    %p51 = por %p49, %p50
    %p52 = scmp.ne.s32.totalorder %s38, %s39
    %p53 = scmp.eq.s32.totalorder %s31, 1
    %p54 = por %p52, %p53
    %p56 = scmp.ne.s32.totalorder %s39, %s55
    %p57 = scmp.eq.s32.totalorder %s31, 0
    %p58 = por %p56, %p57
    %s60 = sadd.s32 %s59, 1
    %p63 = scmp.eq.s32.totalorder %s25, 1
    %p64 = scmp.ne.s32.totalorder %s59, %s61
    %p65 = scmp.eq.s32.totalorder %s25, 0
    %p66 = por %p64, %p65
    %p67 = scmp.ne.s32.totalorder %s59, %s61
    %p68 = scmp.eq.s32.totalorder %s30, 1
    %p69 = por %p67, %p68
    %p70 = scmp.ne.s32.totalorder %s61, %s62
    %p71 = scmp.eq.s32.totalorder %s30, 0
    %p72 = por %p70, %p71
    %p73 = scmp.ne.s32.totalorder %s61, %s62
    %p74 = scmp.eq.s32.totalorder %s31, 1
    %p75 = por %p73, %p74
    %p77 = scmp.ne.s32.totalorder %s62, %s76
    %p78 = scmp.eq.s32.totalorder %s31, 0
    %p79 = por %p77, %p78
    %s81 = sadd.s32 %s80, 1
    %p84 = scmp.eq.s32.totalorder %s25, 1
    %p85 = scmp.ne.s32.totalorder %s80, %s82
    %p86 = scmp.eq.s32.totalorder %s25, 0
    %p87 = por %p85, %p86
    %p88 = scmp.ne.s32.totalorder %s80, %s82
    %p89 = scmp.eq.s32.totalorder %s30, 1
    %p90 = por %p88, %p89
    %p91 = scmp.ne.s32.totalorder %s82, %s83
    %p92 = scmp.eq.s32.totalorder %s30, 0
    %p93 = por %p91, %p92
    %p94 = scmp.ne.s32.totalorder %s82, %s83
    %p95 = scmp.eq.s32.totalorder %s31, 1
    %p96 = por %p94, %p95
    %p98 = scmp.ne.s32.totalorder %s83, %s97
    %p99 = scmp.eq.s32.totalorder %s31, 0
    %p100 = por %p98, %p99
    %s102 = sadd.s32 %s101, 1
    %p105 = scmp.eq.s32.totalorder %s25, 1
    %p106 = scmp.ne.s32.totalorder %s101, %s103
    %p107 = scmp.eq.s32.totalorder %s25, 0
    %p108 = por %p106, %p107
    %p109 = scmp.ne.s32.totalorder %s101, %s103
    %p110 = scmp.eq.s32.totalorder %s30, 1
    %p111 = por %p109, %p110
    %p112 = scmp.ne.s32.totalorder %s103, %s104
    %p113 = scmp.eq.s32.totalorder %s30, 0
    %p114 = por %p112, %p113
    %p115 = scmp.ne.s32.totalorder %s103, %s104
    %p116 = scmp.eq.s32.totalorder %s31, 1
    %p117 = por %p115, %p116
    %p119 = scmp.ne.s32.totalorder %s104, %s118
    %p120 = scmp.eq.s32.totalorder %s31, 0
    %p121 = por %p119, %p120
    %s123 = sadd.s32 %s122, 1
    %p126 = scmp.eq.s32.totalorder %s25, 1
    %p127 = scmp.ne.s32.totalorder %s122, %s124
    %p128 = scmp.eq.s32.totalorder %s25, 0
    %p129 = por %p127, %p128
    %p130 = scmp.ne.s32.totalorder %s122, %s124
    %p131 = scmp.eq.s32.totalorder %s30, 1
    %p132 = por %p130, %p131
    %p133 = scmp.ne.s32.totalorder %s124, %s125
    %p134 = scmp.eq.s32.totalorder %s30, 0
    %p135 = por %p133, %p134
    %p136 = scmp.ne.s32.totalorder %s124, %s125
    %p137 = scmp.eq.s32.totalorder %s31, 1
    %p138 = por %p136, %p137
    %p140 = scmp.ne.s32.totalorder %s125, %s139
    %p141 = scmp.eq.s32.totalorder %s31, 0
    %p142 = por %p140, %p141
    %s144 = sadd.s32 %s143, 1
    %p147 = scmp.eq.s32.totalorder %s25, 1
    %p148 = scmp.ne.s32.totalorder %s143, %s145
    %p149 = scmp.eq.s32.totalorder %s25, 0
    %p150 = por %p148, %p149
    %p151 = scmp.ne.s32.totalorder %s143, %s145
    %p152 = scmp.eq.s32.totalorder %s30, 1
    %p153 = por %p151, %p152
    %p154 = scmp.ne.s32.totalorder %s145, %s146
    %p155 = scmp.eq.s32.totalorder %s30, 0
    %p156 = por %p154, %p155
    %p157 = scmp.ne.s32.totalorder %s145, %s146
    %p158 = scmp.eq.s32.totalorder %s31, 1
    %p159 = por %p157, %p158
    %p161 = scmp.ne.s32.totalorder %s146, %s160
    %p162 = scmp.eq.s32.totalorder %s31, 0
    %p163 = por %p161, %p162
    %s165 = sadd.s32 %s164, 1
    %p168 = scmp.eq.s32.totalorder %s25, 1
    %p169 = scmp.ne.s32.totalorder %s164, %s166
    %p170 = scmp.eq.s32.totalorder %s25, 0
    %p171 = por %p169, %p170
    %p172 = scmp.ne.s32.totalorder %s164, %s166
    %p173 = scmp.eq.s32.totalorder %s30, 1
    %p174 = por %p172, %p173
    %p175 = scmp.ne.s32.totalorder %s166, %s167
    %p176 = scmp.eq.s32.totalorder %s30, 0
    %p177 = por %p175, %p176
    %p178 = scmp.ne.s32.totalorder %s166, %s167
    %p179 = scmp.eq.s32.totalorder %s31, 1
    %p180 = por %p178, %p179
    %p182 = scmp.ne.s32.totalorder %s167, %s181
    %p183 = scmp.eq.s32.totalorder %s31, 0
    %p184 = por %p182, %p183
    %s186 = sadd.s32 %s185, 1
    %p189 = scmp.eq.s32.totalorder %s25, 1
    %p190 = scmp.ne.s32.totalorder %s185, %s187
    %p191 = scmp.eq.s32.totalorder %s25, 0
    %p192 = por %p190, %p191
    %p193 = scmp.ne.s32.totalorder %s185, %s187
    %p194 = scmp.eq.s32.totalorder %s30, 1
    %p195 = por %p193, %p194
    %p196 = scmp.ne.s32.totalorder %s187, %s188
    %p197 = scmp.eq.s32.totalorder %s30, 0
    %p198 = por %p196, %p197
    %p199 = scmp.ne.s32.totalorder %s187, %s188
    %p200 = scmp.eq.s32.totalorder %s31, 1
    %p201 = por %p199, %p200
    %p203 = scmp.ne.s32.totalorder %s188, %s202
    %p204 = scmp.eq.s32.totalorder %s31, 0
    %p205 = por %p203, %p204
    %s207 = sadd.s32 %s206, 1
    %p210 = scmp.eq.s32.totalorder %s25, 1
    %p211 = scmp.ne.s32.totalorder %s206, %s208
    %p212 = scmp.eq.s32.totalorder %s25, 0
    %p213 = por %p211, %p212
    %p214 = scmp.ne.s32.totalorder %s206, %s208
    %p215 = scmp.eq.s32.totalorder %s30, 1
    %p216 = por %p214, %p215
    %p217 = scmp.ne.s32.totalorder %s208, %s209
    %p218 = scmp.eq.s32.totalorder %s30, 0
    %p219 = por %p217, %p218
    %p220 = scmp.ne.s32.totalorder %s208, %s209
    %p221 = scmp.eq.s32.totalorder %s31, 1
    %p222 = por %p220, %p221
    %p224 = scmp.ne.s32.totalorder %s209, %s223
    %p225 = scmp.eq.s32.totalorder %s31, 0
    %p226 = por %p224, %p225
    %s228 = sadd.s32 %s227, 1
    %p231 = scmp.eq.s32.totalorder %s25, 1
    %p232 = scmp.ne.s32.totalorder %s227, %s229
    %p233 = scmp.eq.s32.totalorder %s25, 0
    %p234 = por %p232, %p233
    %p235 = scmp.ne.s32.totalorder %s227, %s229
    %p236 = scmp.eq.s32.totalorder %s30, 1
    %p237 = por %p235, %p236
    %p238 = scmp.ne.s32.totalorder %s229, %s230
    %p239 = scmp.eq.s32.totalorder %s30, 0
    %p240 = por %p238, %p239
    %p241 = scmp.ne.s32.totalorder %s229, %s230
    %p242 = scmp.eq.s32.totalorder %s31, 1
    %p243 = por %p241, %p242
    %p245 = scmp.ne.s32.totalorder %s230, %s244
    %p246 = scmp.eq.s32.totalorder %s31, 0
    %p247 = por %p245, %p246
    %s249 = sadd.s32 %s248, 1
    %p252 = scmp.eq.s32.totalorder %s25, 1
    %p253 = scmp.ne.s32.totalorder %s248, %s250
    %p254 = scmp.eq.s32.totalorder %s25, 0
    %p255 = por %p253, %p254
    %p256 = scmp.ne.s32.totalorder %s248, %s250
    %p257 = scmp.eq.s32.totalorder %s30, 1
    %p258 = por %p256, %p257
    %p259 = scmp.ne.s32.totalorder %s250, %s251
    %p260 = scmp.eq.s32.totalorder %s30, 0
    %p261 = por %p259, %p260
    %p262 = scmp.ne.s32.totalorder %s250, %s251
    %p263 = scmp.eq.s32.totalorder %s31, 1
    %p264 = por %p262, %p263
    %p266 = scmp.ne.s32.totalorder %s251, %s265
    %p267 = scmp.eq.s32.totalorder %s31, 0
    %p268 = por %p266, %p267
    %s270 = sadd.s32 %s269, 1
    %p273 = scmp.eq.s32.totalorder %s25, 1
    %p274 = scmp.ne.s32.totalorder %s269, %s271
    %p275 = scmp.eq.s32.totalorder %s25, 0
    %p276 = por %p274, %p275
    %p277 = scmp.ne.s32.totalorder %s269, %s271
    %p278 = scmp.eq.s32.totalorder %s30, 1
    %p279 = por %p277, %p278
    %p280 = scmp.ne.s32.totalorder %s271, %s272
    %p281 = scmp.eq.s32.totalorder %s30, 0
    %p282 = por %p280, %p281
    %p283 = scmp.ne.s32.totalorder %s271, %s272
    %p284 = scmp.eq.s32.totalorder %s31, 1
    %p285 = por %p283, %p284
    %p287 = scmp.ne.s32.totalorder %s272, %s286
    %p288 = scmp.eq.s32.totalorder %s31, 0
    %p289 = por %p287, %p288
    %s291 = sadd.s32 %s290, 1
    %p294 = scmp.eq.s32.totalorder %s25, 1
    %p295 = scmp.ne.s32.totalorder %s290, %s292
    %p296 = scmp.eq.s32.totalorder %s25, 0
    %p297 = por %p295, %p296
    %p298 = scmp.ne.s32.totalorder %s290, %s292
    %p299 = scmp.eq.s32.totalorder %s30, 1
    %p300 = por %p298, %p299
    %p301 = scmp.ne.s32.totalorder %s292, %s293
    %p302 = scmp.eq.s32.totalorder %s30, 0
    %p303 = por %p301, %p302
    %p304 = scmp.ne.s32.totalorder %s292, %s293
    %p305 = scmp.eq.s32.totalorder %s31, 1
    %p306 = por %p304, %p305
    %p308 = scmp.ne.s32.totalorder %s293, %s307
    %p309 = scmp.eq.s32.totalorder %s31, 0
    %p310 = por %p308, %p309
    %s312 = sadd.s32 %s311, 1
    %p315 = scmp.eq.s32.totalorder %s25, 1
    %p316 = scmp.ne.s32.totalorder %s311, %s313
    %p317 = scmp.eq.s32.totalorder %s25, 0
    %p318 = por %p316, %p317
    %p319 = scmp.ne.s32.totalorder %s311, %s313
    %p320 = scmp.eq.s32.totalorder %s30, 1
    %p321 = por %p319, %p320
    %p322 = scmp.ne.s32.totalorder %s313, %s314
    %p323 = scmp.eq.s32.totalorder %s30, 0
    %p324 = por %p322, %p323
    %p325 = scmp.ne.s32.totalorder %s313, %s314
    %p326 = scmp.eq.s32.totalorder %s31, 1
    %p327 = por %p325, %p326
    %p329 = scmp.ne.s32.totalorder %s314, %s328
    %p330 = scmp.eq.s32.totalorder %s31, 0
    %p331 = por %p329, %p330
    %s333 = sadd.s32 %s332, 1
    %p336 = scmp.eq.s32.totalorder %s25, 1
    %p337 = scmp.ne.s32.totalorder %s332, %s334
    %p338 = scmp.eq.s32.totalorder %s25, 0
    %p339 = por %p337, %p338
    %p340 = scmp.ne.s32.totalorder %s332, %s334
    %p341 = scmp.eq.s32.totalorder %s30, 1
    %p342 = por %p340, %p341
    %p343 = scmp.ne.s32.totalorder %s334, %s335
    %p344 = scmp.eq.s32.totalorder %s30, 0
    %p345 = por %p343, %p344
    %p346 = scmp.ne.s32.totalorder %s334, %s335
    %p347 = scmp.eq.s32.totalorder %s31, 1
    %p348 = por %p346, %p347
    %p350 = scmp.ne.s32.totalorder %s335, %s349
    %p351 = scmp.eq.s32.totalorder %s31, 0
    %p352 = por %p350, %p351
    %s354 = sadd.s32 %s353, 1
    %p357 = scmp.eq.s32.totalorder %s25, 1
    %p358 = scmp.ne.s32.totalorder %s353, %s355
    %p359 = scmp.eq.s32.totalorder %s25, 0
    %p360 = por %p358, %p359
    %p361 = scmp.ne.s32.totalorder %s353, %s355
    %p362 = scmp.eq.s32.totalorder %s30, 1
    %p363 = por %p361, %p362
    %p364 = scmp.ne.s32.totalorder %s355, %s356
    %p365 = scmp.eq.s32.totalorder %s30, 0
    %p366 = por %p364, %p365
    %p367 = scmp.ne.s32.totalorder %s355, %s356
    %p368 = scmp.eq.s32.totalorder %s31, 1
    %p369 = por %p367, %p368
    %p371 = scmp.ne.s32.totalorder %s356, %s370
    %p372 = scmp.eq.s32.totalorder %s31, 0
    %p373 = por %p371, %p372
    %s375 = sadd.s32 %s374, 1
    %p378 = scmp.eq.s32.totalorder %s25, 1
    %p379 = scmp.ne.s32.totalorder %s374, %s376
    %p380 = scmp.eq.s32.totalorder %s25, 0
    %p381 = por %p379, %p380
    %p382 = scmp.ne.s32.totalorder %s374, %s376
    %p383 = scmp.eq.s32.totalorder %s30, 1
    %p384 = por %p382, %p383
    %p385 = scmp.ne.s32.totalorder %s376, %s377
    %p386 = scmp.eq.s32.totalorder %s30, 0
    %p387 = por %p385, %p386
    %p388 = scmp.ne.s32.totalorder %s376, %s377
    %p389 = scmp.eq.s32.totalorder %s31, 1
    %p390 = por %p388, %p389
    %p392 = scmp.ne.s32.totalorder %s377, %s391
    %p393 = scmp.eq.s32.totalorder %s31, 0
    %p394 = por %p392, %p393
    %s396 = sadd.s32 %s395, 1
    %p399 = scmp.eq.s32.totalorder %s25, 1
    %p400 = scmp.ne.s32.totalorder %s395, %s397
    %p401 = scmp.eq.s32.totalorder %s25, 0
    %p402 = por %p400, %p401
    %p403 = scmp.ne.s32.totalorder %s395, %s397
    %p404 = scmp.eq.s32.totalorder %s30, 1
    %p405 = por %p403, %p404
    %p406 = scmp.ne.s32.totalorder %s397, %s398
    %p407 = scmp.eq.s32.totalorder %s30, 0
    %p408 = por %p406, %p407
    %p409 = scmp.ne.s32.totalorder %s397, %s398
    %p410 = scmp.eq.s32.totalorder %s31, 1
    %p411 = por %p409, %p410
    %p413 = scmp.ne.s32.totalorder %s398, %s412
    %p414 = scmp.eq.s32.totalorder %s31, 0
    %p415 = por %p413, %p414
    %s417 = sadd.s32 %s416, 1
    %p420 = scmp.eq.s32.totalorder %s25, 1
    %p421 = scmp.ne.s32.totalorder %s416, %s418
    %p422 = scmp.eq.s32.totalorder %s25, 0
    %p423 = por %p421, %p422
    %p424 = scmp.ne.s32.totalorder %s416, %s418
    %p425 = scmp.eq.s32.totalorder %s30, 1
    %p426 = por %p424, %p425
    %p427 = scmp.ne.s32.totalorder %s418, %s419
    %p428 = scmp.eq.s32.totalorder %s30, 0
    %p429 = por %p427, %p428
    %p430 = scmp.ne.s32.totalorder %s418, %s419
    %p431 = scmp.eq.s32.totalorder %s31, 1
    %p432 = por %p430, %p431
    %p434 = scmp.ne.s32.totalorder %s419, %s433
    %p435 = scmp.eq.s32.totalorder %s31, 0
    %p436 = por %p434, %p435
    %s437 = ssub.s32 %s25, %s32
    %p438 = scmp.eq.s32.totalorder %s437, 0
    %s440 = sadd.s32 %s439, 1
    %s441 = scalar_select %p438, %s439, %s440
    %p444 = pneg %p438
    %p445 = scmp.eq.s32.totalorder %s25, 1
    %p446 = por %p444, %p445
    %p447 = scmp.ne.s32.totalorder %s439, %s442
    %p448 = scmp.eq.s32.totalorder %s25, 0
    %p449 = por %p447, %p448
    %p450 = scmp.ne.s32.totalorder %s439, %s442
    %p451 = scmp.eq.s32.totalorder %s30, 1
    %p452 = por %p450, %p451
    %p453 = scmp.ne.s32.totalorder %s442, %s443
    %p454 = scmp.eq.s32.totalorder %s30, 0
    %p455 = por %p453, %p454
    %p456 = scmp.ne.s32.totalorder %s442, %s443
    %p457 = scmp.eq.s32.totalorder %s31, 1
    %p458 = por %p456, %p457
    %p460 = scmp.ne.s32.totalorder %s443, %s459
    %p461 = scmp.eq.s32.totalorder %s31, 0
    %p462 = por %p460, %p461
    %p463 = scmp.le.s32.totalorder 1, %s25
    %p464 = scmp.lt.s32.totalorder %s25, 3
    %p465 = pnand %p463, %p464
    %p466 = pneg %p465
    // Predicated region
    $region9: #{critic_forward.1} parent=5 // pred_check
      _
    $region10: #{critic_forward.1} parent=5 // pred_check_branch
      %468 = sbr.rel (%p465) target = $region12
    $region11: #{critic_forward.1} parent=5 // pred_region
      %s469 = ssub.s32 %s25, 1
      // Predicated region
      $region13: #{critic_forward.1} parent=11 // pred_check
        %p470 = pneg %p72
      $region14: #{critic_forward.1} parent=11 // pred_check_branch
        %472 = sbr.rel (%p470) target = $region16
      $region15: #{critic_forward.1} parent=11 // pred_region
        _
      $region16: #{critic_forward.1} parent=11 // pred_fallthru
        _
      // Predicated region
      $region17: #{critic_forward.1} parent=11 // pred_check
        %p473 = pneg %p93
      $region18: #{critic_forward.1} parent=11 // pred_check_branch
        %475 = sbr.rel (%p473) target = $region20
      $region19: #{critic_forward.1} parent=11 // pred_region
        _
      $region20: #{critic_forward.1} parent=11 // pred_fallthru
        _
      // Predicated region
      $region21: #{critic_forward.1} parent=11 // pred_check
        %p476 = pneg %p114
      $region22: #{critic_forward.1} parent=11 // pred_check_branch
        %478 = sbr.rel (%p476) target = $region24
      $region23: #{critic_forward.1} parent=11 // pred_region
        _
      $region24: #{critic_forward.1} parent=11 // pred_fallthru
        _
      // Predicated region
      $region25: #{critic_forward.1} parent=11 // pred_check
        %p479 = pneg %p135
      $region26: #{critic_forward.1} parent=11 // pred_check_branch
        %481 = sbr.rel (%p479) target = $region28
      $region27: #{critic_forward.1} parent=11 // pred_region
        _
      $region28: #{critic_forward.1} parent=11 // pred_fallthru
        _
      // Predicated region
      $region29: #{critic_forward.1} parent=11 // pred_check
        %p482 = pneg %p156
      $region30: #{critic_forward.1} parent=11 // pred_check_branch
        %484 = sbr.rel (%p482) target = $region32
      $region31: #{critic_forward.1} parent=11 // pred_region
        _
      $region32: #{critic_forward.1} parent=11 // pred_fallthru
        _
      // Predicated region
      $region33: #{critic_forward.1} parent=11 // pred_check
        %p485 = pneg %p177
      $region34: #{critic_forward.1} parent=11 // pred_check_branch
        %487 = sbr.rel (%p485) target = $region36
      $region35: #{critic_forward.1} parent=11 // pred_region
        _
      $region36: #{critic_forward.1} parent=11 // pred_fallthru
        _
      // Predicated region
      $region37: #{critic_forward.1} parent=11 // pred_check
        %p488 = pneg %p198
      $region38: #{critic_forward.1} parent=11 // pred_check_branch
        %490 = sbr.rel (%p488) target = $region40
      $region39: #{critic_forward.1} parent=11 // pred_region
        _
      $region40: #{critic_forward.1} parent=11 // pred_fallthru
        _
      // Predicated region
      $region41: #{critic_forward.1} parent=11 // pred_check
        %p491 = pneg %p219
      $region42: #{critic_forward.1} parent=11 // pred_check_branch
        %493 = sbr.rel (%p491) target = $region44
      $region43: #{critic_forward.1} parent=11 // pred_region
        _
      $region44: #{critic_forward.1} parent=11 // pred_fallthru
        _
      // Predicated region
      $region45: #{critic_forward.1} parent=11 // pred_check
        %p494 = pneg %p240
      $region46: #{critic_forward.1} parent=11 // pred_check_branch
        %496 = sbr.rel (%p494) target = $region48
      $region47: #{critic_forward.1} parent=11 // pred_region
        _
      $region48: #{critic_forward.1} parent=11 // pred_fallthru
        _
      // Predicated region
      $region49: #{critic_forward.1} parent=11 // pred_check
        %p497 = pneg %p261
      $region50: #{critic_forward.1} parent=11 // pred_check_branch
        %499 = sbr.rel (%p497) target = $region52
      $region51: #{critic_forward.1} parent=11 // pred_region
        _
      $region52: #{critic_forward.1} parent=11 // pred_fallthru
        _
      // Predicated region
      $region53: #{critic_forward.1} parent=11 // pred_check
        %p500 = pneg %p282
      $region54: #{critic_forward.1} parent=11 // pred_check_branch
        %502 = sbr.rel (%p500) target = $region56
      $region55: #{critic_forward.1} parent=11 // pred_region
        _
      $region56: #{critic_forward.1} parent=11 // pred_fallthru
        _
      // Predicated region
      $region57: #{critic_forward.1} parent=11 // pred_check
        %p503 = pneg %p303
      $region58: #{critic_forward.1} parent=11 // pred_check_branch
        %505 = sbr.rel (%p503) target = $region60
      $region59: #{critic_forward.1} parent=11 // pred_region
        _
      $region60: #{critic_forward.1} parent=11 // pred_fallthru
        _
      // Predicated region
      $region61: #{critic_forward.1} parent=11 // pred_check
        %p506 = pneg %p324
      $region62: #{critic_forward.1} parent=11 // pred_check_branch
        %508 = sbr.rel (%p506) target = $region64
      $region63: #{critic_forward.1} parent=11 // pred_region
        _
      $region64: #{critic_forward.1} parent=11 // pred_fallthru
        _
      // Predicated region
      $region65: #{critic_forward.1} parent=11 // pred_check
        %p509 = pneg %p345
      $region66: #{critic_forward.1} parent=11 // pred_check_branch
        %511 = sbr.rel (%p509) target = $region68
      $region67: #{critic_forward.1} parent=11 // pred_region
        _
      $region68: #{critic_forward.1} parent=11 // pred_fallthru
        _
      // Predicated region
      $region69: #{critic_forward.1} parent=11 // pred_check
        %p512 = pneg %p366
      $region70: #{critic_forward.1} parent=11 // pred_check_branch
        %514 = sbr.rel (%p512) target = $region72
      $region71: #{critic_forward.1} parent=11 // pred_region
        _
      $region72: #{critic_forward.1} parent=11 // pred_fallthru
        _
      // Predicated region
      $region73: #{critic_forward.1} parent=11 // pred_check
        %p515 = pneg %p387
      $region74: #{critic_forward.1} parent=11 // pred_check_branch
        %517 = sbr.rel (%p515) target = $region76
      $region75: #{critic_forward.1} parent=11 // pred_region
        _
      $region76: #{critic_forward.1} parent=11 // pred_fallthru
        _
      // Predicated region
      $region77: #{critic_forward.1} parent=11 // pred_check
        %p518 = pneg %p408
      $region78: #{critic_forward.1} parent=11 // pred_check_branch
        %520 = sbr.rel (%p518) target = $region80
      $region79: #{critic_forward.1} parent=11 // pred_region
        _
      $region80: #{critic_forward.1} parent=11 // pred_fallthru
        _
      // Predicated region
      $region81: #{critic_forward.1} parent=11 // pred_check
        %p521 = pneg %p429
      $region82: #{critic_forward.1} parent=11 // pred_check_branch
        %523 = sbr.rel (%p521) target = $region84
      $region83: #{critic_forward.1} parent=11 // pred_region
        _
      $region84: #{critic_forward.1} parent=11 // pred_fallthru
        _
    $region12: #{critic_forward.1} parent=5 // pred_fallthru
      _
    %p524 = scmp.lt.s32.totalorder %s25, 2
    // Predicated region
    $region85: #{critic_forward.1} parent=5 // pred_check
      %p525 = pneg %p524
    $region86: #{critic_forward.1} parent=5 // pred_check_branch
      %527 = sbr.rel (%p525) target = $region88
    $region87: #{critic_forward.1} parent=5 // pred_region
      // Predicated region
      $region89: #{critic_forward.1} parent=87 // pred_check
        %p528 = pneg %p45
      $region90: #{critic_forward.1} parent=87 // pred_check_branch
        %530 = sbr.rel (%p528) target = $region92
      $region91: #{critic_forward.1} parent=87 // pred_region
        %p531 = scmp.lt.s32.totalorder %s25, 1
        %s532 = scalar_select %p531, %s25, 1
        %s533 = smul.addr %s532, 12
        %s534 = smul.addr %s533, 8
        %s535 = scalar_lea.vmem %s0, %s534
      $region92: #{critic_forward.1} parent=87 // pred_fallthru
        _
    $region88: #{critic_forward.1} parent=5 // pred_fallthru
      _
    %p536 = scmp.le.s32.totalorder 1, %s25
    %p537 = scmp.lt.s32.totalorder %s25, 3
    %p538 = pnand %p536, %p537
    %p539 = pneg %p538
    // Predicated region
    $region93: #{critic_forward.1} parent=5 // pred_check
      _
    $region94: #{critic_forward.1} parent=5 // pred_check_branch
      %541 = sbr.rel (%p538) target = $region96
    $region95: #{critic_forward.1} parent=5 // pred_region
      %s542 = ssub.s32 %s25, 1
      %p543 = scmp.lt.s32.totalorder %s30, 1
      %s544 = scalar_select %p543, %s30, 1
      %s545 = smul.addr %s544, 12
      %s546 = smul.addr %s545, 8
      %s547 = scalar_lea.vmem %s0, %s546
      %p548 = pneg %p51
      %p549 = pneg %p48
      %p550 = pneg %p72
      %p551 = pneg %p69
      %p552 = pneg %p93
      %p553 = pneg %p90
      %p554 = pneg %p114
      %p555 = pneg %p111
      %p556 = pneg %p135
      %p557 = pneg %p132
      %p558 = pneg %p156
      %p559 = pneg %p153
      %p560 = pneg %p177
      %p561 = pneg %p174
      %p562 = pneg %p198
      %p563 = pneg %p195
      %p564 = pneg %p219
      %p565 = pneg %p216
      %p566 = pneg %p240
      %p567 = pneg %p237
      %p568 = pneg %p261
      %p569 = pneg %p258
      %p570 = pneg %p282
      %p571 = pneg %p279
      %p572 = pneg %p303
      %p573 = pneg %p300
      %p574 = pneg %p324
      %p575 = pneg %p321
      %p576 = pneg %p345
      %p577 = pneg %p342
      %p578 = pneg %p366
      %p579 = pneg %p363
      %p580 = pneg %p387
      %p581 = pneg %p384
      %p582 = pneg %p408
      %p583 = pneg %p405
      %p584 = pneg %p429
      %p585 = pneg %p426
      %p586 = pneg %p455
      %p587 = pneg %p452
      %p588 = scmp.lt.s32.totalorder %s30, 1
      %s589 = scalar_select %p588, %s30, 1
      %s590 = smul.addr %s589, 8
      %s591 = scalar_lea.vmem %s19, %s590
      %p592 = scmp.lt.s32.totalorder %s30, 1
      %s593 = scalar_select %p592, %s30, 1
      %s594 = smul.addr %s593, 12
      %s595 = smul.addr %s594, 8
      %s596 = scalar_lea.vmem %s0, %s595
      %p597 = scmp.lt.s32.totalorder %s30, 1
      %s598 = scalar_select %p597, %s30, 1
      %s599 = smul.addr %s598, 8
      %s600 = scalar_lea.vmem %s19, %s599
      %v602 = vld [vmem:[%s596] sm:$0xff]
      %v603 = vld [vmem:[%s596 + $0x8] sm:$0xff]
      %v604 = vld [vmem:[%s596 + $0x10] sm:$0xff]
      %v605 = vld [vmem:[%s596 + $0x18] sm:$0xff]
      %v606 = vld [vmem:[%s596 + $0x20] sm:$0xff]
      %v607 = vld [vmem:[%s596 + $0x28] sm:$0xff]
      %v608 = vld [vmem:[%s596 + $0x30] sm:$0xff]
      %v609 = vld [vmem:[%s596 + $0x38] sm:$0xff]
      %v610 = vld [vmem:[%s596 + $0x40] sm:$0xff]
      %v611 = vld [vmem:[%s596 + $0x48] sm:$0xff]
      %v612 = vld [vmem:[%s596 + $0x50] sm:$0xff]
      %v613 = vld [vmem:[%s596 + $0x58] sm:$0xff]
      %v614 = vpack.c.bf16 %v603, %v602
      %v615 = vpack.c.bf16 %v605, %v604
      %v616 = vpack.c.bf16 %v607, %v606
      %v617 = vpack.c.bf16 %v609, %v608
      %v618 = vpack.c.bf16 %v611, %v610
      %v619 = vpack.c.bf16 %v613, %v612
      %v620 = vld [vmem:[%s1] sm:$0xf]
      %v621 = vld [vmem:[%s1 + $0x4] sm:$0xf]
      %v622 = vld [vmem:[%s1 + $0x8] sm:$0xf]
      %v623 = vld [vmem:[%s1 + $0xc] sm:$0xf]
      %v624 = vld [vmem:[%s1 + $0x10] sm:$0xf]
      %v625 = vld [vmem:[%s1 + $0x14] sm:$0xf]
      %v632 = vunpack.c.l.b16 %v620
      %v633 = vunpack.c.l.b16 %v621
      %v634 = vunpack.c.l.b16 %v622
      %v635 = vunpack.c.l.b16 %v623
      %v636 = vunpack.c.l.b16 %v624
      %v637 = vunpack.c.l.b16 %v625
      %v638 = vpack.c.b16 %v633, %v632
      %v639 = vpack.c.b16 %v635, %v634
      %v640 = vpack.c.b16 %v637, %v636
      %vm641 = vcmask 785408
      %v643 = vsel %vm641, %v638, 0
      %v646 = vsel %vm641, %v639, 0
      %v649 = vsel %vm641, %v640, 0
      %651 = vmatpush.bf16.msra.mxu0 0
      %652 = vmatpush.bf16.msra.mxu0 0
      %653 = vmatpush.bf16.msra.mxu0 %v619
      %654 = vmatpush.bf16.msra.mxu0 %v618
      %655 = vmatpush.bf16.msra.mxu0 %v617
      %656 = vmatpush.bf16.msra.mxu0 %v616
      %657 = vmatpush.bf16.msra.mxu0 %v615
      %658 = vmatpush.bf16.msra.mxu0 %v614
      %659 = vmatmul.bf16.gmra.mxu0 %v643
      %v660 = vpop.f32.mrf.mxu0
      %v661 = vadd.f32 0.0, %v660
      %v662 = vpop.f32.mrf.mxu0
      %v663 = vadd.f32 0.0, %v662
      %664 = vmatmul.bf16.gmra.mxu0 %v646
      %v665 = vpop.f32.mrf.mxu0
      %v666 = vadd.f32 0.0, %v665
      %v667 = vpop.f32.mrf.mxu0
      %v668 = vadd.f32 0.0, %v667
      %669 = vmatmul.bf16.gmra.mxu0 %v649
      %v670 = vpop.f32.mrf.mxu0
      %v671 = vadd.f32 0.0, %v670
      %v672 = vpop.f32.mrf.mxu0
      %v673 = vadd.f32 0.0, %v672
      %674 = vdwg.mxu0
      %v675 = vpack.c.bf16 %v663, %v661
      %v676 = vpack.c.bf16 %v668, %v666
      %v677 = vpack.c.bf16 %v673, %v671
      %v678 = vld [vmem:[%s2] sm:$0xff]
      %v679 = vld [vmem:[%s2 + $0x8] sm:$0xf]
      %v680 = vld [vmem:[%s2 + $0xc] sm:$0xff]
      %v681 = vld [vmem:[%s2 + $0x14] sm:$0xf]
      %v682 = vld [vmem:[%s2 + $0x18] sm:$0xff]
      %v683 = vld [vmem:[%s2 + $0x20] sm:$0xf]
      %v684 = vld [vmem:[%s2 + $0x24] sm:$0xff]
      %v685 = vld [vmem:[%s2 + $0x2c] sm:$0xf]
      %v686 = vld [vmem:[%s2 + $0x30] sm:$0xff]
      %v687 = vld [vmem:[%s2 + $0x38] sm:$0xf]
      %v688 = vld [vmem:[%s2 + $0x3c] sm:$0xff]
      %v689 = vld [vmem:[%s2 + $0x44] sm:$0xf]
      %v690 = vld [vmem:[%s2 + $0x48] sm:$0xff]
      %v691 = vld [vmem:[%s2 + $0x50] sm:$0xf]
      %v692 = vld [vmem:[%s2 + $0x54] sm:$0xff]
      %v693 = vld [vmem:[%s2 + $0x5c] sm:$0xf]
      %v694 = vld [vmem:[%s2 + $0x60] sm:$0xff]
      %v695 = vld [vmem:[%s2 + $0x68] sm:$0xf]
      %v696 = vld [vmem:[%s2 + $0x6c] sm:$0xff]
      %v697 = vld [vmem:[%s2 + $0x74] sm:$0xf]
      %v698 = vld [vmem:[%s2 + $0x78] sm:$0xff]
      %v699 = vld [vmem:[%s2 + $0x80] sm:$0xf]
      %v700 = vld [vmem:[%s2 + $0x84] sm:$0xff]
      %v701 = vld [vmem:[%s2 + $0x8c] sm:$0xf]
      %s702 = scalar_lea.vmem %s1, 24
      %v703 = vld [vmem:[%s702] sm:$0xf]
      %v704 = vld [vmem:[%s702 + $0x4] sm:$0xf]
      %v705 = vld [vmem:[%s702 + $0x8] sm:$0xf]
      %v706 = vld [vmem:[%s702 + $0xc] sm:$0xf]
      %v707 = vld [vmem:[%s702 + $0x10] sm:$0xf]
      %v708 = vld [vmem:[%s702 + $0x14] sm:$0xf]
      %v715 = vunpack.c.l.b16 %v703
      %v716 = vunpack.c.l.b16 %v704
      %v717 = vunpack.c.l.b16 %v705
      %v718 = vunpack.c.l.b16 %v706
      %v719 = vunpack.c.l.b16 %v707
      %v720 = vunpack.c.l.b16 %v708
      %v721 = vpack.c.b16 %v716, %v715
      %v722 = vpack.c.b16 %v718, %v717
      %v723 = vpack.c.b16 %v720, %v719
      %v725 = vsel %vm641, %v721, 0
      %v728 = vsel %vm641, %v722, 0
      %v731 = vsel %vm641, %v723, 0
      %733 = vmatpush.bf16.msra.mxu0 0
      %734 = vmatpush.bf16.msra.mxu0 0
      %735 = vmatpush.bf16.msra.mxu0 %v619
      %736 = vmatpush.bf16.msra.mxu0 %v618
      %737 = vmatpush.bf16.msra.mxu0 %v617
      %738 = vmatpush.bf16.msra.mxu0 %v616
      %739 = vmatpush.bf16.msra.mxu0 %v615
      %740 = vmatpush.bf16.msra.mxu0 %v614
      %741 = vmatmul.bf16.gmra.mxu0 %v725
      %v742 = vpop.f32.mrf.mxu0
      %v743 = vadd.f32 0.0, %v742
      %v744 = vpop.f32.mrf.mxu0
      %v745 = vadd.f32 0.0, %v744
      %746 = vmatmul.bf16.gmra.mxu0 %v728
      %v747 = vpop.f32.mrf.mxu0
      %v748 = vadd.f32 0.0, %v747
      %v749 = vpop.f32.mrf.mxu0
      %v750 = vadd.f32 0.0, %v749
      %751 = vmatmul.bf16.gmra.mxu0 %v731
      %v752 = vpop.f32.mrf.mxu0
      %v753 = vadd.f32 0.0, %v752
      %v754 = vpop.f32.mrf.mxu0
      %v755 = vadd.f32 0.0, %v754
      %756 = vdwg.mxu0
      %v757 = vpack.c.bf16 %v745, %v743
      %v758 = vpack.c.bf16 %v750, %v748
      %v759 = vpack.c.bf16 %v755, %v753
      %s760 = scalar_lea.vmem %s2, 144
      %v761 = vld [vmem:[%s760] sm:$0xff]
      %v762 = vld [vmem:[%s760 + $0x8] sm:$0xf]
      %v763 = vld [vmem:[%s760 + $0xc] sm:$0xff]
      %v764 = vld [vmem:[%s760 + $0x14] sm:$0xf]
      %v765 = vld [vmem:[%s760 + $0x18] sm:$0xff]
      %v766 = vld [vmem:[%s760 + $0x20] sm:$0xf]
      %v767 = vld [vmem:[%s760 + $0x24] sm:$0xff]
      %v768 = vld [vmem:[%s760 + $0x2c] sm:$0xf]
      %v769 = vld [vmem:[%s760 + $0x30] sm:$0xff]
      %v770 = vld [vmem:[%s760 + $0x38] sm:$0xf]
      %v771 = vld [vmem:[%s760 + $0x3c] sm:$0xff]
      %v772 = vld [vmem:[%s760 + $0x44] sm:$0xf]
      %v773 = vld [vmem:[%s760 + $0x48] sm:$0xff]
      %v774 = vld [vmem:[%s760 + $0x50] sm:$0xf]
      %v775 = vld [vmem:[%s760 + $0x54] sm:$0xff]
      %v776 = vld [vmem:[%s760 + $0x5c] sm:$0xf]
      %v777 = vld [vmem:[%s760 + $0x60] sm:$0xff]
      %v778 = vld [vmem:[%s760 + $0x68] sm:$0xf]
      %v779 = vld [vmem:[%s760 + $0x6c] sm:$0xff]
      %v780 = vld [vmem:[%s760 + $0x74] sm:$0xf]
      %v781 = vld [vmem:[%s760 + $0x78] sm:$0xff]
      %v782 = vld [vmem:[%s760 + $0x80] sm:$0xf]
      %v783 = vld [vmem:[%s760 + $0x84] sm:$0xff]
      %v784 = vld [vmem:[%s760 + $0x8c] sm:$0xf]
      %v809 = vunpack.c.l.b16 %v761
      %v810 = vunpack.c.h.b16 %v761
      %v811 = vunpack.c.l.b16 %v762
      %v812 = vunpack.c.l.b16 %v763
      %v813 = vunpack.c.h.b16 %v763
      %v814 = vunpack.c.l.b16 %v764
      %v815 = vunpack.c.l.b16 %v765
      %v816 = vunpack.c.h.b16 %v765
      %v817 = vunpack.c.l.b16 %v766
      %v818 = vunpack.c.l.b16 %v767
      %v819 = vunpack.c.h.b16 %v767
      %v820 = vunpack.c.l.b16 %v768
      %v821 = vunpack.c.l.b16 %v769
      %v822 = vunpack.c.h.b16 %v769
      %v823 = vunpack.c.l.b16 %v770
      %v824 = vunpack.c.l.b16 %v771
      %v825 = vunpack.c.h.b16 %v771
      %v826 = vunpack.c.l.b16 %v772
      %v827 = vunpack.c.l.b16 %v773
      %v828 = vunpack.c.h.b16 %v773
      %v829 = vunpack.c.l.b16 %v774
      %v830 = vunpack.c.l.b16 %v775
      %v831 = vunpack.c.h.b16 %v775
      %v832 = vunpack.c.l.b16 %v776
      %v833 = vunpack.c.l.b16 %v777
      %v834 = vunpack.c.h.b16 %v777
      %v835 = vunpack.c.l.b16 %v778
      %v836 = vunpack.c.l.b16 %v779
      %v837 = vunpack.c.h.b16 %v779
      %v838 = vunpack.c.l.b16 %v780
      %v839 = vunpack.c.l.b16 %v781
      %v840 = vunpack.c.h.b16 %v781
      %v841 = vunpack.c.l.b16 %v782
      %v842 = vunpack.c.l.b16 %v783
      %v843 = vunpack.c.h.b16 %v783
      %v844 = vunpack.c.l.b16 %v784
      %v845 = vpack.c.b16 %v812, %v809
      %v846 = vpack.c.b16 %v813, %v810
      %v847 = vpack.c.b16 %v814, %v811
      %v848 = vpack.c.b16 %v818, %v815
      %v849 = vpack.c.b16 %v819, %v816
      %v850 = vpack.c.b16 %v820, %v817
      %v851 = vpack.c.b16 %v824, %v821
      %v852 = vpack.c.b16 %v825, %v822
      %v853 = vpack.c.b16 %v826, %v823
      %v854 = vpack.c.b16 %v830, %v827
      %v855 = vpack.c.b16 %v831, %v828
      %v856 = vpack.c.b16 %v832, %v829
      %v857 = vpack.c.b16 %v836, %v833
      %v858 = vpack.c.b16 %v837, %v834
      %v859 = vpack.c.b16 %v838, %v835
      %v860 = vpack.c.b16 %v842, %v839
      %v861 = vpack.c.b16 %v843, %v840
      %v862 = vpack.c.b16 %v844, %v841
      %v882 = vsel %vm641, %v757, 0
      %v885 = vsel %vm641, %v758, 0
      %v888 = vsel %vm641, %v759, 0
      %890 = vmatpush.bf16.msra.mxu0 0
      %891 = vmatpush.bf16.msra.mxu0 0
      %892 = vmatpush.bf16.msra.mxu0 %v860
      %893 = vmatpush.bf16.msra.mxu0 %v857
      %894 = vmatpush.bf16.msra.mxu0 %v854
      %895 = vmatpush.bf16.msra.mxu0 %v851
      %896 = vmatpush.bf16.msra.mxu0 %v848
      %897 = vmatpush.bf16.msra.mxu0 %v845
      %898 = vmatmul.bf16.gmra.mxu0 %v882
      %v899 = vpop.f32.mrf.mxu0
      %v900 = vadd.f32 0.0, %v899
      %v901 = vpop.f32.mrf.mxu0
      %v902 = vadd.f32 0.0, %v901
      %903 = vmatmul.bf16.gmra.mxu0 %v885
      %v904 = vpop.f32.mrf.mxu0
      %v905 = vadd.f32 0.0, %v904
      %v906 = vpop.f32.mrf.mxu0
      %v907 = vadd.f32 0.0, %v906
      %908 = vmatmul.bf16.gmra.mxu0 %v888
      %v909 = vpop.f32.mrf.mxu0
      %v910 = vadd.f32 0.0, %v909
      %v911 = vpop.f32.mrf.mxu0
      %v912 = vadd.f32 0.0, %v911
      %913 = vdwg.mxu0
      %914 = vmatpush.bf16.msra.mxu0 0
      %915 = vmatpush.bf16.msra.mxu0 0
      %916 = vmatpush.bf16.msra.mxu0 %v861
      %917 = vmatpush.bf16.msra.mxu0 %v858
      %918 = vmatpush.bf16.msra.mxu0 %v855
      %919 = vmatpush.bf16.msra.mxu0 %v852
      %920 = vmatpush.bf16.msra.mxu0 %v849
      %921 = vmatpush.bf16.msra.mxu0 %v846
      %922 = vmatmul.bf16.gmra.mxu0 %v882
      %v923 = vpop.f32.mrf.mxu0
      %v924 = vadd.f32 0.0, %v923
      %v925 = vpop.f32.mrf.mxu0
      %v926 = vadd.f32 0.0, %v925
      %927 = vmatmul.bf16.gmra.mxu0 %v885
      %v928 = vpop.f32.mrf.mxu0
      %v929 = vadd.f32 0.0, %v928
      %v930 = vpop.f32.mrf.mxu0
      %v931 = vadd.f32 0.0, %v930
      %932 = vmatmul.bf16.gmra.mxu0 %v888
      %v933 = vpop.f32.mrf.mxu0
      %v934 = vadd.f32 0.0, %v933
      %v935 = vpop.f32.mrf.mxu0
      %v936 = vadd.f32 0.0, %v935
      %937 = vdwg.mxu0
      %938 = vmatpush.bf16.msra.mxu0 0
      %939 = vmatpush.bf16.msra.mxu0 0
      %940 = vmatpush.bf16.msra.mxu0 %v862
      %941 = vmatpush.bf16.msra.mxu0 %v859
      %942 = vmatpush.bf16.msra.mxu0 %v856
      %943 = vmatpush.bf16.msra.mxu0 %v853
      %944 = vmatpush.bf16.msra.mxu0 %v850
      %945 = vmatpush.bf16.msra.mxu0 %v847
      %946 = vmatmul.bf16.gmra.mxu0 %v882
      %v947 = vpop.f32.mrf.mxu0
      %v948 = vadd.f32 0.0, %v947
      %v949 = vpop.f32.mrf.mxu0
      %v950 = vadd.f32 0.0, %v949
      %951 = vmatmul.bf16.gmra.mxu0 %v885
      %v952 = vpop.f32.mrf.mxu0
      %v953 = vadd.f32 0.0, %v952
      %v954 = vpop.f32.mrf.mxu0
      %v955 = vadd.f32 0.0, %v954
      %956 = vmatmul.bf16.gmra.mxu0 %v888
      %v957 = vpop.f32.mrf.mxu0
      %v958 = vadd.f32 0.0, %v957
      %v959 = vpop.f32.mrf.mxu0
      %v960 = vadd.f32 0.0, %v959
      %961 = vdwg.mxu0
      %v986 = vunpack.c.l.b16 %v678
      %v987 = vunpack.c.h.b16 %v678
      %v988 = vunpack.c.l.b16 %v679
      %v989 = vunpack.c.l.b16 %v680
      %v990 = vunpack.c.h.b16 %v680
      %v991 = vunpack.c.l.b16 %v681
      %v992 = vunpack.c.l.b16 %v682
      %v993 = vunpack.c.h.b16 %v682
      %v994 = vunpack.c.l.b16 %v683
      %v995 = vunpack.c.l.b16 %v684
      %v996 = vunpack.c.h.b16 %v684
      %v997 = vunpack.c.l.b16 %v685
      %v998 = vunpack.c.l.b16 %v686
      %v999 = vunpack.c.h.b16 %v686
      %v1000 = vunpack.c.l.b16 %v687
      %v1001 = vunpack.c.l.b16 %v688
      %v1002 = vunpack.c.h.b16 %v688
      %v1003 = vunpack.c.l.b16 %v689
      %v1004 = vunpack.c.l.b16 %v690
      %v1005 = vunpack.c.h.b16 %v690
      %v1006 = vunpack.c.l.b16 %v691
      %v1007 = vunpack.c.l.b16 %v692
      %v1008 = vunpack.c.h.b16 %v692
      %v1009 = vunpack.c.l.b16 %v693
      %v1010 = vunpack.c.l.b16 %v694
      %v1011 = vunpack.c.h.b16 %v694
      %v1012 = vunpack.c.l.b16 %v695
      %v1013 = vunpack.c.l.b16 %v696
      %v1014 = vunpack.c.h.b16 %v696
      %v1015 = vunpack.c.l.b16 %v697
      %v1016 = vunpack.c.l.b16 %v698
      %v1017 = vunpack.c.h.b16 %v698
      %v1018 = vunpack.c.l.b16 %v699
      %v1019 = vunpack.c.l.b16 %v700
      %v1020 = vunpack.c.h.b16 %v700
      %v1021 = vunpack.c.l.b16 %v701
      %v1022 = vpack.c.b16 %v989, %v986
      %v1023 = vpack.c.b16 %v990, %v987
      %v1024 = vpack.c.b16 %v991, %v988
      %v1025 = vpack.c.b16 %v995, %v992
      %v1026 = vpack.c.b16 %v996, %v993
      %v1027 = vpack.c.b16 %v997, %v994
      %v1028 = vpack.c.b16 %v1001, %v998
      %v1029 = vpack.c.b16 %v1002, %v999
      %v1030 = vpack.c.b16 %v1003, %v1000
      %v1031 = vpack.c.b16 %v1007, %v1004
      %v1032 = vpack.c.b16 %v1008, %v1005
      %v1033 = vpack.c.b16 %v1009, %v1006
      %v1034 = vpack.c.b16 %v1013, %v1010
      %v1035 = vpack.c.b16 %v1014, %v1011
      %v1036 = vpack.c.b16 %v1015, %v1012
      %v1037 = vpack.c.b16 %v1019, %v1016
      %v1038 = vpack.c.b16 %v1020, %v1017
      %v1039 = vpack.c.b16 %v1021, %v1018
      %v1059 = vsel %vm641, %v675, 0
      %v1062 = vsel %vm641, %v676, 0
      %v1065 = vsel %vm641, %v677, 0
      %1067 = vmatpush.bf16.msra.mxu0 0
      %1068 = vmatpush.bf16.msra.mxu0 0
      %1069 = vmatpush.bf16.msra.mxu0 %v1037
      %1070 = vmatpush.bf16.msra.mxu0 %v1034
      %1071 = vmatpush.bf16.msra.mxu0 %v1031
      %1072 = vmatpush.bf16.msra.mxu0 %v1028
      %1073 = vmatpush.bf16.msra.mxu0 %v1025
      %1074 = vmatpush.bf16.msra.mxu0 %v1022
      %1075 = vmatmul.bf16.gmra.mxu0 %v1059
      %v1076 = vpop.f32.mrf.mxu0
      %v1077 = vadd.f32 %v900, %v1076
      %v1078 = vpop.f32.mrf.mxu0
      %v1079 = vadd.f32 %v902, %v1078
      %1080 = vmatmul.bf16.gmra.mxu0 %v1062
      %v1081 = vpop.f32.mrf.mxu0
      %v1082 = vadd.f32 %v905, %v1081
      %v1083 = vpop.f32.mrf.mxu0
      %v1084 = vadd.f32 %v907, %v1083
      %1085 = vmatmul.bf16.gmra.mxu0 %v1065
      %v1086 = vpop.f32.mrf.mxu0
      %v1087 = vadd.f32 %v910, %v1086
      %v1088 = vpop.f32.mrf.mxu0
      %v1089 = vadd.f32 %v912, %v1088
      %1090 = vdwg.mxu0
      %1091 = vmatpush.bf16.msra.mxu0 0
      %1092 = vmatpush.bf16.msra.mxu0 0
      %1093 = vmatpush.bf16.msra.mxu0 %v1038
      %1094 = vmatpush.bf16.msra.mxu0 %v1035
      %1095 = vmatpush.bf16.msra.mxu0 %v1032
      %1096 = vmatpush.bf16.msra.mxu0 %v1029
      %1097 = vmatpush.bf16.msra.mxu0 %v1026
      %1098 = vmatpush.bf16.msra.mxu0 %v1023
      %1099 = vmatmul.bf16.gmra.mxu0 %v1059
      %v1100 = vpop.f32.mrf.mxu0
      %v1101 = vadd.f32 %v924, %v1100
      %v1102 = vpop.f32.mrf.mxu0
      %v1103 = vadd.f32 %v926, %v1102
      %1104 = vmatmul.bf16.gmra.mxu0 %v1062
      %v1105 = vpop.f32.mrf.mxu0
      %v1106 = vadd.f32 %v929, %v1105
      %v1107 = vpop.f32.mrf.mxu0
      %v1108 = vadd.f32 %v931, %v1107
      %1109 = vmatmul.bf16.gmra.mxu0 %v1065
      %v1110 = vpop.f32.mrf.mxu0
      %v1111 = vadd.f32 %v934, %v1110
      %v1112 = vpop.f32.mrf.mxu0
      %v1113 = vadd.f32 %v936, %v1112
      %1114 = vdwg.mxu0
      %1115 = vmatpush.bf16.msra.mxu0 0
      %1116 = vmatpush.bf16.msra.mxu0 0
      %1117 = vmatpush.bf16.msra.mxu0 %v1039
      %1118 = vmatpush.bf16.msra.mxu0 %v1036
      %1119 = vmatpush.bf16.msra.mxu0 %v1033
      %1120 = vmatpush.bf16.msra.mxu0 %v1030
      %1121 = vmatpush.bf16.msra.mxu0 %v1027
      %1122 = vmatpush.bf16.msra.mxu0 %v1024
      %1123 = vmatmul.bf16.gmra.mxu0 %v1059
      %v1124 = vpop.f32.mrf.mxu0
      %v1125 = vadd.f32 %v948, %v1124
      %v1126 = vpop.f32.mrf.mxu0
      %v1127 = vadd.f32 %v950, %v1126
      %1128 = vmatmul.bf16.gmra.mxu0 %v1062
      %v1129 = vpop.f32.mrf.mxu0
      %v1130 = vadd.f32 %v953, %v1129
      %v1131 = vpop.f32.mrf.mxu0
      %v1132 = vadd.f32 %v955, %v1131
      %1133 = vmatmul.bf16.gmra.mxu0 %v1065
      %v1134 = vpop.f32.mrf.mxu0
      %v1135 = vadd.f32 %v958, %v1134
      %v1136 = vpop.f32.mrf.mxu0
      %v1137 = vadd.f32 %v960, %v1136
      %1138 = vdwg.mxu0
      %s1139 = scalar_lea.vmem %s1, 48
      %v1140 = vld [vmem:[%s1139] sm:$0xf]
      %v1141 = vld [vmem:[%s1139 + $0x4] sm:$0xf]
      %v1142 = vld [vmem:[%s1139 + $0x8] sm:$0xf]
      %v1143 = vld [vmem:[%s1139 + $0xc] sm:$0xf]
      %v1144 = vld [vmem:[%s1139 + $0x10] sm:$0xf]
      %v1145 = vld [vmem:[%s1139 + $0x14] sm:$0xf]
      %v1152 = vunpack.c.l.b16 %v1140
      %v1153 = vunpack.c.l.b16 %v1141
      %v1154 = vunpack.c.l.b16 %v1142
      %v1155 = vunpack.c.l.b16 %v1143
      %v1156 = vunpack.c.l.b16 %v1144
      %v1157 = vunpack.c.l.b16 %v1145
      %v1158 = vpack.c.b16 %v1153, %v1152
      %v1159 = vpack.c.b16 %v1155, %v1154
      %v1160 = vpack.c.b16 %v1157, %v1156
      %v1162 = vsel %vm641, %v1158, 0
      %v1165 = vsel %vm641, %v1159, 0
      %v1168 = vsel %vm641, %v1160, 0
      %1170 = vmatpush.bf16.msra.mxu0 0
      %1171 = vmatpush.bf16.msra.mxu0 0
      %1172 = vmatpush.bf16.msra.mxu0 %v619
      %1173 = vmatpush.bf16.msra.mxu0 %v618
      %1174 = vmatpush.bf16.msra.mxu0 %v617
      %1175 = vmatpush.bf16.msra.mxu0 %v616
      %1176 = vmatpush.bf16.msra.mxu0 %v615
      %1177 = vmatpush.bf16.msra.mxu0 %v614
      %1178 = vmatmul.bf16.gmra.mxu0 %v1162
      %v1179 = vpop.f32.mrf.mxu0
      %v1180 = vadd.f32 0.0, %v1179
      %v1181 = vpop.f32.mrf.mxu0
      %v1182 = vadd.f32 0.0, %v1181
      %1183 = vmatmul.bf16.gmra.mxu0 %v1165
      %v1184 = vpop.f32.mrf.mxu0
      %v1185 = vadd.f32 0.0, %v1184
      %v1186 = vpop.f32.mrf.mxu0
      %v1187 = vadd.f32 0.0, %v1186
      %1188 = vmatmul.bf16.gmra.mxu0 %v1168
      %v1189 = vpop.f32.mrf.mxu0
      %v1190 = vadd.f32 0.0, %v1189
      %v1191 = vpop.f32.mrf.mxu0
      %v1192 = vadd.f32 0.0, %v1191
      %1193 = vdwg.mxu0
      %v1194 = vpack.c.bf16 %v1182, %v1180
      %v1195 = vpack.c.bf16 %v1187, %v1185
      %v1196 = vpack.c.bf16 %v1192, %v1190
      %s1197 = scalar_lea.vmem %s2, 288
      %v1198 = vld [vmem:[%s1197] sm:$0xff]
      %v1199 = vld [vmem:[%s1197 + $0x8] sm:$0xf]
      %v1200 = vld [vmem:[%s1197 + $0xc] sm:$0xff]
      %v1201 = vld [vmem:[%s1197 + $0x14] sm:$0xf]
      %v1202 = vld [vmem:[%s1197 + $0x18] sm:$0xff]
      %v1203 = vld [vmem:[%s1197 + $0x20] sm:$0xf]
      %v1204 = vld [vmem:[%s1197 + $0x24] sm:$0xff]
      %v1205 = vld [vmem:[%s1197 + $0x2c] sm:$0xf]
      %v1206 = vld [vmem:[%s1197 + $0x30] sm:$0xff]
      %v1207 = vld [vmem:[%s1197 + $0x38] sm:$0xf]
      %v1208 = vld [vmem:[%s1197 + $0x3c] sm:$0xff]
      %v1209 = vld [vmem:[%s1197 + $0x44] sm:$0xf]
      %v1210 = vld [vmem:[%s1197 + $0x48] sm:$0xff]
      %v1211 = vld [vmem:[%s1197 + $0x50] sm:$0xf]
      %v1212 = vld [vmem:[%s1197 + $0x54] sm:$0xff]
      %v1213 = vld [vmem:[%s1197 + $0x5c] sm:$0xf]
      %v1214 = vld [vmem:[%s1197 + $0x60] sm:$0xff]
      %v1215 = vld [vmem:[%s1197 + $0x68] sm:$0xf]
      %v1216 = vld [vmem:[%s1197 + $0x6c] sm:$0xff]
      %v1217 = vld [vmem:[%s1197 + $0x74] sm:$0xf]
      %v1218 = vld [vmem:[%s1197 + $0x78] sm:$0xff]
      %v1219 = vld [vmem:[%s1197 + $0x80] sm:$0xf]
      %v1220 = vld [vmem:[%s1197 + $0x84] sm:$0xff]
      %v1221 = vld [vmem:[%s1197 + $0x8c] sm:$0xf]
      %v1246 = vunpack.c.l.b16 %v1198
      %v1247 = vunpack.c.h.b16 %v1198
      %v1248 = vunpack.c.l.b16 %v1199
      %v1249 = vunpack.c.l.b16 %v1200
      %v1250 = vunpack.c.h.b16 %v1200
      %v1251 = vunpack.c.l.b16 %v1201
      %v1252 = vunpack.c.l.b16 %v1202
      %v1253 = vunpack.c.h.b16 %v1202
      %v1254 = vunpack.c.l.b16 %v1203
      %v1255 = vunpack.c.l.b16 %v1204
      %v1256 = vunpack.c.h.b16 %v1204
      %v1257 = vunpack.c.l.b16 %v1205
      %v1258 = vunpack.c.l.b16 %v1206
      %v1259 = vunpack.c.h.b16 %v1206
      %v1260 = vunpack.c.l.b16 %v1207
      %v1261 = vunpack.c.l.b16 %v1208
      %v1262 = vunpack.c.h.b16 %v1208
      %v1263 = vunpack.c.l.b16 %v1209
      %v1264 = vunpack.c.l.b16 %v1210
      %v1265 = vunpack.c.h.b16 %v1210
      %v1266 = vunpack.c.l.b16 %v1211
      %v1267 = vunpack.c.l.b16 %v1212
      %v1268 = vunpack.c.h.b16 %v1212
      %v1269 = vunpack.c.l.b16 %v1213
      %v1270 = vunpack.c.l.b16 %v1214
      %v1271 = vunpack.c.h.b16 %v1214
      %v1272 = vunpack.c.l.b16 %v1215
      %v1273 = vunpack.c.l.b16 %v1216
      %v1274 = vunpack.c.h.b16 %v1216
      %v1275 = vunpack.c.l.b16 %v1217
      %v1276 = vunpack.c.l.b16 %v1218
      %v1277 = vunpack.c.h.b16 %v1218
      %v1278 = vunpack.c.l.b16 %v1219
      %v1279 = vunpack.c.l.b16 %v1220
      %v1280 = vunpack.c.h.b16 %v1220
      %v1281 = vunpack.c.l.b16 %v1221
      %v1282 = vpack.c.b16 %v1249, %v1246
      %v1283 = vpack.c.b16 %v1250, %v1247
      %v1284 = vpack.c.b16 %v1251, %v1248
      %v1285 = vpack.c.b16 %v1255, %v1252
      %v1286 = vpack.c.b16 %v1256, %v1253
      %v1287 = vpack.c.b16 %v1257, %v1254
      %v1288 = vpack.c.b16 %v1261, %v1258
      %v1289 = vpack.c.b16 %v1262, %v1259
      %v1290 = vpack.c.b16 %v1263, %v1260
      %v1291 = vpack.c.b16 %v1267, %v1264
      %v1292 = vpack.c.b16 %v1268, %v1265
      %v1293 = vpack.c.b16 %v1269, %v1266
      %v1294 = vpack.c.b16 %v1273, %v1270
      %v1295 = vpack.c.b16 %v1274, %v1271
      %v1296 = vpack.c.b16 %v1275, %v1272
      %v1297 = vpack.c.b16 %v1279, %v1276
      %v1298 = vpack.c.b16 %v1280, %v1277
      %v1299 = vpack.c.b16 %v1281, %v1278
      %v1319 = vsel %vm641, %v1194, 0
      %v1322 = vsel %vm641, %v1195, 0
      %v1325 = vsel %vm641, %v1196, 0
      %1327 = vmatpush.bf16.msra.mxu0 0
      %1328 = vmatpush.bf16.msra.mxu0 0
      %1329 = vmatpush.bf16.msra.mxu0 %v1297
      %1330 = vmatpush.bf16.msra.mxu0 %v1294
      %1331 = vmatpush.bf16.msra.mxu0 %v1291
      %1332 = vmatpush.bf16.msra.mxu0 %v1288
      %1333 = vmatpush.bf16.msra.mxu0 %v1285
      %1334 = vmatpush.bf16.msra.mxu0 %v1282
      %1335 = vmatmul.bf16.gmra.mxu0 %v1319
      %v1336 = vpop.f32.mrf.mxu0
      %v1337 = vadd.f32 0.0, %v1336
      %v1338 = vpop.f32.mrf.mxu0
      %v1339 = vadd.f32 0.0, %v1338
      %1340 = vmatmul.bf16.gmra.mxu0 %v1322
      %v1341 = vpop.f32.mrf.mxu0
      %v1342 = vadd.f32 0.0, %v1341
      %v1343 = vpop.f32.mrf.mxu0
      %v1344 = vadd.f32 0.0, %v1343
      %1345 = vmatmul.bf16.gmra.mxu0 %v1325
      %v1346 = vpop.f32.mrf.mxu0
      %v1347 = vadd.f32 0.0, %v1346
      %v1348 = vpop.f32.mrf.mxu0
      %v1349 = vadd.f32 0.0, %v1348
      %1350 = vdwg.mxu0
      %1351 = vmatpush.bf16.msra.mxu0 0
      %1352 = vmatpush.bf16.msra.mxu0 0
      %1353 = vmatpush.bf16.msra.mxu0 %v1298
      %1354 = vmatpush.bf16.msra.mxu0 %v1295
      %1355 = vmatpush.bf16.msra.mxu0 %v1292
      %1356 = vmatpush.bf16.msra.mxu0 %v1289
      %1357 = vmatpush.bf16.msra.mxu0 %v1286
      %1358 = vmatpush.bf16.msra.mxu0 %v1283
      %1359 = vmatmul.bf16.gmra.mxu0 %v1319
      %v1360 = vpop.f32.mrf.mxu0
      %v1361 = vadd.f32 0.0, %v1360
      %v1362 = vpop.f32.mrf.mxu0
      %v1363 = vadd.f32 0.0, %v1362
      %1364 = vmatmul.bf16.gmra.mxu0 %v1322
      %v1365 = vpop.f32.mrf.mxu0
      %v1366 = vadd.f32 0.0, %v1365
      %v1367 = vpop.f32.mrf.mxu0
      %v1368 = vadd.f32 0.0, %v1367
      %1369 = vmatmul.bf16.gmra.mxu0 %v1325
      %v1370 = vpop.f32.mrf.mxu0
      %v1371 = vadd.f32 0.0, %v1370
      %v1372 = vpop.f32.mrf.mxu0
      %v1373 = vadd.f32 0.0, %v1372
      %1374 = vdwg.mxu0
      %1375 = vmatpush.bf16.msra.mxu0 0
      %1376 = vmatpush.bf16.msra.mxu0 0
      %1377 = vmatpush.bf16.msra.mxu0 %v1299
      %1378 = vmatpush.bf16.msra.mxu0 %v1296
      %1379 = vmatpush.bf16.msra.mxu0 %v1293
      %1380 = vmatpush.bf16.msra.mxu0 %v1290
      %1381 = vmatpush.bf16.msra.mxu0 %v1287
      %1382 = vmatpush.bf16.msra.mxu0 %v1284
      %1383 = vmatmul.bf16.gmra.mxu0 %v1319
      %v1384 = vpop.f32.mrf.mxu0
      %v1385 = vadd.f32 0.0, %v1384
      %v1386 = vpop.f32.mrf.mxu0
      %v1387 = vadd.f32 0.0, %v1386
      %1388 = vmatmul.bf16.gmra.mxu0 %v1322
      %v1389 = vpop.f32.mrf.mxu0
      %v1390 = vadd.f32 0.0, %v1389
      %v1391 = vpop.f32.mrf.mxu0
      %v1392 = vadd.f32 0.0, %v1391
      %1393 = vmatmul.bf16.gmra.mxu0 %v1325
      %v1394 = vpop.f32.mrf.mxu0
      %v1395 = vadd.f32 0.0, %v1394
      %v1396 = vpop.f32.mrf.mxu0
      %v1397 = vadd.f32 0.0, %v1396
      %1398 = vdwg.mxu0
      %v1399 = vadd.f32 %v1077, %v1337
      %v1400 = vadd.f32 %v1101, %v1361
      %v1401 = vadd.f32 %v1125, %v1385
      %v1402 = vadd.f32 %v1079, %v1339
      %v1403 = vadd.f32 %v1103, %v1363
      %v1404 = vadd.f32 %v1127, %v1387
      %v1405 = vadd.f32 %v1082, %v1342
      %v1406 = vadd.f32 %v1106, %v1366
      %v1407 = vadd.f32 %v1130, %v1390
      %v1408 = vadd.f32 %v1084, %v1344
      %v1409 = vadd.f32 %v1108, %v1368
      %v1410 = vadd.f32 %v1132, %v1392
      %v1411 = vadd.f32 %v1087, %v1347
      %v1412 = vadd.f32 %v1111, %v1371
      %v1413 = vadd.f32 %v1135, %v1395
      %v1414 = vadd.f32 %v1089, %v1349
      %v1415 = vadd.f32 %v1113, %v1373
      %v1416 = vadd.f32 %v1137, %v1397
      %s1417 = scalar_lea.vmem %s1, 72
      %v1418 = vld [vmem:[%s1417] sm:$0xf]
      %v1419 = vld [vmem:[%s1417 + $0x4] sm:$0xf]
      %v1420 = vld [vmem:[%s1417 + $0x8] sm:$0xf]
      %v1421 = vld [vmem:[%s1417 + $0xc] sm:$0xf]
      %v1422 = vld [vmem:[%s1417 + $0x10] sm:$0xf]
      %v1423 = vld [vmem:[%s1417 + $0x14] sm:$0xf]
      %v1430 = vunpack.c.l.b16 %v1418
      %v1431 = vunpack.c.l.b16 %v1419
      %v1432 = vunpack.c.l.b16 %v1420
      %v1433 = vunpack.c.l.b16 %v1421
      %v1434 = vunpack.c.l.b16 %v1422
      %v1435 = vunpack.c.l.b16 %v1423
      %v1436 = vpack.c.b16 %v1431, %v1430
      %v1437 = vpack.c.b16 %v1433, %v1432
      %v1438 = vpack.c.b16 %v1435, %v1434
      %v1440 = vsel %vm641, %v1436, 0
      %v1443 = vsel %vm641, %v1437, 0
      %v1446 = vsel %vm641, %v1438, 0
      %1448 = vmatpush.bf16.msra.mxu0 0
      %1449 = vmatpush.bf16.msra.mxu0 0
      %1450 = vmatpush.bf16.msra.mxu0 %v619
      %1451 = vmatpush.bf16.msra.mxu0 %v618
      %1452 = vmatpush.bf16.msra.mxu0 %v617
      %1453 = vmatpush.bf16.msra.mxu0 %v616
      %1454 = vmatpush.bf16.msra.mxu0 %v615
      %1455 = vmatpush.bf16.msra.mxu0 %v614
      %1456 = vmatmul.bf16.gmra.mxu0 %v1440
      %v1457 = vpop.f32.mrf.mxu0
      %v1458 = vadd.f32 0.0, %v1457
      %v1459 = vpop.f32.mrf.mxu0
      %v1460 = vadd.f32 0.0, %v1459
      %1461 = vmatmul.bf16.gmra.mxu0 %v1443
      %v1462 = vpop.f32.mrf.mxu0
      %v1463 = vadd.f32 0.0, %v1462
      %v1464 = vpop.f32.mrf.mxu0
      %v1465 = vadd.f32 0.0, %v1464
      %1466 = vmatmul.bf16.gmra.mxu0 %v1446
      %v1467 = vpop.f32.mrf.mxu0
      %v1468 = vadd.f32 0.0, %v1467
      %v1469 = vpop.f32.mrf.mxu0
      %v1470 = vadd.f32 0.0, %v1469
      %1471 = vdwg.mxu0
      %v1472 = vpack.c.bf16 %v1460, %v1458
      %v1473 = vpack.c.bf16 %v1465, %v1463
      %v1474 = vpack.c.bf16 %v1470, %v1468
      %s1475 = scalar_lea.vmem %s2, 432
      %v1476 = vld [vmem:[%s1475] sm:$0xff]
      %v1477 = vld [vmem:[%s1475 + $0x8] sm:$0xf]
      %v1478 = vld [vmem:[%s1475 + $0xc] sm:$0xff]
      %v1479 = vld [vmem:[%s1475 + $0x14] sm:$0xf]
      %v1480 = vld [vmem:[%s1475 + $0x18] sm:$0xff]
      %v1481 = vld [vmem:[%s1475 + $0x20] sm:$0xf]
      %v1482 = vld [vmem:[%s1475 + $0x24] sm:$0xff]
      %v1483 = vld [vmem:[%s1475 + $0x2c] sm:$0xf]
      %v1484 = vld [vmem:[%s1475 + $0x30] sm:$0xff]
      %v1485 = vld [vmem:[%s1475 + $0x38] sm:$0xf]
      %v1486 = vld [vmem:[%s1475 + $0x3c] sm:$0xff]
      %v1487 = vld [vmem:[%s1475 + $0x44] sm:$0xf]
      %v1488 = vld [vmem:[%s1475 + $0x48] sm:$0xff]
      %v1489 = vld [vmem:[%s1475 + $0x50] sm:$0xf]
      %v1490 = vld [vmem:[%s1475 + $0x54] sm:$0xff]
      %v1491 = vld [vmem:[%s1475 + $0x5c] sm:$0xf]
      %v1492 = vld [vmem:[%s1475 + $0x60] sm:$0xff]
      %v1493 = vld [vmem:[%s1475 + $0x68] sm:$0xf]
      %v1494 = vld [vmem:[%s1475 + $0x6c] sm:$0xff]
      %v1495 = vld [vmem:[%s1475 + $0x74] sm:$0xf]
      %v1496 = vld [vmem:[%s1475 + $0x78] sm:$0xff]
      %v1497 = vld [vmem:[%s1475 + $0x80] sm:$0xf]
      %v1498 = vld [vmem:[%s1475 + $0x84] sm:$0xff]
      %v1499 = vld [vmem:[%s1475 + $0x8c] sm:$0xf]
      %v1524 = vunpack.c.l.b16 %v1476
      %v1525 = vunpack.c.h.b16 %v1476
      %v1526 = vunpack.c.l.b16 %v1477
      %v1527 = vunpack.c.l.b16 %v1478
      %v1528 = vunpack.c.h.b16 %v1478
      %v1529 = vunpack.c.l.b16 %v1479
      %v1530 = vunpack.c.l.b16 %v1480
      %v1531 = vunpack.c.h.b16 %v1480
      %v1532 = vunpack.c.l.b16 %v1481
      %v1533 = vunpack.c.l.b16 %v1482
      %v1534 = vunpack.c.h.b16 %v1482
      %v1535 = vunpack.c.l.b16 %v1483
      %v1536 = vunpack.c.l.b16 %v1484
      %v1537 = vunpack.c.h.b16 %v1484
      %v1538 = vunpack.c.l.b16 %v1485
      %v1539 = vunpack.c.l.b16 %v1486
      %v1540 = vunpack.c.h.b16 %v1486
      %v1541 = vunpack.c.l.b16 %v1487
      %v1542 = vunpack.c.l.b16 %v1488
      %v1543 = vunpack.c.h.b16 %v1488
      %v1544 = vunpack.c.l.b16 %v1489
      %v1545 = vunpack.c.l.b16 %v1490
      %v1546 = vunpack.c.h.b16 %v1490
      %v1547 = vunpack.c.l.b16 %v1491
      %v1548 = vunpack.c.l.b16 %v1492
      %v1549 = vunpack.c.h.b16 %v1492
      %v1550 = vunpack.c.l.b16 %v1493
      %v1551 = vunpack.c.l.b16 %v1494
      %v1552 = vunpack.c.h.b16 %v1494
      %v1553 = vunpack.c.l.b16 %v1495
      %v1554 = vunpack.c.l.b16 %v1496
      %v1555 = vunpack.c.h.b16 %v1496
      %v1556 = vunpack.c.l.b16 %v1497
      %v1557 = vunpack.c.l.b16 %v1498
      %v1558 = vunpack.c.h.b16 %v1498
      %v1559 = vunpack.c.l.b16 %v1499
      %v1560 = vpack.c.b16 %v1527, %v1524
      %v1561 = vpack.c.b16 %v1528, %v1525
      %v1562 = vpack.c.b16 %v1529, %v1526
      %v1563 = vpack.c.b16 %v1533, %v1530
      %v1564 = vpack.c.b16 %v1534, %v1531
      %v1565 = vpack.c.b16 %v1535, %v1532
      %v1566 = vpack.c.b16 %v1539, %v1536
      %v1567 = vpack.c.b16 %v1540, %v1537
      %v1568 = vpack.c.b16 %v1541, %v1538
      %v1569 = vpack.c.b16 %v1545, %v1542
      %v1570 = vpack.c.b16 %v1546, %v1543
      %v1571 = vpack.c.b16 %v1547, %v1544
      %v1572 = vpack.c.b16 %v1551, %v1548
      %v1573 = vpack.c.b16 %v1552, %v1549
      %v1574 = vpack.c.b16 %v1553, %v1550
      %v1575 = vpack.c.b16 %v1557, %v1554
      %v1576 = vpack.c.b16 %v1558, %v1555
      %v1577 = vpack.c.b16 %v1559, %v1556
      %v1597 = vsel %vm641, %v1472, 0
      %v1600 = vsel %vm641, %v1473, 0
      %v1603 = vsel %vm641, %v1474, 0
      %1605 = vmatpush.bf16.msra.mxu0 0
      %1606 = vmatpush.bf16.msra.mxu0 0
      %1607 = vmatpush.bf16.msra.mxu0 %v1575
      %1608 = vmatpush.bf16.msra.mxu0 %v1572
      %1609 = vmatpush.bf16.msra.mxu0 %v1569
      %1610 = vmatpush.bf16.msra.mxu0 %v1566
      %1611 = vmatpush.bf16.msra.mxu0 %v1563
      %1612 = vmatpush.bf16.msra.mxu0 %v1560
      %1613 = vmatmul.bf16.gmra.mxu0 %v1597
      %v1614 = vpop.f32.mrf.mxu0
      %v1615 = vadd.f32 0.0, %v1614
      %v1616 = vpop.f32.mrf.mxu0
      %v1617 = vadd.f32 0.0, %v1616
      %1618 = vmatmul.bf16.gmra.mxu0 %v1600
      %v1619 = vpop.f32.mrf.mxu0
      %v1620 = vadd.f32 0.0, %v1619
      %v1621 = vpop.f32.mrf.mxu0
      %v1622 = vadd.f32 0.0, %v1621
      %1623 = vmatmul.bf16.gmra.mxu0 %v1603
      %v1624 = vpop.f32.mrf.mxu0
      %v1625 = vadd.f32 0.0, %v1624
      %v1626 = vpop.f32.mrf.mxu0
      %v1627 = vadd.f32 0.0, %v1626
      %1628 = vdwg.mxu0
      %1629 = vmatpush.bf16.msra.mxu0 0
      %1630 = vmatpush.bf16.msra.mxu0 0
      %1631 = vmatpush.bf16.msra.mxu0 %v1576
      %1632 = vmatpush.bf16.msra.mxu0 %v1573
      %1633 = vmatpush.bf16.msra.mxu0 %v1570
      %1634 = vmatpush.bf16.msra.mxu0 %v1567
      %1635 = vmatpush.bf16.msra.mxu0 %v1564
      %1636 = vmatpush.bf16.msra.mxu0 %v1561
      %1637 = vmatmul.bf16.gmra.mxu0 %v1597
      %v1638 = vpop.f32.mrf.mxu0
      %v1639 = vadd.f32 0.0, %v1638
      %v1640 = vpop.f32.mrf.mxu0
      %v1641 = vadd.f32 0.0, %v1640
      %1642 = vmatmul.bf16.gmra.mxu0 %v1600
      %v1643 = vpop.f32.mrf.mxu0
      %v1644 = vadd.f32 0.0, %v1643
      %v1645 = vpop.f32.mrf.mxu0
      %v1646 = vadd.f32 0.0, %v1645
      %1647 = vmatmul.bf16.gmra.mxu0 %v1603
      %v1648 = vpop.f32.mrf.mxu0
      %v1649 = vadd.f32 0.0, %v1648
      %v1650 = vpop.f32.mrf.mxu0
      %v1651 = vadd.f32 0.0, %v1650
      %1652 = vdwg.mxu0
      %1653 = vmatpush.bf16.msra.mxu0 0
      %1654 = vmatpush.bf16.msra.mxu0 0
      %1655 = vmatpush.bf16.msra.mxu0 %v1577
      %1656 = vmatpush.bf16.msra.mxu0 %v1574
      %1657 = vmatpush.bf16.msra.mxu0 %v1571
      %1658 = vmatpush.bf16.msra.mxu0 %v1568
      %1659 = vmatpush.bf16.msra.mxu0 %v1565
      %1660 = vmatpush.bf16.msra.mxu0 %v1562
      %1661 = vmatmul.bf16.gmra.mxu0 %v1597
      %v1662 = vpop.f32.mrf.mxu0
      %v1663 = vadd.f32 0.0, %v1662
      %v1664 = vpop.f32.mrf.mxu0
      %v1665 = vadd.f32 0.0, %v1664
      %1666 = vmatmul.bf16.gmra.mxu0 %v1600
      %v1667 = vpop.f32.mrf.mxu0
      %v1668 = vadd.f32 0.0, %v1667
      %v1669 = vpop.f32.mrf.mxu0
      %v1670 = vadd.f32 0.0, %v1669
      %1671 = vmatmul.bf16.gmra.mxu0 %v1603
      %v1672 = vpop.f32.mrf.mxu0
      %v1673 = vadd.f32 0.0, %v1672
      %v1674 = vpop.f32.mrf.mxu0
      %v1675 = vadd.f32 0.0, %v1674
      %1676 = vdwg.mxu0
      %v1677 = vadd.f32 %v1399, %v1615
      %v1678 = vadd.f32 %v1400, %v1639
      %v1679 = vadd.f32 %v1401, %v1663
      %v1680 = vadd.f32 %v1402, %v1617
      %v1681 = vadd.f32 %v1403, %v1641
      %v1682 = vadd.f32 %v1404, %v1665
      %v1683 = vadd.f32 %v1405, %v1620
      %v1684 = vadd.f32 %v1406, %v1644
      %v1685 = vadd.f32 %v1407, %v1668
      %v1686 = vadd.f32 %v1408, %v1622
      %v1687 = vadd.f32 %v1409, %v1646
      %v1688 = vadd.f32 %v1410, %v1670
      %v1689 = vadd.f32 %v1411, %v1625
      %v1690 = vadd.f32 %v1412, %v1649
      %v1691 = vadd.f32 %v1413, %v1673
      %v1692 = vadd.f32 %v1414, %v1627
      %v1693 = vadd.f32 %v1415, %v1651
      %v1694 = vadd.f32 %v1416, %v1675
      %v1695 = vld [vmem:[%s3] sm:$0x7]
      %v1697 = vperm.slane %v1695, 0
      %v1698 = vperm.slane %v1695, 1
      %v1699 = vperm.slane %v1695, 2
      %v1703 = vadd.f32 %v1677, %v1697
      %v1704 = vadd.f32 %v1678, %v1698
      %v1705 = vadd.f32 %v1679, %v1699
      %v1706 = vadd.f32 %v1680, %v1697
      %v1707 = vadd.f32 %v1681, %v1698
      %v1708 = vadd.f32 %v1682, %v1699
      %v1709 = vadd.f32 %v1683, %v1697
      %v1710 = vadd.f32 %v1684, %v1698
      %v1711 = vadd.f32 %v1685, %v1699
      %v1712 = vadd.f32 %v1686, %v1697
      %v1713 = vadd.f32 %v1687, %v1698
      %v1714 = vadd.f32 %v1688, %v1699
      %v1715 = vadd.f32 %v1689, %v1697
      %v1716 = vadd.f32 %v1690, %v1698
      %v1717 = vadd.f32 %v1691, %v1699
      %v1718 = vadd.f32 %v1692, %v1697
      %v1719 = vadd.f32 %v1693, %v1698
      %v1720 = vadd.f32 %v1694, %v1699
      %v1721 = vmax.f32 %v1703, 0.0
      %v1722 = vmax.f32 %v1704, 0.0
      %v1723 = vmax.f32 %v1705, 0.0
      %v1724 = vmax.f32 %v1706, 0.0
      %v1725 = vmax.f32 %v1707, 0.0
      %v1726 = vmax.f32 %v1708, 0.0
      %v1727 = vmax.f32 %v1709, 0.0
      %v1728 = vmax.f32 %v1710, 0.0
      %v1729 = vmax.f32 %v1711, 0.0
      %v1730 = vmax.f32 %v1712, 0.0
      %v1731 = vmax.f32 %v1713, 0.0
      %v1732 = vmax.f32 %v1714, 0.0
      %v1733 = vmax.f32 %v1715, 0.0
      %v1734 = vmax.f32 %v1716, 0.0
      %v1735 = vmax.f32 %v1717, 0.0
      %v1736 = vmax.f32 %v1718, 0.0
      %v1737 = vmax.f32 %v1719, 0.0
      %v1738 = vmax.f32 %v1720, 0.0
      %v1739 = vpack.c.bf16 %v1724, %v1721
      %v1740 = vpack.c.bf16 %v1725, %v1722
      %v1741 = vpack.c.bf16 %v1726, %v1723
      %v1742 = vpack.c.bf16 %v1730, %v1727
      %v1743 = vpack.c.bf16 %v1731, %v1728
      %v1744 = vpack.c.bf16 %v1732, %v1729
      %v1745 = vpack.c.bf16 %v1736, %v1733
      %v1746 = vpack.c.bf16 %v1737, %v1734
      %v1747 = vpack.c.bf16 %v1738, %v1735
      %v1748 = vld [vmem:[%s4] sm:$0xf]
      %v1749 = vld [vmem:[%s4 + $0x4] sm:$0xf]
      %v1750 = vld [vmem:[%s4 + $0x8] sm:$0x7]
      %v1754 = vunpack.c.l.b16 %v1748
      %v1755 = vunpack.c.l.b16 %v1749
      %v1756 = vunpack.c.l.b16 %v1750
      %v1757 = vpack.c.b16 %v1755, %v1754
      %v1758 = vpack.c.b16 %v1756, %v1756
      %vm1759 = vcmask 384000
      %v1761 = vsel %vm1759, %v1757, 0
      %v1764 = vsel %vm1759, %v1758, 0
      %vm1766 = vcmask 1046528
      %vm1767 = vcmask 1047552
      %v1768 = vsel %vm1766, 4294967295, 65535
      %v1769 = vsel %vm1767, %v1768, 0
      %v1771 = vand.u32 %v1745, %v1769
      %v1774 = vand.u32 %v1746, %v1769
      %v1777 = vand.u32 %v1747, %v1769
      %1779 = vmatpush.bf16.msra.mxu0 0
      %1780 = vmatpush.bf16.msra.mxu0 0
      %1781 = vmatpush.bf16.msra.mxu0 0
      %1782 = vmatpush.bf16.msra.mxu0 0
      %1783 = vmatpush.bf16.msra.mxu0 0
      %1784 = vmatpush.bf16.msra.mxu0 %v1771
      %1785 = vmatpush.bf16.msra.mxu0 %v1742
      %1786 = vmatpush.bf16.msra.mxu0 %v1739
      %1787 = vmatmul.bf16.gmra.mxu0 %v1761
      %v1788 = vpop.f32.mrf.mxu0
      %v1789 = vadd.f32 0.0, %v1788
      %v1790 = vpop.f32.mrf.mxu0
      %v1791 = vadd.f32 0.0, %v1790
      %1792 = vmatmul.bf16.gmra.mxu0 %v1764
      %v1793 = vpop.f32.mrf.mxu0
      %v1794 = vadd.f32 0.0, %v1793
      %v1795 = vpop.f32.mrf.mxu0
      %1796 = vdwg.mxu0
      %1797 = vmatpush.bf16.msra.mxu0 0
      %1798 = vmatpush.bf16.msra.mxu0 0
      %1799 = vmatpush.bf16.msra.mxu0 0
      %1800 = vmatpush.bf16.msra.mxu0 0
      %1801 = vmatpush.bf16.msra.mxu0 0
      %1802 = vmatpush.bf16.msra.mxu0 %v1774
      %1803 = vmatpush.bf16.msra.mxu0 %v1743
      %1804 = vmatpush.bf16.msra.mxu0 %v1740
      %1805 = vmatmul.bf16.gmra.mxu0 %v1761
      %v1806 = vpop.f32.mrf.mxu0
      %v1807 = vadd.f32 0.0, %v1806
      %v1808 = vpop.f32.mrf.mxu0
      %v1809 = vadd.f32 0.0, %v1808
      %1810 = vmatmul.bf16.gmra.mxu0 %v1764
      %v1811 = vpop.f32.mrf.mxu0
      %v1812 = vadd.f32 0.0, %v1811
      %v1813 = vpop.f32.mrf.mxu0
      %1814 = vdwg.mxu0
      %1815 = vmatpush.bf16.msra.mxu0 0
      %1816 = vmatpush.bf16.msra.mxu0 0
      %1817 = vmatpush.bf16.msra.mxu0 0
      %1818 = vmatpush.bf16.msra.mxu0 0
      %1819 = vmatpush.bf16.msra.mxu0 0
      %1820 = vmatpush.bf16.msra.mxu0 %v1777
      %1821 = vmatpush.bf16.msra.mxu0 %v1744
      %1822 = vmatpush.bf16.msra.mxu0 %v1741
      %1823 = vmatmul.bf16.gmra.mxu0 %v1761
      %v1824 = vpop.f32.mrf.mxu0
      %v1825 = vadd.f32 0.0, %v1824
      %v1826 = vpop.f32.mrf.mxu0
      %v1827 = vadd.f32 0.0, %v1826
      %1828 = vmatmul.bf16.gmra.mxu0 %v1764
      %v1829 = vpop.f32.mrf.mxu0
      %v1830 = vadd.f32 0.0, %v1829
      %v1831 = vpop.f32.mrf.mxu0
      %1832 = vdwg.mxu0
      %v1833 = vpack.c.bf16 %v1791, %v1789
      %v1834 = vpack.c.bf16 %v1809, %v1807
      %v1835 = vpack.c.bf16 %v1827, %v1825
      %v1836 = vpack.c.bf16 %v1794, %v1794
      %v1837 = vpack.c.bf16 %v1812, %v1812
      %v1838 = vpack.c.bf16 %v1830, %v1830
      %v1839 = vld [vmem:[%s5] sm:$0xff]
      %v1840 = vld [vmem:[%s5 + $0x8] sm:$0xf]
      %v1841 = vld [vmem:[%s5 + $0xc] sm:$0xff]
      %v1842 = vld [vmem:[%s5 + $0x14] sm:$0xf]
      %v1843 = vld [vmem:[%s5 + $0x18] sm:$0xff]
      %v1844 = vld [vmem:[%s5 + $0x20] sm:$0xf]
      %v1845 = vld [vmem:[%s5 + $0x24] sm:$0xff]
      %v1846 = vld [vmem:[%s5 + $0x2c] sm:$0xf]
      %v1847 = vld [vmem:[%s5 + $0x30] sm:$0xff]
      %v1848 = vld [vmem:[%s5 + $0x38] sm:$0xf]
      %v1849 = vld [vmem:[%s5 + $0x3c] sm:$0xff]
      %v1850 = vld [vmem:[%s5 + $0x44] sm:$0xf]
      %v1851 = vld [vmem:[%s5 + $0x48] sm:$0xff]
      %v1852 = vld [vmem:[%s5 + $0x50] sm:$0xf]
      %v1853 = vld [vmem:[%s5 + $0x54] sm:$0xff]
      %v1854 = vld [vmem:[%s5 + $0x5c] sm:$0xf]
      %v1855 = vld [vmem:[%s5 + $0x60] sm:$0xff]
      %v1856 = vld [vmem:[%s5 + $0x68] sm:$0xf]
      %v1857 = vld [vmem:[%s5 + $0x6c] sm:$0xff]
      %v1858 = vld [vmem:[%s5 + $0x74] sm:$0xf]
      %v1859 = vld [vmem:[%s5 + $0x78] sm:$0xff]
      %v1860 = vld [vmem:[%s5 + $0x80] sm:$0xf]
      %v1861 = vld [vmem:[%s5 + $0x84] sm:$0xff]
      %v1862 = vld [vmem:[%s5 + $0x8c] sm:$0xf]
      %v1863 = vld [vmem:[%s5 + $0x90] sm:$0xff]
      %v1864 = vld [vmem:[%s5 + $0x98] sm:$0xf]
      %v1865 = vld [vmem:[%s5 + $0x9c] sm:$0xff]
      %v1866 = vld [vmem:[%s5 + $0xa4] sm:$0xf]
      %v1867 = vld [vmem:[%s5 + $0xa8] sm:$0xff]
      %v1868 = vld [vmem:[%s5 + $0xb0] sm:$0xf]
      %v1869 = vld [vmem:[%s5 + $0xb4] sm:$0xff]
      %v1870 = vld [vmem:[%s5 + $0xbc] sm:$0xf]
      %v1871 = vld [vmem:[%s5 + $0xc0] sm:$0xff]
      %v1872 = vld [vmem:[%s5 + $0xc8] sm:$0xf]
      %v1873 = vld [vmem:[%s5 + $0xcc] sm:$0xff]
      %v1874 = vld [vmem:[%s5 + $0xd4] sm:$0xf]
      %v1875 = vld [vmem:[%s5 + $0xd8] sm:$0xff]
      %v1876 = vld [vmem:[%s5 + $0xe0] sm:$0xf]
      %v1877 = vld [vmem:[%s5 + $0xe4] sm:$0xff]
      %v1878 = vld [vmem:[%s5 + $0xec] sm:$0xf]
      %v1879 = vld [vmem:[%s5 + $0xf0] sm:$0xff]
      %v1880 = vld [vmem:[%s5 + $0xf8] sm:$0xf]
      %v1881 = vld [vmem:[%s5 + $0xfc] sm:$0xff]
      %v1882 = vld [vmem:[%s5 + $0x104] sm:$0xf]
      %v1883 = vld [vmem:[%s5 + $0x108] sm:$0xff]
      %v1884 = vld [vmem:[%s5 + $0x110] sm:$0xf]
      %v1885 = vld [vmem:[%s5 + $0x114] sm:$0xff]
      %v1886 = vld [vmem:[%s5 + $0x11c] sm:$0xf]
      %v1887 = vld [vmem:[%s5 + $0x120] sm:$0xff]
      %v1888 = vld [vmem:[%s5 + $0x128] sm:$0xf]
      %v1889 = vld [vmem:[%s5 + $0x12c] sm:$0xff]
      %v1890 = vld [vmem:[%s5 + $0x134] sm:$0xf]
      %v1891 = vld [vmem:[%s5 + $0x138] sm:$0xff]
      %v1892 = vld [vmem:[%s5 + $0x140] sm:$0xf]
      %v1893 = vld [vmem:[%s5 + $0x144] sm:$0xff]
      %v1894 = vld [vmem:[%s5 + $0x14c] sm:$0xf]
      %v1895 = vld [vmem:[%s5 + $0x150] sm:$0xff]
      %v1896 = vld [vmem:[%s5 + $0x158] sm:$0xf]
      %v1897 = vld [vmem:[%s5 + $0x15c] sm:$0xff]
      %v1898 = vld [vmem:[%s5 + $0x164] sm:$0xf]
      %v1899 = vld [vmem:[%s5 + $0x168] sm:$0xff]
      %v1900 = vld [vmem:[%s5 + $0x170] sm:$0xf]
      %v1901 = vld [vmem:[%s5 + $0x174] sm:$0xff]
      %v1902 = vld [vmem:[%s5 + $0x17c] sm:$0xf]
      %v1903 = vld [vmem:[%s5 + $0x180] sm:$0xff]
      %v1904 = vld [vmem:[%s5 + $0x188] sm:$0xf]
      %v1905 = vld [vmem:[%s5 + $0x18c] sm:$0xff]
      %v1906 = vld [vmem:[%s5 + $0x194] sm:$0xf]
      %v1907 = vld [vmem:[%s5 + $0x198] sm:$0xff]
      %v1908 = vld [vmem:[%s5 + $0x1a0] sm:$0xf]
      %v1909 = vld [vmem:[%s5 + $0x1a4] sm:$0x11]
      %v1910 = vld [vmem:[%s5 + $0x1ac] sm:$0x1]
      %s1911 = scalar_lea.vmem %s4, 12
      %v1912 = vld [vmem:[%s1911] sm:$0xf]
      %v1913 = vld [vmem:[%s1911 + $0x4] sm:$0xf]
      %v1914 = vld [vmem:[%s1911 + $0x8] sm:$0x7]
      %v1918 = vunpack.c.l.b16 %v1912
      %v1919 = vunpack.c.l.b16 %v1913
      %v1920 = vunpack.c.l.b16 %v1914
      %v1921 = vpack.c.b16 %v1919, %v1918
      %v1922 = vpack.c.b16 %v1920, %v1920
      %v1924 = vsel %vm1759, %v1921, 0
      %v1927 = vsel %vm1759, %v1922, 0
      %1929 = vmatpush.bf16.msra.mxu0 0
      %1930 = vmatpush.bf16.msra.mxu0 0
      %1931 = vmatpush.bf16.msra.mxu0 0
      %1932 = vmatpush.bf16.msra.mxu0 0
      %1933 = vmatpush.bf16.msra.mxu0 0
      %1934 = vmatpush.bf16.msra.mxu0 %v1771
      %1935 = vmatpush.bf16.msra.mxu0 %v1742
      %1936 = vmatpush.bf16.msra.mxu0 %v1739
      %1937 = vmatmul.bf16.gmra.mxu0 %v1924
      %v1938 = vpop.f32.mrf.mxu0
      %v1939 = vadd.f32 0.0, %v1938
      %v1940 = vpop.f32.mrf.mxu0
      %v1941 = vadd.f32 0.0, %v1940
      %1942 = vmatmul.bf16.gmra.mxu0 %v1927
      %v1943 = vpop.f32.mrf.mxu0
      %v1944 = vadd.f32 0.0, %v1943
      %v1945 = vpop.f32.mrf.mxu0
      %1946 = vdwg.mxu0
      %1947 = vmatpush.bf16.msra.mxu0 0
      %1948 = vmatpush.bf16.msra.mxu0 0
      %1949 = vmatpush.bf16.msra.mxu0 0
      %1950 = vmatpush.bf16.msra.mxu0 0
      %1951 = vmatpush.bf16.msra.mxu0 0
      %1952 = vmatpush.bf16.msra.mxu0 %v1774
      %1953 = vmatpush.bf16.msra.mxu0 %v1743
      %1954 = vmatpush.bf16.msra.mxu0 %v1740
      %1955 = vmatmul.bf16.gmra.mxu0 %v1924
      %v1956 = vpop.f32.mrf.mxu0
      %v1957 = vadd.f32 0.0, %v1956
      %v1958 = vpop.f32.mrf.mxu0
      %v1959 = vadd.f32 0.0, %v1958
      %1960 = vmatmul.bf16.gmra.mxu0 %v1927
      %v1961 = vpop.f32.mrf.mxu0
      %v1962 = vadd.f32 0.0, %v1961
      %v1963 = vpop.f32.mrf.mxu0
      %1964 = vdwg.mxu0
      %1965 = vmatpush.bf16.msra.mxu0 0
      %1966 = vmatpush.bf16.msra.mxu0 0
      %1967 = vmatpush.bf16.msra.mxu0 0
      %1968 = vmatpush.bf16.msra.mxu0 0
      %1969 = vmatpush.bf16.msra.mxu0 0
      %1970 = vmatpush.bf16.msra.mxu0 %v1777
      %1971 = vmatpush.bf16.msra.mxu0 %v1744
      %1972 = vmatpush.bf16.msra.mxu0 %v1741
      %1973 = vmatmul.bf16.gmra.mxu0 %v1924
      %v1974 = vpop.f32.mrf.mxu0
      %v1975 = vadd.f32 0.0, %v1974
      %v1976 = vpop.f32.mrf.mxu0
      %v1977 = vadd.f32 0.0, %v1976
      %1978 = vmatmul.bf16.gmra.mxu0 %v1927
      %v1979 = vpop.f32.mrf.mxu0
      %v1980 = vadd.f32 0.0, %v1979
      %v1981 = vpop.f32.mrf.mxu0
      %1982 = vdwg.mxu0
      %v1983 = vpack.c.bf16 %v1941, %v1939
      %v1984 = vpack.c.bf16 %v1959, %v1957
      %v1985 = vpack.c.bf16 %v1977, %v1975
      %v1986 = vpack.c.bf16 %v1944, %v1944
      %v1987 = vpack.c.bf16 %v1962, %v1962
      %v1988 = vpack.c.bf16 %v1980, %v1980
      %s1989 = scalar_lea.vmem %s5, 432
      %v1990 = vld [vmem:[%s1989] sm:$0xff]
      %v1991 = vld [vmem:[%s1989 + $0x8] sm:$0xf]
      %v1992 = vld [vmem:[%s1989 + $0xc] sm:$0xff]
      %v1993 = vld [vmem:[%s1989 + $0x14] sm:$0xf]
      %v1994 = vld [vmem:[%s1989 + $0x18] sm:$0xff]
      %v1995 = vld [vmem:[%s1989 + $0x20] sm:$0xf]
      %v1996 = vld [vmem:[%s1989 + $0x24] sm:$0xff]
      %v1997 = vld [vmem:[%s1989 + $0x2c] sm:$0xf]
      %v1998 = vld [vmem:[%s1989 + $0x30] sm:$0xff]
      %v1999 = vld [vmem:[%s1989 + $0x38] sm:$0xf]
      %v2000 = vld [vmem:[%s1989 + $0x3c] sm:$0xff]
      %v2001 = vld [vmem:[%s1989 + $0x44] sm:$0xf]
      %v2002 = vld [vmem:[%s1989 + $0x48] sm:$0xff]
      %v2003 = vld [vmem:[%s1989 + $0x50] sm:$0xf]
      %v2004 = vld [vmem:[%s1989 + $0x54] sm:$0xff]
      %v2005 = vld [vmem:[%s1989 + $0x5c] sm:$0xf]
      %v2006 = vld [vmem:[%s1989 + $0x60] sm:$0xff]
      %v2007 = vld [vmem:[%s1989 + $0x68] sm:$0xf]
      %v2008 = vld [vmem:[%s1989 + $0x6c] sm:$0xff]
      %v2009 = vld [vmem:[%s1989 + $0x74] sm:$0xf]
      %v2010 = vld [vmem:[%s1989 + $0x78] sm:$0xff]
      %v2011 = vld [vmem:[%s1989 + $0x80] sm:$0xf]
      %v2012 = vld [vmem:[%s1989 + $0x84] sm:$0xff]
      %v2013 = vld [vmem:[%s1989 + $0x8c] sm:$0xf]
      %v2014 = vld [vmem:[%s1989 + $0x90] sm:$0xff]
      %v2015 = vld [vmem:[%s1989 + $0x98] sm:$0xf]
      %v2016 = vld [vmem:[%s1989 + $0x9c] sm:$0xff]
      %v2017 = vld [vmem:[%s1989 + $0xa4] sm:$0xf]
      %v2018 = vld [vmem:[%s1989 + $0xa8] sm:$0xff]
      %v2019 = vld [vmem:[%s1989 + $0xb0] sm:$0xf]
      %v2020 = vld [vmem:[%s1989 + $0xb4] sm:$0xff]
      %v2021 = vld [vmem:[%s1989 + $0xbc] sm:$0xf]
      %v2022 = vld [vmem:[%s1989 + $0xc0] sm:$0xff]
      %v2023 = vld [vmem:[%s1989 + $0xc8] sm:$0xf]
      %v2024 = vld [vmem:[%s1989 + $0xcc] sm:$0xff]
      %v2025 = vld [vmem:[%s1989 + $0xd4] sm:$0xf]
      %v2026 = vld [vmem:[%s1989 + $0xd8] sm:$0xff]
      %v2027 = vld [vmem:[%s1989 + $0xe0] sm:$0xf]
      %v2028 = vld [vmem:[%s1989 + $0xe4] sm:$0xff]
      %v2029 = vld [vmem:[%s1989 + $0xec] sm:$0xf]
      %v2030 = vld [vmem:[%s1989 + $0xf0] sm:$0xff]
      %v2031 = vld [vmem:[%s1989 + $0xf8] sm:$0xf]
      %v2032 = vld [vmem:[%s1989 + $0xfc] sm:$0xff]
      %v2033 = vld [vmem:[%s1989 + $0x104] sm:$0xf]
      %v2034 = vld [vmem:[%s1989 + $0x108] sm:$0xff]
      %v2035 = vld [vmem:[%s1989 + $0x110] sm:$0xf]
      %v2036 = vld [vmem:[%s1989 + $0x114] sm:$0xff]
      %v2037 = vld [vmem:[%s1989 + $0x11c] sm:$0xf]
      %v2038 = vld [vmem:[%s1989 + $0x120] sm:$0xff]
      %v2039 = vld [vmem:[%s1989 + $0x128] sm:$0xf]
      %v2040 = vld [vmem:[%s1989 + $0x12c] sm:$0xff]
      %v2041 = vld [vmem:[%s1989 + $0x134] sm:$0xf]
      %v2042 = vld [vmem:[%s1989 + $0x138] sm:$0xff]
      %v2043 = vld [vmem:[%s1989 + $0x140] sm:$0xf]
      %v2044 = vld [vmem:[%s1989 + $0x144] sm:$0xff]
      %v2045 = vld [vmem:[%s1989 + $0x14c] sm:$0xf]
      %v2046 = vld [vmem:[%s1989 + $0x150] sm:$0xff]
      %v2047 = vld [vmem:[%s1989 + $0x158] sm:$0xf]
      %v2048 = vld [vmem:[%s1989 + $0x15c] sm:$0xff]
      %v2049 = vld [vmem:[%s1989 + $0x164] sm:$0xf]
      %v2050 = vld [vmem:[%s1989 + $0x168] sm:$0xff]
      %v2051 = vld [vmem:[%s1989 + $0x170] sm:$0xf]
      %v2052 = vld [vmem:[%s1989 + $0x174] sm:$0xff]
      %v2053 = vld [vmem:[%s1989 + $0x17c] sm:$0xf]
      %v2054 = vld [vmem:[%s1989 + $0x180] sm:$0xff]
      %v2055 = vld [vmem:[%s1989 + $0x188] sm:$0xf]
      %v2056 = vld [vmem:[%s1989 + $0x18c] sm:$0xff]
      %v2057 = vld [vmem:[%s1989 + $0x194] sm:$0xf]
      %v2058 = vld [vmem:[%s1989 + $0x198] sm:$0xff]
      %v2059 = vld [vmem:[%s1989 + $0x1a0] sm:$0xf]
      %v2060 = vld [vmem:[%s1989 + $0x1a4] sm:$0x11]
      %v2061 = vld [vmem:[%s1989 + $0x1ac] sm:$0x1]
      %v2134 = vunpack.c.l.b16 %v1990
      %v2135 = vunpack.c.h.b16 %v1990
      %v2136 = vunpack.c.l.b16 %v1991
      %v2137 = vunpack.c.l.b16 %v1992
      %v2138 = vunpack.c.h.b16 %v1992
      %v2139 = vunpack.c.l.b16 %v1993
      %v2140 = vunpack.c.l.b16 %v1994
      %v2141 = vunpack.c.h.b16 %v1994
      %v2142 = vunpack.c.l.b16 %v1995
      %v2143 = vunpack.c.l.b16 %v1996
      %v2144 = vunpack.c.h.b16 %v1996
      %v2145 = vunpack.c.l.b16 %v1997
      %v2146 = vunpack.c.l.b16 %v1998
      %v2147 = vunpack.c.h.b16 %v1998
      %v2148 = vunpack.c.l.b16 %v1999
      %v2149 = vunpack.c.l.b16 %v2000
      %v2150 = vunpack.c.h.b16 %v2000
      %v2151 = vunpack.c.l.b16 %v2001
      %v2152 = vunpack.c.l.b16 %v2002
      %v2153 = vunpack.c.h.b16 %v2002
      %v2154 = vunpack.c.l.b16 %v2003
      %v2155 = vunpack.c.l.b16 %v2004
      %v2156 = vunpack.c.h.b16 %v2004
      %v2157 = vunpack.c.l.b16 %v2005
      %v2158 = vunpack.c.l.b16 %v2006
      %v2159 = vunpack.c.h.b16 %v2006
      %v2160 = vunpack.c.l.b16 %v2007
      %v2161 = vunpack.c.l.b16 %v2008
      %v2162 = vunpack.c.h.b16 %v2008
      %v2163 = vunpack.c.l.b16 %v2009
      %v2164 = vunpack.c.l.b16 %v2010
      %v2165 = vunpack.c.h.b16 %v2010
      %v2166 = vunpack.c.l.b16 %v2011
      %v2167 = vunpack.c.l.b16 %v2012
      %v2168 = vunpack.c.h.b16 %v2012
      %v2169 = vunpack.c.l.b16 %v2013
      %v2170 = vunpack.c.l.b16 %v2014
      %v2171 = vunpack.c.h.b16 %v2014
      %v2172 = vunpack.c.l.b16 %v2015
      %v2173 = vunpack.c.l.b16 %v2016
      %v2174 = vunpack.c.h.b16 %v2016
      %v2175 = vunpack.c.l.b16 %v2017
      %v2176 = vunpack.c.l.b16 %v2018
      %v2177 = vunpack.c.h.b16 %v2018
      %v2178 = vunpack.c.l.b16 %v2019
      %v2179 = vunpack.c.l.b16 %v2020
      %v2180 = vunpack.c.h.b16 %v2020
      %v2181 = vunpack.c.l.b16 %v2021
      %v2182 = vunpack.c.l.b16 %v2022
      %v2183 = vunpack.c.h.b16 %v2022
      %v2184 = vunpack.c.l.b16 %v2023
      %v2185 = vunpack.c.l.b16 %v2024
      %v2186 = vunpack.c.h.b16 %v2024
      %v2187 = vunpack.c.l.b16 %v2025
      %v2188 = vunpack.c.l.b16 %v2026
      %v2189 = vunpack.c.h.b16 %v2026
      %v2190 = vunpack.c.l.b16 %v2027
      %v2191 = vunpack.c.l.b16 %v2028
      %v2192 = vunpack.c.h.b16 %v2028
      %v2193 = vunpack.c.l.b16 %v2029
      %v2194 = vunpack.c.l.b16 %v2030
      %v2195 = vunpack.c.h.b16 %v2030
      %v2196 = vunpack.c.l.b16 %v2031
      %v2197 = vunpack.c.l.b16 %v2032
      %v2198 = vunpack.c.h.b16 %v2032
      %v2199 = vunpack.c.l.b16 %v2033
      %v2200 = vunpack.c.l.b16 %v2034
      %v2201 = vunpack.c.h.b16 %v2034
      %v2202 = vunpack.c.l.b16 %v2035
      %v2203 = vunpack.c.l.b16 %v2036
      %v2204 = vunpack.c.h.b16 %v2036
      %v2205 = vunpack.c.l.b16 %v2037
      %v2206 = vunpack.c.l.b16 %v2038
      %v2207 = vunpack.c.h.b16 %v2038
      %v2208 = vunpack.c.l.b16 %v2039
      %v2209 = vunpack.c.l.b16 %v2040
      %v2210 = vunpack.c.h.b16 %v2040
      %v2211 = vunpack.c.l.b16 %v2041
      %v2212 = vunpack.c.l.b16 %v2042
      %v2213 = vunpack.c.h.b16 %v2042
      %v2214 = vunpack.c.l.b16 %v2043
      %v2215 = vunpack.c.l.b16 %v2044
      %v2216 = vunpack.c.h.b16 %v2044
      %v2217 = vunpack.c.l.b16 %v2045
      %v2218 = vunpack.c.l.b16 %v2046
      %v2219 = vunpack.c.h.b16 %v2046
      %v2220 = vunpack.c.l.b16 %v2047
      %v2221 = vunpack.c.l.b16 %v2048
      %v2222 = vunpack.c.h.b16 %v2048
      %v2223 = vunpack.c.l.b16 %v2049
      %v2224 = vunpack.c.l.b16 %v2050
      %v2225 = vunpack.c.h.b16 %v2050
      %v2226 = vunpack.c.l.b16 %v2051
      %v2227 = vunpack.c.l.b16 %v2052
      %v2228 = vunpack.c.h.b16 %v2052
      %v2229 = vunpack.c.l.b16 %v2053
      %v2230 = vunpack.c.l.b16 %v2054
      %v2231 = vunpack.c.h.b16 %v2054
      %v2232 = vunpack.c.l.b16 %v2055
      %v2233 = vunpack.c.l.b16 %v2056
      %v2234 = vunpack.c.h.b16 %v2056
      %v2235 = vunpack.c.l.b16 %v2057
      %v2236 = vunpack.c.l.b16 %v2058
      %v2237 = vunpack.c.h.b16 %v2058
      %v2238 = vunpack.c.l.b16 %v2059
      %v2239 = vunpack.c.l.b16 %v2060
      %v2240 = vunpack.c.h.b16 %v2060
      %v2241 = vunpack.c.l.b16 %v2061
      %v2242 = vpack.c.b16 %v2137, %v2134
      %v2243 = vpack.c.b16 %v2138, %v2135
      %v2244 = vpack.c.b16 %v2139, %v2136
      %v2245 = vpack.c.b16 %v2143, %v2140
      %v2246 = vpack.c.b16 %v2144, %v2141
      %v2247 = vpack.c.b16 %v2145, %v2142
      %v2248 = vpack.c.b16 %v2149, %v2146
      %v2249 = vpack.c.b16 %v2150, %v2147
      %v2250 = vpack.c.b16 %v2151, %v2148
      %v2251 = vpack.c.b16 %v2155, %v2152
      %v2252 = vpack.c.b16 %v2156, %v2153
      %v2253 = vpack.c.b16 %v2157, %v2154
      %v2254 = vpack.c.b16 %v2161, %v2158
      %v2255 = vpack.c.b16 %v2162, %v2159
      %v2256 = vpack.c.b16 %v2163, %v2160
      %v2257 = vpack.c.b16 %v2167, %v2164
      %v2258 = vpack.c.b16 %v2168, %v2165
      %v2259 = vpack.c.b16 %v2169, %v2166
      %v2260 = vpack.c.b16 %v2173, %v2170
      %v2261 = vpack.c.b16 %v2174, %v2171
      %v2262 = vpack.c.b16 %v2175, %v2172
      %v2263 = vpack.c.b16 %v2179, %v2176
      %v2264 = vpack.c.b16 %v2180, %v2177
      %v2265 = vpack.c.b16 %v2181, %v2178
      %v2266 = vpack.c.b16 %v2185, %v2182
      %v2267 = vpack.c.b16 %v2186, %v2183
      %v2268 = vpack.c.b16 %v2187, %v2184
      %v2269 = vpack.c.b16 %v2191, %v2188
      %v2270 = vpack.c.b16 %v2192, %v2189
      %v2271 = vpack.c.b16 %v2193, %v2190
      %v2272 = vpack.c.b16 %v2197, %v2194
      %v2273 = vpack.c.b16 %v2198, %v2195
      %v2274 = vpack.c.b16 %v2199, %v2196
      %v2275 = vpack.c.b16 %v2203, %v2200
      %v2276 = vpack.c.b16 %v2204, %v2201
      %v2277 = vpack.c.b16 %v2205, %v2202
      %v2278 = vpack.c.b16 %v2209, %v2206
      %v2279 = vpack.c.b16 %v2210, %v2207
      %v2280 = vpack.c.b16 %v2211, %v2208
      %v2281 = vpack.c.b16 %v2215, %v2212
      %v2282 = vpack.c.b16 %v2216, %v2213
      %v2283 = vpack.c.b16 %v2217, %v2214
      %v2284 = vpack.c.b16 %v2221, %v2218
      %v2285 = vpack.c.b16 %v2222, %v2219
      %v2286 = vpack.c.b16 %v2223, %v2220
      %v2287 = vpack.c.b16 %v2227, %v2224
      %v2288 = vpack.c.b16 %v2228, %v2225
      %v2289 = vpack.c.b16 %v2229, %v2226
      %v2290 = vpack.c.b16 %v2233, %v2230
      %v2291 = vpack.c.b16 %v2234, %v2231
      %v2292 = vpack.c.b16 %v2235, %v2232
      %v2293 = vpack.c.b16 %v2239, %v2236
      %v2294 = vpack.c.b16 %v2240, %v2237
      %v2295 = vpack.c.b16 %v2241, %v2238
      %vm2347 = vcmask 211968
      %v2349 = vsel %vm2347, %v1985, 0
      %v2352 = vsel %vm2347, %v1988, 0
      %vm2354 = vcmask 1044480
      %v2356 = vsel %vm2354, %v2293, 0
      %v2359 = vsel %vm2354, %v2294, 0
      %v2362 = vsel %vm2354, %v2295, 0
      %2364 = vmatpush.bf16.msra.mxu0 %v2263
      %2365 = vmatpush.bf16.msra.mxu0 %v2260
      %2366 = vmatpush.bf16.msra.mxu0 %v2257
      %2367 = vmatpush.bf16.msra.mxu0 %v2254
      %2368 = vmatpush.bf16.msra.mxu0 %v2251
      %2369 = vmatpush.bf16.msra.mxu0 %v2248
      %2370 = vmatpush.bf16.msra.mxu0 %v2245
      %2371 = vmatpush.bf16.msra.mxu0 %v2242
      %2372 = vmatmul.bf16.gmra.mxu0 %v1983
      %v2373 = vpop.f32.mrf.mxu0
      %v2374 = vadd.f32 0.0, %v2373
      %v2375 = vpop.f32.mrf.mxu0
      %v2376 = vadd.f32 0.0, %v2375
      %2377 = vmatmul.bf16.gmra.mxu0 %v1986
      %v2378 = vpop.f32.mrf.mxu0
      %v2379 = vadd.f32 0.0, %v2378
      %v2380 = vpop.f32.mrf.mxu0
      %2381 = vdwg.mxu0
      %2382 = vmatpush.bf16.msra.mxu0 %v2287
      %2383 = vmatpush.bf16.msra.mxu0 %v2284
      %2384 = vmatpush.bf16.msra.mxu0 %v2281
      %2385 = vmatpush.bf16.msra.mxu0 %v2278
      %2386 = vmatpush.bf16.msra.mxu0 %v2275
      %2387 = vmatpush.bf16.msra.mxu0 %v2272
      %2388 = vmatpush.bf16.msra.mxu0 %v2269
      %2389 = vmatpush.bf16.msra.mxu0 %v2266
      %2390 = vmatmul.bf16.gmra.mxu0 %v1984
      %v2391 = vpop.f32.mrf.mxu0
      %v2392 = vadd.f32 %v2374, %v2391
      %v2393 = vpop.f32.mrf.mxu0
      %v2394 = vadd.f32 %v2376, %v2393
      %2395 = vmatmul.bf16.gmra.mxu0 %v1987
      %v2396 = vpop.f32.mrf.mxu0
      %v2397 = vadd.f32 %v2379, %v2396
      %v2398 = vpop.f32.mrf.mxu0
      %2399 = vdwg.mxu0
      %2400 = vmatpush.bf16.msra.mxu0 0
      %2401 = vmatpush.bf16.msra.mxu0 0
      %2402 = vmatpush.bf16.msra.mxu0 0
      %2403 = vmatpush.bf16.msra.mxu0 0
      %2404 = vmatpush.bf16.msra.mxu0 0
      %2405 = vmatpush.bf16.msra.mxu0 0
      %2406 = vmatpush.bf16.msra.mxu0 %v2356
      %2407 = vmatpush.bf16.msra.mxu0 %v2290
      %2408 = vmatmul.bf16.gmra.mxu0 %v2349
      %v2409 = vpop.f32.mrf.mxu0
      %v2410 = vadd.f32 %v2392, %v2409
      %v2411 = vpop.f32.mrf.mxu0
      %v2412 = vadd.f32 %v2394, %v2411
      %2413 = vmatmul.bf16.gmra.mxu0 %v2352
      %v2414 = vpop.f32.mrf.mxu0
      %v2415 = vadd.f32 %v2397, %v2414
      %v2416 = vpop.f32.mrf.mxu0
      %2417 = vdwg.mxu0
      %2418 = vmatpush.bf16.msra.mxu0 %v2264
      %2419 = vmatpush.bf16.msra.mxu0 %v2261
      %2420 = vmatpush.bf16.msra.mxu0 %v2258
      %2421 = vmatpush.bf16.msra.mxu0 %v2255
      %2422 = vmatpush.bf16.msra.mxu0 %v2252
      %2423 = vmatpush.bf16.msra.mxu0 %v2249
      %2424 = vmatpush.bf16.msra.mxu0 %v2246
      %2425 = vmatpush.bf16.msra.mxu0 %v2243
      %2426 = vmatmul.bf16.gmra.mxu0 %v1983
      %v2427 = vpop.f32.mrf.mxu0
      %v2428 = vadd.f32 0.0, %v2427
      %v2429 = vpop.f32.mrf.mxu0
      %v2430 = vadd.f32 0.0, %v2429
      %2431 = vmatmul.bf16.gmra.mxu0 %v1986
      %v2432 = vpop.f32.mrf.mxu0
      %v2433 = vadd.f32 0.0, %v2432
      %v2434 = vpop.f32.mrf.mxu0
      %2435 = vdwg.mxu0
      %2436 = vmatpush.bf16.msra.mxu0 %v2288
      %2437 = vmatpush.bf16.msra.mxu0 %v2285
      %2438 = vmatpush.bf16.msra.mxu0 %v2282
      %2439 = vmatpush.bf16.msra.mxu0 %v2279
      %2440 = vmatpush.bf16.msra.mxu0 %v2276
      %2441 = vmatpush.bf16.msra.mxu0 %v2273
      %2442 = vmatpush.bf16.msra.mxu0 %v2270
      %2443 = vmatpush.bf16.msra.mxu0 %v2267
      %2444 = vmatmul.bf16.gmra.mxu0 %v1984
      %v2445 = vpop.f32.mrf.mxu0
      %v2446 = vadd.f32 %v2428, %v2445
      %v2447 = vpop.f32.mrf.mxu0
      %v2448 = vadd.f32 %v2430, %v2447
      %2449 = vmatmul.bf16.gmra.mxu0 %v1987
      %v2450 = vpop.f32.mrf.mxu0
      %v2451 = vadd.f32 %v2433, %v2450
      %v2452 = vpop.f32.mrf.mxu0
      %2453 = vdwg.mxu0
      %2454 = vmatpush.bf16.msra.mxu0 0
      %2455 = vmatpush.bf16.msra.mxu0 0
      %2456 = vmatpush.bf16.msra.mxu0 0
      %2457 = vmatpush.bf16.msra.mxu0 0
      %2458 = vmatpush.bf16.msra.mxu0 0
      %2459 = vmatpush.bf16.msra.mxu0 0
      %2460 = vmatpush.bf16.msra.mxu0 %v2359
      %2461 = vmatpush.bf16.msra.mxu0 %v2291
      %2462 = vmatmul.bf16.gmra.mxu0 %v2349
      %v2463 = vpop.f32.mrf.mxu0
      %v2464 = vadd.f32 %v2446, %v2463
      %v2465 = vpop.f32.mrf.mxu0
      %v2466 = vadd.f32 %v2448, %v2465
      %2467 = vmatmul.bf16.gmra.mxu0 %v2352
      %v2468 = vpop.f32.mrf.mxu0
      %v2469 = vadd.f32 %v2451, %v2468
      %v2470 = vpop.f32.mrf.mxu0
      %2471 = vdwg.mxu0
      %2472 = vmatpush.bf16.msra.mxu0 %v2265
      %2473 = vmatpush.bf16.msra.mxu0 %v2262
      %2474 = vmatpush.bf16.msra.mxu0 %v2259
      %2475 = vmatpush.bf16.msra.mxu0 %v2256
      %2476 = vmatpush.bf16.msra.mxu0 %v2253
      %2477 = vmatpush.bf16.msra.mxu0 %v2250
      %2478 = vmatpush.bf16.msra.mxu0 %v2247
      %2479 = vmatpush.bf16.msra.mxu0 %v2244
      %2480 = vmatmul.bf16.gmra.mxu0 %v1983
      %v2481 = vpop.f32.mrf.mxu0
      %v2482 = vadd.f32 0.0, %v2481
      %v2483 = vpop.f32.mrf.mxu0
      %v2484 = vadd.f32 0.0, %v2483
      %2485 = vmatmul.bf16.gmra.mxu0 %v1986
      %v2486 = vpop.f32.mrf.mxu0
      %v2487 = vadd.f32 0.0, %v2486
      %v2488 = vpop.f32.mrf.mxu0
      %2489 = vdwg.mxu0
      %2490 = vmatpush.bf16.msra.mxu0 %v2289
      %2491 = vmatpush.bf16.msra.mxu0 %v2286
      %2492 = vmatpush.bf16.msra.mxu0 %v2283
      %2493 = vmatpush.bf16.msra.mxu0 %v2280
      %2494 = vmatpush.bf16.msra.mxu0 %v2277
      %2495 = vmatpush.bf16.msra.mxu0 %v2274
      %2496 = vmatpush.bf16.msra.mxu0 %v2271
      %2497 = vmatpush.bf16.msra.mxu0 %v2268
      %2498 = vmatmul.bf16.gmra.mxu0 %v1984
      %v2499 = vpop.f32.mrf.mxu0
      %v2500 = vadd.f32 %v2482, %v2499
      %v2501 = vpop.f32.mrf.mxu0
      %v2502 = vadd.f32 %v2484, %v2501
      %2503 = vmatmul.bf16.gmra.mxu0 %v1987
      %v2504 = vpop.f32.mrf.mxu0
      %v2505 = vadd.f32 %v2487, %v2504
      %v2506 = vpop.f32.mrf.mxu0
      %2507 = vdwg.mxu0
      %2508 = vmatpush.bf16.msra.mxu0 0
      %2509 = vmatpush.bf16.msra.mxu0 0
      %2510 = vmatpush.bf16.msra.mxu0 0
      %2511 = vmatpush.bf16.msra.mxu0 0
      %2512 = vmatpush.bf16.msra.mxu0 0
      %2513 = vmatpush.bf16.msra.mxu0 0
      %2514 = vmatpush.bf16.msra.mxu0 %v2362
      %2515 = vmatpush.bf16.msra.mxu0 %v2292
      %2516 = vmatmul.bf16.gmra.mxu0 %v2349
      %v2517 = vpop.f32.mrf.mxu0
      %v2518 = vadd.f32 %v2500, %v2517
      %v2519 = vpop.f32.mrf.mxu0
      %v2520 = vadd.f32 %v2502, %v2519
      %2521 = vmatmul.bf16.gmra.mxu0 %v2352
      %v2522 = vpop.f32.mrf.mxu0
      %v2523 = vadd.f32 %v2505, %v2522
      %v2524 = vpop.f32.mrf.mxu0
      %2525 = vdwg.mxu0
      %v2598 = vunpack.c.l.b16 %v1839
      %v2599 = vunpack.c.h.b16 %v1839
      %v2600 = vunpack.c.l.b16 %v1840
      %v2601 = vunpack.c.l.b16 %v1841
      %v2602 = vunpack.c.h.b16 %v1841
      %v2603 = vunpack.c.l.b16 %v1842
      %v2604 = vunpack.c.l.b16 %v1843
      %v2605 = vunpack.c.h.b16 %v1843
      %v2606 = vunpack.c.l.b16 %v1844
      %v2607 = vunpack.c.l.b16 %v1845
      %v2608 = vunpack.c.h.b16 %v1845
      %v2609 = vunpack.c.l.b16 %v1846
      %v2610 = vunpack.c.l.b16 %v1847
      %v2611 = vunpack.c.h.b16 %v1847
      %v2612 = vunpack.c.l.b16 %v1848
      %v2613 = vunpack.c.l.b16 %v1849
      %v2614 = vunpack.c.h.b16 %v1849
      %v2615 = vunpack.c.l.b16 %v1850
      %v2616 = vunpack.c.l.b16 %v1851
      %v2617 = vunpack.c.h.b16 %v1851
      %v2618 = vunpack.c.l.b16 %v1852
      %v2619 = vunpack.c.l.b16 %v1853
      %v2620 = vunpack.c.h.b16 %v1853
      %v2621 = vunpack.c.l.b16 %v1854
      %v2622 = vunpack.c.l.b16 %v1855
      %v2623 = vunpack.c.h.b16 %v1855
      %v2624 = vunpack.c.l.b16 %v1856
      %v2625 = vunpack.c.l.b16 %v1857
      %v2626 = vunpack.c.h.b16 %v1857
      %v2627 = vunpack.c.l.b16 %v1858
      %v2628 = vunpack.c.l.b16 %v1859
      %v2629 = vunpack.c.h.b16 %v1859
      %v2630 = vunpack.c.l.b16 %v1860
      %v2631 = vunpack.c.l.b16 %v1861
      %v2632 = vunpack.c.h.b16 %v1861
      %v2633 = vunpack.c.l.b16 %v1862
      %v2634 = vunpack.c.l.b16 %v1863
      %v2635 = vunpack.c.h.b16 %v1863
      %v2636 = vunpack.c.l.b16 %v1864
      %v2637 = vunpack.c.l.b16 %v1865
      %v2638 = vunpack.c.h.b16 %v1865
      %v2639 = vunpack.c.l.b16 %v1866
      %v2640 = vunpack.c.l.b16 %v1867
      %v2641 = vunpack.c.h.b16 %v1867
      %v2642 = vunpack.c.l.b16 %v1868
      %v2643 = vunpack.c.l.b16 %v1869
      %v2644 = vunpack.c.h.b16 %v1869
      %v2645 = vunpack.c.l.b16 %v1870
      %v2646 = vunpack.c.l.b16 %v1871
      %v2647 = vunpack.c.h.b16 %v1871
      %v2648 = vunpack.c.l.b16 %v1872
      %v2649 = vunpack.c.l.b16 %v1873
      %v2650 = vunpack.c.h.b16 %v1873
      %v2651 = vunpack.c.l.b16 %v1874
      %v2652 = vunpack.c.l.b16 %v1875
      %v2653 = vunpack.c.h.b16 %v1875
      %v2654 = vunpack.c.l.b16 %v1876
      %v2655 = vunpack.c.l.b16 %v1877
      %v2656 = vunpack.c.h.b16 %v1877
      %v2657 = vunpack.c.l.b16 %v1878
      %v2658 = vunpack.c.l.b16 %v1879
      %v2659 = vunpack.c.h.b16 %v1879
      %v2660 = vunpack.c.l.b16 %v1880
      %v2661 = vunpack.c.l.b16 %v1881
      %v2662 = vunpack.c.h.b16 %v1881
      %v2663 = vunpack.c.l.b16 %v1882
      %v2664 = vunpack.c.l.b16 %v1883
      %v2665 = vunpack.c.h.b16 %v1883
      %v2666 = vunpack.c.l.b16 %v1884
      %v2667 = vunpack.c.l.b16 %v1885
      %v2668 = vunpack.c.h.b16 %v1885
      %v2669 = vunpack.c.l.b16 %v1886
      %v2670 = vunpack.c.l.b16 %v1887
      %v2671 = vunpack.c.h.b16 %v1887
      %v2672 = vunpack.c.l.b16 %v1888
      %v2673 = vunpack.c.l.b16 %v1889
      %v2674 = vunpack.c.h.b16 %v1889
      %v2675 = vunpack.c.l.b16 %v1890
      %v2676 = vunpack.c.l.b16 %v1891
      %v2677 = vunpack.c.h.b16 %v1891
      %v2678 = vunpack.c.l.b16 %v1892
      %v2679 = vunpack.c.l.b16 %v1893
      %v2680 = vunpack.c.h.b16 %v1893
      %v2681 = vunpack.c.l.b16 %v1894
      %v2682 = vunpack.c.l.b16 %v1895
      %v2683 = vunpack.c.h.b16 %v1895
      %v2684 = vunpack.c.l.b16 %v1896
      %v2685 = vunpack.c.l.b16 %v1897
      %v2686 = vunpack.c.h.b16 %v1897
      %v2687 = vunpack.c.l.b16 %v1898
      %v2688 = vunpack.c.l.b16 %v1899
      %v2689 = vunpack.c.h.b16 %v1899
      %v2690 = vunpack.c.l.b16 %v1900
      %v2691 = vunpack.c.l.b16 %v1901
      %v2692 = vunpack.c.h.b16 %v1901
      %v2693 = vunpack.c.l.b16 %v1902
      %v2694 = vunpack.c.l.b16 %v1903
      %v2695 = vunpack.c.h.b16 %v1903
      %v2696 = vunpack.c.l.b16 %v1904
      %v2697 = vunpack.c.l.b16 %v1905
      %v2698 = vunpack.c.h.b16 %v1905
      %v2699 = vunpack.c.l.b16 %v1906
      %v2700 = vunpack.c.l.b16 %v1907
      %v2701 = vunpack.c.h.b16 %v1907
      %v2702 = vunpack.c.l.b16 %v1908
      %v2703 = vunpack.c.l.b16 %v1909
      %v2704 = vunpack.c.h.b16 %v1909
      %v2705 = vunpack.c.l.b16 %v1910
      %v2706 = vpack.c.b16 %v2601, %v2598
      %v2707 = vpack.c.b16 %v2602, %v2599
      %v2708 = vpack.c.b16 %v2603, %v2600
      %v2709 = vpack.c.b16 %v2607, %v2604
      %v2710 = vpack.c.b16 %v2608, %v2605
      %v2711 = vpack.c.b16 %v2609, %v2606
      %v2712 = vpack.c.b16 %v2613, %v2610
      %v2713 = vpack.c.b16 %v2614, %v2611
      %v2714 = vpack.c.b16 %v2615, %v2612
      %v2715 = vpack.c.b16 %v2619, %v2616
      %v2716 = vpack.c.b16 %v2620, %v2617
      %v2717 = vpack.c.b16 %v2621, %v2618
      %v2718 = vpack.c.b16 %v2625, %v2622
      %v2719 = vpack.c.b16 %v2626, %v2623
      %v2720 = vpack.c.b16 %v2627, %v2624
      %v2721 = vpack.c.b16 %v2631, %v2628
      %v2722 = vpack.c.b16 %v2632, %v2629
      %v2723 = vpack.c.b16 %v2633, %v2630
      %v2724 = vpack.c.b16 %v2637, %v2634
      %v2725 = vpack.c.b16 %v2638, %v2635
      %v2726 = vpack.c.b16 %v2639, %v2636
      %v2727 = vpack.c.b16 %v2643, %v2640
      %v2728 = vpack.c.b16 %v2644, %v2641
      %v2729 = vpack.c.b16 %v2645, %v2642
      %v2730 = vpack.c.b16 %v2649, %v2646
      %v2731 = vpack.c.b16 %v2650, %v2647
      %v2732 = vpack.c.b16 %v2651, %v2648
      %v2733 = vpack.c.b16 %v2655, %v2652
      %v2734 = vpack.c.b16 %v2656, %v2653
      %v2735 = vpack.c.b16 %v2657, %v2654
      %v2736 = vpack.c.b16 %v2661, %v2658
      %v2737 = vpack.c.b16 %v2662, %v2659
      %v2738 = vpack.c.b16 %v2663, %v2660
      %v2739 = vpack.c.b16 %v2667, %v2664
      %v2740 = vpack.c.b16 %v2668, %v2665
      %v2741 = vpack.c.b16 %v2669, %v2666
      %v2742 = vpack.c.b16 %v2673, %v2670
      %v2743 = vpack.c.b16 %v2674, %v2671
      %v2744 = vpack.c.b16 %v2675, %v2672
      %v2745 = vpack.c.b16 %v2679, %v2676
      %v2746 = vpack.c.b16 %v2680, %v2677
      %v2747 = vpack.c.b16 %v2681, %v2678
      %v2748 = vpack.c.b16 %v2685, %v2682
      %v2749 = vpack.c.b16 %v2686, %v2683
      %v2750 = vpack.c.b16 %v2687, %v2684
      %v2751 = vpack.c.b16 %v2691, %v2688
      %v2752 = vpack.c.b16 %v2692, %v2689
      %v2753 = vpack.c.b16 %v2693, %v2690
      %v2754 = vpack.c.b16 %v2697, %v2694
      %v2755 = vpack.c.b16 %v2698, %v2695
      %v2756 = vpack.c.b16 %v2699, %v2696
      %v2757 = vpack.c.b16 %v2703, %v2700
      %v2758 = vpack.c.b16 %v2704, %v2701
      %v2759 = vpack.c.b16 %v2705, %v2702
      %v2812 = vsel %vm2347, %v1835, 0
      %v2815 = vsel %vm2347, %v1838, 0
      %v2818 = vsel %vm2354, %v2757, 0
      %v2821 = vsel %vm2354, %v2758, 0
      %v2824 = vsel %vm2354, %v2759, 0
      %2826 = vmatpush.bf16.msra.mxu0 %v2727
      %2827 = vmatpush.bf16.msra.mxu0 %v2724
      %2828 = vmatpush.bf16.msra.mxu0 %v2721
      %2829 = vmatpush.bf16.msra.mxu0 %v2718
      %2830 = vmatpush.bf16.msra.mxu0 %v2715
      %2831 = vmatpush.bf16.msra.mxu0 %v2712
      %2832 = vmatpush.bf16.msra.mxu0 %v2709
      %2833 = vmatpush.bf16.msra.mxu0 %v2706
      %2834 = vmatmul.bf16.gmra.mxu0 %v1833
      %v2835 = vpop.f32.mrf.mxu0
      %v2836 = vadd.f32 %v2410, %v2835
      %v2837 = vpop.f32.mrf.mxu0
      %v2838 = vadd.f32 %v2412, %v2837
      %2839 = vmatmul.bf16.gmra.mxu0 %v1836
      %v2840 = vpop.f32.mrf.mxu0
      %v2841 = vadd.f32 %v2415, %v2840
      %v2842 = vpop.f32.mrf.mxu0
      %2843 = vdwg.mxu0
      %2844 = vmatpush.bf16.msra.mxu0 %v2751
      %2845 = vmatpush.bf16.msra.mxu0 %v2748
      %2846 = vmatpush.bf16.msra.mxu0 %v2745
      %2847 = vmatpush.bf16.msra.mxu0 %v2742
      %2848 = vmatpush.bf16.msra.mxu0 %v2739
      %2849 = vmatpush.bf16.msra.mxu0 %v2736
      %2850 = vmatpush.bf16.msra.mxu0 %v2733
      %2851 = vmatpush.bf16.msra.mxu0 %v2730
      %2852 = vmatmul.bf16.gmra.mxu0 %v1834
      %v2853 = vpop.f32.mrf.mxu0
      %v2854 = vadd.f32 %v2836, %v2853
      %v2855 = vpop.f32.mrf.mxu0
      %v2856 = vadd.f32 %v2838, %v2855
      %2857 = vmatmul.bf16.gmra.mxu0 %v1837
      %v2858 = vpop.f32.mrf.mxu0
      %v2859 = vadd.f32 %v2841, %v2858
      %v2860 = vpop.f32.mrf.mxu0
      %2861 = vdwg.mxu0
      %2862 = vmatpush.bf16.msra.mxu0 0
      %2863 = vmatpush.bf16.msra.mxu0 0
      %2864 = vmatpush.bf16.msra.mxu0 0
      %2865 = vmatpush.bf16.msra.mxu0 0
      %2866 = vmatpush.bf16.msra.mxu0 0
      %2867 = vmatpush.bf16.msra.mxu0 0
      %2868 = vmatpush.bf16.msra.mxu0 %v2818
      %2869 = vmatpush.bf16.msra.mxu0 %v2754
      %2870 = vmatmul.bf16.gmra.mxu0 %v2812
      %v2871 = vpop.f32.mrf.mxu0
      %v2872 = vadd.f32 %v2854, %v2871
      %v2873 = vpop.f32.mrf.mxu0
      %v2874 = vadd.f32 %v2856, %v2873
      %2875 = vmatmul.bf16.gmra.mxu0 %v2815
      %v2876 = vpop.f32.mrf.mxu0
      %v2877 = vadd.f32 %v2859, %v2876
      %v2878 = vpop.f32.mrf.mxu0
      %2879 = vdwg.mxu0
      %2880 = vmatpush.bf16.msra.mxu0 %v2728
      %2881 = vmatpush.bf16.msra.mxu0 %v2725
      %2882 = vmatpush.bf16.msra.mxu0 %v2722
      %2883 = vmatpush.bf16.msra.mxu0 %v2719
      %2884 = vmatpush.bf16.msra.mxu0 %v2716
      %2885 = vmatpush.bf16.msra.mxu0 %v2713
      %2886 = vmatpush.bf16.msra.mxu0 %v2710
      %2887 = vmatpush.bf16.msra.mxu0 %v2707
      %2888 = vmatmul.bf16.gmra.mxu0 %v1833
      %v2889 = vpop.f32.mrf.mxu0
      %v2890 = vadd.f32 %v2464, %v2889
      %v2891 = vpop.f32.mrf.mxu0
      %v2892 = vadd.f32 %v2466, %v2891
      %2893 = vmatmul.bf16.gmra.mxu0 %v1836
      %v2894 = vpop.f32.mrf.mxu0
      %v2895 = vadd.f32 %v2469, %v2894
      %v2896 = vpop.f32.mrf.mxu0
      %2897 = vdwg.mxu0
      %2898 = vmatpush.bf16.msra.mxu0 %v2752
      %2899 = vmatpush.bf16.msra.mxu0 %v2749
      %2900 = vmatpush.bf16.msra.mxu0 %v2746
      %2901 = vmatpush.bf16.msra.mxu0 %v2743
      %2902 = vmatpush.bf16.msra.mxu0 %v2740
      %2903 = vmatpush.bf16.msra.mxu0 %v2737
      %2904 = vmatpush.bf16.msra.mxu0 %v2734
      %2905 = vmatpush.bf16.msra.mxu0 %v2731
      %2906 = vmatmul.bf16.gmra.mxu0 %v1834
      %v2907 = vpop.f32.mrf.mxu0
      %v2908 = vadd.f32 %v2890, %v2907
      %v2909 = vpop.f32.mrf.mxu0
      %v2910 = vadd.f32 %v2892, %v2909
      %2911 = vmatmul.bf16.gmra.mxu0 %v1837
      %v2912 = vpop.f32.mrf.mxu0
      %v2913 = vadd.f32 %v2895, %v2912
      %v2914 = vpop.f32.mrf.mxu0
      %2915 = vdwg.mxu0
      %2916 = vmatpush.bf16.msra.mxu0 0
      %2917 = vmatpush.bf16.msra.mxu0 0
      %2918 = vmatpush.bf16.msra.mxu0 0
      %2919 = vmatpush.bf16.msra.mxu0 0
      %2920 = vmatpush.bf16.msra.mxu0 0
      %2921 = vmatpush.bf16.msra.mxu0 0
      %2922 = vmatpush.bf16.msra.mxu0 %v2821
      %2923 = vmatpush.bf16.msra.mxu0 %v2755
      %2924 = vmatmul.bf16.gmra.mxu0 %v2812
      %v2925 = vpop.f32.mrf.mxu0
      %v2926 = vadd.f32 %v2908, %v2925
      %v2927 = vpop.f32.mrf.mxu0
      %v2928 = vadd.f32 %v2910, %v2927
      %2929 = vmatmul.bf16.gmra.mxu0 %v2815
      %v2930 = vpop.f32.mrf.mxu0
      %v2931 = vadd.f32 %v2913, %v2930
      %v2932 = vpop.f32.mrf.mxu0
      %2933 = vdwg.mxu0
      %2934 = vmatpush.bf16.msra.mxu0 %v2729
      %2935 = vmatpush.bf16.msra.mxu0 %v2726
      %2936 = vmatpush.bf16.msra.mxu0 %v2723
      %2937 = vmatpush.bf16.msra.mxu0 %v2720
      %2938 = vmatpush.bf16.msra.mxu0 %v2717
      %2939 = vmatpush.bf16.msra.mxu0 %v2714
      %2940 = vmatpush.bf16.msra.mxu0 %v2711
      %2941 = vmatpush.bf16.msra.mxu0 %v2708
      %2942 = vmatmul.bf16.gmra.mxu0 %v1833
      %v2943 = vpop.f32.mrf.mxu0
      %v2944 = vadd.f32 %v2518, %v2943
      %v2945 = vpop.f32.mrf.mxu0
      %v2946 = vadd.f32 %v2520, %v2945
      %2947 = vmatmul.bf16.gmra.mxu0 %v1836
      %v2948 = vpop.f32.mrf.mxu0
      %v2949 = vadd.f32 %v2523, %v2948
      %v2950 = vpop.f32.mrf.mxu0
      %2951 = vdwg.mxu0
      %2952 = vmatpush.bf16.msra.mxu0 %v2753
      %2953 = vmatpush.bf16.msra.mxu0 %v2750
      %2954 = vmatpush.bf16.msra.mxu0 %v2747
      %2955 = vmatpush.bf16.msra.mxu0 %v2744
      %2956 = vmatpush.bf16.msra.mxu0 %v2741
      %2957 = vmatpush.bf16.msra.mxu0 %v2738
      %2958 = vmatpush.bf16.msra.mxu0 %v2735
      %2959 = vmatpush.bf16.msra.mxu0 %v2732
      %2960 = vmatmul.bf16.gmra.mxu0 %v1834
      %v2961 = vpop.f32.mrf.mxu0
      %v2962 = vadd.f32 %v2944, %v2961
      %v2963 = vpop.f32.mrf.mxu0
      %v2964 = vadd.f32 %v2946, %v2963
      %2965 = vmatmul.bf16.gmra.mxu0 %v1837
      %v2966 = vpop.f32.mrf.mxu0
      %v2967 = vadd.f32 %v2949, %v2966
      %v2968 = vpop.f32.mrf.mxu0
      %2969 = vdwg.mxu0
      %2970 = vmatpush.bf16.msra.mxu0 0
      %2971 = vmatpush.bf16.msra.mxu0 0
      %2972 = vmatpush.bf16.msra.mxu0 0
      %2973 = vmatpush.bf16.msra.mxu0 0
      %2974 = vmatpush.bf16.msra.mxu0 0
      %2975 = vmatpush.bf16.msra.mxu0 0
      %2976 = vmatpush.bf16.msra.mxu0 %v2824
      %2977 = vmatpush.bf16.msra.mxu0 %v2756
      %2978 = vmatmul.bf16.gmra.mxu0 %v2812
      %v2979 = vpop.f32.mrf.mxu0
      %v2980 = vadd.f32 %v2962, %v2979
      %v2981 = vpop.f32.mrf.mxu0
      %v2982 = vadd.f32 %v2964, %v2981
      %2983 = vmatmul.bf16.gmra.mxu0 %v2815
      %v2984 = vpop.f32.mrf.mxu0
      %v2985 = vadd.f32 %v2967, %v2984
      %v2986 = vpop.f32.mrf.mxu0
      %2987 = vdwg.mxu0
      %s2988 = scalar_lea.vmem %s4, 24
      %v2989 = vld [vmem:[%s2988] sm:$0xf]
      %v2990 = vld [vmem:[%s2988 + $0x4] sm:$0xf]
      %v2991 = vld [vmem:[%s2988 + $0x8] sm:$0x7]
      %v2995 = vunpack.c.l.b16 %v2989
      %v2996 = vunpack.c.l.b16 %v2990
      %v2997 = vunpack.c.l.b16 %v2991
      %v2998 = vpack.c.b16 %v2996, %v2995
      %v2999 = vpack.c.b16 %v2997, %v2997
      %v3001 = vsel %vm1759, %v2998, 0
      %v3004 = vsel %vm1759, %v2999, 0
      %3006 = vmatpush.bf16.msra.mxu0 0
      %3007 = vmatpush.bf16.msra.mxu0 0
      %3008 = vmatpush.bf16.msra.mxu0 0
      %3009 = vmatpush.bf16.msra.mxu0 0
      %3010 = vmatpush.bf16.msra.mxu0 0
      %3011 = vmatpush.bf16.msra.mxu0 %v1771
      %3012 = vmatpush.bf16.msra.mxu0 %v1742
      %3013 = vmatpush.bf16.msra.mxu0 %v1739
      %3014 = vmatmul.bf16.gmra.mxu0 %v3001
      %v3015 = vpop.f32.mrf.mxu0
      %v3016 = vadd.f32 0.0, %v3015
      %v3017 = vpop.f32.mrf.mxu0
      %v3018 = vadd.f32 0.0, %v3017
      %3019 = vmatmul.bf16.gmra.mxu0 %v3004
      %v3020 = vpop.f32.mrf.mxu0
      %v3021 = vadd.f32 0.0, %v3020
      %v3022 = vpop.f32.mrf.mxu0
      %3023 = vdwg.mxu0
      %3024 = vmatpush.bf16.msra.mxu0 0
      %3025 = vmatpush.bf16.msra.mxu0 0
      %3026 = vmatpush.bf16.msra.mxu0 0
      %3027 = vmatpush.bf16.msra.mxu0 0
      %3028 = vmatpush.bf16.msra.mxu0 0
      %3029 = vmatpush.bf16.msra.mxu0 %v1774
      %3030 = vmatpush.bf16.msra.mxu0 %v1743
      %3031 = vmatpush.bf16.msra.mxu0 %v1740
      %3032 = vmatmul.bf16.gmra.mxu0 %v3001
      %v3033 = vpop.f32.mrf.mxu0
      %v3034 = vadd.f32 0.0, %v3033
      %v3035 = vpop.f32.mrf.mxu0
      %v3036 = vadd.f32 0.0, %v3035
      %3037 = vmatmul.bf16.gmra.mxu0 %v3004
      %v3038 = vpop.f32.mrf.mxu0
      %v3039 = vadd.f32 0.0, %v3038
      %v3040 = vpop.f32.mrf.mxu0
      %3041 = vdwg.mxu0
      %3042 = vmatpush.bf16.msra.mxu0 0
      %3043 = vmatpush.bf16.msra.mxu0 0
      %3044 = vmatpush.bf16.msra.mxu0 0
      %3045 = vmatpush.bf16.msra.mxu0 0
      %3046 = vmatpush.bf16.msra.mxu0 0
      %3047 = vmatpush.bf16.msra.mxu0 %v1777
      %3048 = vmatpush.bf16.msra.mxu0 %v1744
      %3049 = vmatpush.bf16.msra.mxu0 %v1741
      %3050 = vmatmul.bf16.gmra.mxu0 %v3001
      %v3051 = vpop.f32.mrf.mxu0
      %v3052 = vadd.f32 0.0, %v3051
      %v3053 = vpop.f32.mrf.mxu0
      %v3054 = vadd.f32 0.0, %v3053
      %3055 = vmatmul.bf16.gmra.mxu0 %v3004
      %v3056 = vpop.f32.mrf.mxu0
      %v3057 = vadd.f32 0.0, %v3056
      %v3058 = vpop.f32.mrf.mxu0
      %3059 = vdwg.mxu0
      %v3060 = vpack.c.bf16 %v3018, %v3016
      %v3061 = vpack.c.bf16 %v3036, %v3034
      %v3062 = vpack.c.bf16 %v3054, %v3052
      %v3063 = vpack.c.bf16 %v3021, %v3021
      %v3064 = vpack.c.bf16 %v3039, %v3039
      %v3065 = vpack.c.bf16 %v3057, %v3057
      %s3066 = scalar_lea.vmem %s5, 864
      %v3067 = vld [vmem:[%s3066] sm:$0xff]
      %v3068 = vld [vmem:[%s3066 + $0x8] sm:$0xf]
      %v3069 = vld [vmem:[%s3066 + $0xc] sm:$0xff]
      %v3070 = vld [vmem:[%s3066 + $0x14] sm:$0xf]
      %v3071 = vld [vmem:[%s3066 + $0x18] sm:$0xff]
      %v3072 = vld [vmem:[%s3066 + $0x20] sm:$0xf]
      %v3073 = vld [vmem:[%s3066 + $0x24] sm:$0xff]
      %v3074 = vld [vmem:[%s3066 + $0x2c] sm:$0xf]
      %v3075 = vld [vmem:[%s3066 + $0x30] sm:$0xff]
      %v3076 = vld [vmem:[%s3066 + $0x38] sm:$0xf]
      %v3077 = vld [vmem:[%s3066 + $0x3c] sm:$0xff]
      %v3078 = vld [vmem:[%s3066 + $0x44] sm:$0xf]
      %v3079 = vld [vmem:[%s3066 + $0x48] sm:$0xff]
      %v3080 = vld [vmem:[%s3066 + $0x50] sm:$0xf]
      %v3081 = vld [vmem:[%s3066 + $0x54] sm:$0xff]
      %v3082 = vld [vmem:[%s3066 + $0x5c] sm:$0xf]
      %v3083 = vld [vmem:[%s3066 + $0x60] sm:$0xff]
      %v3084 = vld [vmem:[%s3066 + $0x68] sm:$0xf]
      %v3085 = vld [vmem:[%s3066 + $0x6c] sm:$0xff]
      %v3086 = vld [vmem:[%s3066 + $0x74] sm:$0xf]
      %v3087 = vld [vmem:[%s3066 + $0x78] sm:$0xff]
      %v3088 = vld [vmem:[%s3066 + $0x80] sm:$0xf]
      %v3089 = vld [vmem:[%s3066 + $0x84] sm:$0xff]
      %v3090 = vld [vmem:[%s3066 + $0x8c] sm:$0xf]
      %v3091 = vld [vmem:[%s3066 + $0x90] sm:$0xff]
      %v3092 = vld [vmem:[%s3066 + $0x98] sm:$0xf]
      %v3093 = vld [vmem:[%s3066 + $0x9c] sm:$0xff]
      %v3094 = vld [vmem:[%s3066 + $0xa4] sm:$0xf]
      %v3095 = vld [vmem:[%s3066 + $0xa8] sm:$0xff]
      %v3096 = vld [vmem:[%s3066 + $0xb0] sm:$0xf]
      %v3097 = vld [vmem:[%s3066 + $0xb4] sm:$0xff]
      %v3098 = vld [vmem:[%s3066 + $0xbc] sm:$0xf]
      %v3099 = vld [vmem:[%s3066 + $0xc0] sm:$0xff]
      %v3100 = vld [vmem:[%s3066 + $0xc8] sm:$0xf]
      %v3101 = vld [vmem:[%s3066 + $0xcc] sm:$0xff]
      %v3102 = vld [vmem:[%s3066 + $0xd4] sm:$0xf]
      %v3103 = vld [vmem:[%s3066 + $0xd8] sm:$0xff]
      %v3104 = vld [vmem:[%s3066 + $0xe0] sm:$0xf]
      %v3105 = vld [vmem:[%s3066 + $0xe4] sm:$0xff]
      %v3106 = vld [vmem:[%s3066 + $0xec] sm:$0xf]
      %v3107 = vld [vmem:[%s3066 + $0xf0] sm:$0xff]
      %v3108 = vld [vmem:[%s3066 + $0xf8] sm:$0xf]
      %v3109 = vld [vmem:[%s3066 + $0xfc] sm:$0xff]
      %v3110 = vld [vmem:[%s3066 + $0x104] sm:$0xf]
      %v3111 = vld [vmem:[%s3066 + $0x108] sm:$0xff]
      %v3112 = vld [vmem:[%s3066 + $0x110] sm:$0xf]
      %v3113 = vld [vmem:[%s3066 + $0x114] sm:$0xff]
      %v3114 = vld [vmem:[%s3066 + $0x11c] sm:$0xf]
      %v3115 = vld [vmem:[%s3066 + $0x120] sm:$0xff]
      %v3116 = vld [vmem:[%s3066 + $0x128] sm:$0xf]
      %v3117 = vld [vmem:[%s3066 + $0x12c] sm:$0xff]
      %v3118 = vld [vmem:[%s3066 + $0x134] sm:$0xf]
      %v3119 = vld [vmem:[%s3066 + $0x138] sm:$0xff]
      %v3120 = vld [vmem:[%s3066 + $0x140] sm:$0xf]
      %v3121 = vld [vmem:[%s3066 + $0x144] sm:$0xff]
      %v3122 = vld [vmem:[%s3066 + $0x14c] sm:$0xf]
      %v3123 = vld [vmem:[%s3066 + $0x150] sm:$0xff]
      %v3124 = vld [vmem:[%s3066 + $0x158] sm:$0xf]
      %v3125 = vld [vmem:[%s3066 + $0x15c] sm:$0xff]
      %v3126 = vld [vmem:[%s3066 + $0x164] sm:$0xf]
      %v3127 = vld [vmem:[%s3066 + $0x168] sm:$0xff]
      %v3128 = vld [vmem:[%s3066 + $0x170] sm:$0xf]
      %v3129 = vld [vmem:[%s3066 + $0x174] sm:$0xff]
      %v3130 = vld [vmem:[%s3066 + $0x17c] sm:$0xf]
      %v3131 = vld [vmem:[%s3066 + $0x180] sm:$0xff]
      %v3132 = vld [vmem:[%s3066 + $0x188] sm:$0xf]
      %v3133 = vld [vmem:[%s3066 + $0x18c] sm:$0xff]
      %v3134 = vld [vmem:[%s3066 + $0x194] sm:$0xf]
      %v3135 = vld [vmem:[%s3066 + $0x198] sm:$0xff]
      %v3136 = vld [vmem:[%s3066 + $0x1a0] sm:$0xf]
      %v3137 = vld [vmem:[%s3066 + $0x1a4] sm:$0x11]
      %v3138 = vld [vmem:[%s3066 + $0x1ac] sm:$0x1]
      %v3211 = vunpack.c.l.b16 %v3067
      %v3212 = vunpack.c.h.b16 %v3067
      %v3213 = vunpack.c.l.b16 %v3068
      %v3214 = vunpack.c.l.b16 %v3069
      %v3215 = vunpack.c.h.b16 %v3069
      %v3216 = vunpack.c.l.b16 %v3070
      %v3217 = vunpack.c.l.b16 %v3071
      %v3218 = vunpack.c.h.b16 %v3071
      %v3219 = vunpack.c.l.b16 %v3072
      %v3220 = vunpack.c.l.b16 %v3073
      %v3221 = vunpack.c.h.b16 %v3073
      %v3222 = vunpack.c.l.b16 %v3074
      %v3223 = vunpack.c.l.b16 %v3075
      %v3224 = vunpack.c.h.b16 %v3075
      %v3225 = vunpack.c.l.b16 %v3076
      %v3226 = vunpack.c.l.b16 %v3077
      %v3227 = vunpack.c.h.b16 %v3077
      %v3228 = vunpack.c.l.b16 %v3078
      %v3229 = vunpack.c.l.b16 %v3079
      %v3230 = vunpack.c.h.b16 %v3079
      %v3231 = vunpack.c.l.b16 %v3080
      %v3232 = vunpack.c.l.b16 %v3081
      %v3233 = vunpack.c.h.b16 %v3081
      %v3234 = vunpack.c.l.b16 %v3082
      %v3235 = vunpack.c.l.b16 %v3083
      %v3236 = vunpack.c.h.b16 %v3083
      %v3237 = vunpack.c.l.b16 %v3084
      %v3238 = vunpack.c.l.b16 %v3085
      %v3239 = vunpack.c.h.b16 %v3085
      %v3240 = vunpack.c.l.b16 %v3086
      %v3241 = vunpack.c.l.b16 %v3087
      %v3242 = vunpack.c.h.b16 %v3087
      %v3243 = vunpack.c.l.b16 %v3088
      %v3244 = vunpack.c.l.b16 %v3089
      %v3245 = vunpack.c.h.b16 %v3089
      %v3246 = vunpack.c.l.b16 %v3090
      %v3247 = vunpack.c.l.b16 %v3091
      %v3248 = vunpack.c.h.b16 %v3091
      %v3249 = vunpack.c.l.b16 %v3092
      %v3250 = vunpack.c.l.b16 %v3093
      %v3251 = vunpack.c.h.b16 %v3093
      %v3252 = vunpack.c.l.b16 %v3094
      %v3253 = vunpack.c.l.b16 %v3095
      %v3254 = vunpack.c.h.b16 %v3095
      %v3255 = vunpack.c.l.b16 %v3096
      %v3256 = vunpack.c.l.b16 %v3097
      %v3257 = vunpack.c.h.b16 %v3097
      %v3258 = vunpack.c.l.b16 %v3098
      %v3259 = vunpack.c.l.b16 %v3099
      %v3260 = vunpack.c.h.b16 %v3099
      %v3261 = vunpack.c.l.b16 %v3100
      %v3262 = vunpack.c.l.b16 %v3101
      %v3263 = vunpack.c.h.b16 %v3101
      %v3264 = vunpack.c.l.b16 %v3102
      %v3265 = vunpack.c.l.b16 %v3103
      %v3266 = vunpack.c.h.b16 %v3103
      %v3267 = vunpack.c.l.b16 %v3104
      %v3268 = vunpack.c.l.b16 %v3105
      %v3269 = vunpack.c.h.b16 %v3105
      %v3270 = vunpack.c.l.b16 %v3106
      %v3271 = vunpack.c.l.b16 %v3107
      %v3272 = vunpack.c.h.b16 %v3107
      %v3273 = vunpack.c.l.b16 %v3108
      %v3274 = vunpack.c.l.b16 %v3109
      %v3275 = vunpack.c.h.b16 %v3109
      %v3276 = vunpack.c.l.b16 %v3110
      %v3277 = vunpack.c.l.b16 %v3111
      %v3278 = vunpack.c.h.b16 %v3111
      %v3279 = vunpack.c.l.b16 %v3112
      %v3280 = vunpack.c.l.b16 %v3113
      %v3281 = vunpack.c.h.b16 %v3113
      %v3282 = vunpack.c.l.b16 %v3114
      %v3283 = vunpack.c.l.b16 %v3115
      %v3284 = vunpack.c.h.b16 %v3115
      %v3285 = vunpack.c.l.b16 %v3116
      %v3286 = vunpack.c.l.b16 %v3117
      %v3287 = vunpack.c.h.b16 %v3117
      %v3288 = vunpack.c.l.b16 %v3118
      %v3289 = vunpack.c.l.b16 %v3119
      %v3290 = vunpack.c.h.b16 %v3119
      %v3291 = vunpack.c.l.b16 %v3120
      %v3292 = vunpack.c.l.b16 %v3121
      %v3293 = vunpack.c.h.b16 %v3121
      %v3294 = vunpack.c.l.b16 %v3122
      %v3295 = vunpack.c.l.b16 %v3123
      %v3296 = vunpack.c.h.b16 %v3123
      %v3297 = vunpack.c.l.b16 %v3124
      %v3298 = vunpack.c.l.b16 %v3125
      %v3299 = vunpack.c.h.b16 %v3125
      %v3300 = vunpack.c.l.b16 %v3126
      %v3301 = vunpack.c.l.b16 %v3127
      %v3302 = vunpack.c.h.b16 %v3127
      %v3303 = vunpack.c.l.b16 %v3128
      %v3304 = vunpack.c.l.b16 %v3129
      %v3305 = vunpack.c.h.b16 %v3129
      %v3306 = vunpack.c.l.b16 %v3130
      %v3307 = vunpack.c.l.b16 %v3131
      %v3308 = vunpack.c.h.b16 %v3131
      %v3309 = vunpack.c.l.b16 %v3132
      %v3310 = vunpack.c.l.b16 %v3133
      %v3311 = vunpack.c.h.b16 %v3133
      %v3312 = vunpack.c.l.b16 %v3134
      %v3313 = vunpack.c.l.b16 %v3135
      %v3314 = vunpack.c.h.b16 %v3135
      %v3315 = vunpack.c.l.b16 %v3136
      %v3316 = vunpack.c.l.b16 %v3137
      %v3317 = vunpack.c.h.b16 %v3137
      %v3318 = vunpack.c.l.b16 %v3138
      %v3319 = vpack.c.b16 %v3214, %v3211
      %v3320 = vpack.c.b16 %v3215, %v3212
      %v3321 = vpack.c.b16 %v3216, %v3213
      %v3322 = vpack.c.b16 %v3220, %v3217
      %v3323 = vpack.c.b16 %v3221, %v3218
      %v3324 = vpack.c.b16 %v3222, %v3219
      %v3325 = vpack.c.b16 %v3226, %v3223
      %v3326 = vpack.c.b16 %v3227, %v3224
      %v3327 = vpack.c.b16 %v3228, %v3225
      %v3328 = vpack.c.b16 %v3232, %v3229
      %v3329 = vpack.c.b16 %v3233, %v3230
      %v3330 = vpack.c.b16 %v3234, %v3231
      %v3331 = vpack.c.b16 %v3238, %v3235
      %v3332 = vpack.c.b16 %v3239, %v3236
      %v3333 = vpack.c.b16 %v3240, %v3237
      %v3334 = vpack.c.b16 %v3244, %v3241
      %v3335 = vpack.c.b16 %v3245, %v3242
      %v3336 = vpack.c.b16 %v3246, %v3243
      %v3337 = vpack.c.b16 %v3250, %v3247
      %v3338 = vpack.c.b16 %v3251, %v3248
      %v3339 = vpack.c.b16 %v3252, %v3249
      %v3340 = vpack.c.b16 %v3256, %v3253
      %v3341 = vpack.c.b16 %v3257, %v3254
      %v3342 = vpack.c.b16 %v3258, %v3255
      %v3343 = vpack.c.b16 %v3262, %v3259
      %v3344 = vpack.c.b16 %v3263, %v3260
      %v3345 = vpack.c.b16 %v3264, %v3261
      %v3346 = vpack.c.b16 %v3268, %v3265
      %v3347 = vpack.c.b16 %v3269, %v3266
      %v3348 = vpack.c.b16 %v3270, %v3267
      %v3349 = vpack.c.b16 %v3274, %v3271
      %v3350 = vpack.c.b16 %v3275, %v3272
      %v3351 = vpack.c.b16 %v3276, %v3273
      %v3352 = vpack.c.b16 %v3280, %v3277
      %v3353 = vpack.c.b16 %v3281, %v3278
      %v3354 = vpack.c.b16 %v3282, %v3279
      %v3355 = vpack.c.b16 %v3286, %v3283
      %v3356 = vpack.c.b16 %v3287, %v3284
      %v3357 = vpack.c.b16 %v3288, %v3285
      %v3358 = vpack.c.b16 %v3292, %v3289
      %v3359 = vpack.c.b16 %v3293, %v3290
      %v3360 = vpack.c.b16 %v3294, %v3291
      %v3361 = vpack.c.b16 %v3298, %v3295
      %v3362 = vpack.c.b16 %v3299, %v3296
      %v3363 = vpack.c.b16 %v3300, %v3297
      %v3364 = vpack.c.b16 %v3304, %v3301
      %v3365 = vpack.c.b16 %v3305, %v3302
      %v3366 = vpack.c.b16 %v3306, %v3303
      %v3367 = vpack.c.b16 %v3310, %v3307
      %v3368 = vpack.c.b16 %v3311, %v3308
      %v3369 = vpack.c.b16 %v3312, %v3309
      %v3370 = vpack.c.b16 %v3316, %v3313
      %v3371 = vpack.c.b16 %v3317, %v3314
      %v3372 = vpack.c.b16 %v3318, %v3315
      %v3425 = vsel %vm2347, %v3062, 0
      %v3428 = vsel %vm2347, %v3065, 0
      %v3431 = vsel %vm2354, %v3370, 0
      %v3434 = vsel %vm2354, %v3371, 0
      %v3437 = vsel %vm2354, %v3372, 0
      %3439 = vmatpush.bf16.msra.mxu0 %v3340
      %3440 = vmatpush.bf16.msra.mxu0 %v3337
      %3441 = vmatpush.bf16.msra.mxu0 %v3334
      %3442 = vmatpush.bf16.msra.mxu0 %v3331
      %3443 = vmatpush.bf16.msra.mxu0 %v3328
      %3444 = vmatpush.bf16.msra.mxu0 %v3325
      %3445 = vmatpush.bf16.msra.mxu0 %v3322
      %3446 = vmatpush.bf16.msra.mxu0 %v3319
      %3447 = vmatmul.bf16.gmra.mxu0 %v3060
      %v3448 = vpop.f32.mrf.mxu0
      %v3449 = vadd.f32 0.0, %v3448
      %v3450 = vpop.f32.mrf.mxu0
      %v3451 = vadd.f32 0.0, %v3450
      %3452 = vmatmul.bf16.gmra.mxu0 %v3063
      %v3453 = vpop.f32.mrf.mxu0
      %v3454 = vadd.f32 0.0, %v3453
      %v3455 = vpop.f32.mrf.mxu0
      %3456 = vdwg.mxu0
      %3457 = vmatpush.bf16.msra.mxu0 %v3364
      %3458 = vmatpush.bf16.msra.mxu0 %v3361
      %3459 = vmatpush.bf16.msra.mxu0 %v3358
      %3460 = vmatpush.bf16.msra.mxu0 %v3355
      %3461 = vmatpush.bf16.msra.mxu0 %v3352
      %3462 = vmatpush.bf16.msra.mxu0 %v3349
      %3463 = vmatpush.bf16.msra.mxu0 %v3346
      %3464 = vmatpush.bf16.msra.mxu0 %v3343
      %3465 = vmatmul.bf16.gmra.mxu0 %v3061
      %v3466 = vpop.f32.mrf.mxu0
      %v3467 = vadd.f32 %v3449, %v3466
      %v3468 = vpop.f32.mrf.mxu0
      %v3469 = vadd.f32 %v3451, %v3468
      %3470 = vmatmul.bf16.gmra.mxu0 %v3064
      %v3471 = vpop.f32.mrf.mxu0
      %v3472 = vadd.f32 %v3454, %v3471
      %v3473 = vpop.f32.mrf.mxu0
      %3474 = vdwg.mxu0
      %3475 = vmatpush.bf16.msra.mxu0 0
      %3476 = vmatpush.bf16.msra.mxu0 0
      %3477 = vmatpush.bf16.msra.mxu0 0
      %3478 = vmatpush.bf16.msra.mxu0 0
      %3479 = vmatpush.bf16.msra.mxu0 0
      %3480 = vmatpush.bf16.msra.mxu0 0
      %3481 = vmatpush.bf16.msra.mxu0 %v3431
      %3482 = vmatpush.bf16.msra.mxu0 %v3367
      %3483 = vmatmul.bf16.gmra.mxu0 %v3425
      %v3484 = vpop.f32.mrf.mxu0
      %v3485 = vadd.f32 %v3467, %v3484
      %v3486 = vpop.f32.mrf.mxu0
      %v3487 = vadd.f32 %v3469, %v3486
      %3488 = vmatmul.bf16.gmra.mxu0 %v3428
      %v3489 = vpop.f32.mrf.mxu0
      %v3490 = vadd.f32 %v3472, %v3489
      %v3491 = vpop.f32.mrf.mxu0
      %3492 = vdwg.mxu0
      %3493 = vmatpush.bf16.msra.mxu0 %v3341
      %3494 = vmatpush.bf16.msra.mxu0 %v3338
      %3495 = vmatpush.bf16.msra.mxu0 %v3335
      %3496 = vmatpush.bf16.msra.mxu0 %v3332
      %3497 = vmatpush.bf16.msra.mxu0 %v3329
      %3498 = vmatpush.bf16.msra.mxu0 %v3326
      %3499 = vmatpush.bf16.msra.mxu0 %v3323
      %3500 = vmatpush.bf16.msra.mxu0 %v3320
      %3501 = vmatmul.bf16.gmra.mxu0 %v3060
      %v3502 = vpop.f32.mrf.mxu0
      %v3503 = vadd.f32 0.0, %v3502
      %v3504 = vpop.f32.mrf.mxu0
      %v3505 = vadd.f32 0.0, %v3504
      %3506 = vmatmul.bf16.gmra.mxu0 %v3063
      %v3507 = vpop.f32.mrf.mxu0
      %v3508 = vadd.f32 0.0, %v3507
      %v3509 = vpop.f32.mrf.mxu0
      %3510 = vdwg.mxu0
      %3511 = vmatpush.bf16.msra.mxu0 %v3365
      %3512 = vmatpush.bf16.msra.mxu0 %v3362
      %3513 = vmatpush.bf16.msra.mxu0 %v3359
      %3514 = vmatpush.bf16.msra.mxu0 %v3356
      %3515 = vmatpush.bf16.msra.mxu0 %v3353
      %3516 = vmatpush.bf16.msra.mxu0 %v3350
      %3517 = vmatpush.bf16.msra.mxu0 %v3347
      %3518 = vmatpush.bf16.msra.mxu0 %v3344
      %3519 = vmatmul.bf16.gmra.mxu0 %v3061
      %v3520 = vpop.f32.mrf.mxu0
      %v3521 = vadd.f32 %v3503, %v3520
      %v3522 = vpop.f32.mrf.mxu0
      %v3523 = vadd.f32 %v3505, %v3522
      %3524 = vmatmul.bf16.gmra.mxu0 %v3064
      %v3525 = vpop.f32.mrf.mxu0
      %v3526 = vadd.f32 %v3508, %v3525
      %v3527 = vpop.f32.mrf.mxu0
      %3528 = vdwg.mxu0
      %3529 = vmatpush.bf16.msra.mxu0 0
      %3530 = vmatpush.bf16.msra.mxu0 0
      %3531 = vmatpush.bf16.msra.mxu0 0
      %3532 = vmatpush.bf16.msra.mxu0 0
      %3533 = vmatpush.bf16.msra.mxu0 0
      %3534 = vmatpush.bf16.msra.mxu0 0
      %3535 = vmatpush.bf16.msra.mxu0 %v3434
      %3536 = vmatpush.bf16.msra.mxu0 %v3368
      %3537 = vmatmul.bf16.gmra.mxu0 %v3425
      %v3538 = vpop.f32.mrf.mxu0
      %v3539 = vadd.f32 %v3521, %v3538
      %v3540 = vpop.f32.mrf.mxu0
      %v3541 = vadd.f32 %v3523, %v3540
      %3542 = vmatmul.bf16.gmra.mxu0 %v3428
      %v3543 = vpop.f32.mrf.mxu0
      %v3544 = vadd.f32 %v3526, %v3543
      %v3545 = vpop.f32.mrf.mxu0
      %3546 = vdwg.mxu0
      %3547 = vmatpush.bf16.msra.mxu0 %v3342
      %3548 = vmatpush.bf16.msra.mxu0 %v3339
      %3549 = vmatpush.bf16.msra.mxu0 %v3336
      %3550 = vmatpush.bf16.msra.mxu0 %v3333
      %3551 = vmatpush.bf16.msra.mxu0 %v3330
      %3552 = vmatpush.bf16.msra.mxu0 %v3327
      %3553 = vmatpush.bf16.msra.mxu0 %v3324
      %3554 = vmatpush.bf16.msra.mxu0 %v3321
      %3555 = vmatmul.bf16.gmra.mxu0 %v3060
      %v3556 = vpop.f32.mrf.mxu0
      %v3557 = vadd.f32 0.0, %v3556
      %v3558 = vpop.f32.mrf.mxu0
      %v3559 = vadd.f32 0.0, %v3558
      %3560 = vmatmul.bf16.gmra.mxu0 %v3063
      %v3561 = vpop.f32.mrf.mxu0
      %v3562 = vadd.f32 0.0, %v3561
      %v3563 = vpop.f32.mrf.mxu0
      %3564 = vdwg.mxu0
      %3565 = vmatpush.bf16.msra.mxu0 %v3366
      %3566 = vmatpush.bf16.msra.mxu0 %v3363
      %3567 = vmatpush.bf16.msra.mxu0 %v3360
      %3568 = vmatpush.bf16.msra.mxu0 %v3357
      %3569 = vmatpush.bf16.msra.mxu0 %v3354
      %3570 = vmatpush.bf16.msra.mxu0 %v3351
      %3571 = vmatpush.bf16.msra.mxu0 %v3348
      %3572 = vmatpush.bf16.msra.mxu0 %v3345
      %3573 = vmatmul.bf16.gmra.mxu0 %v3061
      %v3574 = vpop.f32.mrf.mxu0
      %v3575 = vadd.f32 %v3557, %v3574
      %v3576 = vpop.f32.mrf.mxu0
      %v3577 = vadd.f32 %v3559, %v3576
      %3578 = vmatmul.bf16.gmra.mxu0 %v3064
      %v3579 = vpop.f32.mrf.mxu0
      %v3580 = vadd.f32 %v3562, %v3579
      %v3581 = vpop.f32.mrf.mxu0
      %3582 = vdwg.mxu0
      %3583 = vmatpush.bf16.msra.mxu0 0
      %3584 = vmatpush.bf16.msra.mxu0 0
      %3585 = vmatpush.bf16.msra.mxu0 0
      %3586 = vmatpush.bf16.msra.mxu0 0
      %3587 = vmatpush.bf16.msra.mxu0 0
      %3588 = vmatpush.bf16.msra.mxu0 0
      %3589 = vmatpush.bf16.msra.mxu0 %v3437
      %3590 = vmatpush.bf16.msra.mxu0 %v3369
      %3591 = vmatmul.bf16.gmra.mxu0 %v3425
      %v3592 = vpop.f32.mrf.mxu0
      %v3593 = vadd.f32 %v3575, %v3592
      %v3594 = vpop.f32.mrf.mxu0
      %v3595 = vadd.f32 %v3577, %v3594
      %3596 = vmatmul.bf16.gmra.mxu0 %v3428
      %v3597 = vpop.f32.mrf.mxu0
      %v3598 = vadd.f32 %v3580, %v3597
      %v3599 = vpop.f32.mrf.mxu0
      %3600 = vdwg.mxu0
      %v3601 = vadd.f32 %v2872, %v3485
      %v3602 = vadd.f32 %v2926, %v3539
      %v3603 = vadd.f32 %v2980, %v3593
      %v3604 = vadd.f32 %v2874, %v3487
      %v3605 = vadd.f32 %v2928, %v3541
      %v3606 = vadd.f32 %v2982, %v3595
      %v3607 = vadd.f32 %v2877, %v3490
      %v3608 = vadd.f32 %v2931, %v3544
      %v3609 = vadd.f32 %v2985, %v3598
      %s3610 = scalar_lea.vmem %s4, 36
      %v3611 = vld [vmem:[%s3610] sm:$0xf]
      %v3612 = vld [vmem:[%s3610 + $0x4] sm:$0xf]
      %v3613 = vld [vmem:[%s3610 + $0x8] sm:$0x7]
      %v3617 = vunpack.c.l.b16 %v3611
      %v3618 = vunpack.c.l.b16 %v3612
      %v3619 = vunpack.c.l.b16 %v3613
      %v3620 = vpack.c.b16 %v3618, %v3617
      %v3621 = vpack.c.b16 %v3619, %v3619
      %v3623 = vsel %vm1759, %v3620, 0
      %v3626 = vsel %vm1759, %v3621, 0
      %3628 = vmatpush.bf16.msra.mxu0 0
      %3629 = vmatpush.bf16.msra.mxu0 0
      %3630 = vmatpush.bf16.msra.mxu0 0
      %3631 = vmatpush.bf16.msra.mxu0 0
      %3632 = vmatpush.bf16.msra.mxu0 0
      %3633 = vmatpush.bf16.msra.mxu0 %v1771
      %3634 = vmatpush.bf16.msra.mxu0 %v1742
      %3635 = vmatpush.bf16.msra.mxu0 %v1739
      %3636 = vmatmul.bf16.gmra.mxu0 %v3623
      %v3637 = vpop.f32.mrf.mxu0
      %v3638 = vadd.f32 0.0, %v3637
      %v3639 = vpop.f32.mrf.mxu0
      %v3640 = vadd.f32 0.0, %v3639
      %3641 = vmatmul.bf16.gmra.mxu0 %v3626
      %v3642 = vpop.f32.mrf.mxu0
      %v3643 = vadd.f32 0.0, %v3642
      %v3644 = vpop.f32.mrf.mxu0
      %3645 = vdwg.mxu0
      %3646 = vmatpush.bf16.msra.mxu0 0
      %3647 = vmatpush.bf16.msra.mxu0 0
      %3648 = vmatpush.bf16.msra.mxu0 0
      %3649 = vmatpush.bf16.msra.mxu0 0
      %3650 = vmatpush.bf16.msra.mxu0 0
      %3651 = vmatpush.bf16.msra.mxu0 %v1774
      %3652 = vmatpush.bf16.msra.mxu0 %v1743
      %3653 = vmatpush.bf16.msra.mxu0 %v1740
      %3654 = vmatmul.bf16.gmra.mxu0 %v3623
      %v3655 = vpop.f32.mrf.mxu0
      %v3656 = vadd.f32 0.0, %v3655
      %v3657 = vpop.f32.mrf.mxu0
      %v3658 = vadd.f32 0.0, %v3657
      %3659 = vmatmul.bf16.gmra.mxu0 %v3626
      %v3660 = vpop.f32.mrf.mxu0
      %v3661 = vadd.f32 0.0, %v3660
      %v3662 = vpop.f32.mrf.mxu0
      %3663 = vdwg.mxu0
      %3664 = vmatpush.bf16.msra.mxu0 0
      %3665 = vmatpush.bf16.msra.mxu0 0
      %3666 = vmatpush.bf16.msra.mxu0 0
      %3667 = vmatpush.bf16.msra.mxu0 0
      %3668 = vmatpush.bf16.msra.mxu0 0
      %3669 = vmatpush.bf16.msra.mxu0 %v1777
      %3670 = vmatpush.bf16.msra.mxu0 %v1744
      %3671 = vmatpush.bf16.msra.mxu0 %v1741
      %3672 = vmatmul.bf16.gmra.mxu0 %v3623
      %v3673 = vpop.f32.mrf.mxu0
      %v3674 = vadd.f32 0.0, %v3673
      %v3675 = vpop.f32.mrf.mxu0
      %v3676 = vadd.f32 0.0, %v3675
      %3677 = vmatmul.bf16.gmra.mxu0 %v3626
      %v3678 = vpop.f32.mrf.mxu0
      %v3679 = vadd.f32 0.0, %v3678
      %v3680 = vpop.f32.mrf.mxu0
      %3681 = vdwg.mxu0
      %v3682 = vpack.c.bf16 %v3640, %v3638
      %v3683 = vpack.c.bf16 %v3658, %v3656
      %v3684 = vpack.c.bf16 %v3676, %v3674
      %v3685 = vpack.c.bf16 %v3643, %v3643
      %v3686 = vpack.c.bf16 %v3661, %v3661
      %v3687 = vpack.c.bf16 %v3679, %v3679
      %s3688 = scalar_lea.vmem %s5, 1296
      %v3689 = vld [vmem:[%s3688] sm:$0xff]
      %v3690 = vld [vmem:[%s3688 + $0x8] sm:$0xf]
      %v3691 = vld [vmem:[%s3688 + $0xc] sm:$0xff]
      %v3692 = vld [vmem:[%s3688 + $0x14] sm:$0xf]
      %v3693 = vld [vmem:[%s3688 + $0x18] sm:$0xff]
      %v3694 = vld [vmem:[%s3688 + $0x20] sm:$0xf]
      %v3695 = vld [vmem:[%s3688 + $0x24] sm:$0xff]
      %v3696 = vld [vmem:[%s3688 + $0x2c] sm:$0xf]
      %v3697 = vld [vmem:[%s3688 + $0x30] sm:$0xff]
      %v3698 = vld [vmem:[%s3688 + $0x38] sm:$0xf]
      %v3699 = vld [vmem:[%s3688 + $0x3c] sm:$0xff]
      %v3700 = vld [vmem:[%s3688 + $0x44] sm:$0xf]
      %v3701 = vld [vmem:[%s3688 + $0x48] sm:$0xff]
      %v3702 = vld [vmem:[%s3688 + $0x50] sm:$0xf]
      %v3703 = vld [vmem:[%s3688 + $0x54] sm:$0xff]
      %v3704 = vld [vmem:[%s3688 + $0x5c] sm:$0xf]
      %v3705 = vld [vmem:[%s3688 + $0x60] sm:$0xff]
      %v3706 = vld [vmem:[%s3688 + $0x68] sm:$0xf]
      %v3707 = vld [vmem:[%s3688 + $0x6c] sm:$0xff]
      %v3708 = vld [vmem:[%s3688 + $0x74] sm:$0xf]
      %v3709 = vld [vmem:[%s3688 + $0x78] sm:$0xff]
      %v3710 = vld [vmem:[%s3688 + $0x80] sm:$0xf]
      %v3711 = vld [vmem:[%s3688 + $0x84] sm:$0xff]
      %v3712 = vld [vmem:[%s3688 + $0x8c] sm:$0xf]
      %v3713 = vld [vmem:[%s3688 + $0x90] sm:$0xff]
      %v3714 = vld [vmem:[%s3688 + $0x98] sm:$0xf]
      %v3715 = vld [vmem:[%s3688 + $0x9c] sm:$0xff]
      %v3716 = vld [vmem:[%s3688 + $0xa4] sm:$0xf]
      %v3717 = vld [vmem:[%s3688 + $0xa8] sm:$0xff]
      %v3718 = vld [vmem:[%s3688 + $0xb0] sm:$0xf]
      %v3719 = vld [vmem:[%s3688 + $0xb4] sm:$0xff]
      %v3720 = vld [vmem:[%s3688 + $0xbc] sm:$0xf]
      %v3721 = vld [vmem:[%s3688 + $0xc0] sm:$0xff]
      %v3722 = vld [vmem:[%s3688 + $0xc8] sm:$0xf]
      %v3723 = vld [vmem:[%s3688 + $0xcc] sm:$0xff]
      %v3724 = vld [vmem:[%s3688 + $0xd4] sm:$0xf]
      %v3725 = vld [vmem:[%s3688 + $0xd8] sm:$0xff]
      %v3726 = vld [vmem:[%s3688 + $0xe0] sm:$0xf]
      %v3727 = vld [vmem:[%s3688 + $0xe4] sm:$0xff]
      %v3728 = vld [vmem:[%s3688 + $0xec] sm:$0xf]
      %v3729 = vld [vmem:[%s3688 + $0xf0] sm:$0xff]
      %v3730 = vld [vmem:[%s3688 + $0xf8] sm:$0xf]
      %v3731 = vld [vmem:[%s3688 + $0xfc] sm:$0xff]
      %v3732 = vld [vmem:[%s3688 + $0x104] sm:$0xf]
      %v3733 = vld [vmem:[%s3688 + $0x108] sm:$0xff]
      %v3734 = vld [vmem:[%s3688 + $0x110] sm:$0xf]
      %v3735 = vld [vmem:[%s3688 + $0x114] sm:$0xff]
      %v3736 = vld [vmem:[%s3688 + $0x11c] sm:$0xf]
      %v3737 = vld [vmem:[%s3688 + $0x120] sm:$0xff]
      %v3738 = vld [vmem:[%s3688 + $0x128] sm:$0xf]
      %v3739 = vld [vmem:[%s3688 + $0x12c] sm:$0xff]
      %v3740 = vld [vmem:[%s3688 + $0x134] sm:$0xf]
      %v3741 = vld [vmem:[%s3688 + $0x138] sm:$0xff]
      %v3742 = vld [vmem:[%s3688 + $0x140] sm:$0xf]
      %v3743 = vld [vmem:[%s3688 + $0x144] sm:$0xff]
      %v3744 = vld [vmem:[%s3688 + $0x14c] sm:$0xf]
      %v3745 = vld [vmem:[%s3688 + $0x150] sm:$0xff]
      %v3746 = vld [vmem:[%s3688 + $0x158] sm:$0xf]
      %v3747 = vld [vmem:[%s3688 + $0x15c] sm:$0xff]
      %v3748 = vld [vmem:[%s3688 + $0x164] sm:$0xf]
      %v3749 = vld [vmem:[%s3688 + $0x168] sm:$0xff]
      %v3750 = vld [vmem:[%s3688 + $0x170] sm:$0xf]
      %v3751 = vld [vmem:[%s3688 + $0x174] sm:$0xff]
      %v3752 = vld [vmem:[%s3688 + $0x17c] sm:$0xf]
      %v3753 = vld [vmem:[%s3688 + $0x180] sm:$0xff]
      %v3754 = vld [vmem:[%s3688 + $0x188] sm:$0xf]
      %v3755 = vld [vmem:[%s3688 + $0x18c] sm:$0xff]
      %v3756 = vld [vmem:[%s3688 + $0x194] sm:$0xf]
      %v3757 = vld [vmem:[%s3688 + $0x198] sm:$0xff]
      %v3758 = vld [vmem:[%s3688 + $0x1a0] sm:$0xf]
      %v3759 = vld [vmem:[%s3688 + $0x1a4] sm:$0x11]
      %v3760 = vld [vmem:[%s3688 + $0x1ac] sm:$0x1]
      %v3833 = vunpack.c.l.b16 %v3689
      %v3834 = vunpack.c.h.b16 %v3689
      %v3835 = vunpack.c.l.b16 %v3690
      %v3836 = vunpack.c.l.b16 %v3691
      %v3837 = vunpack.c.h.b16 %v3691
      %v3838 = vunpack.c.l.b16 %v3692
      %v3839 = vunpack.c.l.b16 %v3693
      %v3840 = vunpack.c.h.b16 %v3693
      %v3841 = vunpack.c.l.b16 %v3694
      %v3842 = vunpack.c.l.b16 %v3695
      %v3843 = vunpack.c.h.b16 %v3695
      %v3844 = vunpack.c.l.b16 %v3696
      %v3845 = vunpack.c.l.b16 %v3697
      %v3846 = vunpack.c.h.b16 %v3697
      %v3847 = vunpack.c.l.b16 %v3698
      %v3848 = vunpack.c.l.b16 %v3699
      %v3849 = vunpack.c.h.b16 %v3699
      %v3850 = vunpack.c.l.b16 %v3700
      %v3851 = vunpack.c.l.b16 %v3701
      %v3852 = vunpack.c.h.b16 %v3701
      %v3853 = vunpack.c.l.b16 %v3702
      %v3854 = vunpack.c.l.b16 %v3703
      %v3855 = vunpack.c.h.b16 %v3703
      %v3856 = vunpack.c.l.b16 %v3704
      %v3857 = vunpack.c.l.b16 %v3705
      %v3858 = vunpack.c.h.b16 %v3705
      %v3859 = vunpack.c.l.b16 %v3706
      %v3860 = vunpack.c.l.b16 %v3707
      %v3861 = vunpack.c.h.b16 %v3707
      %v3862 = vunpack.c.l.b16 %v3708
      %v3863 = vunpack.c.l.b16 %v3709
      %v3864 = vunpack.c.h.b16 %v3709
      %v3865 = vunpack.c.l.b16 %v3710
      %v3866 = vunpack.c.l.b16 %v3711
      %v3867 = vunpack.c.h.b16 %v3711
      %v3868 = vunpack.c.l.b16 %v3712
      %v3869 = vunpack.c.l.b16 %v3713
      %v3870 = vunpack.c.h.b16 %v3713
      %v3871 = vunpack.c.l.b16 %v3714
      %v3872 = vunpack.c.l.b16 %v3715
      %v3873 = vunpack.c.h.b16 %v3715
      %v3874 = vunpack.c.l.b16 %v3716
      %v3875 = vunpack.c.l.b16 %v3717
      %v3876 = vunpack.c.h.b16 %v3717
      %v3877 = vunpack.c.l.b16 %v3718
      %v3878 = vunpack.c.l.b16 %v3719
      %v3879 = vunpack.c.h.b16 %v3719
      %v3880 = vunpack.c.l.b16 %v3720
      %v3881 = vunpack.c.l.b16 %v3721
      %v3882 = vunpack.c.h.b16 %v3721
      %v3883 = vunpack.c.l.b16 %v3722
      %v3884 = vunpack.c.l.b16 %v3723
      %v3885 = vunpack.c.h.b16 %v3723
      %v3886 = vunpack.c.l.b16 %v3724
      %v3887 = vunpack.c.l.b16 %v3725
      %v3888 = vunpack.c.h.b16 %v3725
      %v3889 = vunpack.c.l.b16 %v3726
      %v3890 = vunpack.c.l.b16 %v3727
      %v3891 = vunpack.c.h.b16 %v3727
      %v3892 = vunpack.c.l.b16 %v3728
      %v3893 = vunpack.c.l.b16 %v3729
      %v3894 = vunpack.c.h.b16 %v3729
      %v3895 = vunpack.c.l.b16 %v3730
      %v3896 = vunpack.c.l.b16 %v3731
      %v3897 = vunpack.c.h.b16 %v3731
      %v3898 = vunpack.c.l.b16 %v3732
      %v3899 = vunpack.c.l.b16 %v3733
      %v3900 = vunpack.c.h.b16 %v3733
      %v3901 = vunpack.c.l.b16 %v3734
      %v3902 = vunpack.c.l.b16 %v3735
      %v3903 = vunpack.c.h.b16 %v3735
      %v3904 = vunpack.c.l.b16 %v3736
      %v3905 = vunpack.c.l.b16 %v3737
      %v3906 = vunpack.c.h.b16 %v3737
      %v3907 = vunpack.c.l.b16 %v3738
      %v3908 = vunpack.c.l.b16 %v3739
      %v3909 = vunpack.c.h.b16 %v3739
      %v3910 = vunpack.c.l.b16 %v3740
      %v3911 = vunpack.c.l.b16 %v3741
      %v3912 = vunpack.c.h.b16 %v3741
      %v3913 = vunpack.c.l.b16 %v3742
      %v3914 = vunpack.c.l.b16 %v3743
      %v3915 = vunpack.c.h.b16 %v3743
      %v3916 = vunpack.c.l.b16 %v3744
      %v3917 = vunpack.c.l.b16 %v3745
      %v3918 = vunpack.c.h.b16 %v3745
      %v3919 = vunpack.c.l.b16 %v3746
      %v3920 = vunpack.c.l.b16 %v3747
      %v3921 = vunpack.c.h.b16 %v3747
      %v3922 = vunpack.c.l.b16 %v3748
      %v3923 = vunpack.c.l.b16 %v3749
      %v3924 = vunpack.c.h.b16 %v3749
      %v3925 = vunpack.c.l.b16 %v3750
      %v3926 = vunpack.c.l.b16 %v3751
      %v3927 = vunpack.c.h.b16 %v3751
      %v3928 = vunpack.c.l.b16 %v3752
      %v3929 = vunpack.c.l.b16 %v3753
      %v3930 = vunpack.c.h.b16 %v3753
      %v3931 = vunpack.c.l.b16 %v3754
      %v3932 = vunpack.c.l.b16 %v3755
      %v3933 = vunpack.c.h.b16 %v3755
      %v3934 = vunpack.c.l.b16 %v3756
      %v3935 = vunpack.c.l.b16 %v3757
      %v3936 = vunpack.c.h.b16 %v3757
      %v3937 = vunpack.c.l.b16 %v3758
      %v3938 = vunpack.c.l.b16 %v3759
      %v3939 = vunpack.c.h.b16 %v3759
      %v3940 = vunpack.c.l.b16 %v3760
      %v3941 = vpack.c.b16 %v3836, %v3833
      %v3942 = vpack.c.b16 %v3837, %v3834
      %v3943 = vpack.c.b16 %v3838, %v3835
      %v3944 = vpack.c.b16 %v3842, %v3839
      %v3945 = vpack.c.b16 %v3843, %v3840
      %v3946 = vpack.c.b16 %v3844, %v3841
      %v3947 = vpack.c.b16 %v3848, %v3845
      %v3948 = vpack.c.b16 %v3849, %v3846
      %v3949 = vpack.c.b16 %v3850, %v3847
      %v3950 = vpack.c.b16 %v3854, %v3851
      %v3951 = vpack.c.b16 %v3855, %v3852
      %v3952 = vpack.c.b16 %v3856, %v3853
      %v3953 = vpack.c.b16 %v3860, %v3857
      %v3954 = vpack.c.b16 %v3861, %v3858
      %v3955 = vpack.c.b16 %v3862, %v3859
      %v3956 = vpack.c.b16 %v3866, %v3863
      %v3957 = vpack.c.b16 %v3867, %v3864
      %v3958 = vpack.c.b16 %v3868, %v3865
      %v3959 = vpack.c.b16 %v3872, %v3869
      %v3960 = vpack.c.b16 %v3873, %v3870
      %v3961 = vpack.c.b16 %v3874, %v3871
      %v3962 = vpack.c.b16 %v3878, %v3875
      %v3963 = vpack.c.b16 %v3879, %v3876
      %v3964 = vpack.c.b16 %v3880, %v3877
      %v3965 = vpack.c.b16 %v3884, %v3881
      %v3966 = vpack.c.b16 %v3885, %v3882
      %v3967 = vpack.c.b16 %v3886, %v3883
      %v3968 = vpack.c.b16 %v3890, %v3887
      %v3969 = vpack.c.b16 %v3891, %v3888
      %v3970 = vpack.c.b16 %v3892, %v3889
      %v3971 = vpack.c.b16 %v3896, %v3893
      %v3972 = vpack.c.b16 %v3897, %v3894
      %v3973 = vpack.c.b16 %v3898, %v3895
      %v3974 = vpack.c.b16 %v3902, %v3899
      %v3975 = vpack.c.b16 %v3903, %v3900
      %v3976 = vpack.c.b16 %v3904, %v3901
      %v3977 = vpack.c.b16 %v3908, %v3905
      %v3978 = vpack.c.b16 %v3909, %v3906
      %v3979 = vpack.c.b16 %v3910, %v3907
      %v3980 = vpack.c.b16 %v3914, %v3911
      %v3981 = vpack.c.b16 %v3915, %v3912
      %v3982 = vpack.c.b16 %v3916, %v3913
      %v3983 = vpack.c.b16 %v3920, %v3917
      %v3984 = vpack.c.b16 %v3921, %v3918
      %v3985 = vpack.c.b16 %v3922, %v3919
      %v3986 = vpack.c.b16 %v3926, %v3923
      %v3987 = vpack.c.b16 %v3927, %v3924
      %v3988 = vpack.c.b16 %v3928, %v3925
      %v3989 = vpack.c.b16 %v3932, %v3929
      %v3990 = vpack.c.b16 %v3933, %v3930
      %v3991 = vpack.c.b16 %v3934, %v3931
      %v3992 = vpack.c.b16 %v3938, %v3935
      %v3993 = vpack.c.b16 %v3939, %v3936
      %v3994 = vpack.c.b16 %v3940, %v3937
      %v4047 = vsel %vm2347, %v3684, 0
      %v4050 = vsel %vm2347, %v3687, 0
      %v4053 = vsel %vm2354, %v3992, 0
      %v4056 = vsel %vm2354, %v3993, 0
      %v4059 = vsel %vm2354, %v3994, 0
      %4061 = vmatpush.bf16.msra.mxu0 %v3962
      %4062 = vmatpush.bf16.msra.mxu0 %v3959
      %4063 = vmatpush.bf16.msra.mxu0 %v3956
      %4064 = vmatpush.bf16.msra.mxu0 %v3953
      %4065 = vmatpush.bf16.msra.mxu0 %v3950
      %4066 = vmatpush.bf16.msra.mxu0 %v3947
      %4067 = vmatpush.bf16.msra.mxu0 %v3944
      %4068 = vmatpush.bf16.msra.mxu0 %v3941
      %4069 = vmatmul.bf16.gmra.mxu0 %v3682
      %v4070 = vpop.f32.mrf.mxu0
      %v4071 = vadd.f32 0.0, %v4070
      %v4072 = vpop.f32.mrf.mxu0
      %v4073 = vadd.f32 0.0, %v4072
      %4074 = vmatmul.bf16.gmra.mxu0 %v3685
      %v4075 = vpop.f32.mrf.mxu0
      %v4076 = vadd.f32 0.0, %v4075
      %v4077 = vpop.f32.mrf.mxu0
      %4078 = vdwg.mxu0
      %4079 = vmatpush.bf16.msra.mxu0 %v3986
      %4080 = vmatpush.bf16.msra.mxu0 %v3983
      %4081 = vmatpush.bf16.msra.mxu0 %v3980
      %4082 = vmatpush.bf16.msra.mxu0 %v3977
      %4083 = vmatpush.bf16.msra.mxu0 %v3974
      %4084 = vmatpush.bf16.msra.mxu0 %v3971
      %4085 = vmatpush.bf16.msra.mxu0 %v3968
      %4086 = vmatpush.bf16.msra.mxu0 %v3965
      %4087 = vmatmul.bf16.gmra.mxu0 %v3683
      %v4088 = vpop.f32.mrf.mxu0
      %v4089 = vadd.f32 %v4071, %v4088
      %v4090 = vpop.f32.mrf.mxu0
      %v4091 = vadd.f32 %v4073, %v4090
      %4092 = vmatmul.bf16.gmra.mxu0 %v3686
      %v4093 = vpop.f32.mrf.mxu0
      %v4094 = vadd.f32 %v4076, %v4093
      %v4095 = vpop.f32.mrf.mxu0
      %4096 = vdwg.mxu0
      %4097 = vmatpush.bf16.msra.mxu0 0
      %4098 = vmatpush.bf16.msra.mxu0 0
      %4099 = vmatpush.bf16.msra.mxu0 0
      %4100 = vmatpush.bf16.msra.mxu0 0
      %4101 = vmatpush.bf16.msra.mxu0 0
      %4102 = vmatpush.bf16.msra.mxu0 0
      %4103 = vmatpush.bf16.msra.mxu0 %v4053
      %4104 = vmatpush.bf16.msra.mxu0 %v3989
      %4105 = vmatmul.bf16.gmra.mxu0 %v4047
      %v4106 = vpop.f32.mrf.mxu0
      %v4107 = vadd.f32 %v4089, %v4106
      %v4108 = vpop.f32.mrf.mxu0
      %v4109 = vadd.f32 %v4091, %v4108
      %4110 = vmatmul.bf16.gmra.mxu0 %v4050
      %v4111 = vpop.f32.mrf.mxu0
      %v4112 = vadd.f32 %v4094, %v4111
      %v4113 = vpop.f32.mrf.mxu0
      %4114 = vdwg.mxu0
      %4115 = vmatpush.bf16.msra.mxu0 %v3963
      %4116 = vmatpush.bf16.msra.mxu0 %v3960
      %4117 = vmatpush.bf16.msra.mxu0 %v3957
      %4118 = vmatpush.bf16.msra.mxu0 %v3954
      %4119 = vmatpush.bf16.msra.mxu0 %v3951
      %4120 = vmatpush.bf16.msra.mxu0 %v3948
      %4121 = vmatpush.bf16.msra.mxu0 %v3945
      %4122 = vmatpush.bf16.msra.mxu0 %v3942
      %4123 = vmatmul.bf16.gmra.mxu0 %v3682
      %v4124 = vpop.f32.mrf.mxu0
      %v4125 = vadd.f32 0.0, %v4124
      %v4126 = vpop.f32.mrf.mxu0
      %v4127 = vadd.f32 0.0, %v4126
      %4128 = vmatmul.bf16.gmra.mxu0 %v3685
      %v4129 = vpop.f32.mrf.mxu0
      %v4130 = vadd.f32 0.0, %v4129
      %v4131 = vpop.f32.mrf.mxu0
      %4132 = vdwg.mxu0
      %4133 = vmatpush.bf16.msra.mxu0 %v3987
      %4134 = vmatpush.bf16.msra.mxu0 %v3984
      %4135 = vmatpush.bf16.msra.mxu0 %v3981
      %4136 = vmatpush.bf16.msra.mxu0 %v3978
      %4137 = vmatpush.bf16.msra.mxu0 %v3975
      %4138 = vmatpush.bf16.msra.mxu0 %v3972
      %4139 = vmatpush.bf16.msra.mxu0 %v3969
      %4140 = vmatpush.bf16.msra.mxu0 %v3966
      %4141 = vmatmul.bf16.gmra.mxu0 %v3683
      %v4142 = vpop.f32.mrf.mxu0
      %v4143 = vadd.f32 %v4125, %v4142
      %v4144 = vpop.f32.mrf.mxu0
      %v4145 = vadd.f32 %v4127, %v4144
      %4146 = vmatmul.bf16.gmra.mxu0 %v3686
      %v4147 = vpop.f32.mrf.mxu0
      %v4148 = vadd.f32 %v4130, %v4147
      %v4149 = vpop.f32.mrf.mxu0
      %4150 = vdwg.mxu0
      %4151 = vmatpush.bf16.msra.mxu0 0
      %4152 = vmatpush.bf16.msra.mxu0 0
      %4153 = vmatpush.bf16.msra.mxu0 0
      %4154 = vmatpush.bf16.msra.mxu0 0
      %4155 = vmatpush.bf16.msra.mxu0 0
      %4156 = vmatpush.bf16.msra.mxu0 0
      %4157 = vmatpush.bf16.msra.mxu0 %v4056
      %4158 = vmatpush.bf16.msra.mxu0 %v3990
      %4159 = vmatmul.bf16.gmra.mxu0 %v4047
      %v4160 = vpop.f32.mrf.mxu0
      %v4161 = vadd.f32 %v4143, %v4160
      %v4162 = vpop.f32.mrf.mxu0
      %v4163 = vadd.f32 %v4145, %v4162
      %4164 = vmatmul.bf16.gmra.mxu0 %v4050
      %v4165 = vpop.f32.mrf.mxu0
      %v4166 = vadd.f32 %v4148, %v4165
      %v4167 = vpop.f32.mrf.mxu0
      %4168 = vdwg.mxu0
      %4169 = vmatpush.bf16.msra.mxu0 %v3964
      %4170 = vmatpush.bf16.msra.mxu0 %v3961
      %4171 = vmatpush.bf16.msra.mxu0 %v3958
      %4172 = vmatpush.bf16.msra.mxu0 %v3955
      %4173 = vmatpush.bf16.msra.mxu0 %v3952
      %4174 = vmatpush.bf16.msra.mxu0 %v3949
      %4175 = vmatpush.bf16.msra.mxu0 %v3946
      %4176 = vmatpush.bf16.msra.mxu0 %v3943
      %4177 = vmatmul.bf16.gmra.mxu0 %v3682
      %v4178 = vpop.f32.mrf.mxu0
      %v4179 = vadd.f32 0.0, %v4178
      %v4180 = vpop.f32.mrf.mxu0
      %v4181 = vadd.f32 0.0, %v4180
      %4182 = vmatmul.bf16.gmra.mxu0 %v3685
      %v4183 = vpop.f32.mrf.mxu0
      %v4184 = vadd.f32 0.0, %v4183
      %v4185 = vpop.f32.mrf.mxu0
      %4186 = vdwg.mxu0
      %4187 = vmatpush.bf16.msra.mxu0 %v3988
      %4188 = vmatpush.bf16.msra.mxu0 %v3985
      %4189 = vmatpush.bf16.msra.mxu0 %v3982
      %4190 = vmatpush.bf16.msra.mxu0 %v3979
      %4191 = vmatpush.bf16.msra.mxu0 %v3976
      %4192 = vmatpush.bf16.msra.mxu0 %v3973
      %4193 = vmatpush.bf16.msra.mxu0 %v3970
      %4194 = vmatpush.bf16.msra.mxu0 %v3967
      %4195 = vmatmul.bf16.gmra.mxu0 %v3683
      %v4196 = vpop.f32.mrf.mxu0
      %v4197 = vadd.f32 %v4179, %v4196
      %v4198 = vpop.f32.mrf.mxu0
      %v4199 = vadd.f32 %v4181, %v4198
      %4200 = vmatmul.bf16.gmra.mxu0 %v3686
      %v4201 = vpop.f32.mrf.mxu0
      %v4202 = vadd.f32 %v4184, %v4201
      %v4203 = vpop.f32.mrf.mxu0
      %4204 = vdwg.mxu0
      %4205 = vmatpush.bf16.msra.mxu0 0
      %4206 = vmatpush.bf16.msra.mxu0 0
      %4207 = vmatpush.bf16.msra.mxu0 0
      %4208 = vmatpush.bf16.msra.mxu0 0
      %4209 = vmatpush.bf16.msra.mxu0 0
      %4210 = vmatpush.bf16.msra.mxu0 0
      %4211 = vmatpush.bf16.msra.mxu0 %v4059
      %4212 = vmatpush.bf16.msra.mxu0 %v3991
      %4213 = vmatmul.bf16.gmra.mxu0 %v4047
      %v4214 = vpop.f32.mrf.mxu0
      %v4215 = vadd.f32 %v4197, %v4214
      %v4216 = vpop.f32.mrf.mxu0
      %v4217 = vadd.f32 %v4199, %v4216
      %4218 = vmatmul.bf16.gmra.mxu0 %v4050
      %v4219 = vpop.f32.mrf.mxu0
      %v4220 = vadd.f32 %v4202, %v4219
      %v4221 = vpop.f32.mrf.mxu0
      %4222 = vdwg.mxu0
      %v4223 = vadd.f32 %v3601, %v4107
      %v4224 = vadd.f32 %v3602, %v4161
      %v4225 = vadd.f32 %v3603, %v4215
      %v4226 = vadd.f32 %v3604, %v4109
      %v4227 = vadd.f32 %v3605, %v4163
      %v4228 = vadd.f32 %v3606, %v4217
      %v4229 = vadd.f32 %v3607, %v4112
      %v4230 = vadd.f32 %v3608, %v4166
      %v4231 = vadd.f32 %v3609, %v4220
      %v4232 = vld [vmem:[%s6] sm:$0x7]
      %v4234 = vperm.slane %v4232, 0
      %v4235 = vperm.slane %v4232, 1
      %v4236 = vperm.slane %v4232, 2
      %v4240 = vadd.f32 %v4223, %v4234
      %v4241 = vadd.f32 %v4224, %v4235
      %v4242 = vadd.f32 %v4225, %v4236
      %v4243 = vadd.f32 %v4226, %v4234
      %v4244 = vadd.f32 %v4227, %v4235
      %v4245 = vadd.f32 %v4228, %v4236
      %v4246 = vadd.f32 %v4229, %v4234
      %v4247 = vadd.f32 %v4230, %v4235
      %v4248 = vadd.f32 %v4231, %v4236
      %v4249 = vmax.f32 %v4240, 0.0
      %v4250 = vmax.f32 %v4241, 0.0
      %v4251 = vmax.f32 %v4242, 0.0
      %v4252 = vmax.f32 %v4243, 0.0
      %v4253 = vmax.f32 %v4244, 0.0
      %v4254 = vmax.f32 %v4245, 0.0
      %v4255 = vmax.f32 %v4246, 0.0
      %v4256 = vmax.f32 %v4247, 0.0
      %v4257 = vmax.f32 %v4248, 0.0
      %v4258 = vpack.c.bf16 %v4252, %v4249
      %v4259 = vpack.c.bf16 %v4253, %v4250
      %v4260 = vpack.c.bf16 %v4254, %v4251
      %v4261 = vpack.c.bf16 %v4255, %v4255
      %v4262 = vpack.c.bf16 %v4256, %v4256
      %v4263 = vpack.c.bf16 %v4257, %v4257
      %v4264 = vld [vmem:[%s7] sm:$0xf]
      %v4265 = vld [vmem:[%s7 + $0x4] sm:$0x1]
      %v4268 = vunpack.c.l.b16 %v4264
      %v4269 = vunpack.c.l.b16 %v4265
      %v4270 = vpack.c.b16 %v4269, %v4268
      %vm4271 = vcmask 179200
      %v4273 = vsel %vm4271, %v4270, 0
      %vm4275 = vcmask 1042432
      %v4277 = vsel %vm4275, %v4261, 0
      %v4280 = vsel %vm4275, %v4262, 0
      %v4283 = vsel %vm4275, %v4263, 0
      %4285 = vmatpush.bf16.msra.mxu0 0
      %4286 = vmatpush.bf16.msra.mxu0 0
      %4287 = vmatpush.bf16.msra.mxu0 0
      %4288 = vmatpush.bf16.msra.mxu0 0
      %4289 = vmatpush.bf16.msra.mxu0 0
      %4290 = vmatpush.bf16.msra.mxu0 0
      %4291 = vmatpush.bf16.msra.mxu0 %v4277
      %4292 = vmatpush.bf16.msra.mxu0 %v4258
      %4293 = vmatmul.bf16.gmra.mxu0 %v4273
      %v4294 = vpop.f32.mrf.mxu0
      %v4295 = vadd.f32 0.0, %v4294
      %v4296 = vpop.f32.mrf.mxu0
      %v4297 = vadd.f32 0.0, %v4296
      %4298 = vdwg.mxu0
      %4299 = vmatpush.bf16.msra.mxu0 0
      %4300 = vmatpush.bf16.msra.mxu0 0
      %4301 = vmatpush.bf16.msra.mxu0 0
      %4302 = vmatpush.bf16.msra.mxu0 0
      %4303 = vmatpush.bf16.msra.mxu0 0
      %4304 = vmatpush.bf16.msra.mxu0 0
      %4305 = vmatpush.bf16.msra.mxu0 %v4280
      %4306 = vmatpush.bf16.msra.mxu0 %v4259
      %4307 = vmatmul.bf16.gmra.mxu0 %v4273
      %v4308 = vpop.f32.mrf.mxu0
      %v4309 = vadd.f32 0.0, %v4308
      %v4310 = vpop.f32.mrf.mxu0
      %v4311 = vadd.f32 0.0, %v4310
      %4312 = vdwg.mxu0
      %4313 = vmatpush.bf16.msra.mxu0 0
      %4314 = vmatpush.bf16.msra.mxu0 0
      %4315 = vmatpush.bf16.msra.mxu0 0
      %4316 = vmatpush.bf16.msra.mxu0 0
      %4317 = vmatpush.bf16.msra.mxu0 0
      %4318 = vmatpush.bf16.msra.mxu0 0
      %4319 = vmatpush.bf16.msra.mxu0 %v4283
      %4320 = vmatpush.bf16.msra.mxu0 %v4260
      %4321 = vmatmul.bf16.gmra.mxu0 %v4273
      %v4322 = vpop.f32.mrf.mxu0
      %v4323 = vadd.f32 0.0, %v4322
      %v4324 = vpop.f32.mrf.mxu0
      %v4325 = vadd.f32 0.0, %v4324
      %4326 = vdwg.mxu0
      %v4327 = vpack.c.bf16 %v4297, %v4295
      %v4328 = vpack.c.bf16 %v4311, %v4309
      %v4329 = vpack.c.bf16 %v4325, %v4323
      %v4330 = vld [vmem:[%s8] sm:$0xff]
      %v4331 = vld [vmem:[%s8 + $0x8] sm:$0xf]
      %v4332 = vld [vmem:[%s8 + $0xc] sm:$0xff]
      %v4333 = vld [vmem:[%s8 + $0x14] sm:$0xf]
      %v4334 = vld [vmem:[%s8 + $0x18] sm:$0xff]
      %v4335 = vld [vmem:[%s8 + $0x20] sm:$0xf]
      %v4336 = vld [vmem:[%s8 + $0x24] sm:$0xff]
      %v4337 = vld [vmem:[%s8 + $0x2c] sm:$0xf]
      %v4338 = vld [vmem:[%s8 + $0x30] sm:$0xff]
      %v4339 = vld [vmem:[%s8 + $0x38] sm:$0xf]
      %v4340 = vld [vmem:[%s8 + $0x3c] sm:$0xff]
      %v4341 = vld [vmem:[%s8 + $0x44] sm:$0xf]
      %v4342 = vld [vmem:[%s8 + $0x48] sm:$0xff]
      %v4343 = vld [vmem:[%s8 + $0x50] sm:$0xf]
      %v4344 = vld [vmem:[%s8 + $0x54] sm:$0xff]
      %v4345 = vld [vmem:[%s8 + $0x5c] sm:$0xf]
      %v4346 = vld [vmem:[%s8 + $0x60] sm:$0xff]
      %v4347 = vld [vmem:[%s8 + $0x68] sm:$0xf]
      %v4348 = vld [vmem:[%s8 + $0x6c] sm:$0xff]
      %v4349 = vld [vmem:[%s8 + $0x74] sm:$0xf]
      %v4350 = vld [vmem:[%s8 + $0x78] sm:$0xff]
      %v4351 = vld [vmem:[%s8 + $0x80] sm:$0xf]
      %v4352 = vld [vmem:[%s8 + $0x84] sm:$0xff]
      %v4353 = vld [vmem:[%s8 + $0x8c] sm:$0xf]
      %v4354 = vld [vmem:[%s8 + $0x90] sm:$0xff]
      %v4355 = vld [vmem:[%s8 + $0x98] sm:$0xf]
      %v4356 = vld [vmem:[%s8 + $0x9c] sm:$0xff]
      %v4357 = vld [vmem:[%s8 + $0xa4] sm:$0xf]
      %v4358 = vld [vmem:[%s8 + $0xa8] sm:$0xff]
      %v4359 = vld [vmem:[%s8 + $0xb0] sm:$0xf]
      %v4360 = vld [vmem:[%s8 + $0xb4] sm:$0xff]
      %v4361 = vld [vmem:[%s8 + $0xbc] sm:$0xf]
      %v4362 = vld [vmem:[%s8 + $0xc0] sm:$0xff]
      %v4363 = vld [vmem:[%s8 + $0xc8] sm:$0xf]
      %v4364 = vld [vmem:[%s8 + $0xcc] sm:$0xff]
      %v4365 = vld [vmem:[%s8 + $0xd4] sm:$0xf]
      %v4366 = vld [vmem:[%s8 + $0xd8] sm:$0xff]
      %v4367 = vld [vmem:[%s8 + $0xe0] sm:$0xf]
      %v4368 = vld [vmem:[%s8 + $0xe4] sm:$0xff]
      %v4369 = vld [vmem:[%s8 + $0xec] sm:$0xf]
      %v4370 = vld [vmem:[%s8 + $0xf0] sm:$0xff]
      %v4371 = vld [vmem:[%s8 + $0xf8] sm:$0xf]
      %v4372 = vld [vmem:[%s8 + $0xfc] sm:$0xff]
      %v4373 = vld [vmem:[%s8 + $0x104] sm:$0xf]
      %v4374 = vld [vmem:[%s8 + $0x108] sm:$0xff]
      %v4375 = vld [vmem:[%s8 + $0x110] sm:$0xf]
      %v4376 = vld [vmem:[%s8 + $0x114] sm:$0xff]
      %v4377 = vld [vmem:[%s8 + $0x11c] sm:$0xf]
      %v4378 = vld [vmem:[%s8 + $0x120] sm:$0xff]
      %v4379 = vld [vmem:[%s8 + $0x128] sm:$0xf]
      %v4380 = vld [vmem:[%s8 + $0x12c] sm:$0xff]
      %v4381 = vld [vmem:[%s8 + $0x134] sm:$0xf]
      %v4382 = vld [vmem:[%s8 + $0x138] sm:$0xff]
      %v4383 = vld [vmem:[%s8 + $0x140] sm:$0xf]
      %v4384 = vld [vmem:[%s8 + $0x144] sm:$0xff]
      %v4385 = vld [vmem:[%s8 + $0x14c] sm:$0xf]
      %v4386 = vld [vmem:[%s8 + $0x150] sm:$0xff]
      %v4387 = vld [vmem:[%s8 + $0x158] sm:$0xf]
      %v4388 = vld [vmem:[%s8 + $0x15c] sm:$0xff]
      %v4389 = vld [vmem:[%s8 + $0x164] sm:$0xf]
      %v4390 = vld [vmem:[%s8 + $0x168] sm:$0xff]
      %v4391 = vld [vmem:[%s8 + $0x170] sm:$0xf]
      %v4392 = vld [vmem:[%s8 + $0x174] sm:$0xff]
      %v4393 = vld [vmem:[%s8 + $0x17c] sm:$0xf]
      %v4394 = vld [vmem:[%s8 + $0x180] sm:$0xff]
      %v4395 = vld [vmem:[%s8 + $0x188] sm:$0xf]
      %v4396 = vld [vmem:[%s8 + $0x18c] sm:$0xff]
      %v4397 = vld [vmem:[%s8 + $0x194] sm:$0xf]
      %v4398 = vld [vmem:[%s8 + $0x198] sm:$0xff]
      %v4399 = vld [vmem:[%s8 + $0x1a0] sm:$0xf]
      %v4400 = vld [vmem:[%s8 + $0x1a4] sm:$0xff]
      %v4401 = vld [vmem:[%s8 + $0x1ac] sm:$0xf]
      %v4402 = vld [vmem:[%s8 + $0x1b0] sm:$0xff]
      %v4403 = vld [vmem:[%s8 + $0x1b8] sm:$0xf]
      %v4404 = vld [vmem:[%s8 + $0x1bc] sm:$0xff]
      %v4405 = vld [vmem:[%s8 + $0x1c4] sm:$0xf]
      %v4406 = vld [vmem:[%s8 + $0x1c8] sm:$0xff]
      %v4407 = vld [vmem:[%s8 + $0x1d0] sm:$0xf]
      %v4408 = vld [vmem:[%s8 + $0x1d4] sm:$0xff]
      %v4409 = vld [vmem:[%s8 + $0x1dc] sm:$0xf]
      %v4410 = vld [vmem:[%s8 + $0x1e0] sm:$0xff]
      %v4411 = vld [vmem:[%s8 + $0x1e8] sm:$0xf]
      %v4412 = vld [vmem:[%s8 + $0x1ec] sm:$0xff]
      %v4413 = vld [vmem:[%s8 + $0x1f4] sm:$0xf]
      %v4414 = vld [vmem:[%s8 + $0x1f8] sm:$0xff]
      %v4415 = vld [vmem:[%s8 + $0x200] sm:$0xf]
      %v4416 = vld [vmem:[%s8 + $0x204] sm:$0xff]
      %v4417 = vld [vmem:[%s8 + $0x20c] sm:$0xf]
      %s4418 = scalar_lea.vmem %s7, 8
      %v4419 = vld [vmem:[%s4418] sm:$0xf]
      %v4420 = vld [vmem:[%s4418 + $0x4] sm:$0x1]
      %v4423 = vunpack.c.l.b16 %v4419
      %v4424 = vunpack.c.l.b16 %v4420
      %v4425 = vpack.c.b16 %v4424, %v4423
      %v4427 = vsel %vm4271, %v4425, 0
      %4429 = vmatpush.bf16.msra.mxu0 0
      %4430 = vmatpush.bf16.msra.mxu0 0
      %4431 = vmatpush.bf16.msra.mxu0 0
      %4432 = vmatpush.bf16.msra.mxu0 0
      %4433 = vmatpush.bf16.msra.mxu0 0
      %4434 = vmatpush.bf16.msra.mxu0 0
      %4435 = vmatpush.bf16.msra.mxu0 %v4277
      %4436 = vmatpush.bf16.msra.mxu0 %v4258
      %4437 = vmatmul.bf16.gmra.mxu0 %v4427
      %v4438 = vpop.f32.mrf.mxu0
      %v4439 = vadd.f32 0.0, %v4438
      %v4440 = vpop.f32.mrf.mxu0
      %v4441 = vadd.f32 0.0, %v4440
      %4442 = vdwg.mxu0
      %4443 = vmatpush.bf16.msra.mxu0 0
      %4444 = vmatpush.bf16.msra.mxu0 0
      %4445 = vmatpush.bf16.msra.mxu0 0
      %4446 = vmatpush.bf16.msra.mxu0 0
      %4447 = vmatpush.bf16.msra.mxu0 0
      %4448 = vmatpush.bf16.msra.mxu0 0
      %4449 = vmatpush.bf16.msra.mxu0 %v4280
      %4450 = vmatpush.bf16.msra.mxu0 %v4259
      %4451 = vmatmul.bf16.gmra.mxu0 %v4427
      %v4452 = vpop.f32.mrf.mxu0
      %v4453 = vadd.f32 0.0, %v4452
      %v4454 = vpop.f32.mrf.mxu0
      %v4455 = vadd.f32 0.0, %v4454
      %4456 = vdwg.mxu0
      %4457 = vmatpush.bf16.msra.mxu0 0
      %4458 = vmatpush.bf16.msra.mxu0 0
      %4459 = vmatpush.bf16.msra.mxu0 0
      %4460 = vmatpush.bf16.msra.mxu0 0
      %4461 = vmatpush.bf16.msra.mxu0 0
      %4462 = vmatpush.bf16.msra.mxu0 0
      %4463 = vmatpush.bf16.msra.mxu0 %v4283
      %4464 = vmatpush.bf16.msra.mxu0 %v4260
      %4465 = vmatmul.bf16.gmra.mxu0 %v4427
      %v4466 = vpop.f32.mrf.mxu0
      %v4467 = vadd.f32 0.0, %v4466
      %v4468 = vpop.f32.mrf.mxu0
      %v4469 = vadd.f32 0.0, %v4468
      %4470 = vdwg.mxu0
      %v4471 = vpack.c.bf16 %v4441, %v4439
      %v4472 = vpack.c.bf16 %v4455, %v4453
      %v4473 = vpack.c.bf16 %v4469, %v4467
      %s4474 = scalar_lea.vmem %s8, 528
      %v4475 = vld [vmem:[%s4474] sm:$0xff]
      %v4476 = vld [vmem:[%s4474 + $0x8] sm:$0xf]
      %v4477 = vld [vmem:[%s4474 + $0xc] sm:$0xff]
      %v4478 = vld [vmem:[%s4474 + $0x14] sm:$0xf]
      %v4479 = vld [vmem:[%s4474 + $0x18] sm:$0xff]
      %v4480 = vld [vmem:[%s4474 + $0x20] sm:$0xf]
      %v4481 = vld [vmem:[%s4474 + $0x24] sm:$0xff]
      %v4482 = vld [vmem:[%s4474 + $0x2c] sm:$0xf]
      %v4483 = vld [vmem:[%s4474 + $0x30] sm:$0xff]
      %v4484 = vld [vmem:[%s4474 + $0x38] sm:$0xf]
      %v4485 = vld [vmem:[%s4474 + $0x3c] sm:$0xff]
      %v4486 = vld [vmem:[%s4474 + $0x44] sm:$0xf]
      %v4487 = vld [vmem:[%s4474 + $0x48] sm:$0xff]
      %v4488 = vld [vmem:[%s4474 + $0x50] sm:$0xf]
      %v4489 = vld [vmem:[%s4474 + $0x54] sm:$0xff]
      %v4490 = vld [vmem:[%s4474 + $0x5c] sm:$0xf]
      %v4491 = vld [vmem:[%s4474 + $0x60] sm:$0xff]
      %v4492 = vld [vmem:[%s4474 + $0x68] sm:$0xf]
      %v4493 = vld [vmem:[%s4474 + $0x6c] sm:$0xff]
      %v4494 = vld [vmem:[%s4474 + $0x74] sm:$0xf]
      %v4495 = vld [vmem:[%s4474 + $0x78] sm:$0xff]
      %v4496 = vld [vmem:[%s4474 + $0x80] sm:$0xf]
      %v4497 = vld [vmem:[%s4474 + $0x84] sm:$0xff]
      %v4498 = vld [vmem:[%s4474 + $0x8c] sm:$0xf]
      %v4499 = vld [vmem:[%s4474 + $0x90] sm:$0xff]
      %v4500 = vld [vmem:[%s4474 + $0x98] sm:$0xf]
      %v4501 = vld [vmem:[%s4474 + $0x9c] sm:$0xff]
      %v4502 = vld [vmem:[%s4474 + $0xa4] sm:$0xf]
      %v4503 = vld [vmem:[%s4474 + $0xa8] sm:$0xff]
      %v4504 = vld [vmem:[%s4474 + $0xb0] sm:$0xf]
      %v4505 = vld [vmem:[%s4474 + $0xb4] sm:$0xff]
      %v4506 = vld [vmem:[%s4474 + $0xbc] sm:$0xf]
      %v4507 = vld [vmem:[%s4474 + $0xc0] sm:$0xff]
      %v4508 = vld [vmem:[%s4474 + $0xc8] sm:$0xf]
      %v4509 = vld [vmem:[%s4474 + $0xcc] sm:$0xff]
      %v4510 = vld [vmem:[%s4474 + $0xd4] sm:$0xf]
      %v4511 = vld [vmem:[%s4474 + $0xd8] sm:$0xff]
      %v4512 = vld [vmem:[%s4474 + $0xe0] sm:$0xf]
      %v4513 = vld [vmem:[%s4474 + $0xe4] sm:$0xff]
      %v4514 = vld [vmem:[%s4474 + $0xec] sm:$0xf]
      %v4515 = vld [vmem:[%s4474 + $0xf0] sm:$0xff]
      %v4516 = vld [vmem:[%s4474 + $0xf8] sm:$0xf]
      %v4517 = vld [vmem:[%s4474 + $0xfc] sm:$0xff]
      %v4518 = vld [vmem:[%s4474 + $0x104] sm:$0xf]
      %v4519 = vld [vmem:[%s4474 + $0x108] sm:$0xff]
      %v4520 = vld [vmem:[%s4474 + $0x110] sm:$0xf]
      %v4521 = vld [vmem:[%s4474 + $0x114] sm:$0xff]
      %v4522 = vld [vmem:[%s4474 + $0x11c] sm:$0xf]
      %v4523 = vld [vmem:[%s4474 + $0x120] sm:$0xff]
      %v4524 = vld [vmem:[%s4474 + $0x128] sm:$0xf]
      %v4525 = vld [vmem:[%s4474 + $0x12c] sm:$0xff]
      %v4526 = vld [vmem:[%s4474 + $0x134] sm:$0xf]
      %v4527 = vld [vmem:[%s4474 + $0x138] sm:$0xff]
      %v4528 = vld [vmem:[%s4474 + $0x140] sm:$0xf]
      %v4529 = vld [vmem:[%s4474 + $0x144] sm:$0xff]
      %v4530 = vld [vmem:[%s4474 + $0x14c] sm:$0xf]
      %v4531 = vld [vmem:[%s4474 + $0x150] sm:$0xff]
      %v4532 = vld [vmem:[%s4474 + $0x158] sm:$0xf]
      %v4533 = vld [vmem:[%s4474 + $0x15c] sm:$0xff]
      %v4534 = vld [vmem:[%s4474 + $0x164] sm:$0xf]
      %v4535 = vld [vmem:[%s4474 + $0x168] sm:$0xff]
      %v4536 = vld [vmem:[%s4474 + $0x170] sm:$0xf]
      %v4537 = vld [vmem:[%s4474 + $0x174] sm:$0xff]
      %v4538 = vld [vmem:[%s4474 + $0x17c] sm:$0xf]
      %v4539 = vld [vmem:[%s4474 + $0x180] sm:$0xff]
      %v4540 = vld [vmem:[%s4474 + $0x188] sm:$0xf]
      %v4541 = vld [vmem:[%s4474 + $0x18c] sm:$0xff]
      %v4542 = vld [vmem:[%s4474 + $0x194] sm:$0xf]
      %v4543 = vld [vmem:[%s4474 + $0x198] sm:$0xff]
      %v4544 = vld [vmem:[%s4474 + $0x1a0] sm:$0xf]
      %v4545 = vld [vmem:[%s4474 + $0x1a4] sm:$0xff]
      %v4546 = vld [vmem:[%s4474 + $0x1ac] sm:$0xf]
      %v4547 = vld [vmem:[%s4474 + $0x1b0] sm:$0xff]
      %v4548 = vld [vmem:[%s4474 + $0x1b8] sm:$0xf]
      %v4549 = vld [vmem:[%s4474 + $0x1bc] sm:$0xff]
      %v4550 = vld [vmem:[%s4474 + $0x1c4] sm:$0xf]
      %v4551 = vld [vmem:[%s4474 + $0x1c8] sm:$0xff]
      %v4552 = vld [vmem:[%s4474 + $0x1d0] sm:$0xf]
      %v4553 = vld [vmem:[%s4474 + $0x1d4] sm:$0xff]
      %v4554 = vld [vmem:[%s4474 + $0x1dc] sm:$0xf]
      %v4555 = vld [vmem:[%s4474 + $0x1e0] sm:$0xff]
      %v4556 = vld [vmem:[%s4474 + $0x1e8] sm:$0xf]
      %v4557 = vld [vmem:[%s4474 + $0x1ec] sm:$0xff]
      %v4558 = vld [vmem:[%s4474 + $0x1f4] sm:$0xf]
      %v4559 = vld [vmem:[%s4474 + $0x1f8] sm:$0xff]
      %v4560 = vld [vmem:[%s4474 + $0x200] sm:$0xf]
      %v4561 = vld [vmem:[%s4474 + $0x204] sm:$0xff]
      %v4562 = vld [vmem:[%s4474 + $0x20c] sm:$0xf]
      %v4651 = vunpack.c.l.b16 %v4475
      %v4652 = vunpack.c.h.b16 %v4475
      %v4653 = vunpack.c.l.b16 %v4476
      %v4654 = vunpack.c.l.b16 %v4477
      %v4655 = vunpack.c.h.b16 %v4477
      %v4656 = vunpack.c.l.b16 %v4478
      %v4657 = vunpack.c.l.b16 %v4479
      %v4658 = vunpack.c.h.b16 %v4479
      %v4659 = vunpack.c.l.b16 %v4480
      %v4660 = vunpack.c.l.b16 %v4481
      %v4661 = vunpack.c.h.b16 %v4481
      %v4662 = vunpack.c.l.b16 %v4482
      %v4663 = vunpack.c.l.b16 %v4483
      %v4664 = vunpack.c.h.b16 %v4483
      %v4665 = vunpack.c.l.b16 %v4484
      %v4666 = vunpack.c.l.b16 %v4485
      %v4667 = vunpack.c.h.b16 %v4485
      %v4668 = vunpack.c.l.b16 %v4486
      %v4669 = vunpack.c.l.b16 %v4487
      %v4670 = vunpack.c.h.b16 %v4487
      %v4671 = vunpack.c.l.b16 %v4488
      %v4672 = vunpack.c.l.b16 %v4489
      %v4673 = vunpack.c.h.b16 %v4489
      %v4674 = vunpack.c.l.b16 %v4490
      %v4675 = vunpack.c.l.b16 %v4491
      %v4676 = vunpack.c.h.b16 %v4491
      %v4677 = vunpack.c.l.b16 %v4492
      %v4678 = vunpack.c.l.b16 %v4493
      %v4679 = vunpack.c.h.b16 %v4493
      %v4680 = vunpack.c.l.b16 %v4494
      %v4681 = vunpack.c.l.b16 %v4495
      %v4682 = vunpack.c.h.b16 %v4495
      %v4683 = vunpack.c.l.b16 %v4496
      %v4684 = vunpack.c.l.b16 %v4497
      %v4685 = vunpack.c.h.b16 %v4497
      %v4686 = vunpack.c.l.b16 %v4498
      %v4687 = vunpack.c.l.b16 %v4499
      %v4688 = vunpack.c.h.b16 %v4499
      %v4689 = vunpack.c.l.b16 %v4500
      %v4690 = vunpack.c.l.b16 %v4501
      %v4691 = vunpack.c.h.b16 %v4501
      %v4692 = vunpack.c.l.b16 %v4502
      %v4693 = vunpack.c.l.b16 %v4503
      %v4694 = vunpack.c.h.b16 %v4503
      %v4695 = vunpack.c.l.b16 %v4504
      %v4696 = vunpack.c.l.b16 %v4505
      %v4697 = vunpack.c.h.b16 %v4505
      %v4698 = vunpack.c.l.b16 %v4506
      %v4699 = vunpack.c.l.b16 %v4507
      %v4700 = vunpack.c.h.b16 %v4507
      %v4701 = vunpack.c.l.b16 %v4508
      %v4702 = vunpack.c.l.b16 %v4509
      %v4703 = vunpack.c.h.b16 %v4509
      %v4704 = vunpack.c.l.b16 %v4510
      %v4705 = vunpack.c.l.b16 %v4511
      %v4706 = vunpack.c.h.b16 %v4511
      %v4707 = vunpack.c.l.b16 %v4512
      %v4708 = vunpack.c.l.b16 %v4513
      %v4709 = vunpack.c.h.b16 %v4513
      %v4710 = vunpack.c.l.b16 %v4514
      %v4711 = vunpack.c.l.b16 %v4515
      %v4712 = vunpack.c.h.b16 %v4515
      %v4713 = vunpack.c.l.b16 %v4516
      %v4714 = vunpack.c.l.b16 %v4517
      %v4715 = vunpack.c.h.b16 %v4517
      %v4716 = vunpack.c.l.b16 %v4518
      %v4717 = vunpack.c.l.b16 %v4519
      %v4718 = vunpack.c.h.b16 %v4519
      %v4719 = vunpack.c.l.b16 %v4520
      %v4720 = vunpack.c.l.b16 %v4521
      %v4721 = vunpack.c.h.b16 %v4521
      %v4722 = vunpack.c.l.b16 %v4522
      %v4723 = vunpack.c.l.b16 %v4523
      %v4724 = vunpack.c.h.b16 %v4523
      %v4725 = vunpack.c.l.b16 %v4524
      %v4726 = vunpack.c.l.b16 %v4525
      %v4727 = vunpack.c.h.b16 %v4525
      %v4728 = vunpack.c.l.b16 %v4526
      %v4729 = vunpack.c.l.b16 %v4527
      %v4730 = vunpack.c.h.b16 %v4527
      %v4731 = vunpack.c.l.b16 %v4528
      %v4732 = vunpack.c.l.b16 %v4529
      %v4733 = vunpack.c.h.b16 %v4529
      %v4734 = vunpack.c.l.b16 %v4530
      %v4735 = vunpack.c.l.b16 %v4531
      %v4736 = vunpack.c.h.b16 %v4531
      %v4737 = vunpack.c.l.b16 %v4532
      %v4738 = vunpack.c.l.b16 %v4533
      %v4739 = vunpack.c.h.b16 %v4533
      %v4740 = vunpack.c.l.b16 %v4534
      %v4741 = vunpack.c.l.b16 %v4535
      %v4742 = vunpack.c.h.b16 %v4535
      %v4743 = vunpack.c.l.b16 %v4536
      %v4744 = vunpack.c.l.b16 %v4537
      %v4745 = vunpack.c.h.b16 %v4537
      %v4746 = vunpack.c.l.b16 %v4538
      %v4747 = vunpack.c.l.b16 %v4539
      %v4748 = vunpack.c.h.b16 %v4539
      %v4749 = vunpack.c.l.b16 %v4540
      %v4750 = vunpack.c.l.b16 %v4541
      %v4751 = vunpack.c.h.b16 %v4541
      %v4752 = vunpack.c.l.b16 %v4542
      %v4753 = vunpack.c.l.b16 %v4543
      %v4754 = vunpack.c.h.b16 %v4543
      %v4755 = vunpack.c.l.b16 %v4544
      %v4756 = vunpack.c.l.b16 %v4545
      %v4757 = vunpack.c.h.b16 %v4545
      %v4758 = vunpack.c.l.b16 %v4546
      %v4759 = vunpack.c.l.b16 %v4547
      %v4760 = vunpack.c.h.b16 %v4547
      %v4761 = vunpack.c.l.b16 %v4548
      %v4762 = vunpack.c.l.b16 %v4549
      %v4763 = vunpack.c.h.b16 %v4549
      %v4764 = vunpack.c.l.b16 %v4550
      %v4765 = vunpack.c.l.b16 %v4551
      %v4766 = vunpack.c.h.b16 %v4551
      %v4767 = vunpack.c.l.b16 %v4552
      %v4768 = vunpack.c.l.b16 %v4553
      %v4769 = vunpack.c.h.b16 %v4553
      %v4770 = vunpack.c.l.b16 %v4554
      %v4771 = vunpack.c.l.b16 %v4555
      %v4772 = vunpack.c.h.b16 %v4555
      %v4773 = vunpack.c.l.b16 %v4556
      %v4774 = vunpack.c.l.b16 %v4557
      %v4775 = vunpack.c.h.b16 %v4557
      %v4776 = vunpack.c.l.b16 %v4558
      %v4777 = vunpack.c.l.b16 %v4559
      %v4778 = vunpack.c.h.b16 %v4559
      %v4779 = vunpack.c.l.b16 %v4560
      %v4780 = vunpack.c.l.b16 %v4561
      %v4781 = vunpack.c.h.b16 %v4561
      %v4782 = vunpack.c.l.b16 %v4562
      %v4783 = vpack.c.b16 %v4654, %v4651
      %v4784 = vpack.c.b16 %v4655, %v4652
      %v4785 = vpack.c.b16 %v4656, %v4653
      %v4786 = vpack.c.b16 %v4660, %v4657
      %v4787 = vpack.c.b16 %v4661, %v4658
      %v4788 = vpack.c.b16 %v4662, %v4659
      %v4789 = vpack.c.b16 %v4666, %v4663
      %v4790 = vpack.c.b16 %v4667, %v4664
      %v4791 = vpack.c.b16 %v4668, %v4665
      %v4792 = vpack.c.b16 %v4672, %v4669
      %v4793 = vpack.c.b16 %v4673, %v4670
      %v4794 = vpack.c.b16 %v4674, %v4671
      %v4795 = vpack.c.b16 %v4678, %v4675
      %v4796 = vpack.c.b16 %v4679, %v4676
      %v4797 = vpack.c.b16 %v4680, %v4677
      %v4798 = vpack.c.b16 %v4684, %v4681
      %v4799 = vpack.c.b16 %v4685, %v4682
      %v4800 = vpack.c.b16 %v4686, %v4683
      %v4801 = vpack.c.b16 %v4690, %v4687
      %v4802 = vpack.c.b16 %v4691, %v4688
      %v4803 = vpack.c.b16 %v4692, %v4689
      %v4804 = vpack.c.b16 %v4696, %v4693
      %v4805 = vpack.c.b16 %v4697, %v4694
      %v4806 = vpack.c.b16 %v4698, %v4695
      %v4807 = vpack.c.b16 %v4702, %v4699
      %v4808 = vpack.c.b16 %v4703, %v4700
      %v4809 = vpack.c.b16 %v4704, %v4701
      %v4810 = vpack.c.b16 %v4708, %v4705
      %v4811 = vpack.c.b16 %v4709, %v4706
      %v4812 = vpack.c.b16 %v4710, %v4707
      %v4813 = vpack.c.b16 %v4714, %v4711
      %v4814 = vpack.c.b16 %v4715, %v4712
      %v4815 = vpack.c.b16 %v4716, %v4713
      %v4816 = vpack.c.b16 %v4720, %v4717
      %v4817 = vpack.c.b16 %v4721, %v4718
      %v4818 = vpack.c.b16 %v4722, %v4719
      %v4819 = vpack.c.b16 %v4726, %v4723
      %v4820 = vpack.c.b16 %v4727, %v4724
      %v4821 = vpack.c.b16 %v4728, %v4725
      %v4822 = vpack.c.b16 %v4732, %v4729
      %v4823 = vpack.c.b16 %v4733, %v4730
      %v4824 = vpack.c.b16 %v4734, %v4731
      %v4825 = vpack.c.b16 %v4738, %v4735
      %v4826 = vpack.c.b16 %v4739, %v4736
      %v4827 = vpack.c.b16 %v4740, %v4737
      %v4828 = vpack.c.b16 %v4744, %v4741
      %v4829 = vpack.c.b16 %v4745, %v4742
      %v4830 = vpack.c.b16 %v4746, %v4743
      %v4831 = vpack.c.b16 %v4750, %v4747
      %v4832 = vpack.c.b16 %v4751, %v4748
      %v4833 = vpack.c.b16 %v4752, %v4749
      %v4834 = vpack.c.b16 %v4756, %v4753
      %v4835 = vpack.c.b16 %v4757, %v4754
      %v4836 = vpack.c.b16 %v4758, %v4755
      %v4837 = vpack.c.b16 %v4762, %v4759
      %v4838 = vpack.c.b16 %v4763, %v4760
      %v4839 = vpack.c.b16 %v4764, %v4761
      %v4840 = vpack.c.b16 %v4768, %v4765
      %v4841 = vpack.c.b16 %v4769, %v4766
      %v4842 = vpack.c.b16 %v4770, %v4767
      %v4843 = vpack.c.b16 %v4774, %v4771
      %v4844 = vpack.c.b16 %v4775, %v4772
      %v4845 = vpack.c.b16 %v4776, %v4773
      %v4846 = vpack.c.b16 %v4780, %v4777
      %v4847 = vpack.c.b16 %v4781, %v4778
      %v4848 = vpack.c.b16 %v4782, %v4779
      %v4916 = vsel %vm641, %v4473, 0
      %4918 = vmatpush.bf16.msra.mxu0 %v4804
      %4919 = vmatpush.bf16.msra.mxu0 %v4801
      %4920 = vmatpush.bf16.msra.mxu0 %v4798
      %4921 = vmatpush.bf16.msra.mxu0 %v4795
      %4922 = vmatpush.bf16.msra.mxu0 %v4792
      %4923 = vmatpush.bf16.msra.mxu0 %v4789
      %4924 = vmatpush.bf16.msra.mxu0 %v4786
      %4925 = vmatpush.bf16.msra.mxu0 %v4783
      %4926 = vmatmul.bf16.gmra.mxu0 %v4471
      %v4927 = vpop.f32.mrf.mxu0
      %v4928 = vadd.f32 0.0, %v4927
      %v4929 = vpop.f32.mrf.mxu0
      %v4930 = vadd.f32 0.0, %v4929
      %4931 = vdwg.mxu0
      %4932 = vmatpush.bf16.msra.mxu0 %v4828
      %4933 = vmatpush.bf16.msra.mxu0 %v4825
      %4934 = vmatpush.bf16.msra.mxu0 %v4822
      %4935 = vmatpush.bf16.msra.mxu0 %v4819
      %4936 = vmatpush.bf16.msra.mxu0 %v4816
      %4937 = vmatpush.bf16.msra.mxu0 %v4813
      %4938 = vmatpush.bf16.msra.mxu0 %v4810
      %4939 = vmatpush.bf16.msra.mxu0 %v4807
      %4940 = vmatmul.bf16.gmra.mxu0 %v4472
      %v4941 = vpop.f32.mrf.mxu0
      %v4942 = vadd.f32 %v4928, %v4941
      %v4943 = vpop.f32.mrf.mxu0
      %v4944 = vadd.f32 %v4930, %v4943
      %4945 = vdwg.mxu0
      %4946 = vmatpush.bf16.msra.mxu0 0
      %4947 = vmatpush.bf16.msra.mxu0 0
      %4948 = vmatpush.bf16.msra.mxu0 %v4846
      %4949 = vmatpush.bf16.msra.mxu0 %v4843
      %4950 = vmatpush.bf16.msra.mxu0 %v4840
      %4951 = vmatpush.bf16.msra.mxu0 %v4837
      %4952 = vmatpush.bf16.msra.mxu0 %v4834
      %4953 = vmatpush.bf16.msra.mxu0 %v4831
      %4954 = vmatmul.bf16.gmra.mxu0 %v4916
      %v4955 = vpop.f32.mrf.mxu0
      %v4956 = vadd.f32 %v4942, %v4955
      %v4957 = vpop.f32.mrf.mxu0
      %v4958 = vadd.f32 %v4944, %v4957
      %4959 = vdwg.mxu0
      %4960 = vmatpush.bf16.msra.mxu0 %v4805
      %4961 = vmatpush.bf16.msra.mxu0 %v4802
      %4962 = vmatpush.bf16.msra.mxu0 %v4799
      %4963 = vmatpush.bf16.msra.mxu0 %v4796
      %4964 = vmatpush.bf16.msra.mxu0 %v4793
      %4965 = vmatpush.bf16.msra.mxu0 %v4790
      %4966 = vmatpush.bf16.msra.mxu0 %v4787
      %4967 = vmatpush.bf16.msra.mxu0 %v4784
      %4968 = vmatmul.bf16.gmra.mxu0 %v4471
      %v4969 = vpop.f32.mrf.mxu0
      %v4970 = vadd.f32 0.0, %v4969
      %v4971 = vpop.f32.mrf.mxu0
      %v4972 = vadd.f32 0.0, %v4971
      %4973 = vdwg.mxu0
      %4974 = vmatpush.bf16.msra.mxu0 %v4829
      %4975 = vmatpush.bf16.msra.mxu0 %v4826
      %4976 = vmatpush.bf16.msra.mxu0 %v4823
      %4977 = vmatpush.bf16.msra.mxu0 %v4820
      %4978 = vmatpush.bf16.msra.mxu0 %v4817
      %4979 = vmatpush.bf16.msra.mxu0 %v4814
      %4980 = vmatpush.bf16.msra.mxu0 %v4811
      %4981 = vmatpush.bf16.msra.mxu0 %v4808
      %4982 = vmatmul.bf16.gmra.mxu0 %v4472
      %v4983 = vpop.f32.mrf.mxu0
      %v4984 = vadd.f32 %v4970, %v4983
      %v4985 = vpop.f32.mrf.mxu0
      %v4986 = vadd.f32 %v4972, %v4985
      %4987 = vdwg.mxu0
      %4988 = vmatpush.bf16.msra.mxu0 0
      %4989 = vmatpush.bf16.msra.mxu0 0
      %4990 = vmatpush.bf16.msra.mxu0 %v4847
      %4991 = vmatpush.bf16.msra.mxu0 %v4844
      %4992 = vmatpush.bf16.msra.mxu0 %v4841
      %4993 = vmatpush.bf16.msra.mxu0 %v4838
      %4994 = vmatpush.bf16.msra.mxu0 %v4835
      %4995 = vmatpush.bf16.msra.mxu0 %v4832
      %4996 = vmatmul.bf16.gmra.mxu0 %v4916
      %v4997 = vpop.f32.mrf.mxu0
      %v4998 = vadd.f32 %v4984, %v4997
      %v4999 = vpop.f32.mrf.mxu0
      %v5000 = vadd.f32 %v4986, %v4999
      %5001 = vdwg.mxu0
      %5002 = vmatpush.bf16.msra.mxu0 %v4806
      %5003 = vmatpush.bf16.msra.mxu0 %v4803
      %5004 = vmatpush.bf16.msra.mxu0 %v4800
      %5005 = vmatpush.bf16.msra.mxu0 %v4797
      %5006 = vmatpush.bf16.msra.mxu0 %v4794
      %5007 = vmatpush.bf16.msra.mxu0 %v4791
      %5008 = vmatpush.bf16.msra.mxu0 %v4788
      %5009 = vmatpush.bf16.msra.mxu0 %v4785
      %5010 = vmatmul.bf16.gmra.mxu0 %v4471
      %v5011 = vpop.f32.mrf.mxu0
      %v5012 = vadd.f32 0.0, %v5011
      %v5013 = vpop.f32.mrf.mxu0
      %v5014 = vadd.f32 0.0, %v5013
      %5015 = vdwg.mxu0
      %5016 = vmatpush.bf16.msra.mxu0 %v4830
      %5017 = vmatpush.bf16.msra.mxu0 %v4827
      %5018 = vmatpush.bf16.msra.mxu0 %v4824
      %5019 = vmatpush.bf16.msra.mxu0 %v4821
      %5020 = vmatpush.bf16.msra.mxu0 %v4818
      %5021 = vmatpush.bf16.msra.mxu0 %v4815
      %5022 = vmatpush.bf16.msra.mxu0 %v4812
      %5023 = vmatpush.bf16.msra.mxu0 %v4809
      %5024 = vmatmul.bf16.gmra.mxu0 %v4472
      %v5025 = vpop.f32.mrf.mxu0
      %v5026 = vadd.f32 %v5012, %v5025
      %v5027 = vpop.f32.mrf.mxu0
      %v5028 = vadd.f32 %v5014, %v5027
      %5029 = vdwg.mxu0
      %5030 = vmatpush.bf16.msra.mxu0 0
      %5031 = vmatpush.bf16.msra.mxu0 0
      %5032 = vmatpush.bf16.msra.mxu0 %v4848
      %5033 = vmatpush.bf16.msra.mxu0 %v4845
      %5034 = vmatpush.bf16.msra.mxu0 %v4842
      %5035 = vmatpush.bf16.msra.mxu0 %v4839
      %5036 = vmatpush.bf16.msra.mxu0 %v4836
      %5037 = vmatpush.bf16.msra.mxu0 %v4833
      %5038 = vmatmul.bf16.gmra.mxu0 %v4916
      %v5039 = vpop.f32.mrf.mxu0
      %v5040 = vadd.f32 %v5026, %v5039
      %v5041 = vpop.f32.mrf.mxu0
      %v5042 = vadd.f32 %v5028, %v5041
      %5043 = vdwg.mxu0
      %v5132 = vunpack.c.l.b16 %v4330
      %v5133 = vunpack.c.h.b16 %v4330
      %v5134 = vunpack.c.l.b16 %v4331
      %v5135 = vunpack.c.l.b16 %v4332
      %v5136 = vunpack.c.h.b16 %v4332
      %v5137 = vunpack.c.l.b16 %v4333
      %v5138 = vunpack.c.l.b16 %v4334
      %v5139 = vunpack.c.h.b16 %v4334
      %v5140 = vunpack.c.l.b16 %v4335
      %v5141 = vunpack.c.l.b16 %v4336
      %v5142 = vunpack.c.h.b16 %v4336
      %v5143 = vunpack.c.l.b16 %v4337
      %v5144 = vunpack.c.l.b16 %v4338
      %v5145 = vunpack.c.h.b16 %v4338
      %v5146 = vunpack.c.l.b16 %v4339
      %v5147 = vunpack.c.l.b16 %v4340
      %v5148 = vunpack.c.h.b16 %v4340
      %v5149 = vunpack.c.l.b16 %v4341
      %v5150 = vunpack.c.l.b16 %v4342
      %v5151 = vunpack.c.h.b16 %v4342
      %v5152 = vunpack.c.l.b16 %v4343
      %v5153 = vunpack.c.l.b16 %v4344
      %v5154 = vunpack.c.h.b16 %v4344
      %v5155 = vunpack.c.l.b16 %v4345
      %v5156 = vunpack.c.l.b16 %v4346
      %v5157 = vunpack.c.h.b16 %v4346
      %v5158 = vunpack.c.l.b16 %v4347
      %v5159 = vunpack.c.l.b16 %v4348
      %v5160 = vunpack.c.h.b16 %v4348
      %v5161 = vunpack.c.l.b16 %v4349
      %v5162 = vunpack.c.l.b16 %v4350
      %v5163 = vunpack.c.h.b16 %v4350
      %v5164 = vunpack.c.l.b16 %v4351
      %v5165 = vunpack.c.l.b16 %v4352
      %v5166 = vunpack.c.h.b16 %v4352
      %v5167 = vunpack.c.l.b16 %v4353
      %v5168 = vunpack.c.l.b16 %v4354
      %v5169 = vunpack.c.h.b16 %v4354
      %v5170 = vunpack.c.l.b16 %v4355
      %v5171 = vunpack.c.l.b16 %v4356
      %v5172 = vunpack.c.h.b16 %v4356
      %v5173 = vunpack.c.l.b16 %v4357
      %v5174 = vunpack.c.l.b16 %v4358
      %v5175 = vunpack.c.h.b16 %v4358
      %v5176 = vunpack.c.l.b16 %v4359
      %v5177 = vunpack.c.l.b16 %v4360
      %v5178 = vunpack.c.h.b16 %v4360
      %v5179 = vunpack.c.l.b16 %v4361
      %v5180 = vunpack.c.l.b16 %v4362
      %v5181 = vunpack.c.h.b16 %v4362
      %v5182 = vunpack.c.l.b16 %v4363
      %v5183 = vunpack.c.l.b16 %v4364
      %v5184 = vunpack.c.h.b16 %v4364
      %v5185 = vunpack.c.l.b16 %v4365
      %v5186 = vunpack.c.l.b16 %v4366
      %v5187 = vunpack.c.h.b16 %v4366
      %v5188 = vunpack.c.l.b16 %v4367
      %v5189 = vunpack.c.l.b16 %v4368
      %v5190 = vunpack.c.h.b16 %v4368
      %v5191 = vunpack.c.l.b16 %v4369
      %v5192 = vunpack.c.l.b16 %v4370
      %v5193 = vunpack.c.h.b16 %v4370
      %v5194 = vunpack.c.l.b16 %v4371
      %v5195 = vunpack.c.l.b16 %v4372
      %v5196 = vunpack.c.h.b16 %v4372
      %v5197 = vunpack.c.l.b16 %v4373
      %v5198 = vunpack.c.l.b16 %v4374
      %v5199 = vunpack.c.h.b16 %v4374
      %v5200 = vunpack.c.l.b16 %v4375
      %v5201 = vunpack.c.l.b16 %v4376
      %v5202 = vunpack.c.h.b16 %v4376
      %v5203 = vunpack.c.l.b16 %v4377
      %v5204 = vunpack.c.l.b16 %v4378
      %v5205 = vunpack.c.h.b16 %v4378
      %v5206 = vunpack.c.l.b16 %v4379
      %v5207 = vunpack.c.l.b16 %v4380
      %v5208 = vunpack.c.h.b16 %v4380
      %v5209 = vunpack.c.l.b16 %v4381
      %v5210 = vunpack.c.l.b16 %v4382
      %v5211 = vunpack.c.h.b16 %v4382
      %v5212 = vunpack.c.l.b16 %v4383
      %v5213 = vunpack.c.l.b16 %v4384
      %v5214 = vunpack.c.h.b16 %v4384
      %v5215 = vunpack.c.l.b16 %v4385
      %v5216 = vunpack.c.l.b16 %v4386
      %v5217 = vunpack.c.h.b16 %v4386
      %v5218 = vunpack.c.l.b16 %v4387
      %v5219 = vunpack.c.l.b16 %v4388
      %v5220 = vunpack.c.h.b16 %v4388
      %v5221 = vunpack.c.l.b16 %v4389
      %v5222 = vunpack.c.l.b16 %v4390
      %v5223 = vunpack.c.h.b16 %v4390
      %v5224 = vunpack.c.l.b16 %v4391
      %v5225 = vunpack.c.l.b16 %v4392
      %v5226 = vunpack.c.h.b16 %v4392
      %v5227 = vunpack.c.l.b16 %v4393
      %v5228 = vunpack.c.l.b16 %v4394
      %v5229 = vunpack.c.h.b16 %v4394
      %v5230 = vunpack.c.l.b16 %v4395
      %v5231 = vunpack.c.l.b16 %v4396
      %v5232 = vunpack.c.h.b16 %v4396
      %v5233 = vunpack.c.l.b16 %v4397
      %v5234 = vunpack.c.l.b16 %v4398
      %v5235 = vunpack.c.h.b16 %v4398
      %v5236 = vunpack.c.l.b16 %v4399
      %v5237 = vunpack.c.l.b16 %v4400
      %v5238 = vunpack.c.h.b16 %v4400
      %v5239 = vunpack.c.l.b16 %v4401
      %v5240 = vunpack.c.l.b16 %v4402
      %v5241 = vunpack.c.h.b16 %v4402
      %v5242 = vunpack.c.l.b16 %v4403
      %v5243 = vunpack.c.l.b16 %v4404
      %v5244 = vunpack.c.h.b16 %v4404
      %v5245 = vunpack.c.l.b16 %v4405
      %v5246 = vunpack.c.l.b16 %v4406
      %v5247 = vunpack.c.h.b16 %v4406
      %v5248 = vunpack.c.l.b16 %v4407
      %v5249 = vunpack.c.l.b16 %v4408
      %v5250 = vunpack.c.h.b16 %v4408
      %v5251 = vunpack.c.l.b16 %v4409
      %v5252 = vunpack.c.l.b16 %v4410
      %v5253 = vunpack.c.h.b16 %v4410
      %v5254 = vunpack.c.l.b16 %v4411
      %v5255 = vunpack.c.l.b16 %v4412
      %v5256 = vunpack.c.h.b16 %v4412
      %v5257 = vunpack.c.l.b16 %v4413
      %v5258 = vunpack.c.l.b16 %v4414
      %v5259 = vunpack.c.h.b16 %v4414
      %v5260 = vunpack.c.l.b16 %v4415
      %v5261 = vunpack.c.l.b16 %v4416
      %v5262 = vunpack.c.h.b16 %v4416
      %v5263 = vunpack.c.l.b16 %v4417
      %v5264 = vpack.c.b16 %v5135, %v5132
      %v5265 = vpack.c.b16 %v5136, %v5133
      %v5266 = vpack.c.b16 %v5137, %v5134
      %v5267 = vpack.c.b16 %v5141, %v5138
      %v5268 = vpack.c.b16 %v5142, %v5139
      %v5269 = vpack.c.b16 %v5143, %v5140
      %v5270 = vpack.c.b16 %v5147, %v5144
      %v5271 = vpack.c.b16 %v5148, %v5145
      %v5272 = vpack.c.b16 %v5149, %v5146
      %v5273 = vpack.c.b16 %v5153, %v5150
      %v5274 = vpack.c.b16 %v5154, %v5151
      %v5275 = vpack.c.b16 %v5155, %v5152
      %v5276 = vpack.c.b16 %v5159, %v5156
      %v5277 = vpack.c.b16 %v5160, %v5157
      %v5278 = vpack.c.b16 %v5161, %v5158
      %v5279 = vpack.c.b16 %v5165, %v5162
      %v5280 = vpack.c.b16 %v5166, %v5163
      %v5281 = vpack.c.b16 %v5167, %v5164
      %v5282 = vpack.c.b16 %v5171, %v5168
      %v5283 = vpack.c.b16 %v5172, %v5169
      %v5284 = vpack.c.b16 %v5173, %v5170
      %v5285 = vpack.c.b16 %v5177, %v5174
      %v5286 = vpack.c.b16 %v5178, %v5175
      %v5287 = vpack.c.b16 %v5179, %v5176
      %v5288 = vpack.c.b16 %v5183, %v5180
      %v5289 = vpack.c.b16 %v5184, %v5181
      %v5290 = vpack.c.b16 %v5185, %v5182
      %v5291 = vpack.c.b16 %v5189, %v5186
      %v5292 = vpack.c.b16 %v5190, %v5187
      %v5293 = vpack.c.b16 %v5191, %v5188
      %v5294 = vpack.c.b16 %v5195, %v5192
      %v5295 = vpack.c.b16 %v5196, %v5193
      %v5296 = vpack.c.b16 %v5197, %v5194
      %v5297 = vpack.c.b16 %v5201, %v5198
      %v5298 = vpack.c.b16 %v5202, %v5199
      %v5299 = vpack.c.b16 %v5203, %v5200
      %v5300 = vpack.c.b16 %v5207, %v5204
      %v5301 = vpack.c.b16 %v5208, %v5205
      %v5302 = vpack.c.b16 %v5209, %v5206
      %v5303 = vpack.c.b16 %v5213, %v5210
      %v5304 = vpack.c.b16 %v5214, %v5211
      %v5305 = vpack.c.b16 %v5215, %v5212
      %v5306 = vpack.c.b16 %v5219, %v5216
      %v5307 = vpack.c.b16 %v5220, %v5217
      %v5308 = vpack.c.b16 %v5221, %v5218
      %v5309 = vpack.c.b16 %v5225, %v5222
      %v5310 = vpack.c.b16 %v5226, %v5223
      %v5311 = vpack.c.b16 %v5227, %v5224
      %v5312 = vpack.c.b16 %v5231, %v5228
      %v5313 = vpack.c.b16 %v5232, %v5229
      %v5314 = vpack.c.b16 %v5233, %v5230
      %v5315 = vpack.c.b16 %v5237, %v5234
      %v5316 = vpack.c.b16 %v5238, %v5235
      %v5317 = vpack.c.b16 %v5239, %v5236
      %v5318 = vpack.c.b16 %v5243, %v5240
      %v5319 = vpack.c.b16 %v5244, %v5241
      %v5320 = vpack.c.b16 %v5245, %v5242
      %v5321 = vpack.c.b16 %v5249, %v5246
      %v5322 = vpack.c.b16 %v5250, %v5247
      %v5323 = vpack.c.b16 %v5251, %v5248
      %v5324 = vpack.c.b16 %v5255, %v5252
      %v5325 = vpack.c.b16 %v5256, %v5253
      %v5326 = vpack.c.b16 %v5257, %v5254
      %v5327 = vpack.c.b16 %v5261, %v5258
      %v5328 = vpack.c.b16 %v5262, %v5259
      %v5329 = vpack.c.b16 %v5263, %v5260
      %v5397 = vsel %vm641, %v4329, 0
      %5399 = vmatpush.bf16.msra.mxu0 %v5285
      %5400 = vmatpush.bf16.msra.mxu0 %v5282
      %5401 = vmatpush.bf16.msra.mxu0 %v5279
      %5402 = vmatpush.bf16.msra.mxu0 %v5276
      %5403 = vmatpush.bf16.msra.mxu0 %v5273
      %5404 = vmatpush.bf16.msra.mxu0 %v5270
      %5405 = vmatpush.bf16.msra.mxu0 %v5267
      %5406 = vmatpush.bf16.msra.mxu0 %v5264
      %5407 = vmatmul.bf16.gmra.mxu0 %v4327
      %v5408 = vpop.f32.mrf.mxu0
      %v5409 = vadd.f32 %v4956, %v5408
      %v5410 = vpop.f32.mrf.mxu0
      %v5411 = vadd.f32 %v4958, %v5410
      %5412 = vdwg.mxu0
      %5413 = vmatpush.bf16.msra.mxu0 %v5309
      %5414 = vmatpush.bf16.msra.mxu0 %v5306
      %5415 = vmatpush.bf16.msra.mxu0 %v5303
      %5416 = vmatpush.bf16.msra.mxu0 %v5300
      %5417 = vmatpush.bf16.msra.mxu0 %v5297
      %5418 = vmatpush.bf16.msra.mxu0 %v5294
      %5419 = vmatpush.bf16.msra.mxu0 %v5291
      %5420 = vmatpush.bf16.msra.mxu0 %v5288
      %5421 = vmatmul.bf16.gmra.mxu0 %v4328
      %v5422 = vpop.f32.mrf.mxu0
      %v5423 = vadd.f32 %v5409, %v5422
      %v5424 = vpop.f32.mrf.mxu0
      %v5425 = vadd.f32 %v5411, %v5424
      %5426 = vdwg.mxu0
      %5427 = vmatpush.bf16.msra.mxu0 0
      %5428 = vmatpush.bf16.msra.mxu0 0
      %5429 = vmatpush.bf16.msra.mxu0 %v5327
      %5430 = vmatpush.bf16.msra.mxu0 %v5324
      %5431 = vmatpush.bf16.msra.mxu0 %v5321
      %5432 = vmatpush.bf16.msra.mxu0 %v5318
      %5433 = vmatpush.bf16.msra.mxu0 %v5315
      %5434 = vmatpush.bf16.msra.mxu0 %v5312
      %5435 = vmatmul.bf16.gmra.mxu0 %v5397
      %v5436 = vpop.f32.mrf.mxu0
      %v5437 = vadd.f32 %v5423, %v5436
      %v5438 = vpop.f32.mrf.mxu0
      %v5439 = vadd.f32 %v5425, %v5438
      %5440 = vdwg.mxu0
      %5441 = vmatpush.bf16.msra.mxu0 %v5286
      %5442 = vmatpush.bf16.msra.mxu0 %v5283
      %5443 = vmatpush.bf16.msra.mxu0 %v5280
      %5444 = vmatpush.bf16.msra.mxu0 %v5277
      %5445 = vmatpush.bf16.msra.mxu0 %v5274
      %5446 = vmatpush.bf16.msra.mxu0 %v5271
      %5447 = vmatpush.bf16.msra.mxu0 %v5268
      %5448 = vmatpush.bf16.msra.mxu0 %v5265
      %5449 = vmatmul.bf16.gmra.mxu0 %v4327
      %v5450 = vpop.f32.mrf.mxu0
      %v5451 = vadd.f32 %v4998, %v5450
      %v5452 = vpop.f32.mrf.mxu0
      %v5453 = vadd.f32 %v5000, %v5452
      %5454 = vdwg.mxu0
      %5455 = vmatpush.bf16.msra.mxu0 %v5310
      %5456 = vmatpush.bf16.msra.mxu0 %v5307
      %5457 = vmatpush.bf16.msra.mxu0 %v5304
      %5458 = vmatpush.bf16.msra.mxu0 %v5301
      %5459 = vmatpush.bf16.msra.mxu0 %v5298
      %5460 = vmatpush.bf16.msra.mxu0 %v5295
      %5461 = vmatpush.bf16.msra.mxu0 %v5292
      %5462 = vmatpush.bf16.msra.mxu0 %v5289
      %5463 = vmatmul.bf16.gmra.mxu0 %v4328
      %v5464 = vpop.f32.mrf.mxu0
      %v5465 = vadd.f32 %v5451, %v5464
      %v5466 = vpop.f32.mrf.mxu0
      %v5467 = vadd.f32 %v5453, %v5466
      %5468 = vdwg.mxu0
      %5469 = vmatpush.bf16.msra.mxu0 0
      %5470 = vmatpush.bf16.msra.mxu0 0
      %5471 = vmatpush.bf16.msra.mxu0 %v5328
      %5472 = vmatpush.bf16.msra.mxu0 %v5325
      %5473 = vmatpush.bf16.msra.mxu0 %v5322
      %5474 = vmatpush.bf16.msra.mxu0 %v5319
      %5475 = vmatpush.bf16.msra.mxu0 %v5316
      %5476 = vmatpush.bf16.msra.mxu0 %v5313
      %5477 = vmatmul.bf16.gmra.mxu0 %v5397
      %v5478 = vpop.f32.mrf.mxu0
      %v5479 = vadd.f32 %v5465, %v5478
      %v5480 = vpop.f32.mrf.mxu0
      %v5481 = vadd.f32 %v5467, %v5480
      %5482 = vdwg.mxu0
      %5483 = vmatpush.bf16.msra.mxu0 %v5287
      %5484 = vmatpush.bf16.msra.mxu0 %v5284
      %5485 = vmatpush.bf16.msra.mxu0 %v5281
      %5486 = vmatpush.bf16.msra.mxu0 %v5278
      %5487 = vmatpush.bf16.msra.mxu0 %v5275
      %5488 = vmatpush.bf16.msra.mxu0 %v5272
      %5489 = vmatpush.bf16.msra.mxu0 %v5269
      %5490 = vmatpush.bf16.msra.mxu0 %v5266
      %5491 = vmatmul.bf16.gmra.mxu0 %v4327
      %v5492 = vpop.f32.mrf.mxu0
      %v5493 = vadd.f32 %v5040, %v5492
      %v5494 = vpop.f32.mrf.mxu0
      %v5495 = vadd.f32 %v5042, %v5494
      %5496 = vdwg.mxu0
      %5497 = vmatpush.bf16.msra.mxu0 %v5311
      %5498 = vmatpush.bf16.msra.mxu0 %v5308
      %5499 = vmatpush.bf16.msra.mxu0 %v5305
      %5500 = vmatpush.bf16.msra.mxu0 %v5302
      %5501 = vmatpush.bf16.msra.mxu0 %v5299
      %5502 = vmatpush.bf16.msra.mxu0 %v5296
      %5503 = vmatpush.bf16.msra.mxu0 %v5293
      %5504 = vmatpush.bf16.msra.mxu0 %v5290
      %5505 = vmatmul.bf16.gmra.mxu0 %v4328
      %v5506 = vpop.f32.mrf.mxu0
      %v5507 = vadd.f32 %v5493, %v5506
      %v5508 = vpop.f32.mrf.mxu0
      %v5509 = vadd.f32 %v5495, %v5508
      %5510 = vdwg.mxu0
      %5511 = vmatpush.bf16.msra.mxu0 0
      %5512 = vmatpush.bf16.msra.mxu0 0
      %5513 = vmatpush.bf16.msra.mxu0 %v5329
      %5514 = vmatpush.bf16.msra.mxu0 %v5326
      %5515 = vmatpush.bf16.msra.mxu0 %v5323
      %5516 = vmatpush.bf16.msra.mxu0 %v5320
      %5517 = vmatpush.bf16.msra.mxu0 %v5317
      %5518 = vmatpush.bf16.msra.mxu0 %v5314
      %5519 = vmatmul.bf16.gmra.mxu0 %v5397
      %v5520 = vpop.f32.mrf.mxu0
      %v5521 = vadd.f32 %v5507, %v5520
      %v5522 = vpop.f32.mrf.mxu0
      %v5523 = vadd.f32 %v5509, %v5522
      %5524 = vdwg.mxu0
      %s5525 = scalar_lea.vmem %s7, 16
      %v5526 = vld [vmem:[%s5525] sm:$0xf]
      %v5527 = vld [vmem:[%s5525 + $0x4] sm:$0x1]
      %v5530 = vunpack.c.l.b16 %v5526
      %v5531 = vunpack.c.l.b16 %v5527
      %v5532 = vpack.c.b16 %v5531, %v5530
      %v5534 = vsel %vm4271, %v5532, 0
      %5536 = vmatpush.bf16.msra.mxu0 0
      %5537 = vmatpush.bf16.msra.mxu0 0
      %5538 = vmatpush.bf16.msra.mxu0 0
      %5539 = vmatpush.bf16.msra.mxu0 0
      %5540 = vmatpush.bf16.msra.mxu0 0
      %5541 = vmatpush.bf16.msra.mxu0 0
      %5542 = vmatpush.bf16.msra.mxu0 %v4277
      %5543 = vmatpush.bf16.msra.mxu0 %v4258
      %5544 = vmatmul.bf16.gmra.mxu0 %v5534
      %v5545 = vpop.f32.mrf.mxu0
      %v5546 = vadd.f32 0.0, %v5545
      %v5547 = vpop.f32.mrf.mxu0
      %v5548 = vadd.f32 0.0, %v5547
      %5549 = vdwg.mxu0
      %5550 = vmatpush.bf16.msra.mxu0 0
      %5551 = vmatpush.bf16.msra.mxu0 0
      %5552 = vmatpush.bf16.msra.mxu0 0
      %5553 = vmatpush.bf16.msra.mxu0 0
      %5554 = vmatpush.bf16.msra.mxu0 0
      %5555 = vmatpush.bf16.msra.mxu0 0
      %5556 = vmatpush.bf16.msra.mxu0 %v4280
      %5557 = vmatpush.bf16.msra.mxu0 %v4259
      %5558 = vmatmul.bf16.gmra.mxu0 %v5534
      %v5559 = vpop.f32.mrf.mxu0
      %v5560 = vadd.f32 0.0, %v5559
      %v5561 = vpop.f32.mrf.mxu0
      %v5562 = vadd.f32 0.0, %v5561
      %5563 = vdwg.mxu0
      %5564 = vmatpush.bf16.msra.mxu0 0
      %5565 = vmatpush.bf16.msra.mxu0 0
      %5566 = vmatpush.bf16.msra.mxu0 0
      %5567 = vmatpush.bf16.msra.mxu0 0
      %5568 = vmatpush.bf16.msra.mxu0 0
      %5569 = vmatpush.bf16.msra.mxu0 0
      %5570 = vmatpush.bf16.msra.mxu0 %v4283
      %5571 = vmatpush.bf16.msra.mxu0 %v4260
      %5572 = vmatmul.bf16.gmra.mxu0 %v5534
      %v5573 = vpop.f32.mrf.mxu0
      %v5574 = vadd.f32 0.0, %v5573
      %v5575 = vpop.f32.mrf.mxu0
      %v5576 = vadd.f32 0.0, %v5575
      %5577 = vdwg.mxu0
      %v5578 = vpack.c.bf16 %v5548, %v5546
      %v5579 = vpack.c.bf16 %v5562, %v5560
      %v5580 = vpack.c.bf16 %v5576, %v5574
      %s5581 = scalar_lea.vmem %s8, 1056
      %v5582 = vld [vmem:[%s5581] sm:$0xff]
      %v5583 = vld [vmem:[%s5581 + $0x8] sm:$0xf]
      %v5584 = vld [vmem:[%s5581 + $0xc] sm:$0xff]
      %v5585 = vld [vmem:[%s5581 + $0x14] sm:$0xf]
      %v5586 = vld [vmem:[%s5581 + $0x18] sm:$0xff]
      %v5587 = vld [vmem:[%s5581 + $0x20] sm:$0xf]
      %v5588 = vld [vmem:[%s5581 + $0x24] sm:$0xff]
      %v5589 = vld [vmem:[%s5581 + $0x2c] sm:$0xf]
      %v5590 = vld [vmem:[%s5581 + $0x30] sm:$0xff]
      %v5591 = vld [vmem:[%s5581 + $0x38] sm:$0xf]
      %v5592 = vld [vmem:[%s5581 + $0x3c] sm:$0xff]
      %v5593 = vld [vmem:[%s5581 + $0x44] sm:$0xf]
      %v5594 = vld [vmem:[%s5581 + $0x48] sm:$0xff]
      %v5595 = vld [vmem:[%s5581 + $0x50] sm:$0xf]
      %v5596 = vld [vmem:[%s5581 + $0x54] sm:$0xff]
      %v5597 = vld [vmem:[%s5581 + $0x5c] sm:$0xf]
      %v5598 = vld [vmem:[%s5581 + $0x60] sm:$0xff]
      %v5599 = vld [vmem:[%s5581 + $0x68] sm:$0xf]
      %v5600 = vld [vmem:[%s5581 + $0x6c] sm:$0xff]
      %v5601 = vld [vmem:[%s5581 + $0x74] sm:$0xf]
      %v5602 = vld [vmem:[%s5581 + $0x78] sm:$0xff]
      %v5603 = vld [vmem:[%s5581 + $0x80] sm:$0xf]
      %v5604 = vld [vmem:[%s5581 + $0x84] sm:$0xff]
      %v5605 = vld [vmem:[%s5581 + $0x8c] sm:$0xf]
      %v5606 = vld [vmem:[%s5581 + $0x90] sm:$0xff]
      %v5607 = vld [vmem:[%s5581 + $0x98] sm:$0xf]
      %v5608 = vld [vmem:[%s5581 + $0x9c] sm:$0xff]
      %v5609 = vld [vmem:[%s5581 + $0xa4] sm:$0xf]
      %v5610 = vld [vmem:[%s5581 + $0xa8] sm:$0xff]
      %v5611 = vld [vmem:[%s5581 + $0xb0] sm:$0xf]
      %v5612 = vld [vmem:[%s5581 + $0xb4] sm:$0xff]
      %v5613 = vld [vmem:[%s5581 + $0xbc] sm:$0xf]
      %v5614 = vld [vmem:[%s5581 + $0xc0] sm:$0xff]
      %v5615 = vld [vmem:[%s5581 + $0xc8] sm:$0xf]
      %v5616 = vld [vmem:[%s5581 + $0xcc] sm:$0xff]
      %v5617 = vld [vmem:[%s5581 + $0xd4] sm:$0xf]
      %v5618 = vld [vmem:[%s5581 + $0xd8] sm:$0xff]
      %v5619 = vld [vmem:[%s5581 + $0xe0] sm:$0xf]
      %v5620 = vld [vmem:[%s5581 + $0xe4] sm:$0xff]
      %v5621 = vld [vmem:[%s5581 + $0xec] sm:$0xf]
      %v5622 = vld [vmem:[%s5581 + $0xf0] sm:$0xff]
      %v5623 = vld [vmem:[%s5581 + $0xf8] sm:$0xf]
      %v5624 = vld [vmem:[%s5581 + $0xfc] sm:$0xff]
      %v5625 = vld [vmem:[%s5581 + $0x104] sm:$0xf]
      %v5626 = vld [vmem:[%s5581 + $0x108] sm:$0xff]
      %v5627 = vld [vmem:[%s5581 + $0x110] sm:$0xf]
      %v5628 = vld [vmem:[%s5581 + $0x114] sm:$0xff]
      %v5629 = vld [vmem:[%s5581 + $0x11c] sm:$0xf]
      %v5630 = vld [vmem:[%s5581 + $0x120] sm:$0xff]
      %v5631 = vld [vmem:[%s5581 + $0x128] sm:$0xf]
      %v5632 = vld [vmem:[%s5581 + $0x12c] sm:$0xff]
      %v5633 = vld [vmem:[%s5581 + $0x134] sm:$0xf]
      %v5634 = vld [vmem:[%s5581 + $0x138] sm:$0xff]
      %v5635 = vld [vmem:[%s5581 + $0x140] sm:$0xf]
      %v5636 = vld [vmem:[%s5581 + $0x144] sm:$0xff]
      %v5637 = vld [vmem:[%s5581 + $0x14c] sm:$0xf]
      %v5638 = vld [vmem:[%s5581 + $0x150] sm:$0xff]
      %v5639 = vld [vmem:[%s5581 + $0x158] sm:$0xf]
      %v5640 = vld [vmem:[%s5581 + $0x15c] sm:$0xff]
      %v5641 = vld [vmem:[%s5581 + $0x164] sm:$0xf]
      %v5642 = vld [vmem:[%s5581 + $0x168] sm:$0xff]
      %v5643 = vld [vmem:[%s5581 + $0x170] sm:$0xf]
      %v5644 = vld [vmem:[%s5581 + $0x174] sm:$0xff]
      %v5645 = vld [vmem:[%s5581 + $0x17c] sm:$0xf]
      %v5646 = vld [vmem:[%s5581 + $0x180] sm:$0xff]
      %v5647 = vld [vmem:[%s5581 + $0x188] sm:$0xf]
      %v5648 = vld [vmem:[%s5581 + $0x18c] sm:$0xff]
      %v5649 = vld [vmem:[%s5581 + $0x194] sm:$0xf]
      %v5650 = vld [vmem:[%s5581 + $0x198] sm:$0xff]
      %v5651 = vld [vmem:[%s5581 + $0x1a0] sm:$0xf]
      %v5652 = vld [vmem:[%s5581 + $0x1a4] sm:$0xff]
      %v5653 = vld [vmem:[%s5581 + $0x1ac] sm:$0xf]
      %v5654 = vld [vmem:[%s5581 + $0x1b0] sm:$0xff]
      %v5655 = vld [vmem:[%s5581 + $0x1b8] sm:$0xf]
      %v5656 = vld [vmem:[%s5581 + $0x1bc] sm:$0xff]
      %v5657 = vld [vmem:[%s5581 + $0x1c4] sm:$0xf]
      %v5658 = vld [vmem:[%s5581 + $0x1c8] sm:$0xff]
      %v5659 = vld [vmem:[%s5581 + $0x1d0] sm:$0xf]
      %v5660 = vld [vmem:[%s5581 + $0x1d4] sm:$0xff]
      %v5661 = vld [vmem:[%s5581 + $0x1dc] sm:$0xf]
      %v5662 = vld [vmem:[%s5581 + $0x1e0] sm:$0xff]
      %v5663 = vld [vmem:[%s5581 + $0x1e8] sm:$0xf]
      %v5664 = vld [vmem:[%s5581 + $0x1ec] sm:$0xff]
      %v5665 = vld [vmem:[%s5581 + $0x1f4] sm:$0xf]
      %v5666 = vld [vmem:[%s5581 + $0x1f8] sm:$0xff]
      %v5667 = vld [vmem:[%s5581 + $0x200] sm:$0xf]
      %v5668 = vld [vmem:[%s5581 + $0x204] sm:$0xff]
      %v5669 = vld [vmem:[%s5581 + $0x20c] sm:$0xf]
      %v5758 = vunpack.c.l.b16 %v5582
      %v5759 = vunpack.c.h.b16 %v5582
      %v5760 = vunpack.c.l.b16 %v5583
      %v5761 = vunpack.c.l.b16 %v5584
      %v5762 = vunpack.c.h.b16 %v5584
      %v5763 = vunpack.c.l.b16 %v5585
      %v5764 = vunpack.c.l.b16 %v5586
      %v5765 = vunpack.c.h.b16 %v5586
      %v5766 = vunpack.c.l.b16 %v5587
      %v5767 = vunpack.c.l.b16 %v5588
      %v5768 = vunpack.c.h.b16 %v5588
      %v5769 = vunpack.c.l.b16 %v5589
      %v5770 = vunpack.c.l.b16 %v5590
      %v5771 = vunpack.c.h.b16 %v5590
      %v5772 = vunpack.c.l.b16 %v5591
      %v5773 = vunpack.c.l.b16 %v5592
      %v5774 = vunpack.c.h.b16 %v5592
      %v5775 = vunpack.c.l.b16 %v5593
      %v5776 = vunpack.c.l.b16 %v5594
      %v5777 = vunpack.c.h.b16 %v5594
      %v5778 = vunpack.c.l.b16 %v5595
      %v5779 = vunpack.c.l.b16 %v5596
      %v5780 = vunpack.c.h.b16 %v5596
      %v5781 = vunpack.c.l.b16 %v5597
      %v5782 = vunpack.c.l.b16 %v5598
      %v5783 = vunpack.c.h.b16 %v5598
      %v5784 = vunpack.c.l.b16 %v5599
      %v5785 = vunpack.c.l.b16 %v5600
      %v5786 = vunpack.c.h.b16 %v5600
      %v5787 = vunpack.c.l.b16 %v5601
      %v5788 = vunpack.c.l.b16 %v5602
      %v5789 = vunpack.c.h.b16 %v5602
      %v5790 = vunpack.c.l.b16 %v5603
      %v5791 = vunpack.c.l.b16 %v5604
      %v5792 = vunpack.c.h.b16 %v5604
      %v5793 = vunpack.c.l.b16 %v5605
      %v5794 = vunpack.c.l.b16 %v5606
      %v5795 = vunpack.c.h.b16 %v5606
      %v5796 = vunpack.c.l.b16 %v5607
      %v5797 = vunpack.c.l.b16 %v5608
      %v5798 = vunpack.c.h.b16 %v5608
      %v5799 = vunpack.c.l.b16 %v5609
      %v5800 = vunpack.c.l.b16 %v5610
      %v5801 = vunpack.c.h.b16 %v5610
      %v5802 = vunpack.c.l.b16 %v5611
      %v5803 = vunpack.c.l.b16 %v5612
      %v5804 = vunpack.c.h.b16 %v5612
      %v5805 = vunpack.c.l.b16 %v5613
      %v5806 = vunpack.c.l.b16 %v5614
      %v5807 = vunpack.c.h.b16 %v5614
      %v5808 = vunpack.c.l.b16 %v5615
      %v5809 = vunpack.c.l.b16 %v5616
      %v5810 = vunpack.c.h.b16 %v5616
      %v5811 = vunpack.c.l.b16 %v5617
      %v5812 = vunpack.c.l.b16 %v5618
      %v5813 = vunpack.c.h.b16 %v5618
      %v5814 = vunpack.c.l.b16 %v5619
      %v5815 = vunpack.c.l.b16 %v5620
      %v5816 = vunpack.c.h.b16 %v5620
      %v5817 = vunpack.c.l.b16 %v5621
      %v5818 = vunpack.c.l.b16 %v5622
      %v5819 = vunpack.c.h.b16 %v5622
      %v5820 = vunpack.c.l.b16 %v5623
      %v5821 = vunpack.c.l.b16 %v5624
      %v5822 = vunpack.c.h.b16 %v5624
      %v5823 = vunpack.c.l.b16 %v5625
      %v5824 = vunpack.c.l.b16 %v5626
      %v5825 = vunpack.c.h.b16 %v5626
      %v5826 = vunpack.c.l.b16 %v5627
      %v5827 = vunpack.c.l.b16 %v5628
      %v5828 = vunpack.c.h.b16 %v5628
      %v5829 = vunpack.c.l.b16 %v5629
      %v5830 = vunpack.c.l.b16 %v5630
      %v5831 = vunpack.c.h.b16 %v5630
      %v5832 = vunpack.c.l.b16 %v5631
      %v5833 = vunpack.c.l.b16 %v5632
      %v5834 = vunpack.c.h.b16 %v5632
      %v5835 = vunpack.c.l.b16 %v5633
      %v5836 = vunpack.c.l.b16 %v5634
      %v5837 = vunpack.c.h.b16 %v5634
      %v5838 = vunpack.c.l.b16 %v5635
      %v5839 = vunpack.c.l.b16 %v5636
      %v5840 = vunpack.c.h.b16 %v5636
      %v5841 = vunpack.c.l.b16 %v5637
      %v5842 = vunpack.c.l.b16 %v5638
      %v5843 = vunpack.c.h.b16 %v5638
      %v5844 = vunpack.c.l.b16 %v5639
      %v5845 = vunpack.c.l.b16 %v5640
      %v5846 = vunpack.c.h.b16 %v5640
      %v5847 = vunpack.c.l.b16 %v5641
      %v5848 = vunpack.c.l.b16 %v5642
      %v5849 = vunpack.c.h.b16 %v5642
      %v5850 = vunpack.c.l.b16 %v5643
      %v5851 = vunpack.c.l.b16 %v5644
      %v5852 = vunpack.c.h.b16 %v5644
      %v5853 = vunpack.c.l.b16 %v5645
      %v5854 = vunpack.c.l.b16 %v5646
      %v5855 = vunpack.c.h.b16 %v5646
      %v5856 = vunpack.c.l.b16 %v5647
      %v5857 = vunpack.c.l.b16 %v5648
      %v5858 = vunpack.c.h.b16 %v5648
      %v5859 = vunpack.c.l.b16 %v5649
      %v5860 = vunpack.c.l.b16 %v5650
      %v5861 = vunpack.c.h.b16 %v5650
      %v5862 = vunpack.c.l.b16 %v5651
      %v5863 = vunpack.c.l.b16 %v5652
      %v5864 = vunpack.c.h.b16 %v5652
      %v5865 = vunpack.c.l.b16 %v5653
      %v5866 = vunpack.c.l.b16 %v5654
      %v5867 = vunpack.c.h.b16 %v5654
      %v5868 = vunpack.c.l.b16 %v5655
      %v5869 = vunpack.c.l.b16 %v5656
      %v5870 = vunpack.c.h.b16 %v5656
      %v5871 = vunpack.c.l.b16 %v5657
      %v5872 = vunpack.c.l.b16 %v5658
      %v5873 = vunpack.c.h.b16 %v5658
      %v5874 = vunpack.c.l.b16 %v5659
      %v5875 = vunpack.c.l.b16 %v5660
      %v5876 = vunpack.c.h.b16 %v5660
      %v5877 = vunpack.c.l.b16 %v5661
      %v5878 = vunpack.c.l.b16 %v5662
      %v5879 = vunpack.c.h.b16 %v5662
      %v5880 = vunpack.c.l.b16 %v5663
      %v5881 = vunpack.c.l.b16 %v5664
      %v5882 = vunpack.c.h.b16 %v5664
      %v5883 = vunpack.c.l.b16 %v5665
      %v5884 = vunpack.c.l.b16 %v5666
      %v5885 = vunpack.c.h.b16 %v5666
      %v5886 = vunpack.c.l.b16 %v5667
      %v5887 = vunpack.c.l.b16 %v5668
      %v5888 = vunpack.c.h.b16 %v5668
      %v5889 = vunpack.c.l.b16 %v5669
      %v5890 = vpack.c.b16 %v5761, %v5758
      %v5891 = vpack.c.b16 %v5762, %v5759
      %v5892 = vpack.c.b16 %v5763, %v5760
      %v5893 = vpack.c.b16 %v5767, %v5764
      %v5894 = vpack.c.b16 %v5768, %v5765
      %v5895 = vpack.c.b16 %v5769, %v5766
      %v5896 = vpack.c.b16 %v5773, %v5770
      %v5897 = vpack.c.b16 %v5774, %v5771
      %v5898 = vpack.c.b16 %v5775, %v5772
      %v5899 = vpack.c.b16 %v5779, %v5776
      %v5900 = vpack.c.b16 %v5780, %v5777
      %v5901 = vpack.c.b16 %v5781, %v5778
      %v5902 = vpack.c.b16 %v5785, %v5782
      %v5903 = vpack.c.b16 %v5786, %v5783
      %v5904 = vpack.c.b16 %v5787, %v5784
      %v5905 = vpack.c.b16 %v5791, %v5788
      %v5906 = vpack.c.b16 %v5792, %v5789
      %v5907 = vpack.c.b16 %v5793, %v5790
      %v5908 = vpack.c.b16 %v5797, %v5794
      %v5909 = vpack.c.b16 %v5798, %v5795
      %v5910 = vpack.c.b16 %v5799, %v5796
      %v5911 = vpack.c.b16 %v5803, %v5800
      %v5912 = vpack.c.b16 %v5804, %v5801
      %v5913 = vpack.c.b16 %v5805, %v5802
      %v5914 = vpack.c.b16 %v5809, %v5806
      %v5915 = vpack.c.b16 %v5810, %v5807
      %v5916 = vpack.c.b16 %v5811, %v5808
      %v5917 = vpack.c.b16 %v5815, %v5812
      %v5918 = vpack.c.b16 %v5816, %v5813
      %v5919 = vpack.c.b16 %v5817, %v5814
      %v5920 = vpack.c.b16 %v5821, %v5818
      %v5921 = vpack.c.b16 %v5822, %v5819
      %v5922 = vpack.c.b16 %v5823, %v5820
      %v5923 = vpack.c.b16 %v5827, %v5824
      %v5924 = vpack.c.b16 %v5828, %v5825
      %v5925 = vpack.c.b16 %v5829, %v5826
      %v5926 = vpack.c.b16 %v5833, %v5830
      %v5927 = vpack.c.b16 %v5834, %v5831
      %v5928 = vpack.c.b16 %v5835, %v5832
      %v5929 = vpack.c.b16 %v5839, %v5836
      %v5930 = vpack.c.b16 %v5840, %v5837
      %v5931 = vpack.c.b16 %v5841, %v5838
      %v5932 = vpack.c.b16 %v5845, %v5842
      %v5933 = vpack.c.b16 %v5846, %v5843
      %v5934 = vpack.c.b16 %v5847, %v5844
      %v5935 = vpack.c.b16 %v5851, %v5848
      %v5936 = vpack.c.b16 %v5852, %v5849
      %v5937 = vpack.c.b16 %v5853, %v5850
      %v5938 = vpack.c.b16 %v5857, %v5854
      %v5939 = vpack.c.b16 %v5858, %v5855
      %v5940 = vpack.c.b16 %v5859, %v5856
      %v5941 = vpack.c.b16 %v5863, %v5860
      %v5942 = vpack.c.b16 %v5864, %v5861
      %v5943 = vpack.c.b16 %v5865, %v5862
      %v5944 = vpack.c.b16 %v5869, %v5866
      %v5945 = vpack.c.b16 %v5870, %v5867
      %v5946 = vpack.c.b16 %v5871, %v5868
      %v5947 = vpack.c.b16 %v5875, %v5872
      %v5948 = vpack.c.b16 %v5876, %v5873
      %v5949 = vpack.c.b16 %v5877, %v5874
      %v5950 = vpack.c.b16 %v5881, %v5878
      %v5951 = vpack.c.b16 %v5882, %v5879
      %v5952 = vpack.c.b16 %v5883, %v5880
      %v5953 = vpack.c.b16 %v5887, %v5884
      %v5954 = vpack.c.b16 %v5888, %v5885
      %v5955 = vpack.c.b16 %v5889, %v5886
      %v6023 = vsel %vm641, %v5580, 0
      %6025 = vmatpush.bf16.msra.mxu0 %v5911
      %6026 = vmatpush.bf16.msra.mxu0 %v5908
      %6027 = vmatpush.bf16.msra.mxu0 %v5905
      %6028 = vmatpush.bf16.msra.mxu0 %v5902
      %6029 = vmatpush.bf16.msra.mxu0 %v5899
      %6030 = vmatpush.bf16.msra.mxu0 %v5896
      %6031 = vmatpush.bf16.msra.mxu0 %v5893
      %6032 = vmatpush.bf16.msra.mxu0 %v5890
      %6033 = vmatmul.bf16.gmra.mxu0 %v5578
      %v6034 = vpop.f32.mrf.mxu0
      %v6035 = vadd.f32 0.0, %v6034
      %v6036 = vpop.f32.mrf.mxu0
      %v6037 = vadd.f32 0.0, %v6036
      %6038 = vdwg.mxu0
      %6039 = vmatpush.bf16.msra.mxu0 %v5935
      %6040 = vmatpush.bf16.msra.mxu0 %v5932
      %6041 = vmatpush.bf16.msra.mxu0 %v5929
      %6042 = vmatpush.bf16.msra.mxu0 %v5926
      %6043 = vmatpush.bf16.msra.mxu0 %v5923
      %6044 = vmatpush.bf16.msra.mxu0 %v5920
      %6045 = vmatpush.bf16.msra.mxu0 %v5917
      %6046 = vmatpush.bf16.msra.mxu0 %v5914
      %6047 = vmatmul.bf16.gmra.mxu0 %v5579
      %v6048 = vpop.f32.mrf.mxu0
      %v6049 = vadd.f32 %v6035, %v6048
      %v6050 = vpop.f32.mrf.mxu0
      %v6051 = vadd.f32 %v6037, %v6050
      %6052 = vdwg.mxu0
      %6053 = vmatpush.bf16.msra.mxu0 0
      %6054 = vmatpush.bf16.msra.mxu0 0
      %6055 = vmatpush.bf16.msra.mxu0 %v5953
      %6056 = vmatpush.bf16.msra.mxu0 %v5950
      %6057 = vmatpush.bf16.msra.mxu0 %v5947
      %6058 = vmatpush.bf16.msra.mxu0 %v5944
      %6059 = vmatpush.bf16.msra.mxu0 %v5941
      %6060 = vmatpush.bf16.msra.mxu0 %v5938
      %6061 = vmatmul.bf16.gmra.mxu0 %v6023
      %v6062 = vpop.f32.mrf.mxu0
      %v6063 = vadd.f32 %v6049, %v6062
      %v6064 = vpop.f32.mrf.mxu0
      %v6065 = vadd.f32 %v6051, %v6064
      %6066 = vdwg.mxu0
      %6067 = vmatpush.bf16.msra.mxu0 %v5912
      %6068 = vmatpush.bf16.msra.mxu0 %v5909
      %6069 = vmatpush.bf16.msra.mxu0 %v5906
      %6070 = vmatpush.bf16.msra.mxu0 %v5903
      %6071 = vmatpush.bf16.msra.mxu0 %v5900
      %6072 = vmatpush.bf16.msra.mxu0 %v5897
      %6073 = vmatpush.bf16.msra.mxu0 %v5894
      %6074 = vmatpush.bf16.msra.mxu0 %v5891
      %6075 = vmatmul.bf16.gmra.mxu0 %v5578
      %v6076 = vpop.f32.mrf.mxu0
      %v6077 = vadd.f32 0.0, %v6076
      %v6078 = vpop.f32.mrf.mxu0
      %v6079 = vadd.f32 0.0, %v6078
      %6080 = vdwg.mxu0
      %6081 = vmatpush.bf16.msra.mxu0 %v5936
      %6082 = vmatpush.bf16.msra.mxu0 %v5933
      %6083 = vmatpush.bf16.msra.mxu0 %v5930
      %6084 = vmatpush.bf16.msra.mxu0 %v5927
      %6085 = vmatpush.bf16.msra.mxu0 %v5924
      %6086 = vmatpush.bf16.msra.mxu0 %v5921
      %6087 = vmatpush.bf16.msra.mxu0 %v5918
      %6088 = vmatpush.bf16.msra.mxu0 %v5915
      %6089 = vmatmul.bf16.gmra.mxu0 %v5579
      %v6090 = vpop.f32.mrf.mxu0
      %v6091 = vadd.f32 %v6077, %v6090
      %v6092 = vpop.f32.mrf.mxu0
      %v6093 = vadd.f32 %v6079, %v6092
      %6094 = vdwg.mxu0
      %6095 = vmatpush.bf16.msra.mxu0 0
      %6096 = vmatpush.bf16.msra.mxu0 0
      %6097 = vmatpush.bf16.msra.mxu0 %v5954
      %6098 = vmatpush.bf16.msra.mxu0 %v5951
      %6099 = vmatpush.bf16.msra.mxu0 %v5948
      %6100 = vmatpush.bf16.msra.mxu0 %v5945
      %6101 = vmatpush.bf16.msra.mxu0 %v5942
      %6102 = vmatpush.bf16.msra.mxu0 %v5939
      %6103 = vmatmul.bf16.gmra.mxu0 %v6023
      %v6104 = vpop.f32.mrf.mxu0
      %v6105 = vadd.f32 %v6091, %v6104
      %v6106 = vpop.f32.mrf.mxu0
      %v6107 = vadd.f32 %v6093, %v6106
      %6108 = vdwg.mxu0
      %6109 = vmatpush.bf16.msra.mxu0 %v5913
      %6110 = vmatpush.bf16.msra.mxu0 %v5910
      %6111 = vmatpush.bf16.msra.mxu0 %v5907
      %6112 = vmatpush.bf16.msra.mxu0 %v5904
      %6113 = vmatpush.bf16.msra.mxu0 %v5901
      %6114 = vmatpush.bf16.msra.mxu0 %v5898
      %6115 = vmatpush.bf16.msra.mxu0 %v5895
      %6116 = vmatpush.bf16.msra.mxu0 %v5892
      %6117 = vmatmul.bf16.gmra.mxu0 %v5578
      %v6118 = vpop.f32.mrf.mxu0
      %v6119 = vadd.f32 0.0, %v6118
      %v6120 = vpop.f32.mrf.mxu0
      %v6121 = vadd.f32 0.0, %v6120
      %6122 = vdwg.mxu0
      %6123 = vmatpush.bf16.msra.mxu0 %v5937
      %6124 = vmatpush.bf16.msra.mxu0 %v5934
      %6125 = vmatpush.bf16.msra.mxu0 %v5931
      %6126 = vmatpush.bf16.msra.mxu0 %v5928
      %6127 = vmatpush.bf16.msra.mxu0 %v5925
      %6128 = vmatpush.bf16.msra.mxu0 %v5922
      %6129 = vmatpush.bf16.msra.mxu0 %v5919
      %6130 = vmatpush.bf16.msra.mxu0 %v5916
      %6131 = vmatmul.bf16.gmra.mxu0 %v5579
      %v6132 = vpop.f32.mrf.mxu0
      %v6133 = vadd.f32 %v6119, %v6132
      %v6134 = vpop.f32.mrf.mxu0
      %v6135 = vadd.f32 %v6121, %v6134
      %6136 = vdwg.mxu0
      %6137 = vmatpush.bf16.msra.mxu0 0
      %6138 = vmatpush.bf16.msra.mxu0 0
      %6139 = vmatpush.bf16.msra.mxu0 %v5955
      %6140 = vmatpush.bf16.msra.mxu0 %v5952
      %6141 = vmatpush.bf16.msra.mxu0 %v5949
      %6142 = vmatpush.bf16.msra.mxu0 %v5946
      %6143 = vmatpush.bf16.msra.mxu0 %v5943
      %6144 = vmatpush.bf16.msra.mxu0 %v5940
      %6145 = vmatmul.bf16.gmra.mxu0 %v6023
      %v6146 = vpop.f32.mrf.mxu0
      %v6147 = vadd.f32 %v6133, %v6146
      %v6148 = vpop.f32.mrf.mxu0
      %v6149 = vadd.f32 %v6135, %v6148
      %6150 = vdwg.mxu0
      %v6151 = vadd.f32 %v5437, %v6063
      %v6152 = vadd.f32 %v5479, %v6105
      %v6153 = vadd.f32 %v5521, %v6147
      %v6154 = vadd.f32 %v5439, %v6065
      %v6155 = vadd.f32 %v5481, %v6107
      %v6156 = vadd.f32 %v5523, %v6149
      %s6157 = scalar_lea.vmem %s7, 24
      %v6158 = vld [vmem:[%s6157] sm:$0xf]
      %v6159 = vld [vmem:[%s6157 + $0x4] sm:$0x1]
      %v6162 = vunpack.c.l.b16 %v6158
      %v6163 = vunpack.c.l.b16 %v6159
      %v6164 = vpack.c.b16 %v6163, %v6162
      %v6166 = vsel %vm4271, %v6164, 0
      %6168 = vmatpush.bf16.msra.mxu0 0
      %6169 = vmatpush.bf16.msra.mxu0 0
      %6170 = vmatpush.bf16.msra.mxu0 0
      %6171 = vmatpush.bf16.msra.mxu0 0
      %6172 = vmatpush.bf16.msra.mxu0 0
      %6173 = vmatpush.bf16.msra.mxu0 0
      %6174 = vmatpush.bf16.msra.mxu0 %v4277
      %6175 = vmatpush.bf16.msra.mxu0 %v4258
      %6176 = vmatmul.bf16.gmra.mxu0 %v6166
      %v6177 = vpop.f32.mrf.mxu0
      %v6178 = vadd.f32 0.0, %v6177
      %v6179 = vpop.f32.mrf.mxu0
      %v6180 = vadd.f32 0.0, %v6179
      %6181 = vdwg.mxu0
      %6182 = vmatpush.bf16.msra.mxu0 0
      %6183 = vmatpush.bf16.msra.mxu0 0
      %6184 = vmatpush.bf16.msra.mxu0 0
      %6185 = vmatpush.bf16.msra.mxu0 0
      %6186 = vmatpush.bf16.msra.mxu0 0
      %6187 = vmatpush.bf16.msra.mxu0 0
      %6188 = vmatpush.bf16.msra.mxu0 %v4280
      %6189 = vmatpush.bf16.msra.mxu0 %v4259
      %6190 = vmatmul.bf16.gmra.mxu0 %v6166
      %v6191 = vpop.f32.mrf.mxu0
      %v6192 = vadd.f32 0.0, %v6191
      %v6193 = vpop.f32.mrf.mxu0
      %v6194 = vadd.f32 0.0, %v6193
      %6195 = vdwg.mxu0
      %6196 = vmatpush.bf16.msra.mxu0 0
      %6197 = vmatpush.bf16.msra.mxu0 0
      %6198 = vmatpush.bf16.msra.mxu0 0
      %6199 = vmatpush.bf16.msra.mxu0 0
      %6200 = vmatpush.bf16.msra.mxu0 0
      %6201 = vmatpush.bf16.msra.mxu0 0
      %6202 = vmatpush.bf16.msra.mxu0 %v4283
      %6203 = vmatpush.bf16.msra.mxu0 %v4260
      %6204 = vmatmul.bf16.gmra.mxu0 %v6166
      %v6205 = vpop.f32.mrf.mxu0
      %v6206 = vadd.f32 0.0, %v6205
      %v6207 = vpop.f32.mrf.mxu0
      %v6208 = vadd.f32 0.0, %v6207
      %6209 = vdwg.mxu0
      %v6210 = vpack.c.bf16 %v6180, %v6178
      %v6211 = vpack.c.bf16 %v6194, %v6192
      %v6212 = vpack.c.bf16 %v6208, %v6206
      %s6213 = scalar_lea.vmem %s8, 1584
      %v6214 = vld [vmem:[%s6213] sm:$0xff]
      %v6215 = vld [vmem:[%s6213 + $0x8] sm:$0xf]
      %v6216 = vld [vmem:[%s6213 + $0xc] sm:$0xff]
      %v6217 = vld [vmem:[%s6213 + $0x14] sm:$0xf]
      %v6218 = vld [vmem:[%s6213 + $0x18] sm:$0xff]
      %v6219 = vld [vmem:[%s6213 + $0x20] sm:$0xf]
      %v6220 = vld [vmem:[%s6213 + $0x24] sm:$0xff]
      %v6221 = vld [vmem:[%s6213 + $0x2c] sm:$0xf]
      %v6222 = vld [vmem:[%s6213 + $0x30] sm:$0xff]
      %v6223 = vld [vmem:[%s6213 + $0x38] sm:$0xf]
      %v6224 = vld [vmem:[%s6213 + $0x3c] sm:$0xff]
      %v6225 = vld [vmem:[%s6213 + $0x44] sm:$0xf]
      %v6226 = vld [vmem:[%s6213 + $0x48] sm:$0xff]
      %v6227 = vld [vmem:[%s6213 + $0x50] sm:$0xf]
      %v6228 = vld [vmem:[%s6213 + $0x54] sm:$0xff]
      %v6229 = vld [vmem:[%s6213 + $0x5c] sm:$0xf]
      %v6230 = vld [vmem:[%s6213 + $0x60] sm:$0xff]
      %v6231 = vld [vmem:[%s6213 + $0x68] sm:$0xf]
      %v6232 = vld [vmem:[%s6213 + $0x6c] sm:$0xff]
      %v6233 = vld [vmem:[%s6213 + $0x74] sm:$0xf]
      %v6234 = vld [vmem:[%s6213 + $0x78] sm:$0xff]
      %v6235 = vld [vmem:[%s6213 + $0x80] sm:$0xf]
      %v6236 = vld [vmem:[%s6213 + $0x84] sm:$0xff]
      %v6237 = vld [vmem:[%s6213 + $0x8c] sm:$0xf]
      %v6238 = vld [vmem:[%s6213 + $0x90] sm:$0xff]
      %v6239 = vld [vmem:[%s6213 + $0x98] sm:$0xf]
      %v6240 = vld [vmem:[%s6213 + $0x9c] sm:$0xff]
      %v6241 = vld [vmem:[%s6213 + $0xa4] sm:$0xf]
      %v6242 = vld [vmem:[%s6213 + $0xa8] sm:$0xff]
      %v6243 = vld [vmem:[%s6213 + $0xb0] sm:$0xf]
      %v6244 = vld [vmem:[%s6213 + $0xb4] sm:$0xff]
      %v6245 = vld [vmem:[%s6213 + $0xbc] sm:$0xf]
      %v6246 = vld [vmem:[%s6213 + $0xc0] sm:$0xff]
      %v6247 = vld [vmem:[%s6213 + $0xc8] sm:$0xf]
      %v6248 = vld [vmem:[%s6213 + $0xcc] sm:$0xff]
      %v6249 = vld [vmem:[%s6213 + $0xd4] sm:$0xf]
      %v6250 = vld [vmem:[%s6213 + $0xd8] sm:$0xff]
      %v6251 = vld [vmem:[%s6213 + $0xe0] sm:$0xf]
      %v6252 = vld [vmem:[%s6213 + $0xe4] sm:$0xff]
      %v6253 = vld [vmem:[%s6213 + $0xec] sm:$0xf]
      %v6254 = vld [vmem:[%s6213 + $0xf0] sm:$0xff]
      %v6255 = vld [vmem:[%s6213 + $0xf8] sm:$0xf]
      %v6256 = vld [vmem:[%s6213 + $0xfc] sm:$0xff]
      %v6257 = vld [vmem:[%s6213 + $0x104] sm:$0xf]
      %v6258 = vld [vmem:[%s6213 + $0x108] sm:$0xff]
      %v6259 = vld [vmem:[%s6213 + $0x110] sm:$0xf]
      %v6260 = vld [vmem:[%s6213 + $0x114] sm:$0xff]
      %v6261 = vld [vmem:[%s6213 + $0x11c] sm:$0xf]
      %v6262 = vld [vmem:[%s6213 + $0x120] sm:$0xff]
      %v6263 = vld [vmem:[%s6213 + $0x128] sm:$0xf]
      %v6264 = vld [vmem:[%s6213 + $0x12c] sm:$0xff]
      %v6265 = vld [vmem:[%s6213 + $0x134] sm:$0xf]
      %v6266 = vld [vmem:[%s6213 + $0x138] sm:$0xff]
      %v6267 = vld [vmem:[%s6213 + $0x140] sm:$0xf]
      %v6268 = vld [vmem:[%s6213 + $0x144] sm:$0xff]
      %v6269 = vld [vmem:[%s6213 + $0x14c] sm:$0xf]
      %v6270 = vld [vmem:[%s6213 + $0x150] sm:$0xff]
      %v6271 = vld [vmem:[%s6213 + $0x158] sm:$0xf]
      %v6272 = vld [vmem:[%s6213 + $0x15c] sm:$0xff]
      %v6273 = vld [vmem:[%s6213 + $0x164] sm:$0xf]
      %v6274 = vld [vmem:[%s6213 + $0x168] sm:$0xff]
      %v6275 = vld [vmem:[%s6213 + $0x170] sm:$0xf]
      %v6276 = vld [vmem:[%s6213 + $0x174] sm:$0xff]
      %v6277 = vld [vmem:[%s6213 + $0x17c] sm:$0xf]
      %v6278 = vld [vmem:[%s6213 + $0x180] sm:$0xff]
      %v6279 = vld [vmem:[%s6213 + $0x188] sm:$0xf]
      %v6280 = vld [vmem:[%s6213 + $0x18c] sm:$0xff]
      %v6281 = vld [vmem:[%s6213 + $0x194] sm:$0xf]
      %v6282 = vld [vmem:[%s6213 + $0x198] sm:$0xff]
      %v6283 = vld [vmem:[%s6213 + $0x1a0] sm:$0xf]
      %v6284 = vld [vmem:[%s6213 + $0x1a4] sm:$0xff]
      %v6285 = vld [vmem:[%s6213 + $0x1ac] sm:$0xf]
      %v6286 = vld [vmem:[%s6213 + $0x1b0] sm:$0xff]
      %v6287 = vld [vmem:[%s6213 + $0x1b8] sm:$0xf]
      %v6288 = vld [vmem:[%s6213 + $0x1bc] sm:$0xff]
      %v6289 = vld [vmem:[%s6213 + $0x1c4] sm:$0xf]
      %v6290 = vld [vmem:[%s6213 + $0x1c8] sm:$0xff]
      %v6291 = vld [vmem:[%s6213 + $0x1d0] sm:$0xf]
      %v6292 = vld [vmem:[%s6213 + $0x1d4] sm:$0xff]
      %v6293 = vld [vmem:[%s6213 + $0x1dc] sm:$0xf]
      %v6294 = vld [vmem:[%s6213 + $0x1e0] sm:$0xff]
      %v6295 = vld [vmem:[%s6213 + $0x1e8] sm:$0xf]
      %v6296 = vld [vmem:[%s6213 + $0x1ec] sm:$0xff]
      %v6297 = vld [vmem:[%s6213 + $0x1f4] sm:$0xf]
      %v6298 = vld [vmem:[%s6213 + $0x1f8] sm:$0xff]
      %v6299 = vld [vmem:[%s6213 + $0x200] sm:$0xf]
      %v6300 = vld [vmem:[%s6213 + $0x204] sm:$0xff]
      %v6301 = vld [vmem:[%s6213 + $0x20c] sm:$0xf]
      %v6390 = vunpack.c.l.b16 %v6214
      %v6391 = vunpack.c.h.b16 %v6214
      %v6392 = vunpack.c.l.b16 %v6215
      %v6393 = vunpack.c.l.b16 %v6216
      %v6394 = vunpack.c.h.b16 %v6216
      %v6395 = vunpack.c.l.b16 %v6217
      %v6396 = vunpack.c.l.b16 %v6218
      %v6397 = vunpack.c.h.b16 %v6218
      %v6398 = vunpack.c.l.b16 %v6219
      %v6399 = vunpack.c.l.b16 %v6220
      %v6400 = vunpack.c.h.b16 %v6220
      %v6401 = vunpack.c.l.b16 %v6221
      %v6402 = vunpack.c.l.b16 %v6222
      %v6403 = vunpack.c.h.b16 %v6222
      %v6404 = vunpack.c.l.b16 %v6223
      %v6405 = vunpack.c.l.b16 %v6224
      %v6406 = vunpack.c.h.b16 %v6224
      %v6407 = vunpack.c.l.b16 %v6225
      %v6408 = vunpack.c.l.b16 %v6226
      %v6409 = vunpack.c.h.b16 %v6226
      %v6410 = vunpack.c.l.b16 %v6227
      %v6411 = vunpack.c.l.b16 %v6228
      %v6412 = vunpack.c.h.b16 %v6228
      %v6413 = vunpack.c.l.b16 %v6229
      %v6414 = vunpack.c.l.b16 %v6230
      %v6415 = vunpack.c.h.b16 %v6230
      %v6416 = vunpack.c.l.b16 %v6231
      %v6417 = vunpack.c.l.b16 %v6232
      %v6418 = vunpack.c.h.b16 %v6232
      %v6419 = vunpack.c.l.b16 %v6233
      %v6420 = vunpack.c.l.b16 %v6234
      %v6421 = vunpack.c.h.b16 %v6234
      %v6422 = vunpack.c.l.b16 %v6235
      %v6423 = vunpack.c.l.b16 %v6236
      %v6424 = vunpack.c.h.b16 %v6236
      %v6425 = vunpack.c.l.b16 %v6237
      %v6426 = vunpack.c.l.b16 %v6238
      %v6427 = vunpack.c.h.b16 %v6238
      %v6428 = vunpack.c.l.b16 %v6239
      %v6429 = vunpack.c.l.b16 %v6240
      %v6430 = vunpack.c.h.b16 %v6240
      %v6431 = vunpack.c.l.b16 %v6241
      %v6432 = vunpack.c.l.b16 %v6242
      %v6433 = vunpack.c.h.b16 %v6242
      %v6434 = vunpack.c.l.b16 %v6243
      %v6435 = vunpack.c.l.b16 %v6244
      %v6436 = vunpack.c.h.b16 %v6244
      %v6437 = vunpack.c.l.b16 %v6245
      %v6438 = vunpack.c.l.b16 %v6246
      %v6439 = vunpack.c.h.b16 %v6246
      %v6440 = vunpack.c.l.b16 %v6247
      %v6441 = vunpack.c.l.b16 %v6248
      %v6442 = vunpack.c.h.b16 %v6248
      %v6443 = vunpack.c.l.b16 %v6249
      %v6444 = vunpack.c.l.b16 %v6250
      %v6445 = vunpack.c.h.b16 %v6250
      %v6446 = vunpack.c.l.b16 %v6251
      %v6447 = vunpack.c.l.b16 %v6252
      %v6448 = vunpack.c.h.b16 %v6252
      %v6449 = vunpack.c.l.b16 %v6253
      %v6450 = vunpack.c.l.b16 %v6254
      %v6451 = vunpack.c.h.b16 %v6254
      %v6452 = vunpack.c.l.b16 %v6255
      %v6453 = vunpack.c.l.b16 %v6256
      %v6454 = vunpack.c.h.b16 %v6256
      %v6455 = vunpack.c.l.b16 %v6257
      %v6456 = vunpack.c.l.b16 %v6258
      %v6457 = vunpack.c.h.b16 %v6258
      %v6458 = vunpack.c.l.b16 %v6259
      %v6459 = vunpack.c.l.b16 %v6260
      %v6460 = vunpack.c.h.b16 %v6260
      %v6461 = vunpack.c.l.b16 %v6261
      %v6462 = vunpack.c.l.b16 %v6262
      %v6463 = vunpack.c.h.b16 %v6262
      %v6464 = vunpack.c.l.b16 %v6263
      %v6465 = vunpack.c.l.b16 %v6264
      %v6466 = vunpack.c.h.b16 %v6264
      %v6467 = vunpack.c.l.b16 %v6265
      %v6468 = vunpack.c.l.b16 %v6266
      %v6469 = vunpack.c.h.b16 %v6266
      %v6470 = vunpack.c.l.b16 %v6267
      %v6471 = vunpack.c.l.b16 %v6268
      %v6472 = vunpack.c.h.b16 %v6268
      %v6473 = vunpack.c.l.b16 %v6269
      %v6474 = vunpack.c.l.b16 %v6270
      %v6475 = vunpack.c.h.b16 %v6270
      %v6476 = vunpack.c.l.b16 %v6271
      %v6477 = vunpack.c.l.b16 %v6272
      %v6478 = vunpack.c.h.b16 %v6272
      %v6479 = vunpack.c.l.b16 %v6273
      %v6480 = vunpack.c.l.b16 %v6274
      %v6481 = vunpack.c.h.b16 %v6274
      %v6482 = vunpack.c.l.b16 %v6275
      %v6483 = vunpack.c.l.b16 %v6276
      %v6484 = vunpack.c.h.b16 %v6276
      %v6485 = vunpack.c.l.b16 %v6277
      %v6486 = vunpack.c.l.b16 %v6278
      %v6487 = vunpack.c.h.b16 %v6278
      %v6488 = vunpack.c.l.b16 %v6279
      %v6489 = vunpack.c.l.b16 %v6280
      %v6490 = vunpack.c.h.b16 %v6280
      %v6491 = vunpack.c.l.b16 %v6281
      %v6492 = vunpack.c.l.b16 %v6282
      %v6493 = vunpack.c.h.b16 %v6282
      %v6494 = vunpack.c.l.b16 %v6283
      %v6495 = vunpack.c.l.b16 %v6284
      %v6496 = vunpack.c.h.b16 %v6284
      %v6497 = vunpack.c.l.b16 %v6285
      %v6498 = vunpack.c.l.b16 %v6286
      %v6499 = vunpack.c.h.b16 %v6286
      %v6500 = vunpack.c.l.b16 %v6287
      %v6501 = vunpack.c.l.b16 %v6288
      %v6502 = vunpack.c.h.b16 %v6288
      %v6503 = vunpack.c.l.b16 %v6289
      %v6504 = vunpack.c.l.b16 %v6290
      %v6505 = vunpack.c.h.b16 %v6290
      %v6506 = vunpack.c.l.b16 %v6291
      %v6507 = vunpack.c.l.b16 %v6292
      %v6508 = vunpack.c.h.b16 %v6292
      %v6509 = vunpack.c.l.b16 %v6293
      %v6510 = vunpack.c.l.b16 %v6294
      %v6511 = vunpack.c.h.b16 %v6294
      %v6512 = vunpack.c.l.b16 %v6295
      %v6513 = vunpack.c.l.b16 %v6296
      %v6514 = vunpack.c.h.b16 %v6296
      %v6515 = vunpack.c.l.b16 %v6297
      %v6516 = vunpack.c.l.b16 %v6298
      %v6517 = vunpack.c.h.b16 %v6298
      %v6518 = vunpack.c.l.b16 %v6299
      %v6519 = vunpack.c.l.b16 %v6300
      %v6520 = vunpack.c.h.b16 %v6300
      %v6521 = vunpack.c.l.b16 %v6301
      %v6522 = vpack.c.b16 %v6393, %v6390
      %v6523 = vpack.c.b16 %v6394, %v6391
      %v6524 = vpack.c.b16 %v6395, %v6392
      %v6525 = vpack.c.b16 %v6399, %v6396
      %v6526 = vpack.c.b16 %v6400, %v6397
      %v6527 = vpack.c.b16 %v6401, %v6398
      %v6528 = vpack.c.b16 %v6405, %v6402
      %v6529 = vpack.c.b16 %v6406, %v6403
      %v6530 = vpack.c.b16 %v6407, %v6404
      %v6531 = vpack.c.b16 %v6411, %v6408
      %v6532 = vpack.c.b16 %v6412, %v6409
      %v6533 = vpack.c.b16 %v6413, %v6410
      %v6534 = vpack.c.b16 %v6417, %v6414
      %v6535 = vpack.c.b16 %v6418, %v6415
      %v6536 = vpack.c.b16 %v6419, %v6416
      %v6537 = vpack.c.b16 %v6423, %v6420
      %v6538 = vpack.c.b16 %v6424, %v6421
      %v6539 = vpack.c.b16 %v6425, %v6422
      %v6540 = vpack.c.b16 %v6429, %v6426
      %v6541 = vpack.c.b16 %v6430, %v6427
      %v6542 = vpack.c.b16 %v6431, %v6428
      %v6543 = vpack.c.b16 %v6435, %v6432
      %v6544 = vpack.c.b16 %v6436, %v6433
      %v6545 = vpack.c.b16 %v6437, %v6434
      %v6546 = vpack.c.b16 %v6441, %v6438
      %v6547 = vpack.c.b16 %v6442, %v6439
      %v6548 = vpack.c.b16 %v6443, %v6440
      %v6549 = vpack.c.b16 %v6447, %v6444
      %v6550 = vpack.c.b16 %v6448, %v6445
      %v6551 = vpack.c.b16 %v6449, %v6446
      %v6552 = vpack.c.b16 %v6453, %v6450
      %v6553 = vpack.c.b16 %v6454, %v6451
      %v6554 = vpack.c.b16 %v6455, %v6452
      %v6555 = vpack.c.b16 %v6459, %v6456
      %v6556 = vpack.c.b16 %v6460, %v6457
      %v6557 = vpack.c.b16 %v6461, %v6458
      %v6558 = vpack.c.b16 %v6465, %v6462
      %v6559 = vpack.c.b16 %v6466, %v6463
      %v6560 = vpack.c.b16 %v6467, %v6464
      %v6561 = vpack.c.b16 %v6471, %v6468
      %v6562 = vpack.c.b16 %v6472, %v6469
      %v6563 = vpack.c.b16 %v6473, %v6470
      %v6564 = vpack.c.b16 %v6477, %v6474
      %v6565 = vpack.c.b16 %v6478, %v6475
      %v6566 = vpack.c.b16 %v6479, %v6476
      %v6567 = vpack.c.b16 %v6483, %v6480
      %v6568 = vpack.c.b16 %v6484, %v6481
      %v6569 = vpack.c.b16 %v6485, %v6482
      %v6570 = vpack.c.b16 %v6489, %v6486
      %v6571 = vpack.c.b16 %v6490, %v6487
      %v6572 = vpack.c.b16 %v6491, %v6488
      %v6573 = vpack.c.b16 %v6495, %v6492
      %v6574 = vpack.c.b16 %v6496, %v6493
      %v6575 = vpack.c.b16 %v6497, %v6494
      %v6576 = vpack.c.b16 %v6501, %v6498
      %v6577 = vpack.c.b16 %v6502, %v6499
      %v6578 = vpack.c.b16 %v6503, %v6500
      %v6579 = vpack.c.b16 %v6507, %v6504
      %v6580 = vpack.c.b16 %v6508, %v6505
      %v6581 = vpack.c.b16 %v6509, %v6506
      %v6582 = vpack.c.b16 %v6513, %v6510
      %v6583 = vpack.c.b16 %v6514, %v6511
      %v6584 = vpack.c.b16 %v6515, %v6512
      %v6585 = vpack.c.b16 %v6519, %v6516
      %v6586 = vpack.c.b16 %v6520, %v6517
      %v6587 = vpack.c.b16 %v6521, %v6518
      %v6655 = vsel %vm641, %v6212, 0
      %6657 = vmatpush.bf16.msra.mxu0 %v6543
      %6658 = vmatpush.bf16.msra.mxu0 %v6540
      %6659 = vmatpush.bf16.msra.mxu0 %v6537
      %6660 = vmatpush.bf16.msra.mxu0 %v6534
      %6661 = vmatpush.bf16.msra.mxu0 %v6531
      %6662 = vmatpush.bf16.msra.mxu0 %v6528
      %6663 = vmatpush.bf16.msra.mxu0 %v6525
      %6664 = vmatpush.bf16.msra.mxu0 %v6522
      %6665 = vmatmul.bf16.gmra.mxu0 %v6210
      %v6666 = vpop.f32.mrf.mxu0
      %v6667 = vadd.f32 0.0, %v6666
      %v6668 = vpop.f32.mrf.mxu0
      %v6669 = vadd.f32 0.0, %v6668
      %6670 = vdwg.mxu0
      %6671 = vmatpush.bf16.msra.mxu0 %v6567
      %6672 = vmatpush.bf16.msra.mxu0 %v6564
      %6673 = vmatpush.bf16.msra.mxu0 %v6561
      %6674 = vmatpush.bf16.msra.mxu0 %v6558
      %6675 = vmatpush.bf16.msra.mxu0 %v6555
      %6676 = vmatpush.bf16.msra.mxu0 %v6552
      %6677 = vmatpush.bf16.msra.mxu0 %v6549
      %6678 = vmatpush.bf16.msra.mxu0 %v6546
      %6679 = vmatmul.bf16.gmra.mxu0 %v6211
      %v6680 = vpop.f32.mrf.mxu0
      %v6681 = vadd.f32 %v6667, %v6680
      %v6682 = vpop.f32.mrf.mxu0
      %v6683 = vadd.f32 %v6669, %v6682
      %6684 = vdwg.mxu0
      %6685 = vmatpush.bf16.msra.mxu0 0
      %6686 = vmatpush.bf16.msra.mxu0 0
      %6687 = vmatpush.bf16.msra.mxu0 %v6585
      %6688 = vmatpush.bf16.msra.mxu0 %v6582
      %6689 = vmatpush.bf16.msra.mxu0 %v6579
      %6690 = vmatpush.bf16.msra.mxu0 %v6576
      %6691 = vmatpush.bf16.msra.mxu0 %v6573
      %6692 = vmatpush.bf16.msra.mxu0 %v6570
      %6693 = vmatmul.bf16.gmra.mxu0 %v6655
      %v6694 = vpop.f32.mrf.mxu0
      %v6695 = vadd.f32 %v6681, %v6694
      %v6696 = vpop.f32.mrf.mxu0
      %v6697 = vadd.f32 %v6683, %v6696
      %6698 = vdwg.mxu0
      %6699 = vmatpush.bf16.msra.mxu0 %v6544
      %6700 = vmatpush.bf16.msra.mxu0 %v6541
      %6701 = vmatpush.bf16.msra.mxu0 %v6538
      %6702 = vmatpush.bf16.msra.mxu0 %v6535
      %6703 = vmatpush.bf16.msra.mxu0 %v6532
      %6704 = vmatpush.bf16.msra.mxu0 %v6529
      %6705 = vmatpush.bf16.msra.mxu0 %v6526
      %6706 = vmatpush.bf16.msra.mxu0 %v6523
      %6707 = vmatmul.bf16.gmra.mxu0 %v6210
      %v6708 = vpop.f32.mrf.mxu0
      %v6709 = vadd.f32 0.0, %v6708
      %v6710 = vpop.f32.mrf.mxu0
      %v6711 = vadd.f32 0.0, %v6710
      %6712 = vdwg.mxu0
      %6713 = vmatpush.bf16.msra.mxu0 %v6568
      %6714 = vmatpush.bf16.msra.mxu0 %v6565
      %6715 = vmatpush.bf16.msra.mxu0 %v6562
      %6716 = vmatpush.bf16.msra.mxu0 %v6559
      %6717 = vmatpush.bf16.msra.mxu0 %v6556
      %6718 = vmatpush.bf16.msra.mxu0 %v6553
      %6719 = vmatpush.bf16.msra.mxu0 %v6550
      %6720 = vmatpush.bf16.msra.mxu0 %v6547
      %6721 = vmatmul.bf16.gmra.mxu0 %v6211
      %v6722 = vpop.f32.mrf.mxu0
      %v6723 = vadd.f32 %v6709, %v6722
      %v6724 = vpop.f32.mrf.mxu0
      %v6725 = vadd.f32 %v6711, %v6724
      %6726 = vdwg.mxu0
      %6727 = vmatpush.bf16.msra.mxu0 0
      %6728 = vmatpush.bf16.msra.mxu0 0
      %6729 = vmatpush.bf16.msra.mxu0 %v6586
      %6730 = vmatpush.bf16.msra.mxu0 %v6583
      %6731 = vmatpush.bf16.msra.mxu0 %v6580
      %6732 = vmatpush.bf16.msra.mxu0 %v6577
      %6733 = vmatpush.bf16.msra.mxu0 %v6574
      %6734 = vmatpush.bf16.msra.mxu0 %v6571
      %6735 = vmatmul.bf16.gmra.mxu0 %v6655
      %v6736 = vpop.f32.mrf.mxu0
      %v6737 = vadd.f32 %v6723, %v6736
      %v6738 = vpop.f32.mrf.mxu0
      %v6739 = vadd.f32 %v6725, %v6738
      %6740 = vdwg.mxu0
      %6741 = vmatpush.bf16.msra.mxu0 %v6545
      %6742 = vmatpush.bf16.msra.mxu0 %v6542
      %6743 = vmatpush.bf16.msra.mxu0 %v6539
      %6744 = vmatpush.bf16.msra.mxu0 %v6536
      %6745 = vmatpush.bf16.msra.mxu0 %v6533
      %6746 = vmatpush.bf16.msra.mxu0 %v6530
      %6747 = vmatpush.bf16.msra.mxu0 %v6527
      %6748 = vmatpush.bf16.msra.mxu0 %v6524
      %6749 = vmatmul.bf16.gmra.mxu0 %v6210
      %v6750 = vpop.f32.mrf.mxu0
      %v6751 = vadd.f32 0.0, %v6750
      %v6752 = vpop.f32.mrf.mxu0
      %v6753 = vadd.f32 0.0, %v6752
      %6754 = vdwg.mxu0
      %6755 = vmatpush.bf16.msra.mxu0 %v6569
      %6756 = vmatpush.bf16.msra.mxu0 %v6566
      %6757 = vmatpush.bf16.msra.mxu0 %v6563
      %6758 = vmatpush.bf16.msra.mxu0 %v6560
      %6759 = vmatpush.bf16.msra.mxu0 %v6557
      %6760 = vmatpush.bf16.msra.mxu0 %v6554
      %6761 = vmatpush.bf16.msra.mxu0 %v6551
      %6762 = vmatpush.bf16.msra.mxu0 %v6548
      %6763 = vmatmul.bf16.gmra.mxu0 %v6211
      %v6764 = vpop.f32.mrf.mxu0
      %v6765 = vadd.f32 %v6751, %v6764
      %v6766 = vpop.f32.mrf.mxu0
      %v6767 = vadd.f32 %v6753, %v6766
      %6768 = vdwg.mxu0
      %6769 = vmatpush.bf16.msra.mxu0 0
      %6770 = vmatpush.bf16.msra.mxu0 0
      %6771 = vmatpush.bf16.msra.mxu0 %v6587
      %6772 = vmatpush.bf16.msra.mxu0 %v6584
      %6773 = vmatpush.bf16.msra.mxu0 %v6581
      %6774 = vmatpush.bf16.msra.mxu0 %v6578
      %6775 = vmatpush.bf16.msra.mxu0 %v6575
      %6776 = vmatpush.bf16.msra.mxu0 %v6572
      %6777 = vmatmul.bf16.gmra.mxu0 %v6655
      %v6778 = vpop.f32.mrf.mxu0
      %v6779 = vadd.f32 %v6765, %v6778
      %v6780 = vpop.f32.mrf.mxu0
      %v6781 = vadd.f32 %v6767, %v6780
      %6782 = vdwg.mxu0
      %v6783 = vadd.f32 %v6151, %v6695
      %v6784 = vadd.f32 %v6152, %v6737
      %v6785 = vadd.f32 %v6153, %v6779
      %v6786 = vadd.f32 %v6154, %v6697
      %v6787 = vadd.f32 %v6155, %v6739
      %v6788 = vadd.f32 %v6156, %v6781
      %v6789 = vld [vmem:[%s9] sm:$0x7]
      %v6791 = vperm.slane %v6789, 0
      %v6792 = vperm.slane %v6789, 1
      %v6793 = vperm.slane %v6789, 2
      %v6797 = vadd.f32 %v6783, %v6791
      %v6798 = vadd.f32 %v6784, %v6792
      %v6799 = vadd.f32 %v6785, %v6793
      %v6800 = vadd.f32 %v6786, %v6791
      %v6801 = vadd.f32 %v6787, %v6792
      %v6802 = vadd.f32 %v6788, %v6793
      %v6803 = vmax.f32 %v6797, 0.0
      %v6804 = vmax.f32 %v6798, 0.0
      %v6805 = vmax.f32 %v6799, 0.0
      %v6806 = vmax.f32 %v6800, 0.0
      %v6807 = vmax.f32 %v6801, 0.0
      %v6808 = vmax.f32 %v6802, 0.0
      %v6809 = vpack.c.bf16 %v6806, %v6803
      %v6810 = vpack.c.bf16 %v6807, %v6804
      %v6811 = vpack.c.bf16 %v6808, %v6805
      %v6812 = vld [vmem:[%s10] sm:$0x3]
      %vm6813 = vcmask 80896
      %v6815 = vsel %vm6813, %v6812, 0
      %v6818 = vsel %vm2354, %v6809, 0
      %v6821 = vsel %vm2354, %v6810, 0
      %v6824 = vsel %vm2354, %v6811, 0
      %6826 = vmatpush.bf16.msra.mxu0 0
      %6827 = vmatpush.bf16.msra.mxu0 0
      %6828 = vmatpush.bf16.msra.mxu0 0
      %6829 = vmatpush.bf16.msra.mxu0 0
      %6830 = vmatpush.bf16.msra.mxu0 0
      %6831 = vmatpush.bf16.msra.mxu0 0
      %6832 = vmatpush.bf16.msra.mxu0 0
      %6833 = vmatpush.bf16.msra.mxu0 %v6818
      %6834 = vmatmul.bf16.gmra.mxu0 %v6815
      %v6835 = vpop.f32.mrf.mxu0
      %v6836 = vadd.f32 0.0, %v6835
      %v6837 = vpop.f32.mrf.mxu0
      %6838 = vdwg.mxu0
      %6839 = vmatpush.bf16.msra.mxu0 0
      %6840 = vmatpush.bf16.msra.mxu0 0
      %6841 = vmatpush.bf16.msra.mxu0 0
      %6842 = vmatpush.bf16.msra.mxu0 0
      %6843 = vmatpush.bf16.msra.mxu0 0
      %6844 = vmatpush.bf16.msra.mxu0 0
      %6845 = vmatpush.bf16.msra.mxu0 0
      %6846 = vmatpush.bf16.msra.mxu0 %v6821
      %6847 = vmatmul.bf16.gmra.mxu0 %v6815
      %v6848 = vpop.f32.mrf.mxu0
      %v6849 = vadd.f32 0.0, %v6848
      %v6850 = vpop.f32.mrf.mxu0
      %6851 = vdwg.mxu0
      %6852 = vmatpush.bf16.msra.mxu0 0
      %6853 = vmatpush.bf16.msra.mxu0 0
      %6854 = vmatpush.bf16.msra.mxu0 0
      %6855 = vmatpush.bf16.msra.mxu0 0
      %6856 = vmatpush.bf16.msra.mxu0 0
      %6857 = vmatpush.bf16.msra.mxu0 0
      %6858 = vmatpush.bf16.msra.mxu0 0
      %6859 = vmatpush.bf16.msra.mxu0 %v6824
      %6860 = vmatmul.bf16.gmra.mxu0 %v6815
      %v6861 = vpop.f32.mrf.mxu0
      %v6862 = vadd.f32 0.0, %v6861
      %v6863 = vpop.f32.mrf.mxu0
      %6864 = vdwg.mxu0
      %v6865 = vpack.c.bf16 %v6836, %v6836
      %v6866 = vpack.c.bf16 %v6849, %v6849
      %v6867 = vpack.c.bf16 %v6862, %v6862
      %v6868 = vld [vmem:[%s11] sm:$0xff]
      %v6869 = vld [vmem:[%s11 + $0x8] sm:$0xff]
      %v6870 = vld [vmem:[%s11 + $0x10] sm:$0xff]
      %v6871 = vld [vmem:[%s11 + $0x18] sm:$0xff]
      %v6872 = vld [vmem:[%s11 + $0x20] sm:$0xff]
      %v6873 = vld [vmem:[%s11 + $0x28] sm:$0xff]
      %v6874 = vld [vmem:[%s11 + $0x30] sm:$0xff]
      %v6875 = vld [vmem:[%s11 + $0x38] sm:$0xff]
      %v6876 = vld [vmem:[%s11 + $0x40] sm:$0xff]
      %v6877 = vld [vmem:[%s11 + $0x48] sm:$0xff]
      %v6878 = vld [vmem:[%s11 + $0x50] sm:$0xff]
      %v6879 = vld [vmem:[%s11 + $0x58] sm:$0xff]
      %v6880 = vld [vmem:[%s11 + $0x60] sm:$0xff]
      %v6881 = vld [vmem:[%s11 + $0x68] sm:$0xff]
      %v6882 = vld [vmem:[%s11 + $0x70] sm:$0xff]
      %v6883 = vld [vmem:[%s11 + $0x78] sm:$0xff]
      %v6884 = vld [vmem:[%s11 + $0x80] sm:$0xff]
      %v6885 = vld [vmem:[%s11 + $0x88] sm:$0xff]
      %v6886 = vld [vmem:[%s11 + $0x90] sm:$0xff]
      %v6887 = vld [vmem:[%s11 + $0x98] sm:$0xff]
      %v6888 = vld [vmem:[%s11 + $0xa0] sm:$0xff]
      %v6889 = vld [vmem:[%s11 + $0xa8] sm:$0xff]
      %v6890 = vld [vmem:[%s11 + $0xb0] sm:$0xff]
      %v6891 = vld [vmem:[%s11 + $0xb8] sm:$0xff]
      %v6892 = vld [vmem:[%s11 + $0xc0] sm:$0xff]
      %v6893 = vld [vmem:[%s11 + $0xc8] sm:$0xff]
      %v6894 = vld [vmem:[%s11 + $0xd0] sm:$0xff]
      %v6895 = vld [vmem:[%s11 + $0xd8] sm:$0xff]
      %v6896 = vld [vmem:[%s11 + $0xe0] sm:$0xff]
      %v6897 = vld [vmem:[%s11 + $0xe8] sm:$0xff]
      %v6898 = vld [vmem:[%s11 + $0xf0] sm:$0xff]
      %v6899 = vld [vmem:[%s11 + $0xf8] sm:$0xff]
      %v6900 = vld [vmem:[%s11 + $0x100] sm:$0xff]
      %v6901 = vld [vmem:[%s11 + $0x108] sm:$0xff]
      %v6902 = vld [vmem:[%s11 + $0x110] sm:$0xff]
      %v6903 = vld [vmem:[%s11 + $0x118] sm:$0xff]
      %v6904 = vld [vmem:[%s11 + $0x120] sm:$0xff]
      %v6905 = vld [vmem:[%s11 + $0x128] sm:$0xff]
      %v6906 = vld [vmem:[%s11 + $0x130] sm:$0xff]
      %v6907 = vld [vmem:[%s11 + $0x138] sm:$0xff]
      %s6908 = scalar_lea.vmem %s10, 2
      %v6909 = vld [vmem:[%s6908] sm:$0x3]
      %v6911 = vsel %vm6813, %v6909, 0
      %6913 = vmatpush.bf16.msra.mxu0 0
      %6914 = vmatpush.bf16.msra.mxu0 0
      %6915 = vmatpush.bf16.msra.mxu0 0
      %6916 = vmatpush.bf16.msra.mxu0 0
      %6917 = vmatpush.bf16.msra.mxu0 0
      %6918 = vmatpush.bf16.msra.mxu0 0
      %6919 = vmatpush.bf16.msra.mxu0 0
      %6920 = vmatpush.bf16.msra.mxu0 %v6818
      %6921 = vmatmul.bf16.gmra.mxu0 %v6911
      %v6922 = vpop.f32.mrf.mxu0
      %v6923 = vadd.f32 0.0, %v6922
      %v6924 = vpop.f32.mrf.mxu0
      %6925 = vdwg.mxu0
      %6926 = vmatpush.bf16.msra.mxu0 0
      %6927 = vmatpush.bf16.msra.mxu0 0
      %6928 = vmatpush.bf16.msra.mxu0 0
      %6929 = vmatpush.bf16.msra.mxu0 0
      %6930 = vmatpush.bf16.msra.mxu0 0
      %6931 = vmatpush.bf16.msra.mxu0 0
      %6932 = vmatpush.bf16.msra.mxu0 0
      %6933 = vmatpush.bf16.msra.mxu0 %v6821
      %6934 = vmatmul.bf16.gmra.mxu0 %v6911
      %v6935 = vpop.f32.mrf.mxu0
      %v6936 = vadd.f32 0.0, %v6935
      %v6937 = vpop.f32.mrf.mxu0
      %6938 = vdwg.mxu0
      %6939 = vmatpush.bf16.msra.mxu0 0
      %6940 = vmatpush.bf16.msra.mxu0 0
      %6941 = vmatpush.bf16.msra.mxu0 0
      %6942 = vmatpush.bf16.msra.mxu0 0
      %6943 = vmatpush.bf16.msra.mxu0 0
      %6944 = vmatpush.bf16.msra.mxu0 0
      %6945 = vmatpush.bf16.msra.mxu0 0
      %6946 = vmatpush.bf16.msra.mxu0 %v6824
      %6947 = vmatmul.bf16.gmra.mxu0 %v6911
      %v6948 = vpop.f32.mrf.mxu0
      %v6949 = vadd.f32 0.0, %v6948
      %v6950 = vpop.f32.mrf.mxu0
      %6951 = vdwg.mxu0
      %v6952 = vpack.c.bf16 %v6923, %v6923
      %v6953 = vpack.c.bf16 %v6936, %v6936
      %v6954 = vpack.c.bf16 %v6949, %v6949
      %s6955 = scalar_lea.vmem %s11, 320
      %v6956 = vld [vmem:[%s6955] sm:$0xff]
      %v6957 = vld [vmem:[%s6955 + $0x8] sm:$0xff]
      %v6958 = vld [vmem:[%s6955 + $0x10] sm:$0xff]
      %v6959 = vld [vmem:[%s6955 + $0x18] sm:$0xff]
      %v6960 = vld [vmem:[%s6955 + $0x20] sm:$0xff]
      %v6961 = vld [vmem:[%s6955 + $0x28] sm:$0xff]
      %v6962 = vld [vmem:[%s6955 + $0x30] sm:$0xff]
      %v6963 = vld [vmem:[%s6955 + $0x38] sm:$0xff]
      %v6964 = vld [vmem:[%s6955 + $0x40] sm:$0xff]
      %v6965 = vld [vmem:[%s6955 + $0x48] sm:$0xff]
      %v6966 = vld [vmem:[%s6955 + $0x50] sm:$0xff]
      %v6967 = vld [vmem:[%s6955 + $0x58] sm:$0xff]
      %v6968 = vld [vmem:[%s6955 + $0x60] sm:$0xff]
      %v6969 = vld [vmem:[%s6955 + $0x68] sm:$0xff]
      %v6970 = vld [vmem:[%s6955 + $0x70] sm:$0xff]
      %v6971 = vld [vmem:[%s6955 + $0x78] sm:$0xff]
      %v6972 = vld [vmem:[%s6955 + $0x80] sm:$0xff]
      %v6973 = vld [vmem:[%s6955 + $0x88] sm:$0xff]
      %v6974 = vld [vmem:[%s6955 + $0x90] sm:$0xff]
      %v6975 = vld [vmem:[%s6955 + $0x98] sm:$0xff]
      %v6976 = vld [vmem:[%s6955 + $0xa0] sm:$0xff]
      %v6977 = vld [vmem:[%s6955 + $0xa8] sm:$0xff]
      %v6978 = vld [vmem:[%s6955 + $0xb0] sm:$0xff]
      %v6979 = vld [vmem:[%s6955 + $0xb8] sm:$0xff]
      %v6980 = vld [vmem:[%s6955 + $0xc0] sm:$0xff]
      %v6981 = vld [vmem:[%s6955 + $0xc8] sm:$0xff]
      %v6982 = vld [vmem:[%s6955 + $0xd0] sm:$0xff]
      %v6983 = vld [vmem:[%s6955 + $0xd8] sm:$0xff]
      %v6984 = vld [vmem:[%s6955 + $0xe0] sm:$0xff]
      %v6985 = vld [vmem:[%s6955 + $0xe8] sm:$0xff]
      %v6986 = vld [vmem:[%s6955 + $0xf0] sm:$0xff]
      %v6987 = vld [vmem:[%s6955 + $0xf8] sm:$0xff]
      %v6988 = vld [vmem:[%s6955 + $0x100] sm:$0xff]
      %v6989 = vld [vmem:[%s6955 + $0x108] sm:$0xff]
      %v6990 = vld [vmem:[%s6955 + $0x110] sm:$0xff]
      %v6991 = vld [vmem:[%s6955 + $0x118] sm:$0xff]
      %v6992 = vld [vmem:[%s6955 + $0x120] sm:$0xff]
      %v6993 = vld [vmem:[%s6955 + $0x128] sm:$0xff]
      %v6994 = vld [vmem:[%s6955 + $0x130] sm:$0xff]
      %v6995 = vld [vmem:[%s6955 + $0x138] sm:$0xff]
      %v7036 = vunpack.c.l.b16 %v6956
      %v7037 = vunpack.c.h.b16 %v6956
      %v7038 = vunpack.c.l.b16 %v6957
      %v7039 = vunpack.c.h.b16 %v6957
      %v7040 = vunpack.c.l.b16 %v6958
      %v7041 = vunpack.c.h.b16 %v6958
      %v7042 = vunpack.c.l.b16 %v6959
      %v7043 = vunpack.c.h.b16 %v6959
      %v7044 = vunpack.c.l.b16 %v6960
      %v7045 = vunpack.c.h.b16 %v6960
      %v7046 = vunpack.c.l.b16 %v6961
      %v7047 = vunpack.c.h.b16 %v6961
      %v7048 = vunpack.c.l.b16 %v6962
      %v7049 = vunpack.c.h.b16 %v6962
      %v7050 = vunpack.c.l.b16 %v6963
      %v7051 = vunpack.c.h.b16 %v6963
      %v7052 = vunpack.c.l.b16 %v6964
      %v7053 = vunpack.c.h.b16 %v6964
      %v7054 = vunpack.c.l.b16 %v6965
      %v7055 = vunpack.c.h.b16 %v6965
      %v7056 = vunpack.c.l.b16 %v6966
      %v7057 = vunpack.c.h.b16 %v6966
      %v7058 = vunpack.c.l.b16 %v6967
      %v7059 = vunpack.c.h.b16 %v6967
      %v7060 = vunpack.c.l.b16 %v6968
      %v7061 = vunpack.c.h.b16 %v6968
      %v7062 = vunpack.c.l.b16 %v6969
      %v7063 = vunpack.c.h.b16 %v6969
      %v7064 = vunpack.c.l.b16 %v6970
      %v7065 = vunpack.c.h.b16 %v6970
      %v7066 = vunpack.c.l.b16 %v6971
      %v7067 = vunpack.c.h.b16 %v6971
      %v7068 = vunpack.c.l.b16 %v6972
      %v7069 = vunpack.c.h.b16 %v6972
      %v7070 = vunpack.c.l.b16 %v6973
      %v7071 = vunpack.c.h.b16 %v6973
      %v7072 = vunpack.c.l.b16 %v6974
      %v7073 = vunpack.c.h.b16 %v6974
      %v7074 = vunpack.c.l.b16 %v6975
      %v7075 = vunpack.c.h.b16 %v6975
      %v7076 = vunpack.c.l.b16 %v6976
      %v7077 = vunpack.c.h.b16 %v6976
      %v7078 = vunpack.c.l.b16 %v6977
      %v7079 = vunpack.c.h.b16 %v6977
      %v7080 = vunpack.c.l.b16 %v6978
      %v7081 = vunpack.c.h.b16 %v6978
      %v7082 = vunpack.c.l.b16 %v6979
      %v7083 = vunpack.c.h.b16 %v6979
      %v7084 = vunpack.c.l.b16 %v6980
      %v7085 = vunpack.c.h.b16 %v6980
      %v7086 = vunpack.c.l.b16 %v6981
      %v7087 = vunpack.c.h.b16 %v6981
      %v7088 = vunpack.c.l.b16 %v6982
      %v7089 = vunpack.c.h.b16 %v6982
      %v7090 = vunpack.c.l.b16 %v6983
      %v7091 = vunpack.c.h.b16 %v6983
      %v7092 = vunpack.c.l.b16 %v6984
      %v7093 = vunpack.c.h.b16 %v6984
      %v7094 = vunpack.c.l.b16 %v6985
      %v7095 = vunpack.c.h.b16 %v6985
      %v7096 = vunpack.c.l.b16 %v6986
      %v7097 = vunpack.c.h.b16 %v6986
      %v7098 = vunpack.c.l.b16 %v6987
      %v7099 = vunpack.c.h.b16 %v6987
      %v7100 = vunpack.c.l.b16 %v6988
      %v7101 = vunpack.c.h.b16 %v6988
      %v7102 = vunpack.c.l.b16 %v6989
      %v7103 = vunpack.c.h.b16 %v6989
      %v7104 = vunpack.c.l.b16 %v6990
      %v7105 = vunpack.c.h.b16 %v6990
      %v7106 = vunpack.c.l.b16 %v6991
      %v7107 = vunpack.c.h.b16 %v6991
      %v7108 = vunpack.c.l.b16 %v6992
      %v7109 = vunpack.c.h.b16 %v6992
      %v7110 = vunpack.c.l.b16 %v6993
      %v7111 = vunpack.c.h.b16 %v6993
      %v7112 = vunpack.c.l.b16 %v6994
      %v7113 = vunpack.c.h.b16 %v6994
      %v7114 = vunpack.c.l.b16 %v6995
      %v7115 = vunpack.c.h.b16 %v6995
      %v7116 = vpack.c.b16 %v7038, %v7036
      %v7117 = vpack.c.b16 %v7039, %v7037
      %v7118 = vpack.c.b16 %v7042, %v7040
      %v7119 = vpack.c.b16 %v7043, %v7041
      %v7120 = vpack.c.b16 %v7046, %v7044
      %v7121 = vpack.c.b16 %v7047, %v7045
      %v7122 = vpack.c.b16 %v7050, %v7048
      %v7123 = vpack.c.b16 %v7051, %v7049
      %v7124 = vpack.c.b16 %v7054, %v7052
      %v7125 = vpack.c.b16 %v7055, %v7053
      %v7126 = vpack.c.b16 %v7058, %v7056
      %v7127 = vpack.c.b16 %v7059, %v7057
      %v7128 = vpack.c.b16 %v7062, %v7060
      %v7129 = vpack.c.b16 %v7063, %v7061
      %v7130 = vpack.c.b16 %v7066, %v7064
      %v7131 = vpack.c.b16 %v7067, %v7065
      %v7132 = vpack.c.b16 %v7070, %v7068
      %v7133 = vpack.c.b16 %v7071, %v7069
      %v7134 = vpack.c.b16 %v7074, %v7072
      %v7135 = vpack.c.b16 %v7075, %v7073
      %v7136 = vpack.c.b16 %v7078, %v7076
      %v7137 = vpack.c.b16 %v7079, %v7077
      %v7138 = vpack.c.b16 %v7082, %v7080
      %v7139 = vpack.c.b16 %v7083, %v7081
      %v7140 = vpack.c.b16 %v7086, %v7084
      %v7141 = vpack.c.b16 %v7087, %v7085
      %v7142 = vpack.c.b16 %v7090, %v7088
      %v7143 = vpack.c.b16 %v7091, %v7089
      %v7144 = vpack.c.b16 %v7094, %v7092
      %v7145 = vpack.c.b16 %v7095, %v7093
      %v7146 = vpack.c.b16 %v7098, %v7096
      %v7147 = vpack.c.b16 %v7099, %v7097
      %v7148 = vpack.c.b16 %v7102, %v7100
      %v7149 = vpack.c.b16 %v7103, %v7101
      %v7150 = vpack.c.b16 %v7106, %v7104
      %v7151 = vpack.c.b16 %v7107, %v7105
      %v7152 = vpack.c.b16 %v7110, %v7108
      %v7153 = vpack.c.b16 %v7111, %v7109
      %v7154 = vpack.c.b16 %v7114, %v7112
      %v7155 = vpack.c.b16 %v7115, %v7113
      %vm7196 = vcmask 523264
      %v7198 = vsel %vm7196, %v6954, 0
      %7200 = vmatpush.bf16.msra.mxu0 %v7130
      %7201 = vmatpush.bf16.msra.mxu0 %v7128
      %7202 = vmatpush.bf16.msra.mxu0 %v7126
      %7203 = vmatpush.bf16.msra.mxu0 %v7124
      %7204 = vmatpush.bf16.msra.mxu0 %v7122
      %7205 = vmatpush.bf16.msra.mxu0 %v7120
      %7206 = vmatpush.bf16.msra.mxu0 %v7118
      %7207 = vmatpush.bf16.msra.mxu0 %v7116
      %7208 = vmatmul.bf16.gmra.mxu0 %v6952
      %v7209 = vpop.f32.mrf.mxu0
      %v7210 = vadd.f32 0.0, %v7209
      %v7211 = vpop.f32.mrf.mxu0
      %7212 = vdwg.mxu0
      %7213 = vmatpush.bf16.msra.mxu0 %v7146
      %7214 = vmatpush.bf16.msra.mxu0 %v7144
      %7215 = vmatpush.bf16.msra.mxu0 %v7142
      %7216 = vmatpush.bf16.msra.mxu0 %v7140
      %7217 = vmatpush.bf16.msra.mxu0 %v7138
      %7218 = vmatpush.bf16.msra.mxu0 %v7136
      %7219 = vmatpush.bf16.msra.mxu0 %v7134
      %7220 = vmatpush.bf16.msra.mxu0 %v7132
      %7221 = vmatmul.bf16.gmra.mxu0 %v6953
      %v7222 = vpop.f32.mrf.mxu0
      %v7223 = vadd.f32 %v7210, %v7222
      %v7224 = vpop.f32.mrf.mxu0
      %7225 = vdwg.mxu0
      %7226 = vmatpush.bf16.msra.mxu0 0
      %7227 = vmatpush.bf16.msra.mxu0 0
      %7228 = vmatpush.bf16.msra.mxu0 0
      %7229 = vmatpush.bf16.msra.mxu0 0
      %7230 = vmatpush.bf16.msra.mxu0 %v7154
      %7231 = vmatpush.bf16.msra.mxu0 %v7152
      %7232 = vmatpush.bf16.msra.mxu0 %v7150
      %7233 = vmatpush.bf16.msra.mxu0 %v7148
      %7234 = vmatmul.bf16.gmra.mxu0 %v7198
      %v7235 = vpop.f32.mrf.mxu0
      %v7236 = vadd.f32 %v7223, %v7235
      %v7237 = vpop.f32.mrf.mxu0
      %7238 = vdwg.mxu0
      %7239 = vmatpush.bf16.msra.mxu0 %v7131
      %7240 = vmatpush.bf16.msra.mxu0 %v7129
      %7241 = vmatpush.bf16.msra.mxu0 %v7127
      %7242 = vmatpush.bf16.msra.mxu0 %v7125
      %7243 = vmatpush.bf16.msra.mxu0 %v7123
      %7244 = vmatpush.bf16.msra.mxu0 %v7121
      %7245 = vmatpush.bf16.msra.mxu0 %v7119
      %7246 = vmatpush.bf16.msra.mxu0 %v7117
      %7247 = vmatmul.bf16.gmra.mxu0 %v6952
      %v7248 = vpop.f32.mrf.mxu0
      %v7249 = vadd.f32 0.0, %v7248
      %v7250 = vpop.f32.mrf.mxu0
      %7251 = vdwg.mxu0
      %7252 = vmatpush.bf16.msra.mxu0 %v7147
      %7253 = vmatpush.bf16.msra.mxu0 %v7145
      %7254 = vmatpush.bf16.msra.mxu0 %v7143
      %7255 = vmatpush.bf16.msra.mxu0 %v7141
      %7256 = vmatpush.bf16.msra.mxu0 %v7139
      %7257 = vmatpush.bf16.msra.mxu0 %v7137
      %7258 = vmatpush.bf16.msra.mxu0 %v7135
      %7259 = vmatpush.bf16.msra.mxu0 %v7133
      %7260 = vmatmul.bf16.gmra.mxu0 %v6953
      %v7261 = vpop.f32.mrf.mxu0
      %v7262 = vadd.f32 %v7249, %v7261
      %v7263 = vpop.f32.mrf.mxu0
      %7264 = vdwg.mxu0
      %7265 = vmatpush.bf16.msra.mxu0 0
      %7266 = vmatpush.bf16.msra.mxu0 0
      %7267 = vmatpush.bf16.msra.mxu0 0
      %7268 = vmatpush.bf16.msra.mxu0 0
      %7269 = vmatpush.bf16.msra.mxu0 %v7155
      %7270 = vmatpush.bf16.msra.mxu0 %v7153
      %7271 = vmatpush.bf16.msra.mxu0 %v7151
      %7272 = vmatpush.bf16.msra.mxu0 %v7149
      %7273 = vmatmul.bf16.gmra.mxu0 %v7198
      %v7274 = vpop.f32.mrf.mxu0
      %v7275 = vadd.f32 %v7262, %v7274
      %v7276 = vpop.f32.mrf.mxu0
      %7277 = vdwg.mxu0
      %v7318 = vunpack.c.l.b16 %v6868
      %v7319 = vunpack.c.h.b16 %v6868
      %v7320 = vunpack.c.l.b16 %v6869
      %v7321 = vunpack.c.h.b16 %v6869
      %v7322 = vunpack.c.l.b16 %v6870
      %v7323 = vunpack.c.h.b16 %v6870
      %v7324 = vunpack.c.l.b16 %v6871
      %v7325 = vunpack.c.h.b16 %v6871
      %v7326 = vunpack.c.l.b16 %v6872
      %v7327 = vunpack.c.h.b16 %v6872
      %v7328 = vunpack.c.l.b16 %v6873
      %v7329 = vunpack.c.h.b16 %v6873
      %v7330 = vunpack.c.l.b16 %v6874
      %v7331 = vunpack.c.h.b16 %v6874
      %v7332 = vunpack.c.l.b16 %v6875
      %v7333 = vunpack.c.h.b16 %v6875
      %v7334 = vunpack.c.l.b16 %v6876
      %v7335 = vunpack.c.h.b16 %v6876
      %v7336 = vunpack.c.l.b16 %v6877
      %v7337 = vunpack.c.h.b16 %v6877
      %v7338 = vunpack.c.l.b16 %v6878
      %v7339 = vunpack.c.h.b16 %v6878
      %v7340 = vunpack.c.l.b16 %v6879
      %v7341 = vunpack.c.h.b16 %v6879
      %v7342 = vunpack.c.l.b16 %v6880
      %v7343 = vunpack.c.h.b16 %v6880
      %v7344 = vunpack.c.l.b16 %v6881
      %v7345 = vunpack.c.h.b16 %v6881
      %v7346 = vunpack.c.l.b16 %v6882
      %v7347 = vunpack.c.h.b16 %v6882
      %v7348 = vunpack.c.l.b16 %v6883
      %v7349 = vunpack.c.h.b16 %v6883
      %v7350 = vunpack.c.l.b16 %v6884
      %v7351 = vunpack.c.h.b16 %v6884
      %v7352 = vunpack.c.l.b16 %v6885
      %v7353 = vunpack.c.h.b16 %v6885
      %v7354 = vunpack.c.l.b16 %v6886
      %v7355 = vunpack.c.h.b16 %v6886
      %v7356 = vunpack.c.l.b16 %v6887
      %v7357 = vunpack.c.h.b16 %v6887
      %v7358 = vunpack.c.l.b16 %v6888
      %v7359 = vunpack.c.h.b16 %v6888
      %v7360 = vunpack.c.l.b16 %v6889
      %v7361 = vunpack.c.h.b16 %v6889
      %v7362 = vunpack.c.l.b16 %v6890
      %v7363 = vunpack.c.h.b16 %v6890
      %v7364 = vunpack.c.l.b16 %v6891
      %v7365 = vunpack.c.h.b16 %v6891
      %v7366 = vunpack.c.l.b16 %v6892
      %v7367 = vunpack.c.h.b16 %v6892
      %v7368 = vunpack.c.l.b16 %v6893
      %v7369 = vunpack.c.h.b16 %v6893
      %v7370 = vunpack.c.l.b16 %v6894
      %v7371 = vunpack.c.h.b16 %v6894
      %v7372 = vunpack.c.l.b16 %v6895
      %v7373 = vunpack.c.h.b16 %v6895
      %v7374 = vunpack.c.l.b16 %v6896
      %v7375 = vunpack.c.h.b16 %v6896
      %v7376 = vunpack.c.l.b16 %v6897
      %v7377 = vunpack.c.h.b16 %v6897
      %v7378 = vunpack.c.l.b16 %v6898
      %v7379 = vunpack.c.h.b16 %v6898
      %v7380 = vunpack.c.l.b16 %v6899
      %v7381 = vunpack.c.h.b16 %v6899
      %v7382 = vunpack.c.l.b16 %v6900
      %v7383 = vunpack.c.h.b16 %v6900
      %v7384 = vunpack.c.l.b16 %v6901
      %v7385 = vunpack.c.h.b16 %v6901
      %v7386 = vunpack.c.l.b16 %v6902
      %v7387 = vunpack.c.h.b16 %v6902
      %v7388 = vunpack.c.l.b16 %v6903
      %v7389 = vunpack.c.h.b16 %v6903
      %v7390 = vunpack.c.l.b16 %v6904
      %v7391 = vunpack.c.h.b16 %v6904
      %v7392 = vunpack.c.l.b16 %v6905
      %v7393 = vunpack.c.h.b16 %v6905
      %v7394 = vunpack.c.l.b16 %v6906
      %v7395 = vunpack.c.h.b16 %v6906
      %v7396 = vunpack.c.l.b16 %v6907
      %v7397 = vunpack.c.h.b16 %v6907
      %v7398 = vpack.c.b16 %v7320, %v7318
      %v7399 = vpack.c.b16 %v7321, %v7319
      %v7400 = vpack.c.b16 %v7324, %v7322
      %v7401 = vpack.c.b16 %v7325, %v7323
      %v7402 = vpack.c.b16 %v7328, %v7326
      %v7403 = vpack.c.b16 %v7329, %v7327
      %v7404 = vpack.c.b16 %v7332, %v7330
      %v7405 = vpack.c.b16 %v7333, %v7331
      %v7406 = vpack.c.b16 %v7336, %v7334
      %v7407 = vpack.c.b16 %v7337, %v7335
      %v7408 = vpack.c.b16 %v7340, %v7338
      %v7409 = vpack.c.b16 %v7341, %v7339
      %v7410 = vpack.c.b16 %v7344, %v7342
      %v7411 = vpack.c.b16 %v7345, %v7343
      %v7412 = vpack.c.b16 %v7348, %v7346
      %v7413 = vpack.c.b16 %v7349, %v7347
      %v7414 = vpack.c.b16 %v7352, %v7350
      %v7415 = vpack.c.b16 %v7353, %v7351
      %v7416 = vpack.c.b16 %v7356, %v7354
      %v7417 = vpack.c.b16 %v7357, %v7355
      %v7418 = vpack.c.b16 %v7360, %v7358
      %v7419 = vpack.c.b16 %v7361, %v7359
      %v7420 = vpack.c.b16 %v7364, %v7362
      %v7421 = vpack.c.b16 %v7365, %v7363
      %v7422 = vpack.c.b16 %v7368, %v7366
      %v7423 = vpack.c.b16 %v7369, %v7367
      %v7424 = vpack.c.b16 %v7372, %v7370
      %v7425 = vpack.c.b16 %v7373, %v7371
      %v7426 = vpack.c.b16 %v7376, %v7374
      %v7427 = vpack.c.b16 %v7377, %v7375
      %v7428 = vpack.c.b16 %v7380, %v7378
      %v7429 = vpack.c.b16 %v7381, %v7379
      %v7430 = vpack.c.b16 %v7384, %v7382
      %v7431 = vpack.c.b16 %v7385, %v7383
      %v7432 = vpack.c.b16 %v7388, %v7386
      %v7433 = vpack.c.b16 %v7389, %v7387
      %v7434 = vpack.c.b16 %v7392, %v7390
      %v7435 = vpack.c.b16 %v7393, %v7391
      %v7436 = vpack.c.b16 %v7396, %v7394
      %v7437 = vpack.c.b16 %v7397, %v7395
      %v7479 = vsel %vm7196, %v6867, 0
      %7481 = vmatpush.bf16.msra.mxu0 %v7412
      %7482 = vmatpush.bf16.msra.mxu0 %v7410
      %7483 = vmatpush.bf16.msra.mxu0 %v7408
      %7484 = vmatpush.bf16.msra.mxu0 %v7406
      %7485 = vmatpush.bf16.msra.mxu0 %v7404
      %7486 = vmatpush.bf16.msra.mxu0 %v7402
      %7487 = vmatpush.bf16.msra.mxu0 %v7400
      %7488 = vmatpush.bf16.msra.mxu0 %v7398
      %7489 = vmatmul.bf16.gmra.mxu0 %v6865
      %v7490 = vpop.f32.mrf.mxu0
      %v7491 = vadd.f32 %v7236, %v7490
      %v7492 = vpop.f32.mrf.mxu0
      %7493 = vdwg.mxu0
      %7494 = vmatpush.bf16.msra.mxu0 %v7428
      %7495 = vmatpush.bf16.msra.mxu0 %v7426
      %7496 = vmatpush.bf16.msra.mxu0 %v7424
      %7497 = vmatpush.bf16.msra.mxu0 %v7422
      %7498 = vmatpush.bf16.msra.mxu0 %v7420
      %7499 = vmatpush.bf16.msra.mxu0 %v7418
      %7500 = vmatpush.bf16.msra.mxu0 %v7416
      %7501 = vmatpush.bf16.msra.mxu0 %v7414
      %7502 = vmatmul.bf16.gmra.mxu0 %v6866
      %v7503 = vpop.f32.mrf.mxu0
      %v7504 = vadd.f32 %v7491, %v7503
      %v7505 = vpop.f32.mrf.mxu0
      %7506 = vdwg.mxu0
      %7507 = vmatpush.bf16.msra.mxu0 0
      %7508 = vmatpush.bf16.msra.mxu0 0
      %7509 = vmatpush.bf16.msra.mxu0 0
      %7510 = vmatpush.bf16.msra.mxu0 0
      %7511 = vmatpush.bf16.msra.mxu0 %v7436
      %7512 = vmatpush.bf16.msra.mxu0 %v7434
      %7513 = vmatpush.bf16.msra.mxu0 %v7432
      %7514 = vmatpush.bf16.msra.mxu0 %v7430
      %7515 = vmatmul.bf16.gmra.mxu0 %v7479
      %v7516 = vpop.f32.mrf.mxu0
      %v7517 = vadd.f32 %v7504, %v7516
      %v7518 = vpop.f32.mrf.mxu0
      %7519 = vdwg.mxu0
      %7520 = vmatpush.bf16.msra.mxu0 %v7413
      %7521 = vmatpush.bf16.msra.mxu0 %v7411
      %7522 = vmatpush.bf16.msra.mxu0 %v7409
      %7523 = vmatpush.bf16.msra.mxu0 %v7407
      %7524 = vmatpush.bf16.msra.mxu0 %v7405
      %7525 = vmatpush.bf16.msra.mxu0 %v7403
      %7526 = vmatpush.bf16.msra.mxu0 %v7401
      %7527 = vmatpush.bf16.msra.mxu0 %v7399
      %7528 = vmatmul.bf16.gmra.mxu0 %v6865
      %v7529 = vpop.f32.mrf.mxu0
      %v7530 = vadd.f32 %v7275, %v7529
      %v7531 = vpop.f32.mrf.mxu0
      %7532 = vdwg.mxu0
      %7533 = vmatpush.bf16.msra.mxu0 %v7429
      %7534 = vmatpush.bf16.msra.mxu0 %v7427
      %7535 = vmatpush.bf16.msra.mxu0 %v7425
      %7536 = vmatpush.bf16.msra.mxu0 %v7423
      %7537 = vmatpush.bf16.msra.mxu0 %v7421
      %7538 = vmatpush.bf16.msra.mxu0 %v7419
      %7539 = vmatpush.bf16.msra.mxu0 %v7417
      %7540 = vmatpush.bf16.msra.mxu0 %v7415
      %7541 = vmatmul.bf16.gmra.mxu0 %v6866
      %v7542 = vpop.f32.mrf.mxu0
      %v7543 = vadd.f32 %v7530, %v7542
      %v7544 = vpop.f32.mrf.mxu0
      %7545 = vdwg.mxu0
      %7546 = vmatpush.bf16.msra.mxu0 0
      %7547 = vmatpush.bf16.msra.mxu0 0
      %7548 = vmatpush.bf16.msra.mxu0 0
      %7549 = vmatpush.bf16.msra.mxu0 0
      %7550 = vmatpush.bf16.msra.mxu0 %v7437
      %7551 = vmatpush.bf16.msra.mxu0 %v7435
      %7552 = vmatpush.bf16.msra.mxu0 %v7433
      %7553 = vmatpush.bf16.msra.mxu0 %v7431
      %7554 = vmatmul.bf16.gmra.mxu0 %v7479
      %v7555 = vpop.f32.mrf.mxu0
      %v7556 = vadd.f32 %v7543, %v7555
      %v7557 = vpop.f32.mrf.mxu0
      %7558 = vdwg.mxu0
      %s7559 = scalar_lea.vmem %s10, 4
      %v7560 = vld [vmem:[%s7559] sm:$0x3]
      %v7562 = vsel %vm6813, %v7560, 0
      %7564 = vmatpush.bf16.msra.mxu0 0
      %7565 = vmatpush.bf16.msra.mxu0 0
      %7566 = vmatpush.bf16.msra.mxu0 0
      %7567 = vmatpush.bf16.msra.mxu0 0
      %7568 = vmatpush.bf16.msra.mxu0 0
      %7569 = vmatpush.bf16.msra.mxu0 0
      %7570 = vmatpush.bf16.msra.mxu0 0
      %7571 = vmatpush.bf16.msra.mxu0 %v6818
      %7572 = vmatmul.bf16.gmra.mxu0 %v7562
      %v7573 = vpop.f32.mrf.mxu0
      %v7574 = vadd.f32 0.0, %v7573
      %v7575 = vpop.f32.mrf.mxu0
      %7576 = vdwg.mxu0
      %7577 = vmatpush.bf16.msra.mxu0 0
      %7578 = vmatpush.bf16.msra.mxu0 0
      %7579 = vmatpush.bf16.msra.mxu0 0
      %7580 = vmatpush.bf16.msra.mxu0 0
      %7581 = vmatpush.bf16.msra.mxu0 0
      %7582 = vmatpush.bf16.msra.mxu0 0
      %7583 = vmatpush.bf16.msra.mxu0 0
      %7584 = vmatpush.bf16.msra.mxu0 %v6821
      %7585 = vmatmul.bf16.gmra.mxu0 %v7562
      %v7586 = vpop.f32.mrf.mxu0
      %v7587 = vadd.f32 0.0, %v7586
      %v7588 = vpop.f32.mrf.mxu0
      %7589 = vdwg.mxu0
      %7590 = vmatpush.bf16.msra.mxu0 0
      %7591 = vmatpush.bf16.msra.mxu0 0
      %7592 = vmatpush.bf16.msra.mxu0 0
      %7593 = vmatpush.bf16.msra.mxu0 0
      %7594 = vmatpush.bf16.msra.mxu0 0
      %7595 = vmatpush.bf16.msra.mxu0 0
      %7596 = vmatpush.bf16.msra.mxu0 0
      %7597 = vmatpush.bf16.msra.mxu0 %v6824
      %7598 = vmatmul.bf16.gmra.mxu0 %v7562
      %v7599 = vpop.f32.mrf.mxu0
      %v7600 = vadd.f32 0.0, %v7599
      %v7601 = vpop.f32.mrf.mxu0
      %7602 = vdwg.mxu0
      %v7603 = vpack.c.bf16 %v7574, %v7574
      %v7604 = vpack.c.bf16 %v7587, %v7587
      %v7605 = vpack.c.bf16 %v7600, %v7600
      %s7606 = scalar_lea.vmem %s11, 640
      %v7607 = vld [vmem:[%s7606] sm:$0xff]
      %v7608 = vld [vmem:[%s7606 + $0x8] sm:$0xff]
      %v7609 = vld [vmem:[%s7606 + $0x10] sm:$0xff]
      %v7610 = vld [vmem:[%s7606 + $0x18] sm:$0xff]
      %v7611 = vld [vmem:[%s7606 + $0x20] sm:$0xff]
      %v7612 = vld [vmem:[%s7606 + $0x28] sm:$0xff]
      %v7613 = vld [vmem:[%s7606 + $0x30] sm:$0xff]
      %v7614 = vld [vmem:[%s7606 + $0x38] sm:$0xff]
      %v7615 = vld [vmem:[%s7606 + $0x40] sm:$0xff]
      %v7616 = vld [vmem:[%s7606 + $0x48] sm:$0xff]
      %v7617 = vld [vmem:[%s7606 + $0x50] sm:$0xff]
      %v7618 = vld [vmem:[%s7606 + $0x58] sm:$0xff]
      %v7619 = vld [vmem:[%s7606 + $0x60] sm:$0xff]
      %v7620 = vld [vmem:[%s7606 + $0x68] sm:$0xff]
      %v7621 = vld [vmem:[%s7606 + $0x70] sm:$0xff]
      %v7622 = vld [vmem:[%s7606 + $0x78] sm:$0xff]
      %v7623 = vld [vmem:[%s7606 + $0x80] sm:$0xff]
      %v7624 = vld [vmem:[%s7606 + $0x88] sm:$0xff]
      %v7625 = vld [vmem:[%s7606 + $0x90] sm:$0xff]
      %v7626 = vld [vmem:[%s7606 + $0x98] sm:$0xff]
      %v7627 = vld [vmem:[%s7606 + $0xa0] sm:$0xff]
      %v7628 = vld [vmem:[%s7606 + $0xa8] sm:$0xff]
      %v7629 = vld [vmem:[%s7606 + $0xb0] sm:$0xff]
      %v7630 = vld [vmem:[%s7606 + $0xb8] sm:$0xff]
      %v7631 = vld [vmem:[%s7606 + $0xc0] sm:$0xff]
      %v7632 = vld [vmem:[%s7606 + $0xc8] sm:$0xff]
      %v7633 = vld [vmem:[%s7606 + $0xd0] sm:$0xff]
      %v7634 = vld [vmem:[%s7606 + $0xd8] sm:$0xff]
      %v7635 = vld [vmem:[%s7606 + $0xe0] sm:$0xff]
      %v7636 = vld [vmem:[%s7606 + $0xe8] sm:$0xff]
      %v7637 = vld [vmem:[%s7606 + $0xf0] sm:$0xff]
      %v7638 = vld [vmem:[%s7606 + $0xf8] sm:$0xff]
      %v7639 = vld [vmem:[%s7606 + $0x100] sm:$0xff]
      %v7640 = vld [vmem:[%s7606 + $0x108] sm:$0xff]
      %v7641 = vld [vmem:[%s7606 + $0x110] sm:$0xff]
      %v7642 = vld [vmem:[%s7606 + $0x118] sm:$0xff]
      %v7643 = vld [vmem:[%s7606 + $0x120] sm:$0xff]
      %v7644 = vld [vmem:[%s7606 + $0x128] sm:$0xff]
      %v7645 = vld [vmem:[%s7606 + $0x130] sm:$0xff]
      %v7646 = vld [vmem:[%s7606 + $0x138] sm:$0xff]
      %v7687 = vunpack.c.l.b16 %v7607
      %v7688 = vunpack.c.h.b16 %v7607
      %v7689 = vunpack.c.l.b16 %v7608
      %v7690 = vunpack.c.h.b16 %v7608
      %v7691 = vunpack.c.l.b16 %v7609
      %v7692 = vunpack.c.h.b16 %v7609
      %v7693 = vunpack.c.l.b16 %v7610
      %v7694 = vunpack.c.h.b16 %v7610
      %v7695 = vunpack.c.l.b16 %v7611
      %v7696 = vunpack.c.h.b16 %v7611
      %v7697 = vunpack.c.l.b16 %v7612
      %v7698 = vunpack.c.h.b16 %v7612
      %v7699 = vunpack.c.l.b16 %v7613
      %v7700 = vunpack.c.h.b16 %v7613
      %v7701 = vunpack.c.l.b16 %v7614
      %v7702 = vunpack.c.h.b16 %v7614
      %v7703 = vunpack.c.l.b16 %v7615
      %v7704 = vunpack.c.h.b16 %v7615
      %v7705 = vunpack.c.l.b16 %v7616
      %v7706 = vunpack.c.h.b16 %v7616
      %v7707 = vunpack.c.l.b16 %v7617
      %v7708 = vunpack.c.h.b16 %v7617
      %v7709 = vunpack.c.l.b16 %v7618
      %v7710 = vunpack.c.h.b16 %v7618
      %v7711 = vunpack.c.l.b16 %v7619
      %v7712 = vunpack.c.h.b16 %v7619
      %v7713 = vunpack.c.l.b16 %v7620
      %v7714 = vunpack.c.h.b16 %v7620
      %v7715 = vunpack.c.l.b16 %v7621
      %v7716 = vunpack.c.h.b16 %v7621
      %v7717 = vunpack.c.l.b16 %v7622
      %v7718 = vunpack.c.h.b16 %v7622
      %v7719 = vunpack.c.l.b16 %v7623
      %v7720 = vunpack.c.h.b16 %v7623
      %v7721 = vunpack.c.l.b16 %v7624
      %v7722 = vunpack.c.h.b16 %v7624
      %v7723 = vunpack.c.l.b16 %v7625
      %v7724 = vunpack.c.h.b16 %v7625
      %v7725 = vunpack.c.l.b16 %v7626
      %v7726 = vunpack.c.h.b16 %v7626
      %v7727 = vunpack.c.l.b16 %v7627
      %v7728 = vunpack.c.h.b16 %v7627
      %v7729 = vunpack.c.l.b16 %v7628
      %v7730 = vunpack.c.h.b16 %v7628
      %v7731 = vunpack.c.l.b16 %v7629
      %v7732 = vunpack.c.h.b16 %v7629
      %v7733 = vunpack.c.l.b16 %v7630
      %v7734 = vunpack.c.h.b16 %v7630
      %v7735 = vunpack.c.l.b16 %v7631
      %v7736 = vunpack.c.h.b16 %v7631
      %v7737 = vunpack.c.l.b16 %v7632
      %v7738 = vunpack.c.h.b16 %v7632
      %v7739 = vunpack.c.l.b16 %v7633
      %v7740 = vunpack.c.h.b16 %v7633
      %v7741 = vunpack.c.l.b16 %v7634
      %v7742 = vunpack.c.h.b16 %v7634
      %v7743 = vunpack.c.l.b16 %v7635
      %v7744 = vunpack.c.h.b16 %v7635
      %v7745 = vunpack.c.l.b16 %v7636
      %v7746 = vunpack.c.h.b16 %v7636
      %v7747 = vunpack.c.l.b16 %v7637
      %v7748 = vunpack.c.h.b16 %v7637
      %v7749 = vunpack.c.l.b16 %v7638
      %v7750 = vunpack.c.h.b16 %v7638
      %v7751 = vunpack.c.l.b16 %v7639
      %v7752 = vunpack.c.h.b16 %v7639
      %v7753 = vunpack.c.l.b16 %v7640
      %v7754 = vunpack.c.h.b16 %v7640
      %v7755 = vunpack.c.l.b16 %v7641
      %v7756 = vunpack.c.h.b16 %v7641
      %v7757 = vunpack.c.l.b16 %v7642
      %v7758 = vunpack.c.h.b16 %v7642
      %v7759 = vunpack.c.l.b16 %v7643
      %v7760 = vunpack.c.h.b16 %v7643
      %v7761 = vunpack.c.l.b16 %v7644
      %v7762 = vunpack.c.h.b16 %v7644
      %v7763 = vunpack.c.l.b16 %v7645
      %v7764 = vunpack.c.h.b16 %v7645
      %v7765 = vunpack.c.l.b16 %v7646
      %v7766 = vunpack.c.h.b16 %v7646
      %v7767 = vpack.c.b16 %v7689, %v7687
      %v7768 = vpack.c.b16 %v7690, %v7688
      %v7769 = vpack.c.b16 %v7693, %v7691
      %v7770 = vpack.c.b16 %v7694, %v7692
      %v7771 = vpack.c.b16 %v7697, %v7695
      %v7772 = vpack.c.b16 %v7698, %v7696
      %v7773 = vpack.c.b16 %v7701, %v7699
      %v7774 = vpack.c.b16 %v7702, %v7700
      %v7775 = vpack.c.b16 %v7705, %v7703
      %v7776 = vpack.c.b16 %v7706, %v7704
      %v7777 = vpack.c.b16 %v7709, %v7707
      %v7778 = vpack.c.b16 %v7710, %v7708
      %v7779 = vpack.c.b16 %v7713, %v7711
      %v7780 = vpack.c.b16 %v7714, %v7712
      %v7781 = vpack.c.b16 %v7717, %v7715
      %v7782 = vpack.c.b16 %v7718, %v7716
      %v7783 = vpack.c.b16 %v7721, %v7719
      %v7784 = vpack.c.b16 %v7722, %v7720
      %v7785 = vpack.c.b16 %v7725, %v7723
      %v7786 = vpack.c.b16 %v7726, %v7724
      %v7787 = vpack.c.b16 %v7729, %v7727
      %v7788 = vpack.c.b16 %v7730, %v7728
      %v7789 = vpack.c.b16 %v7733, %v7731
      %v7790 = vpack.c.b16 %v7734, %v7732
      %v7791 = vpack.c.b16 %v7737, %v7735
      %v7792 = vpack.c.b16 %v7738, %v7736
      %v7793 = vpack.c.b16 %v7741, %v7739
      %v7794 = vpack.c.b16 %v7742, %v7740
      %v7795 = vpack.c.b16 %v7745, %v7743
      %v7796 = vpack.c.b16 %v7746, %v7744
      %v7797 = vpack.c.b16 %v7749, %v7747
      %v7798 = vpack.c.b16 %v7750, %v7748
      %v7799 = vpack.c.b16 %v7753, %v7751
      %v7800 = vpack.c.b16 %v7754, %v7752
      %v7801 = vpack.c.b16 %v7757, %v7755
      %v7802 = vpack.c.b16 %v7758, %v7756
      %v7803 = vpack.c.b16 %v7761, %v7759
      %v7804 = vpack.c.b16 %v7762, %v7760
      %v7805 = vpack.c.b16 %v7765, %v7763
      %v7806 = vpack.c.b16 %v7766, %v7764
      %v7848 = vsel %vm7196, %v7605, 0
      %7850 = vmatpush.bf16.msra.mxu0 %v7781
      %7851 = vmatpush.bf16.msra.mxu0 %v7779
      %7852 = vmatpush.bf16.msra.mxu0 %v7777
      %7853 = vmatpush.bf16.msra.mxu0 %v7775
      %7854 = vmatpush.bf16.msra.mxu0 %v7773
      %7855 = vmatpush.bf16.msra.mxu0 %v7771
      %7856 = vmatpush.bf16.msra.mxu0 %v7769
      %7857 = vmatpush.bf16.msra.mxu0 %v7767
      %7858 = vmatmul.bf16.gmra.mxu0 %v7603
      %v7859 = vpop.f32.mrf.mxu0
      %v7860 = vadd.f32 0.0, %v7859
      %v7861 = vpop.f32.mrf.mxu0
      %7862 = vdwg.mxu0
      %7863 = vmatpush.bf16.msra.mxu0 %v7797
      %7864 = vmatpush.bf16.msra.mxu0 %v7795
      %7865 = vmatpush.bf16.msra.mxu0 %v7793
      %7866 = vmatpush.bf16.msra.mxu0 %v7791
      %7867 = vmatpush.bf16.msra.mxu0 %v7789
      %7868 = vmatpush.bf16.msra.mxu0 %v7787
      %7869 = vmatpush.bf16.msra.mxu0 %v7785
      %7870 = vmatpush.bf16.msra.mxu0 %v7783
      %7871 = vmatmul.bf16.gmra.mxu0 %v7604
      %v7872 = vpop.f32.mrf.mxu0
      %v7873 = vadd.f32 %v7860, %v7872
      %v7874 = vpop.f32.mrf.mxu0
      %7875 = vdwg.mxu0
      %7876 = vmatpush.bf16.msra.mxu0 0
      %7877 = vmatpush.bf16.msra.mxu0 0
      %7878 = vmatpush.bf16.msra.mxu0 0
      %7879 = vmatpush.bf16.msra.mxu0 0
      %7880 = vmatpush.bf16.msra.mxu0 %v7805
      %7881 = vmatpush.bf16.msra.mxu0 %v7803
      %7882 = vmatpush.bf16.msra.mxu0 %v7801
      %7883 = vmatpush.bf16.msra.mxu0 %v7799
      %7884 = vmatmul.bf16.gmra.mxu0 %v7848
      %v7885 = vpop.f32.mrf.mxu0
      %v7886 = vadd.f32 %v7873, %v7885
      %v7887 = vpop.f32.mrf.mxu0
      %7888 = vdwg.mxu0
      %7889 = vmatpush.bf16.msra.mxu0 %v7782
      %7890 = vmatpush.bf16.msra.mxu0 %v7780
      %7891 = vmatpush.bf16.msra.mxu0 %v7778
      %7892 = vmatpush.bf16.msra.mxu0 %v7776
      %7893 = vmatpush.bf16.msra.mxu0 %v7774
      %7894 = vmatpush.bf16.msra.mxu0 %v7772
      %7895 = vmatpush.bf16.msra.mxu0 %v7770
      %7896 = vmatpush.bf16.msra.mxu0 %v7768
      %7897 = vmatmul.bf16.gmra.mxu0 %v7603
      %v7898 = vpop.f32.mrf.mxu0
      %v7899 = vadd.f32 0.0, %v7898
      %v7900 = vpop.f32.mrf.mxu0
      %7901 = vdwg.mxu0
      %7902 = vmatpush.bf16.msra.mxu0 %v7798
      %7903 = vmatpush.bf16.msra.mxu0 %v7796
      %7904 = vmatpush.bf16.msra.mxu0 %v7794
      %7905 = vmatpush.bf16.msra.mxu0 %v7792
      %7906 = vmatpush.bf16.msra.mxu0 %v7790
      %7907 = vmatpush.bf16.msra.mxu0 %v7788
      %7908 = vmatpush.bf16.msra.mxu0 %v7786
      %7909 = vmatpush.bf16.msra.mxu0 %v7784
      %7910 = vmatmul.bf16.gmra.mxu0 %v7604
      %v7911 = vpop.f32.mrf.mxu0
      %v7912 = vadd.f32 %v7899, %v7911
      %v7913 = vpop.f32.mrf.mxu0
      %7914 = vdwg.mxu0
      %7915 = vmatpush.bf16.msra.mxu0 0
      %7916 = vmatpush.bf16.msra.mxu0 0
      %7917 = vmatpush.bf16.msra.mxu0 0
      %7918 = vmatpush.bf16.msra.mxu0 0
      %7919 = vmatpush.bf16.msra.mxu0 %v7806
      %7920 = vmatpush.bf16.msra.mxu0 %v7804
      %7921 = vmatpush.bf16.msra.mxu0 %v7802
      %7922 = vmatpush.bf16.msra.mxu0 %v7800
      %7923 = vmatmul.bf16.gmra.mxu0 %v7848
      %v7924 = vpop.f32.mrf.mxu0
      %v7925 = vadd.f32 %v7912, %v7924
      %v7926 = vpop.f32.mrf.mxu0
      %7927 = vdwg.mxu0
      %v7928 = vadd.f32 %v7517, %v7886
      %v7929 = vadd.f32 %v7556, %v7925
      %s7930 = scalar_lea.vmem %s10, 6
      %v7931 = vld [vmem:[%s7930] sm:$0x3]
      %v7933 = vsel %vm6813, %v7931, 0
      %7935 = vmatpush.bf16.msra.mxu0 0
      %7936 = vmatpush.bf16.msra.mxu0 0
      %7937 = vmatpush.bf16.msra.mxu0 0
      %7938 = vmatpush.bf16.msra.mxu0 0
      %7939 = vmatpush.bf16.msra.mxu0 0
      %7940 = vmatpush.bf16.msra.mxu0 0
      %7941 = vmatpush.bf16.msra.mxu0 0
      %7942 = vmatpush.bf16.msra.mxu0 %v6818
      %7943 = vmatmul.bf16.gmra.mxu0 %v7933
      %v7944 = vpop.f32.mrf.mxu0
      %v7945 = vadd.f32 0.0, %v7944
      %v7946 = vpop.f32.mrf.mxu0
      %7947 = vdwg.mxu0
      %7948 = vmatpush.bf16.msra.mxu0 0
      %7949 = vmatpush.bf16.msra.mxu0 0
      %7950 = vmatpush.bf16.msra.mxu0 0
      %7951 = vmatpush.bf16.msra.mxu0 0
      %7952 = vmatpush.bf16.msra.mxu0 0
      %7953 = vmatpush.bf16.msra.mxu0 0
      %7954 = vmatpush.bf16.msra.mxu0 0
      %7955 = vmatpush.bf16.msra.mxu0 %v6821
      %7956 = vmatmul.bf16.gmra.mxu0 %v7933
      %v7957 = vpop.f32.mrf.mxu0
      %v7958 = vadd.f32 0.0, %v7957
      %v7959 = vpop.f32.mrf.mxu0
      %7960 = vdwg.mxu0
      %7961 = vmatpush.bf16.msra.mxu0 0
      %7962 = vmatpush.bf16.msra.mxu0 0
      %7963 = vmatpush.bf16.msra.mxu0 0
      %7964 = vmatpush.bf16.msra.mxu0 0
      %7965 = vmatpush.bf16.msra.mxu0 0
      %7966 = vmatpush.bf16.msra.mxu0 0
      %7967 = vmatpush.bf16.msra.mxu0 0
      %7968 = vmatpush.bf16.msra.mxu0 %v6824
      %7969 = vmatmul.bf16.gmra.mxu0 %v7933
      %v7970 = vpop.f32.mrf.mxu0
      %v7971 = vadd.f32 0.0, %v7970
      %v7972 = vpop.f32.mrf.mxu0
      %7973 = vdwg.mxu0
      %v7974 = vpack.c.bf16 %v7945, %v7945
      %v7975 = vpack.c.bf16 %v7958, %v7958
      %v7976 = vpack.c.bf16 %v7971, %v7971
      %s7977 = scalar_lea.vmem %s11, 960
      %v7978 = vld [vmem:[%s7977] sm:$0xff]
      %v7979 = vld [vmem:[%s7977 + $0x8] sm:$0xff]
      %v7980 = vld [vmem:[%s7977 + $0x10] sm:$0xff]
      %v7981 = vld [vmem:[%s7977 + $0x18] sm:$0xff]
      %v7982 = vld [vmem:[%s7977 + $0x20] sm:$0xff]
      %v7983 = vld [vmem:[%s7977 + $0x28] sm:$0xff]
      %v7984 = vld [vmem:[%s7977 + $0x30] sm:$0xff]
      %v7985 = vld [vmem:[%s7977 + $0x38] sm:$0xff]
      %v7986 = vld [vmem:[%s7977 + $0x40] sm:$0xff]
      %v7987 = vld [vmem:[%s7977 + $0x48] sm:$0xff]
      %v7988 = vld [vmem:[%s7977 + $0x50] sm:$0xff]
      %v7989 = vld [vmem:[%s7977 + $0x58] sm:$0xff]
      %v7990 = vld [vmem:[%s7977 + $0x60] sm:$0xff]
      %v7991 = vld [vmem:[%s7977 + $0x68] sm:$0xff]
      %v7992 = vld [vmem:[%s7977 + $0x70] sm:$0xff]
      %v7993 = vld [vmem:[%s7977 + $0x78] sm:$0xff]
      %v7994 = vld [vmem:[%s7977 + $0x80] sm:$0xff]
      %v7995 = vld [vmem:[%s7977 + $0x88] sm:$0xff]
      %v7996 = vld [vmem:[%s7977 + $0x90] sm:$0xff]
      %v7997 = vld [vmem:[%s7977 + $0x98] sm:$0xff]
      %v7998 = vld [vmem:[%s7977 + $0xa0] sm:$0xff]
      %v7999 = vld [vmem:[%s7977 + $0xa8] sm:$0xff]
      %v8000 = vld [vmem:[%s7977 + $0xb0] sm:$0xff]
      %v8001 = vld [vmem:[%s7977 + $0xb8] sm:$0xff]
      %v8002 = vld [vmem:[%s7977 + $0xc0] sm:$0xff]
      %v8003 = vld [vmem:[%s7977 + $0xc8] sm:$0xff]
      %v8004 = vld [vmem:[%s7977 + $0xd0] sm:$0xff]
      %v8005 = vld [vmem:[%s7977 + $0xd8] sm:$0xff]
      %v8006 = vld [vmem:[%s7977 + $0xe0] sm:$0xff]
      %v8007 = vld [vmem:[%s7977 + $0xe8] sm:$0xff]
      %v8008 = vld [vmem:[%s7977 + $0xf0] sm:$0xff]
      %v8009 = vld [vmem:[%s7977 + $0xf8] sm:$0xff]
      %v8010 = vld [vmem:[%s7977 + $0x100] sm:$0xff]
      %v8011 = vld [vmem:[%s7977 + $0x108] sm:$0xff]
      %v8012 = vld [vmem:[%s7977 + $0x110] sm:$0xff]
      %v8013 = vld [vmem:[%s7977 + $0x118] sm:$0xff]
      %v8014 = vld [vmem:[%s7977 + $0x120] sm:$0xff]
      %v8015 = vld [vmem:[%s7977 + $0x128] sm:$0xff]
      %v8016 = vld [vmem:[%s7977 + $0x130] sm:$0xff]
      %v8017 = vld [vmem:[%s7977 + $0x138] sm:$0xff]
      %v8058 = vunpack.c.l.b16 %v7978
      %v8059 = vunpack.c.h.b16 %v7978
      %v8060 = vunpack.c.l.b16 %v7979
      %v8061 = vunpack.c.h.b16 %v7979
      %v8062 = vunpack.c.l.b16 %v7980
      %v8063 = vunpack.c.h.b16 %v7980
      %v8064 = vunpack.c.l.b16 %v7981
      %v8065 = vunpack.c.h.b16 %v7981
      %v8066 = vunpack.c.l.b16 %v7982
      %v8067 = vunpack.c.h.b16 %v7982
      %v8068 = vunpack.c.l.b16 %v7983
      %v8069 = vunpack.c.h.b16 %v7983
      %v8070 = vunpack.c.l.b16 %v7984
      %v8071 = vunpack.c.h.b16 %v7984
      %v8072 = vunpack.c.l.b16 %v7985
      %v8073 = vunpack.c.h.b16 %v7985
      %v8074 = vunpack.c.l.b16 %v7986
      %v8075 = vunpack.c.h.b16 %v7986
      %v8076 = vunpack.c.l.b16 %v7987
      %v8077 = vunpack.c.h.b16 %v7987
      %v8078 = vunpack.c.l.b16 %v7988
      %v8079 = vunpack.c.h.b16 %v7988
      %v8080 = vunpack.c.l.b16 %v7989
      %v8081 = vunpack.c.h.b16 %v7989
      %v8082 = vunpack.c.l.b16 %v7990
      %v8083 = vunpack.c.h.b16 %v7990
      %v8084 = vunpack.c.l.b16 %v7991
      %v8085 = vunpack.c.h.b16 %v7991
      %v8086 = vunpack.c.l.b16 %v7992
      %v8087 = vunpack.c.h.b16 %v7992
      %v8088 = vunpack.c.l.b16 %v7993
      %v8089 = vunpack.c.h.b16 %v7993
      %v8090 = vunpack.c.l.b16 %v7994
      %v8091 = vunpack.c.h.b16 %v7994
      %v8092 = vunpack.c.l.b16 %v7995
      %v8093 = vunpack.c.h.b16 %v7995
      %v8094 = vunpack.c.l.b16 %v7996
      %v8095 = vunpack.c.h.b16 %v7996
      %v8096 = vunpack.c.l.b16 %v7997
      %v8097 = vunpack.c.h.b16 %v7997
      %v8098 = vunpack.c.l.b16 %v7998
      %v8099 = vunpack.c.h.b16 %v7998
      %v8100 = vunpack.c.l.b16 %v7999
      %v8101 = vunpack.c.h.b16 %v7999
      %v8102 = vunpack.c.l.b16 %v8000
      %v8103 = vunpack.c.h.b16 %v8000
      %v8104 = vunpack.c.l.b16 %v8001
      %v8105 = vunpack.c.h.b16 %v8001
      %v8106 = vunpack.c.l.b16 %v8002
      %v8107 = vunpack.c.h.b16 %v8002
      %v8108 = vunpack.c.l.b16 %v8003
      %v8109 = vunpack.c.h.b16 %v8003
      %v8110 = vunpack.c.l.b16 %v8004
      %v8111 = vunpack.c.h.b16 %v8004
      %v8112 = vunpack.c.l.b16 %v8005
      %v8113 = vunpack.c.h.b16 %v8005
      %v8114 = vunpack.c.l.b16 %v8006
      %v8115 = vunpack.c.h.b16 %v8006
      %v8116 = vunpack.c.l.b16 %v8007
      %v8117 = vunpack.c.h.b16 %v8007
      %v8118 = vunpack.c.l.b16 %v8008
      %v8119 = vunpack.c.h.b16 %v8008
      %v8120 = vunpack.c.l.b16 %v8009
      %v8121 = vunpack.c.h.b16 %v8009
      %v8122 = vunpack.c.l.b16 %v8010
      %v8123 = vunpack.c.h.b16 %v8010
      %v8124 = vunpack.c.l.b16 %v8011
      %v8125 = vunpack.c.h.b16 %v8011
      %v8126 = vunpack.c.l.b16 %v8012
      %v8127 = vunpack.c.h.b16 %v8012
      %v8128 = vunpack.c.l.b16 %v8013
      %v8129 = vunpack.c.h.b16 %v8013
      %v8130 = vunpack.c.l.b16 %v8014
      %v8131 = vunpack.c.h.b16 %v8014
      %v8132 = vunpack.c.l.b16 %v8015
      %v8133 = vunpack.c.h.b16 %v8015
      %v8134 = vunpack.c.l.b16 %v8016
      %v8135 = vunpack.c.h.b16 %v8016
      %v8136 = vunpack.c.l.b16 %v8017
      %v8137 = vunpack.c.h.b16 %v8017
      %v8138 = vpack.c.b16 %v8060, %v8058
      %v8139 = vpack.c.b16 %v8061, %v8059
      %v8140 = vpack.c.b16 %v8064, %v8062
      %v8141 = vpack.c.b16 %v8065, %v8063
      %v8142 = vpack.c.b16 %v8068, %v8066
      %v8143 = vpack.c.b16 %v8069, %v8067
      %v8144 = vpack.c.b16 %v8072, %v8070
      %v8145 = vpack.c.b16 %v8073, %v8071
      %v8146 = vpack.c.b16 %v8076, %v8074
      %v8147 = vpack.c.b16 %v8077, %v8075
      %v8148 = vpack.c.b16 %v8080, %v8078
      %v8149 = vpack.c.b16 %v8081, %v8079
      %v8150 = vpack.c.b16 %v8084, %v8082
      %v8151 = vpack.c.b16 %v8085, %v8083
      %v8152 = vpack.c.b16 %v8088, %v8086
      %v8153 = vpack.c.b16 %v8089, %v8087
      %v8154 = vpack.c.b16 %v8092, %v8090
      %v8155 = vpack.c.b16 %v8093, %v8091
      %v8156 = vpack.c.b16 %v8096, %v8094
      %v8157 = vpack.c.b16 %v8097, %v8095
      %v8158 = vpack.c.b16 %v8100, %v8098
      %v8159 = vpack.c.b16 %v8101, %v8099
      %v8160 = vpack.c.b16 %v8104, %v8102
      %v8161 = vpack.c.b16 %v8105, %v8103
      %v8162 = vpack.c.b16 %v8108, %v8106
      %v8163 = vpack.c.b16 %v8109, %v8107
      %v8164 = vpack.c.b16 %v8112, %v8110
      %v8165 = vpack.c.b16 %v8113, %v8111
      %v8166 = vpack.c.b16 %v8116, %v8114
      %v8167 = vpack.c.b16 %v8117, %v8115
      %v8168 = vpack.c.b16 %v8120, %v8118
      %v8169 = vpack.c.b16 %v8121, %v8119
      %v8170 = vpack.c.b16 %v8124, %v8122
      %v8171 = vpack.c.b16 %v8125, %v8123
      %v8172 = vpack.c.b16 %v8128, %v8126
      %v8173 = vpack.c.b16 %v8129, %v8127
      %v8174 = vpack.c.b16 %v8132, %v8130
      %v8175 = vpack.c.b16 %v8133, %v8131
      %v8176 = vpack.c.b16 %v8136, %v8134
      %v8177 = vpack.c.b16 %v8137, %v8135
      %v8219 = vsel %vm7196, %v7976, 0
      %8221 = vmatpush.bf16.msra.mxu0 %v8152
      %8222 = vmatpush.bf16.msra.mxu0 %v8150
      %8223 = vmatpush.bf16.msra.mxu0 %v8148
      %8224 = vmatpush.bf16.msra.mxu0 %v8146
      %8225 = vmatpush.bf16.msra.mxu0 %v8144
      %8226 = vmatpush.bf16.msra.mxu0 %v8142
      %8227 = vmatpush.bf16.msra.mxu0 %v8140
      %8228 = vmatpush.bf16.msra.mxu0 %v8138
      %8229 = vmatmul.bf16.gmra.mxu0 %v7974
      %v8230 = vpop.f32.mrf.mxu0
      %v8231 = vadd.f32 0.0, %v8230
      %v8232 = vpop.f32.mrf.mxu0
      %8233 = vdwg.mxu0
      %8234 = vmatpush.bf16.msra.mxu0 %v8168
      %8235 = vmatpush.bf16.msra.mxu0 %v8166
      %8236 = vmatpush.bf16.msra.mxu0 %v8164
      %8237 = vmatpush.bf16.msra.mxu0 %v8162
      %8238 = vmatpush.bf16.msra.mxu0 %v8160
      %8239 = vmatpush.bf16.msra.mxu0 %v8158
      %8240 = vmatpush.bf16.msra.mxu0 %v8156
      %8241 = vmatpush.bf16.msra.mxu0 %v8154
      %8242 = vmatmul.bf16.gmra.mxu0 %v7975
      %v8243 = vpop.f32.mrf.mxu0
      %v8244 = vadd.f32 %v8231, %v8243
      %v8245 = vpop.f32.mrf.mxu0
      %8246 = vdwg.mxu0
      %8247 = vmatpush.bf16.msra.mxu0 0
      %8248 = vmatpush.bf16.msra.mxu0 0
      %8249 = vmatpush.bf16.msra.mxu0 0
      %8250 = vmatpush.bf16.msra.mxu0 0
      %8251 = vmatpush.bf16.msra.mxu0 %v8176
      %8252 = vmatpush.bf16.msra.mxu0 %v8174
      %8253 = vmatpush.bf16.msra.mxu0 %v8172
      %8254 = vmatpush.bf16.msra.mxu0 %v8170
      %8255 = vmatmul.bf16.gmra.mxu0 %v8219
      %v8256 = vpop.f32.mrf.mxu0
      %v8257 = vadd.f32 %v8244, %v8256
      %v8258 = vpop.f32.mrf.mxu0
      %8259 = vdwg.mxu0
      %8260 = vmatpush.bf16.msra.mxu0 %v8153
      %8261 = vmatpush.bf16.msra.mxu0 %v8151
      %8262 = vmatpush.bf16.msra.mxu0 %v8149
      %8263 = vmatpush.bf16.msra.mxu0 %v8147
      %8264 = vmatpush.bf16.msra.mxu0 %v8145
      %8265 = vmatpush.bf16.msra.mxu0 %v8143
      %8266 = vmatpush.bf16.msra.mxu0 %v8141
      %8267 = vmatpush.bf16.msra.mxu0 %v8139
      %8268 = vmatmul.bf16.gmra.mxu0 %v7974
      %v8269 = vpop.f32.mrf.mxu0
      %v8270 = vadd.f32 0.0, %v8269
      %v8271 = vpop.f32.mrf.mxu0
      %8272 = vdwg.mxu0
      %8273 = vmatpush.bf16.msra.mxu0 %v8169
      %8274 = vmatpush.bf16.msra.mxu0 %v8167
      %8275 = vmatpush.bf16.msra.mxu0 %v8165
      %8276 = vmatpush.bf16.msra.mxu0 %v8163
      %8277 = vmatpush.bf16.msra.mxu0 %v8161
      %8278 = vmatpush.bf16.msra.mxu0 %v8159
      %8279 = vmatpush.bf16.msra.mxu0 %v8157
      %8280 = vmatpush.bf16.msra.mxu0 %v8155
      %8281 = vmatmul.bf16.gmra.mxu0 %v7975
      %v8282 = vpop.f32.mrf.mxu0
      %v8283 = vadd.f32 %v8270, %v8282
      %v8284 = vpop.f32.mrf.mxu0
      %8285 = vdwg.mxu0
      %8286 = vmatpush.bf16.msra.mxu0 0
      %8287 = vmatpush.bf16.msra.mxu0 0
      %8288 = vmatpush.bf16.msra.mxu0 0
      %8289 = vmatpush.bf16.msra.mxu0 0
      %8290 = vmatpush.bf16.msra.mxu0 %v8177
      %8291 = vmatpush.bf16.msra.mxu0 %v8175
      %8292 = vmatpush.bf16.msra.mxu0 %v8173
      %8293 = vmatpush.bf16.msra.mxu0 %v8171
      %8294 = vmatmul.bf16.gmra.mxu0 %v8219
      %v8295 = vpop.f32.mrf.mxu0
      %v8296 = vadd.f32 %v8283, %v8295
      %v8297 = vpop.f32.mrf.mxu0
      %8298 = vdwg.mxu0
      %v8299 = vadd.f32 %v7928, %v8257
      %v8300 = vadd.f32 %v7929, %v8296
      %v8301 = vld [vmem:[%s12] sm:$0x3]
      %v8303 = vperm.slane %v8301, 0
      %v8304 = vperm.slane %v8301, 1
      %v8307 = vadd.f32 %v8299, %v8303
      %v8308 = vadd.f32 %v8300, %v8304
      %v8309 = vmax.f32 %v8307, 0.0
      %v8310 = vmax.f32 %v8308, 0.0
      %v8311 = vpack.c.bf16 %v8310, %v8309
      %v8312 = vld [vmem:[%s13] sm:$0xf]
      %v8313 = vld [vmem:[%s13 + $0x4] sm:$0xf]
      %v8314 = vld [vmem:[%s13 + $0x8] sm:$0xf]
      %v8315 = vld [vmem:[%s13 + $0xc] sm:$0xf]
      %v8316 = vld [vmem:[%s13 + $0x10] sm:$0xf]
      %v8317 = vld [vmem:[%s13 + $0x14] sm:$0xf]
      %v8318 = vld [vmem:[%s13 + $0x18] sm:$0xf]
      %v8319 = vld [vmem:[%s13 + $0x1c] sm:$0xf]
      %v8320 = vld [vmem:[%s13 + $0x20] sm:$0xf]
      %v8321 = vld [vmem:[%s13 + $0x24] sm:$0xf]
      %v8322 = vld [vmem:[%s13 + $0x28] sm:$0xf]
      %v8323 = vld [vmem:[%s13 + $0x2c] sm:$0xf]
      %v8324 = vld [vmem:[%s13 + $0x30] sm:$0xf]
      %v8325 = vld [vmem:[%s13 + $0x34] sm:$0xf]
      %v8326 = vld [vmem:[%s13 + $0x38] sm:$0xf]
      %v8327 = vld [vmem:[%s13 + $0x3c] sm:$0xf]
      %v8328 = vld [vmem:[%s13 + $0x40] sm:$0xf]
      %v8329 = vld [vmem:[%s13 + $0x44] sm:$0xf]
      %v8330 = vld [vmem:[%s13 + $0x48] sm:$0xf]
      %v8331 = vld [vmem:[%s13 + $0x4c] sm:$0xf]
      %v8332 = vld [vmem:[%s13 + $0x50] sm:$0xf]
      %v8333 = vld [vmem:[%s13 + $0x54] sm:$0xf]
      %v8334 = vld [vmem:[%s13 + $0x58] sm:$0xf]
      %v8335 = vld [vmem:[%s13 + $0x5c] sm:$0xf]
      %v8336 = vld [vmem:[%s13 + $0x60] sm:$0xf]
      %v8337 = vld [vmem:[%s13 + $0x64] sm:$0xf]
      %v8338 = vld [vmem:[%s13 + $0x68] sm:$0xf]
      %v8339 = vld [vmem:[%s13 + $0x6c] sm:$0xf]
      %v8340 = vld [vmem:[%s13 + $0x70] sm:$0xf]
      %v8341 = vld [vmem:[%s13 + $0x74] sm:$0xf]
      %v8342 = vld [vmem:[%s13 + $0x78] sm:$0xf]
      %v8343 = vld [vmem:[%s13 + $0x7c] sm:$0xf]
      %s8344 = scalar_lea.vmem %s13, 128
      %v8345 = vld [vmem:[%s8344] sm:$0xf]
      %v8346 = vld [vmem:[%s8344 + $0x4] sm:$0xf]
      %v8347 = vld [vmem:[%s8344 + $0x8] sm:$0xf]
      %v8348 = vld [vmem:[%s8344 + $0xc] sm:$0xf]
      %v8349 = vld [vmem:[%s8344 + $0x10] sm:$0xf]
      %v8350 = vld [vmem:[%s8344 + $0x14] sm:$0xf]
      %v8351 = vld [vmem:[%s8344 + $0x18] sm:$0xf]
      %v8352 = vld [vmem:[%s8344 + $0x1c] sm:$0xf]
      %v8353 = vld [vmem:[%s8344 + $0x20] sm:$0xf]
      %v8354 = vld [vmem:[%s8344 + $0x24] sm:$0xf]
      %v8355 = vld [vmem:[%s8344 + $0x28] sm:$0xf]
      %v8356 = vld [vmem:[%s8344 + $0x2c] sm:$0xf]
      %v8357 = vld [vmem:[%s8344 + $0x30] sm:$0xf]
      %v8358 = vld [vmem:[%s8344 + $0x34] sm:$0xf]
      %v8359 = vld [vmem:[%s8344 + $0x38] sm:$0xf]
      %v8360 = vld [vmem:[%s8344 + $0x3c] sm:$0xf]
      %v8361 = vld [vmem:[%s8344 + $0x40] sm:$0xf]
      %v8362 = vld [vmem:[%s8344 + $0x44] sm:$0xf]
      %v8363 = vld [vmem:[%s8344 + $0x48] sm:$0xf]
      %v8364 = vld [vmem:[%s8344 + $0x4c] sm:$0xf]
      %v8365 = vld [vmem:[%s8344 + $0x50] sm:$0xf]
      %v8366 = vld [vmem:[%s8344 + $0x54] sm:$0xf]
      %v8367 = vld [vmem:[%s8344 + $0x58] sm:$0xf]
      %v8368 = vld [vmem:[%s8344 + $0x5c] sm:$0xf]
      %v8369 = vld [vmem:[%s8344 + $0x60] sm:$0xf]
      %v8370 = vld [vmem:[%s8344 + $0x64] sm:$0xf]
      %v8371 = vld [vmem:[%s8344 + $0x68] sm:$0xf]
      %v8372 = vld [vmem:[%s8344 + $0x6c] sm:$0xf]
      %v8373 = vld [vmem:[%s8344 + $0x70] sm:$0xf]
      %v8374 = vld [vmem:[%s8344 + $0x74] sm:$0xf]
      %v8375 = vld [vmem:[%s8344 + $0x78] sm:$0xf]
      %v8376 = vld [vmem:[%s8344 + $0x7c] sm:$0xf]
      %v8378 = vunpack.c.l.b16 %v8311
      %v8379 = vunpack.c.h.b16 %v8311
      %v8380 = vpack.c.b16 %v8378, %v8378
      %v8381 = vpack.c.b16 %v8379, %v8379
      %v8383 = vshrl.u32 %v8380, 16
      %v8386 = vshrl.u32 %v8381, 16
      %v8422 = vunpack.c.l.b16 %v8345
      %v8423 = vunpack.c.l.b16 %v8346
      %v8424 = vunpack.c.l.b16 %v8347
      %v8425 = vunpack.c.l.b16 %v8348
      %v8426 = vunpack.c.l.b16 %v8349
      %v8427 = vunpack.c.l.b16 %v8350
      %v8428 = vunpack.c.l.b16 %v8351
      %v8429 = vunpack.c.l.b16 %v8352
      %v8430 = vunpack.c.l.b16 %v8353
      %v8431 = vunpack.c.l.b16 %v8354
      %v8432 = vunpack.c.l.b16 %v8355
      %v8433 = vunpack.c.l.b16 %v8356
      %v8434 = vunpack.c.l.b16 %v8357
      %v8435 = vunpack.c.l.b16 %v8358
      %v8436 = vunpack.c.l.b16 %v8359
      %v8437 = vunpack.c.l.b16 %v8360
      %v8438 = vunpack.c.l.b16 %v8361
      %v8439 = vunpack.c.l.b16 %v8362
      %v8440 = vunpack.c.l.b16 %v8363
      %v8441 = vunpack.c.l.b16 %v8364
      %v8442 = vunpack.c.l.b16 %v8365
      %v8443 = vunpack.c.l.b16 %v8366
      %v8444 = vunpack.c.l.b16 %v8367
      %v8445 = vunpack.c.l.b16 %v8368
      %v8446 = vunpack.c.l.b16 %v8369
      %v8447 = vunpack.c.l.b16 %v8370
      %v8448 = vunpack.c.l.b16 %v8371
      %v8449 = vunpack.c.l.b16 %v8372
      %v8450 = vunpack.c.l.b16 %v8373
      %v8451 = vunpack.c.l.b16 %v8374
      %v8452 = vunpack.c.l.b16 %v8375
      %v8453 = vunpack.c.l.b16 %v8376
      %v8454 = vpack.c.b16 %v8423, %v8422
      %v8455 = vpack.c.b16 %v8425, %v8424
      %v8456 = vpack.c.b16 %v8427, %v8426
      %v8457 = vpack.c.b16 %v8429, %v8428
      %v8458 = vpack.c.b16 %v8431, %v8430
      %v8459 = vpack.c.b16 %v8433, %v8432
      %v8460 = vpack.c.b16 %v8435, %v8434
      %v8461 = vpack.c.b16 %v8437, %v8436
      %v8462 = vpack.c.b16 %v8439, %v8438
      %v8463 = vpack.c.b16 %v8441, %v8440
      %v8464 = vpack.c.b16 %v8443, %v8442
      %v8465 = vpack.c.b16 %v8445, %v8444
      %v8466 = vpack.c.b16 %v8447, %v8446
      %v8467 = vpack.c.b16 %v8449, %v8448
      %v8468 = vpack.c.b16 %v8451, %v8450
      %v8469 = vpack.c.b16 %v8453, %v8452
      %8486 = vmatpush.bf16.msra.mxu0 %v8461
      %8487 = vmatpush.bf16.msra.mxu0 %v8460
      %8488 = vmatpush.bf16.msra.mxu0 %v8459
      %8489 = vmatpush.bf16.msra.mxu0 %v8458
      %8490 = vmatpush.bf16.msra.mxu0 %v8457
      %8491 = vmatpush.bf16.msra.mxu0 %v8456
      %8492 = vmatpush.bf16.msra.mxu0 %v8455
      %8493 = vmatpush.bf16.msra.mxu0 %v8454
      %8494 = vmatmul.bf16.gmra.mxu0 %v8383
      %v8495 = vpop.f32.mrf.mxu0
      %v8496 = vadd.f32 0.0, %v8495
      %v8497 = vpop.f32.mrf.mxu0
      %8498 = vdwg.mxu0
      %8499 = vmatpush.bf16.msra.mxu0 %v8469
      %8500 = vmatpush.bf16.msra.mxu0 %v8468
      %8501 = vmatpush.bf16.msra.mxu0 %v8467
      %8502 = vmatpush.bf16.msra.mxu0 %v8466
      %8503 = vmatpush.bf16.msra.mxu0 %v8465
      %8504 = vmatpush.bf16.msra.mxu0 %v8464
      %8505 = vmatpush.bf16.msra.mxu0 %v8463
      %8506 = vmatpush.bf16.msra.mxu0 %v8462
      %8507 = vmatmul.bf16.gmra.mxu0 %v8386
      %v8508 = vpop.f32.mrf.mxu0
      %v8509 = vadd.f32 %v8496, %v8508
      %v8510 = vpop.f32.mrf.mxu0
      %8511 = vdwg.mxu0
      %v8546 = vunpack.c.l.b16 %v8312
      %v8547 = vunpack.c.l.b16 %v8313
      %v8548 = vunpack.c.l.b16 %v8314
      %v8549 = vunpack.c.l.b16 %v8315
      %v8550 = vunpack.c.l.b16 %v8316
      %v8551 = vunpack.c.l.b16 %v8317
      %v8552 = vunpack.c.l.b16 %v8318
      %v8553 = vunpack.c.l.b16 %v8319
      %v8554 = vunpack.c.l.b16 %v8320
      %v8555 = vunpack.c.l.b16 %v8321
      %v8556 = vunpack.c.l.b16 %v8322
      %v8557 = vunpack.c.l.b16 %v8323
      %v8558 = vunpack.c.l.b16 %v8324
      %v8559 = vunpack.c.l.b16 %v8325
      %v8560 = vunpack.c.l.b16 %v8326
      %v8561 = vunpack.c.l.b16 %v8327
      %v8562 = vunpack.c.l.b16 %v8328
      %v8563 = vunpack.c.l.b16 %v8329
      %v8564 = vunpack.c.l.b16 %v8330
      %v8565 = vunpack.c.l.b16 %v8331
      %v8566 = vunpack.c.l.b16 %v8332
      %v8567 = vunpack.c.l.b16 %v8333
      %v8568 = vunpack.c.l.b16 %v8334
      %v8569 = vunpack.c.l.b16 %v8335
      %v8570 = vunpack.c.l.b16 %v8336
      %v8571 = vunpack.c.l.b16 %v8337
      %v8572 = vunpack.c.l.b16 %v8338
      %v8573 = vunpack.c.l.b16 %v8339
      %v8574 = vunpack.c.l.b16 %v8340
      %v8575 = vunpack.c.l.b16 %v8341
      %v8576 = vunpack.c.l.b16 %v8342
      %v8577 = vunpack.c.l.b16 %v8343
      %v8578 = vpack.c.b16 %v8547, %v8546
      %v8579 = vpack.c.b16 %v8549, %v8548
      %v8580 = vpack.c.b16 %v8551, %v8550
      %v8581 = vpack.c.b16 %v8553, %v8552
      %v8582 = vpack.c.b16 %v8555, %v8554
      %v8583 = vpack.c.b16 %v8557, %v8556
      %v8584 = vpack.c.b16 %v8559, %v8558
      %v8585 = vpack.c.b16 %v8561, %v8560
      %v8586 = vpack.c.b16 %v8563, %v8562
      %v8587 = vpack.c.b16 %v8565, %v8564
      %v8588 = vpack.c.b16 %v8567, %v8566
      %v8589 = vpack.c.b16 %v8569, %v8568
      %v8590 = vpack.c.b16 %v8571, %v8570
      %v8591 = vpack.c.b16 %v8573, %v8572
      %v8592 = vpack.c.b16 %v8575, %v8574
      %v8593 = vpack.c.b16 %v8577, %v8576
      %8610 = vmatpush.bf16.msra.mxu0 %v8585
      %8611 = vmatpush.bf16.msra.mxu0 %v8584
      %8612 = vmatpush.bf16.msra.mxu0 %v8583
      %8613 = vmatpush.bf16.msra.mxu0 %v8582
      %8614 = vmatpush.bf16.msra.mxu0 %v8581
      %8615 = vmatpush.bf16.msra.mxu0 %v8580
      %8616 = vmatpush.bf16.msra.mxu0 %v8579
      %8617 = vmatpush.bf16.msra.mxu0 %v8578
      %8618 = vmatmul.bf16.gmra.mxu0 %v8380
      %v8619 = vpop.f32.mrf.mxu0
      %v8620 = vadd.f32 %v8509, %v8619
      %v8621 = vpop.f32.mrf.mxu0
      %8622 = vdwg.mxu0
      %8623 = vmatpush.bf16.msra.mxu0 %v8593
      %8624 = vmatpush.bf16.msra.mxu0 %v8592
      %8625 = vmatpush.bf16.msra.mxu0 %v8591
      %8626 = vmatpush.bf16.msra.mxu0 %v8590
      %8627 = vmatpush.bf16.msra.mxu0 %v8589
      %8628 = vmatpush.bf16.msra.mxu0 %v8588
      %8629 = vmatpush.bf16.msra.mxu0 %v8587
      %8630 = vmatpush.bf16.msra.mxu0 %v8586
      %8631 = vmatmul.bf16.gmra.mxu0 %v8381
      %v8632 = vpop.f32.mrf.mxu0
      %v8633 = vadd.f32 %v8620, %v8632
      %v8634 = vpop.f32.mrf.mxu0
      %8635 = vdwg.mxu0
      %s8636 = scalar_lea.vmem %s13, 256
      %v8637 = vld [vmem:[%s8636] sm:$0xf]
      %v8638 = vld [vmem:[%s8636 + $0x4] sm:$0xf]
      %v8639 = vld [vmem:[%s8636 + $0x8] sm:$0xf]
      %v8640 = vld [vmem:[%s8636 + $0xc] sm:$0xf]
      %v8641 = vld [vmem:[%s8636 + $0x10] sm:$0xf]
      %v8642 = vld [vmem:[%s8636 + $0x14] sm:$0xf]
      %v8643 = vld [vmem:[%s8636 + $0x18] sm:$0xf]
      %v8644 = vld [vmem:[%s8636 + $0x1c] sm:$0xf]
      %v8645 = vld [vmem:[%s8636 + $0x20] sm:$0xf]
      %v8646 = vld [vmem:[%s8636 + $0x24] sm:$0xf]
      %v8647 = vld [vmem:[%s8636 + $0x28] sm:$0xf]
      %v8648 = vld [vmem:[%s8636 + $0x2c] sm:$0xf]
      %v8649 = vld [vmem:[%s8636 + $0x30] sm:$0xf]
      %v8650 = vld [vmem:[%s8636 + $0x34] sm:$0xf]
      %v8651 = vld [vmem:[%s8636 + $0x38] sm:$0xf]
      %v8652 = vld [vmem:[%s8636 + $0x3c] sm:$0xf]
      %v8653 = vld [vmem:[%s8636 + $0x40] sm:$0xf]
      %v8654 = vld [vmem:[%s8636 + $0x44] sm:$0xf]
      %v8655 = vld [vmem:[%s8636 + $0x48] sm:$0xf]
      %v8656 = vld [vmem:[%s8636 + $0x4c] sm:$0xf]
      %v8657 = vld [vmem:[%s8636 + $0x50] sm:$0xf]
      %v8658 = vld [vmem:[%s8636 + $0x54] sm:$0xf]
      %v8659 = vld [vmem:[%s8636 + $0x58] sm:$0xf]
      %v8660 = vld [vmem:[%s8636 + $0x5c] sm:$0xf]
      %v8661 = vld [vmem:[%s8636 + $0x60] sm:$0xf]
      %v8662 = vld [vmem:[%s8636 + $0x64] sm:$0xf]
      %v8663 = vld [vmem:[%s8636 + $0x68] sm:$0xf]
      %v8664 = vld [vmem:[%s8636 + $0x6c] sm:$0xf]
      %v8665 = vld [vmem:[%s8636 + $0x70] sm:$0xf]
      %v8666 = vld [vmem:[%s8636 + $0x74] sm:$0xf]
      %v8667 = vld [vmem:[%s8636 + $0x78] sm:$0xf]
      %v8668 = vld [vmem:[%s8636 + $0x7c] sm:$0xf]
      %v8669 = vrot.slane %v8380, 1
      %v8670 = vrot.slane %v8381, 1
      %v8705 = vunpack.c.l.b16 %v8637
      %v8706 = vunpack.c.l.b16 %v8638
      %v8707 = vunpack.c.l.b16 %v8639
      %v8708 = vunpack.c.l.b16 %v8640
      %v8709 = vunpack.c.l.b16 %v8641
      %v8710 = vunpack.c.l.b16 %v8642
      %v8711 = vunpack.c.l.b16 %v8643
      %v8712 = vunpack.c.l.b16 %v8644
      %v8713 = vunpack.c.l.b16 %v8645
      %v8714 = vunpack.c.l.b16 %v8646
      %v8715 = vunpack.c.l.b16 %v8647
      %v8716 = vunpack.c.l.b16 %v8648
      %v8717 = vunpack.c.l.b16 %v8649
      %v8718 = vunpack.c.l.b16 %v8650
      %v8719 = vunpack.c.l.b16 %v8651
      %v8720 = vunpack.c.l.b16 %v8652
      %v8721 = vunpack.c.l.b16 %v8653
      %v8722 = vunpack.c.l.b16 %v8654
      %v8723 = vunpack.c.l.b16 %v8655
      %v8724 = vunpack.c.l.b16 %v8656
      %v8725 = vunpack.c.l.b16 %v8657
      %v8726 = vunpack.c.l.b16 %v8658
      %v8727 = vunpack.c.l.b16 %v8659
      %v8728 = vunpack.c.l.b16 %v8660
      %v8729 = vunpack.c.l.b16 %v8661
      %v8730 = vunpack.c.l.b16 %v8662
      %v8731 = vunpack.c.l.b16 %v8663
      %v8732 = vunpack.c.l.b16 %v8664
      %v8733 = vunpack.c.l.b16 %v8665
      %v8734 = vunpack.c.l.b16 %v8666
      %v8735 = vunpack.c.l.b16 %v8667
      %v8736 = vunpack.c.l.b16 %v8668
      %v8737 = vpack.c.b16 %v8706, %v8705
      %v8738 = vpack.c.b16 %v8708, %v8707
      %v8739 = vpack.c.b16 %v8710, %v8709
      %v8740 = vpack.c.b16 %v8712, %v8711
      %v8741 = vpack.c.b16 %v8714, %v8713
      %v8742 = vpack.c.b16 %v8716, %v8715
      %v8743 = vpack.c.b16 %v8718, %v8717
      %v8744 = vpack.c.b16 %v8720, %v8719
      %v8745 = vpack.c.b16 %v8722, %v8721
      %v8746 = vpack.c.b16 %v8724, %v8723
      %v8747 = vpack.c.b16 %v8726, %v8725
      %v8748 = vpack.c.b16 %v8728, %v8727
      %v8749 = vpack.c.b16 %v8730, %v8729
      %v8750 = vpack.c.b16 %v8732, %v8731
      %v8751 = vpack.c.b16 %v8734, %v8733
      %v8752 = vpack.c.b16 %v8736, %v8735
      %8769 = vmatpush.bf16.msra.mxu0 %v8744
      %8770 = vmatpush.bf16.msra.mxu0 %v8743
      %8771 = vmatpush.bf16.msra.mxu0 %v8742
      %8772 = vmatpush.bf16.msra.mxu0 %v8741
      %8773 = vmatpush.bf16.msra.mxu0 %v8740
      %8774 = vmatpush.bf16.msra.mxu0 %v8739
      %8775 = vmatpush.bf16.msra.mxu0 %v8738
      %8776 = vmatpush.bf16.msra.mxu0 %v8737
      %8777 = vmatmul.bf16.gmra.mxu0 %v8669
      %v8778 = vpop.f32.mrf.mxu0
      %v8779 = vadd.f32 0.0, %v8778
      %v8780 = vpop.f32.mrf.mxu0
      %8781 = vdwg.mxu0
      %8782 = vmatpush.bf16.msra.mxu0 %v8752
      %8783 = vmatpush.bf16.msra.mxu0 %v8751
      %8784 = vmatpush.bf16.msra.mxu0 %v8750
      %8785 = vmatpush.bf16.msra.mxu0 %v8749
      %8786 = vmatpush.bf16.msra.mxu0 %v8748
      %8787 = vmatpush.bf16.msra.mxu0 %v8747
      %8788 = vmatpush.bf16.msra.mxu0 %v8746
      %8789 = vmatpush.bf16.msra.mxu0 %v8745
      %8790 = vmatmul.bf16.gmra.mxu0 %v8670
      %v8791 = vpop.f32.mrf.mxu0
      %v8792 = vadd.f32 %v8779, %v8791
      %v8793 = vpop.f32.mrf.mxu0
      %8794 = vdwg.mxu0
      %v8795 = vadd.f32 %v8633, %v8792
      %s8796 = scalar_lea.vmem %s13, 384
      %v8797 = vld [vmem:[%s8796] sm:$0xf]
      %v8798 = vld [vmem:[%s8796 + $0x4] sm:$0xf]
      %v8799 = vld [vmem:[%s8796 + $0x8] sm:$0xf]
      %v8800 = vld [vmem:[%s8796 + $0xc] sm:$0xf]
      %v8801 = vld [vmem:[%s8796 + $0x10] sm:$0xf]
      %v8802 = vld [vmem:[%s8796 + $0x14] sm:$0xf]
      %v8803 = vld [vmem:[%s8796 + $0x18] sm:$0xf]
      %v8804 = vld [vmem:[%s8796 + $0x1c] sm:$0xf]
      %v8805 = vld [vmem:[%s8796 + $0x20] sm:$0xf]
      %v8806 = vld [vmem:[%s8796 + $0x24] sm:$0xf]
      %v8807 = vld [vmem:[%s8796 + $0x28] sm:$0xf]
      %v8808 = vld [vmem:[%s8796 + $0x2c] sm:$0xf]
      %v8809 = vld [vmem:[%s8796 + $0x30] sm:$0xf]
      %v8810 = vld [vmem:[%s8796 + $0x34] sm:$0xf]
      %v8811 = vld [vmem:[%s8796 + $0x38] sm:$0xf]
      %v8812 = vld [vmem:[%s8796 + $0x3c] sm:$0xf]
      %v8813 = vld [vmem:[%s8796 + $0x40] sm:$0xf]
      %v8814 = vld [vmem:[%s8796 + $0x44] sm:$0xf]
      %v8815 = vld [vmem:[%s8796 + $0x48] sm:$0xf]
      %v8816 = vld [vmem:[%s8796 + $0x4c] sm:$0xf]
      %v8817 = vld [vmem:[%s8796 + $0x50] sm:$0xf]
      %v8818 = vld [vmem:[%s8796 + $0x54] sm:$0xf]
      %v8819 = vld [vmem:[%s8796 + $0x58] sm:$0xf]
      %v8820 = vld [vmem:[%s8796 + $0x5c] sm:$0xf]
      %v8821 = vld [vmem:[%s8796 + $0x60] sm:$0xf]
      %v8822 = vld [vmem:[%s8796 + $0x64] sm:$0xf]
      %v8823 = vld [vmem:[%s8796 + $0x68] sm:$0xf]
      %v8824 = vld [vmem:[%s8796 + $0x6c] sm:$0xf]
      %v8825 = vld [vmem:[%s8796 + $0x70] sm:$0xf]
      %v8826 = vld [vmem:[%s8796 + $0x74] sm:$0xf]
      %v8827 = vld [vmem:[%s8796 + $0x78] sm:$0xf]
      %v8828 = vld [vmem:[%s8796 + $0x7c] sm:$0xf]
      %v8829 = vrot.slane %v8383, 1
      %v8830 = vrot.slane %v8386, 1
      %v8865 = vunpack.c.l.b16 %v8797
      %v8866 = vunpack.c.l.b16 %v8798
      %v8867 = vunpack.c.l.b16 %v8799
      %v8868 = vunpack.c.l.b16 %v8800
      %v8869 = vunpack.c.l.b16 %v8801
      %v8870 = vunpack.c.l.b16 %v8802
      %v8871 = vunpack.c.l.b16 %v8803
      %v8872 = vunpack.c.l.b16 %v8804
      %v8873 = vunpack.c.l.b16 %v8805
      %v8874 = vunpack.c.l.b16 %v8806
      %v8875 = vunpack.c.l.b16 %v8807
      %v8876 = vunpack.c.l.b16 %v8808
      %v8877 = vunpack.c.l.b16 %v8809
      %v8878 = vunpack.c.l.b16 %v8810
      %v8879 = vunpack.c.l.b16 %v8811
      %v8880 = vunpack.c.l.b16 %v8812
      %v8881 = vunpack.c.l.b16 %v8813
      %v8882 = vunpack.c.l.b16 %v8814
      %v8883 = vunpack.c.l.b16 %v8815
      %v8884 = vunpack.c.l.b16 %v8816
      %v8885 = vunpack.c.l.b16 %v8817
      %v8886 = vunpack.c.l.b16 %v8818
      %v8887 = vunpack.c.l.b16 %v8819
      %v8888 = vunpack.c.l.b16 %v8820
      %v8889 = vunpack.c.l.b16 %v8821
      %v8890 = vunpack.c.l.b16 %v8822
      %v8891 = vunpack.c.l.b16 %v8823
      %v8892 = vunpack.c.l.b16 %v8824
      %v8893 = vunpack.c.l.b16 %v8825
      %v8894 = vunpack.c.l.b16 %v8826
      %v8895 = vunpack.c.l.b16 %v8827
      %v8896 = vunpack.c.l.b16 %v8828
      %v8897 = vpack.c.b16 %v8866, %v8865
      %v8898 = vpack.c.b16 %v8868, %v8867
      %v8899 = vpack.c.b16 %v8870, %v8869
      %v8900 = vpack.c.b16 %v8872, %v8871
      %v8901 = vpack.c.b16 %v8874, %v8873
      %v8902 = vpack.c.b16 %v8876, %v8875
      %v8903 = vpack.c.b16 %v8878, %v8877
      %v8904 = vpack.c.b16 %v8880, %v8879
      %v8905 = vpack.c.b16 %v8882, %v8881
      %v8906 = vpack.c.b16 %v8884, %v8883
      %v8907 = vpack.c.b16 %v8886, %v8885
      %v8908 = vpack.c.b16 %v8888, %v8887
      %v8909 = vpack.c.b16 %v8890, %v8889
      %v8910 = vpack.c.b16 %v8892, %v8891
      %v8911 = vpack.c.b16 %v8894, %v8893
      %v8912 = vpack.c.b16 %v8896, %v8895
      %8929 = vmatpush.bf16.msra.mxu0 %v8904
      %8930 = vmatpush.bf16.msra.mxu0 %v8903
      %8931 = vmatpush.bf16.msra.mxu0 %v8902
      %8932 = vmatpush.bf16.msra.mxu0 %v8901
      %8933 = vmatpush.bf16.msra.mxu0 %v8900
      %8934 = vmatpush.bf16.msra.mxu0 %v8899
      %8935 = vmatpush.bf16.msra.mxu0 %v8898
      %8936 = vmatpush.bf16.msra.mxu0 %v8897
      %8937 = vmatmul.bf16.gmra.mxu0 %v8829
      %v8938 = vpop.f32.mrf.mxu0
      %v8939 = vadd.f32 0.0, %v8938
      %v8940 = vpop.f32.mrf.mxu0
      %8941 = vdwg.mxu0
      %8942 = vmatpush.bf16.msra.mxu0 %v8912
      %8943 = vmatpush.bf16.msra.mxu0 %v8911
      %8944 = vmatpush.bf16.msra.mxu0 %v8910
      %8945 = vmatpush.bf16.msra.mxu0 %v8909
      %8946 = vmatpush.bf16.msra.mxu0 %v8908
      %8947 = vmatpush.bf16.msra.mxu0 %v8907
      %8948 = vmatpush.bf16.msra.mxu0 %v8906
      %8949 = vmatpush.bf16.msra.mxu0 %v8905
      %8950 = vmatmul.bf16.gmra.mxu0 %v8830
      %v8951 = vpop.f32.mrf.mxu0
      %v8952 = vadd.f32 %v8939, %v8951
      %v8953 = vpop.f32.mrf.mxu0
      %8954 = vdwg.mxu0
      %v8955 = vadd.f32 %v8795, %v8952
      %v8956 = vld [vmem:[%s14] sm:$0x1]
      %v8957 = vadd.f32 %v8955, %v8956
      %v8958 = vmax.f32 %v8957, 0.0
      %v8959 = vpack.c.bf16 %v8958, %v8958
      %v8960 = vld [vmem:[%s15] sm:$0xf]
      %v8961 = vld [vmem:[%s15 + $0x4] sm:$0xf]
      %v8962 = vld [vmem:[%s15 + $0x8] sm:$0xf]
      %v8963 = vld [vmem:[%s15 + $0xc] sm:$0xf]
      %v8964 = vld [vmem:[%s15 + $0x10] sm:$0xf]
      %v8965 = vld [vmem:[%s15 + $0x14] sm:$0xf]
      %v8966 = vld [vmem:[%s15 + $0x18] sm:$0xf]
      %v8967 = vld [vmem:[%s15 + $0x1c] sm:$0xf]
      %v8968 = vld [vmem:[%s16] sm:$0x1]
      %v8977 = vunpack.c.l.b16 %v8960
      %v8978 = vunpack.c.l.b16 %v8961
      %v8979 = vunpack.c.l.b16 %v8962
      %v8980 = vunpack.c.l.b16 %v8963
      %v8981 = vunpack.c.l.b16 %v8964
      %v8982 = vunpack.c.l.b16 %v8965
      %v8983 = vunpack.c.l.b16 %v8966
      %v8984 = vunpack.c.l.b16 %v8967
      %v8985 = vpack.c.b16 %v8978, %v8977
      %v8986 = vpack.c.b16 %v8980, %v8979
      %v8987 = vpack.c.b16 %v8982, %v8981
      %v8988 = vpack.c.b16 %v8984, %v8983
      %v8994 = vsel %vm7196, %v8959, 0
      %8996 = vmatpush.bf16.msra.mxu0 0
      %8997 = vmatpush.bf16.msra.mxu0 0
      %8998 = vmatpush.bf16.msra.mxu0 0
      %8999 = vmatpush.bf16.msra.mxu0 0
      %9000 = vmatpush.bf16.msra.mxu0 %v8988
      %9001 = vmatpush.bf16.msra.mxu0 %v8987
      %9002 = vmatpush.bf16.msra.mxu0 %v8986
      %9003 = vmatpush.bf16.msra.mxu0 %v8985
      %9004 = vmatmul.bf16.gmra.mxu0 %v8994
      %v9005 = vpop.f32.mrf.mxu0
      %v9006 = vadd.f32 %v8968, %v9005
      %v9007 = vpop.f32.mrf.mxu0
      %9008 = vdwg.mxu0
      %v9009 = vmax.f32 %v9006, 0.0
      %v9010 = vpack.c.bf16 %v9009, %v9009
      %v9011 = vld [vmem:[%s17] sm:$0xf]
      %v9012 = vld [vmem:[%s17 + $0x4] sm:$0xf]
      %v9013 = vld [vmem:[%s17 + $0x8] sm:$0xf]
      %v9014 = vld [vmem:[%s17 + $0xc] sm:$0xf]
      %v9015 = vld [vmem:[%s18] sm:$0x1]
      %v9020 = vunpack.c.l.b16 %v9011
      %v9021 = vunpack.c.l.b16 %v9012
      %v9022 = vunpack.c.l.b16 %v9013
      %v9023 = vunpack.c.l.b16 %v9014
      %v9024 = vpack.c.b16 %v9021, %v9020
      %v9025 = vpack.c.b16 %v9023, %v9022
      %vm9028 = vcmask 261120
      %v9030 = vsel %vm9028, %v9010, 0
      %9032 = vmatpush.bf16.msra.mxu0 0
      %9033 = vmatpush.bf16.msra.mxu0 0
      %9034 = vmatpush.bf16.msra.mxu0 0
      %9035 = vmatpush.bf16.msra.mxu0 0
      %9036 = vmatpush.bf16.msra.mxu0 0
      %9037 = vmatpush.bf16.msra.mxu0 0
      %9038 = vmatpush.bf16.msra.mxu0 %v9025
      %9039 = vmatpush.bf16.msra.mxu0 %v9024
      %9040 = vmatmul.bf16.gmra.mxu0 %v9030
      %v9041 = vpop.f32.mrf.mxu0
      %v9042 = vadd.f32 %v9015, %v9041
      %v9043 = vpop.f32.mrf.mxu0
      %9044 = vdwg.mxu0
      %v9045 = vperm.slane %v9042, 0
      %9046 = vst [vmem:[%s600] sm:$0xff] %v9045
      %p9047 = scmp.lt.s32.totalorder %s30, 1
      %s9048 = scalar_select %p9047, %s30, 1
      %s9049 = smul.addr %s9048, 8
      %s9050 = scalar_lea.vmem %s19, %s9049
      // Predicated region
      $region97: #{critic_forward.1} parent=95 // pred_check
        %p9051 = pneg %p452
      $region98: #{critic_forward.1} parent=95 // pred_check_branch
        %9053 = sbr.rel (%p9051) target = $region100
      $region99: #{critic_forward.1} parent=95 // pred_region
        _
      $region100: #{critic_forward.1} parent=95 // pred_fallthru
        _
    $region96: #{critic_forward.1} parent=5 // pred_fallthru
      _
    %p9054 = scmp.le.s32.totalorder 2, %s25
    // Predicated region
    $region101: #{critic_forward.1} parent=5 // pred_check
      %p9055 = pneg %p9054
    $region102: #{critic_forward.1} parent=5 // pred_check_branch
      %9057 = sbr.rel (%p9055) target = $region104
    $region103: #{critic_forward.1} parent=5 // pred_region
      %s9058 = ssub.s32 %s25, 2
      // Predicated region
      $region105: #{critic_forward.1} parent=103 // pred_check
        %p9059 = pneg %p458
      $region106: #{critic_forward.1} parent=103 // pred_check_branch
        %9061 = sbr.rel (%p9059) target = $region108
      $region107: #{critic_forward.1} parent=103 // pred_region
        %p9062 = scmp.lt.s32.totalorder %s31, 1
        %s9063 = scalar_select %p9062, %s31, 1
        %s9064 = smul.addr %s9063, 8
        %s9065 = scalar_lea.vmem %s19, %s9064
      $region108: #{critic_forward.1} parent=103 // pred_fallthru
        _
    $region104: #{critic_forward.1} parent=5 // pred_fallthru
      _
  $region6: #{critic_forward.1} parent=0 // loop_footer
    %s29 = sadd.s32 1, %s25
  $region7: #{critic_forward.1} parent=0 // loop_footer_branch
    %24 = sbr.rel target = $region3
  $region8: #{critic_forward.1} parent=0 // loop_exit
    _

</llo_original>
